<compile_context>
chip_gen: v7x
topology: tpu7x:2x2x1
jax: 0.10.0
libtpu: 0.0.40
codegen_flags: <defaults>
</compile_context>

<pallas_src>
import numpy as np
import jax
import jax.numpy as jnp
from jax.experimental import pallas as pl
from jax.experimental.pallas import tpu as pltpu

_NUM_SPU_STEPS = 7   # DSPMOD.forward applies SPU_layer 7 times with shared weights
_BN_EPS = 1e-5       # nn.BatchNorm2d default eps


def _dspmod_kernel(x_ref, m_ref, b_ref, pfc_ref, pcf_ref,
                   gamma_ref, beta_ref, theta_ref,
                   data_out_ref, code_out_ref):
    """Fused DSPMOD forward: 7 SPU steps, all operands resident in VMEM.

    x_ref:      (N, F)  input `data` (== initial `code`), F = C*H*W
    m_ref:      (F, F)  fused dense operator for en_conv1(en_conv0(.)) (3x3, pad=1)
    b_ref:      (1, F)  fused bias (b0 pushed through conv1, plus b1)
    pfc_ref:    (F, C)  per-channel averaging projector (entries 0 or 1/(N*H*W))
    pcf_ref:    (C, F)  channel -> flat broadcast projector (0/1)
    gamma/beta: (1, C)  BatchNorm2d affine parameters
    theta:      (1, F)  SST threshold (per-channel value repeated over H*W)
    """
    x = x_ref[...]
    m = m_ref[...]
    bias = b_ref[...]
    p_fc = pfc_ref[...]
    p_cf = pcf_ref[...]
    gamma = gamma_ref[...]
    beta = beta_ref[...]
    theta = jnp.maximum(theta_ref[...], 0.0)       # torch.clamp(theta, min=0.0)

    def conv_encoder(z):                           # en_conv1(en_conv0(z)) as ONE matmul
        return jnp.dot(z, m, preferred_element_type=jnp.float32) + bias

    def sst(z):                                    # sign(z)*relu(|z|-theta) with theta >= 0
        return jnp.where(z > theta, z - theta,
                         jnp.where(z < -theta, z + theta, 0.0))

    def step(_, carry):
        data, code = carry
        dcode = conv_encoder(code)
        res = data - dcode
        dres = conv_encoder(res)
        code = code + dres

        # BatchNorm2d, training-mode batch statistics (biased variance), per channel.
        # TODO(synk): running-mean/var buffer updates (stateful side effect) not modeled.
        colsum = jnp.sum(code, axis=0, keepdims=True)          # (1, F)
        colsq = jnp.sum(code * code, axis=0, keepdims=True)    # (1, F)
        mean_c = jnp.dot(colsum, p_fc, preferred_element_type=jnp.float32)   # (1, C)
        ex2_c = jnp.dot(colsq, p_fc, preferred_element_type=jnp.float32)     # (1, C)
        var_c = jnp.maximum(ex2_c - mean_c * mean_c, 0.0)      # guard one-pass cancellation
        inv_c = jax.lax.rsqrt(var_c + _BN_EPS)
        scale_c = inv_c * gamma                                # (1, C)
        shift_c = beta - mean_c * scale_c                      # (1, C)
        scale_f = jnp.dot(scale_c, p_cf, preferred_element_type=jnp.float32)  # (1, F)
        shift_f = jnp.dot(shift_c, p_cf, preferred_element_type=jnp.float32)  # (1, F)

        code = sst(code * scale_f + shift_f)
        data = sst(conv_encoder(code))
        return (data, code)

    data, code = jax.lax.fori_loop(0, _NUM_SPU_STEPS, step, (x, x))
    data_out_ref[...] = data
    code_out_ref[...] = code


def _conv3x3_to_dense(w, b, H, W):
    """Fold Conv2d(Cin,Cout,3,pad=1,bias=True) into y_flat = x_flat @ M + b_flat (float64).

    Vectorized over (Cin, Cout, spatial); only the 9 kernel taps remain as a Python loop.
    """
    w = np.asarray(w, np.float64)
    b = np.asarray(b, np.float64)
    Cout, Cin, KH, KW = w.shape
    HW = H * W
    M = np.zeros((Cin * HW, Cout * HW), np.float64)
    hh, ww = np.meshgrid(np.arange(H), np.arange(W), indexing="ij")
    out_sp = (hh * W + ww).reshape(-1)
    ci = np.arange(Cin)[:, None, None]      # (Cin, 1, 1)
    co = np.arange(Cout)[None, :, None]     # (1, Cout, 1)
    for i in range(KH):
        for j in range(KW):
            hp = hh + i - KH // 2
            wp = ww + j - KW // 2
            valid = ((hp >= 0) & (hp < H) & (wp >= 0) & (wp < W)).reshape(-1)
            rows = (hp * W + wp).reshape(-1)[valid]
            cols = out_sp[valid]
            M[ci * HW + rows[None, None, :], co * HW + cols[None, None, :]] = \
                w[:, :, i, j].T[:, :, None]
    b_flat = np.repeat(b, HW)[None, :]
    return M, b_flat


def dspmod_pallas(data_nchw, params):
    N, C, H, W = data_nchw.shape
    HW = H * W
    F = C * HW

    # Host-side (float64) folding of the two shared 3x3 convs into ONE dense operator:
    #   conv1(conv0(z)) = z @ (M0 @ M1) + (b0 @ M1 + b1)
    m0, b0 = _conv3x3_to_dense(params["w0"], params["b0"], H, W)
    m1, b1 = _conv3x3_to_dense(params["w1"], params["b1"], H, W)
    m01 = jnp.asarray(m0 @ m1, jnp.float32)
    b01 = jnp.asarray(b0 @ m1 + b1, jnp.float32)
    # NOTE: m01 could be stored as bf16 (halves operator VMEM, native MXU path) when F
    # grows large; kept f32 here so the 7-step chained forward stays well inside tolerance.

    # Skinny per-channel projectors (replace the old dense (F, F) averaging operator).
    ch_of = np.arange(F) // HW
    p_fc = np.zeros((F, C), np.float32)
    p_fc[np.arange(F), ch_of] = 1.0 / (N * HW)     # baked batch-mean scale (uses actual N)
    p_cf = np.zeros((C, F), np.float32)
    p_cf[ch_of, np.arange(F)] = 1.0
    p_fc = jnp.asarray(p_fc)
    p_cf = jnp.asarray(p_cf)

    gamma = jnp.asarray(np.asarray(params["gamma"], np.float32).reshape(1, C))
    beta = jnp.asarray(np.asarray(params["beta"], np.float32).reshape(1, C))
    theta_f = jnp.asarray(
        np.repeat(np.asarray(params["theta"], np.float32).reshape(-1), HW)[None, :])

    x_flat = data_nchw.reshape(N, F).astype(jnp.float32)

    # Explicit VMEM budget: resident operands + headroom for loop temporaries, capped at
    # v7x's 64 MiB physical VMEM (scoped defaults are 16 MiB v5e / 32 MiB v6e-v7x).
    resident = 4 * (F * F + 3 * N * F + 2 * F * C + 3 * F + 2 * C)
    vmem_limit = int(min(resident + (16 << 20), 64 << 20))

    vmem = pltpu.MemorySpace.VMEM
    data_f, code_f = pl.pallas_call(
        _dspmod_kernel,
        # No grid: single invocation with whole arrays resident in VMEM, so the (F, F)
        # operator is single-buffered (no pipeline double-buffering).
        in_specs=[pl.BlockSpec(memory_space=vmem)] * 8,
        out_specs=(pl.BlockSpec(memory_space=vmem),
                   pl.BlockSpec(memory_space=vmem)),
        out_shape=(jax.ShapeDtypeStruct((N, F), jnp.float32),
                   jax.ShapeDtypeStruct((N, F), jnp.float32)),
        compiler_params=pltpu.CompilerParams(vmem_limit_bytes=vmem_limit),
    )(x_flat, m01, b01, p_fc, p_cf, gamma, beta, theta_f)
    # TODO(synk): v7x second TensorCore left idle; splitting the conv output-F dimension
    # across cores needs a per-step cross-core BatchNorm-stat reduction (not implemented).

    return data_f.reshape(N, C, H, W), code_f.reshape(N, C, H, W)


# ---------------- pure-JAX reference (correctness check only) ----------------

def _conv2d_ref(x, w, b):
    y = jax.lax.conv_general_dilated(
        x, w, window_strides=(1, 1), padding=((1, 1), (1, 1)),
        dimension_numbers=("NCHW", "OIHW", "NCHW"),
        precision=jax.lax.Precision.HIGHEST)
    return y + b[None, :, None, None]


def dspmod_reference(data, params):
    def conv_encoder(z):
        z = _conv2d_ref(z, params["w0"], params["b0"])
        z = _conv2d_ref(z, params["w1"], params["b1"])
        return z

    theta = jnp.maximum(params["theta"].reshape(1, -1, 1, 1), 0.0)
    gamma = params["gamma"][None, :, None, None]
    beta = params["beta"][None, :, None, None]

    def sst(z):
        return jnp.sign(z) * jnp.maximum(jnp.abs(z) - theta, 0.0)

    code = data
    for _ in range(_NUM_SPU_STEPS):
        dcode = conv_encoder(code)
        res = data - dcode
        dres = conv_encoder(res)
        code = code + dres
        mean = jnp.mean(code, axis=(0, 2, 3), keepdims=True)
        var = jnp.mean(jnp.square(code - mean), axis=(0, 2, 3), keepdims=True)
        code = (code - mean) * jax.lax.rsqrt(var + _BN_EPS) * gamma + beta
        code = sst(code)
        data = conv_encoder(code)
        data = sst(data)
    return data, code


if __name__ == "__main__":
    # DictConv2d.forward only type-checks when img_channels == in_channels == out_channels.
    # N=8 fills the 8 f32 MXU sublane rows (perf feedback: M=2 wasted >=75% of MXU rows).
    N, C, H, W = 8, 4, 16, 16
    key = jax.random.PRNGKey(0)
    kw0, kb0, kw1, kb1, kx = jax.random.split(key, 5)
    bound = 1.0 / np.sqrt(C * 9)   # ~ torch Conv2d default init scale
    params = {
        "w0": jax.random.uniform(kw0, (C, C, 3, 3), jnp.float32, -bound, bound),
        "b0": jax.random.uniform(kb0, (C,), jnp.float32, -bound, bound),
        "w1": jax.random.uniform(kw1, (C, C, 3, 3), jnp.float32, -bound, bound),
        "b1": jax.random.uniform(kb1, (C,), jnp.float32, -bound, bound),
        "gamma": jnp.ones((C,), jnp.float32),        # BatchNorm2d.weight default
        "beta": jnp.zeros((C,), jnp.float32),        # BatchNorm2d.bias default
        "theta": jnp.full((C,), 1e-3, jnp.float32),  # SST theta (1,C,1,1), init=0.001
    }
    data = jax.random.normal(kx, (N, C, H, W), jnp.float32)

    d_out, c_out = dspmod_pallas(data, params)
    jax.block_until_ready((d_out, c_out))

    d_ref, c_ref = dspmod_reference(data, params)
    assert jnp.allclose(d_out, d_ref, rtol=2e-2, atol=2e-2), "data output mismatch vs reference"
    assert jnp.allclose(c_out, c_ref, rtol=2e-2, atol=2e-2), "code output mismatch vs reference"

    print("KERNEL_OK")
</pallas_src>

<mosaic_0001>
module attributes {stable_mosaic.version = 11 : i64} {
  func.func @_dspmod_kernel(%arg0: memref<8x1024xf32, #tpu.memory_space<vmem>>, %arg1: memref<1024x1024xf32, #tpu.memory_space<vmem>>, %arg2: memref<1x1024xf32, #tpu.memory_space<vmem>>, %arg3: memref<1024x4xf32, #tpu.memory_space<vmem>>, %arg4: memref<4x1024xf32, #tpu.memory_space<vmem>>, %arg5: memref<1x4xf32, #tpu.memory_space<vmem>>, %arg6: memref<1x4xf32, #tpu.memory_space<vmem>>, %arg7: memref<1x1024xf32, #tpu.memory_space<vmem>>, %arg8: memref<8x1024xf32, #tpu.memory_space<vmem>>, %arg9: memref<8x1024xf32, #tpu.memory_space<vmem>>) attributes {dimension_semantics = [], scalar_prefetch = 0 : i64, scratch_operands = 0 : i64, tpu.core_type = #tpu.core_type<tc>} {
    %c0 = arith.constant 0 : index
    %c0_0 = arith.constant 0 : index
    %0 = vector.load %arg0[%c0, %c0_0] : memref<8x1024xf32, #tpu.memory_space<vmem>>, vector<8x1024xf32>
    %c0_1 = arith.constant 0 : index
    %c0_2 = arith.constant 0 : index
    %1 = vector.load %arg1[%c0_1, %c0_2] : memref<1024x1024xf32, #tpu.memory_space<vmem>>, vector<1024x1024xf32>
    %c0_3 = arith.constant 0 : index
    %c0_4 = arith.constant 0 : index
    %2 = vector.load %arg2[%c0_3, %c0_4] : memref<1x1024xf32, #tpu.memory_space<vmem>>, vector<1x1024xf32>
    %c0_5 = arith.constant 0 : index
    %c0_6 = arith.constant 0 : index
    %3 = vector.load %arg3[%c0_5, %c0_6] : memref<1024x4xf32, #tpu.memory_space<vmem>>, vector<1024x4xf32>
    %c0_7 = arith.constant 0 : index
    %c0_8 = arith.constant 0 : index
    %4 = vector.load %arg4[%c0_7, %c0_8] : memref<4x1024xf32, #tpu.memory_space<vmem>>, vector<4x1024xf32>
    %c0_9 = arith.constant 0 : index
    %c0_10 = arith.constant 0 : index
    %5 = vector.load %arg5[%c0_9, %c0_10] : memref<1x4xf32, #tpu.memory_space<vmem>>, vector<1x4xf32>
    %c0_11 = arith.constant 0 : index
    %c0_12 = arith.constant 0 : index
    %6 = vector.load %arg6[%c0_11, %c0_12] : memref<1x4xf32, #tpu.memory_space<vmem>>, vector<1x4xf32>
    %c0_13 = arith.constant 0 : index
    %c0_14 = arith.constant 0 : index
    %7 = vector.load %arg7[%c0_13, %c0_14] : memref<1x1024xf32, #tpu.memory_space<vmem>>, vector<1x1024xf32>
    %cst = arith.constant 0.000000e+00 : f32
    %8 = vector.broadcast %cst : f32 to vector<1x1024xf32>
    %9 = arith.maximumf %7, %8 : vector<1x1024xf32>
    %c0_i32 = arith.constant 0 : i32
    %c7_i32 = arith.constant 7 : i32
    %10 = arith.addi %c0_i32, %c7_i32 : i32
    %c1_i32 = arith.constant 1 : i32
    %11:2 = scf.for %arg10 = %c0_i32 to %10 step %c1_i32 iter_args(%arg11 = %0, %arg12 = %0) -> (vector<8x1024xf32>, vector<8x1024xf32>)  : i32 {
      %cst_19 = arith.constant dense<0.000000e+00> : vector<8x1024xf32>
      %14 = tpu.matmul %arg12, %1, %cst_19 {dimension_numbers = #tpu.dot_dimension_numbers<[1], [0], [0], [1], [0, 0, 1, 1], [], []>} : vector<8x1024xf32>, vector<1024x1024xf32>, vector<8x1024xf32> -> vector<8x1024xf32>
      %15 = vector.broadcast %2 : vector<1x1024xf32> to vector<8x1024xf32>
      %16 = arith.addf %14, %15 : vector<8x1024xf32>
      %17 = arith.subf %arg11, %16 : vector<8x1024xf32>
      %cst_20 = arith.constant dense<0.000000e+00> : vector<8x1024xf32>
      %18 = tpu.matmul %17, %1, %cst_20 {dimension_numbers = #tpu.dot_dimension_numbers<[1], [0], [0], [1], [0, 0, 1, 1], [], []>} : vector<8x1024xf32>, vector<1024x1024xf32>, vector<8x1024xf32> -> vector<8x1024xf32>
      %19 = vector.broadcast %2 : vector<1x1024xf32> to vector<8x1024xf32>
      %20 = arith.addf %18, %19 : vector<8x1024xf32>
      %21 = arith.addf %arg12, %20 : vector<8x1024xf32>
      %cst_21 = arith.constant dense<0.000000e+00> : vector<1024xf32>
      %22 = vector.multi_reduction <add>, %21, %cst_21 [0] : vector<8x1024xf32> to vector<1024xf32>
      %23 = vector.shape_cast %22 : vector<1024xf32> to vector<1x1024xf32>
      %24 = arith.mulf %21, %21 : vector<8x1024xf32>
      %cst_22 = arith.constant dense<0.000000e+00> : vector<1024xf32>
      %25 = vector.multi_reduction <add>, %24, %cst_22 [0] : vector<8x1024xf32> to vector<1024xf32>
      %26 = vector.shape_cast %25 : vector<1024xf32> to vector<1x1024xf32>
      %cst_23 = arith.constant dense<0.000000e+00> : vector<1x4xf32>
      %27 = tpu.matmul %23, %3, %cst_23 {dimension_numbers = #tpu.dot_dimension_numbers<[1], [0], [0], [1], [0, 0, 1, 1], [], []>} : vector<1x1024xf32>, vector<1024x4xf32>, vector<1x4xf32> -> vector<1x4xf32>
      %cst_24 = arith.constant dense<0.000000e+00> : vector<1x4xf32>
      %28 = tpu.matmul %26, %3, %cst_24 {dimension_numbers = #tpu.dot_dimension_numbers<[1], [0], [0], [1], [0, 0, 1, 1], [], []>} : vector<1x1024xf32>, vector<1024x4xf32>, vector<1x4xf32> -> vector<1x4xf32>
      %29 = arith.mulf %27, %27 : vector<1x4xf32>
      %30 = arith.subf %28, %29 : vector<1x4xf32>
      %cst_25 = arith.constant 0.000000e+00 : f32
      %31 = vector.broadcast %cst_25 : f32 to vector<1x4xf32>
      %32 = arith.maximumf %30, %31 : vector<1x4xf32>
      %cst_26 = arith.constant 9.99999974E-6 : f32
      %33 = vector.broadcast %cst_26 : f32 to vector<1x4xf32>
      %34 = arith.addf %32, %33 : vector<1x4xf32>
      %35 = math.rsqrt %34 : vector<1x4xf32>
      %36 = arith.mulf %35, %5 : vector<1x4xf32>
      %37 = arith.mulf %27, %36 : vector<1x4xf32>
      %38 = arith.subf %6, %37 : vector<1x4xf32>
      %cst_27 = arith.constant dense<0.000000e+00> : vector<1x1024xf32>
      %39 = tpu.matmul %36, %4, %cst_27 {dimension_numbers = #tpu.dot_dimension_numbers<[1], [0], [0], [1], [0, 0, 1, 1], [], []>} : vector<1x4xf32>, vector<4x1024xf32>, vector<1x1024xf32> -> vector<1x1024xf32>
      %cst_28 = arith.constant dense<0.000000e+00> : vector<1x1024xf32>
      %40 = tpu.matmul %38, %4, %cst_28 {dimension_numbers = #tpu.dot_dimension_numbers<[1], [0], [0], [1], [0, 0, 1, 1], [], []>} : vector<1x4xf32>, vector<4x1024xf32>, vector<1x1024xf32> -> vector<1x1024xf32>
      %41 = vector.broadcast %39 : vector<1x1024xf32> to vector<8x1024xf32>
      %42 = arith.mulf %21, %41 : vector<8x1024xf32>
      %43 = vector.broadcast %40 : vector<1x1024xf32> to vector<8x1024xf32>
      %44 = arith.addf %42, %43 : vector<8x1024xf32>
      %45 = vector.broadcast %9 : vector<1x1024xf32> to vector<8x1024xf32>
      %46 = arith.cmpf ogt, %44, %45 : vector<8x1024xf32>
      %47 = vector.broadcast %9 : vector<1x1024xf32> to vector<8x1024xf32>
      %48 = arith.subf %44, %47 : vector<8x1024xf32>
      %cst_29 = arith.constant 0.000000e+00 : f32
      %49 = vector.broadcast %cst_29 : f32 to vector<1x1024xf32>
      %50 = arith.subf %49, %9 : vector<1x1024xf32>
      %51 = vector.broadcast %50 : vector<1x1024xf32> to vector<8x1024xf32>
      %52 = arith.cmpf olt, %44, %51 : vector<8x1024xf32>
      %53 = vector.broadcast %9 : vector<1x1024xf32> to vector<8x1024xf32>
      %54 = arith.addf %44, %53 : vector<8x1024xf32>
      %cst_30 = arith.constant 0.000000e+00 : f32
      %55 = vector.broadcast %cst_30 : f32 to vector<8x1024xf32>
      %56 = arith.select %52, %54, %55 : vector<8x1024xi1>, vector<8x1024xf32>
      %57 = arith.select %46, %48, %56 : vector<8x1024xi1>, vector<8x1024xf32>
      %cst_31 = arith.constant dense<0.000000e+00> : vector<8x1024xf32>
      %58 = tpu.matmul %57, %1, %cst_31 {dimension_numbers = #tpu.dot_dimension_numbers<[1], [0], [0], [1], [0, 0, 1, 1], [], []>} : vector<8x1024xf32>, vector<1024x1024xf32>, vector<8x1024xf32> -> vector<8x1024xf32>
      %59 = vector.broadcast %2 : vector<1x1024xf32> to vector<8x1024xf32>
      %60 = arith.addf %58, %59 : vector<8x1024xf32>
      %61 = vector.broadcast %9 : vector<1x1024xf32> to vector<8x1024xf32>
      %62 = arith.cmpf ogt, %60, %61 : vector<8x1024xf32>
      %63 = vector.broadcast %9 : vector<1x1024xf32> to vector<8x1024xf32>
      %64 = arith.subf %60, %63 : vector<8x1024xf32>
      %cst_32 = arith.constant 0.000000e+00 : f32
      %65 = vector.broadcast %cst_32 : f32 to vector<1x1024xf32>
      %66 = arith.subf %65, %9 : vector<1x1024xf32>
      %67 = vector.broadcast %66 : vector<1x1024xf32> to vector<8x1024xf32>
      %68 = arith.cmpf olt, %60, %67 : vector<8x1024xf32>
      %69 = vector.broadcast %9 : vector<1x1024xf32> to vector<8x1024xf32>
      %70 = arith.addf %60, %69 : vector<8x1024xf32>
      %cst_33 = arith.constant 0.000000e+00 : f32
      %71 = vector.broadcast %cst_33 : f32 to vector<8x1024xf32>
      %72 = arith.select %68, %70, %71 : vector<8x1024xi1>, vector<8x1024xf32>
      %73 = arith.select %62, %64, %72 : vector<8x1024xi1>, vector<8x1024xf32>
      scf.yield %73, %57 : vector<8x1024xf32>, vector<8x1024xf32>
    }
    %c0_15 = arith.constant 0 : index
    %c0_16 = arith.constant 0 : index
    %12 = vector.load %arg8[%c0_15, %c0_16] : memref<8x1024xf32, #tpu.memory_space<vmem>>, vector<8x1024xf32>
    tpu.vector_store %arg8[%c0_15, %c0_16], %11#0 {strides = array<i32>} : memref<8x1024xf32, #tpu.memory_space<vmem>>, vector<8x1024xf32>,
    %c0_17 = arith.constant 0 : index
    %c0_18 = arith.constant 0 : index
    %13 = vector.load %arg9[%c0_17, %c0_18] : memref<8x1024xf32, #tpu.memory_space<vmem>>, vector<8x1024xf32>
    tpu.vector_store %arg9[%c0_17, %c0_18], %11#1 {strides = array<i32>} : memref<8x1024xf32, #tpu.memory_space<vmem>>, vector<8x1024xf32>,
    return
  }
}

</mosaic_0001>

<llo_original>
// kernel: tpu_custom_call.1
$region0: #{tpu_custom_call.1}
  #allocation0 [shape = 'u32[]', space=smem, size = 0x4, offset = 0x4, fixed_abs, tag = 'smem constant byte address 0x4 - core index']
  #allocation1 [shape = 'u32[144,128]{1,0:T(1,128)}', space=vmem, size = 0x12000, scoped, tag = 'internal scratch']
  %s0 = inlined_call_operand.hbm [shape: f32[8,1024], index: 0, kind: input, shape index: {}]
  %s1 = inlined_call_operand.hbm [shape: f32[1024,1024], index: 1, kind: input, shape index: {}]
  %s2 = inlined_call_operand.hbm [shape: f32[1,1024], index: 2, kind: input, shape index: {}]
  %s3 = inlined_call_operand.vmem [shape: f32[1024,4], index: 3, kind: input, shape index: {}]
  %s4 = inlined_call_operand.hbm [shape: f32[4,1024], index: 4, kind: input, shape index: {}]
  %s5 = inlined_call_operand.hbm [shape: f32[1,4], index: 5, kind: input, shape index: {}]
  %s6 = inlined_call_operand.hbm [shape: f32[1,4], index: 6, kind: input, shape index: {}]
  %s7 = inlined_call_operand.hbm [shape: f32[1,1024], index: 7, kind: input, shape index: {}]
  %s8 = inlined_call_operand.hbm [shape: f32[8,1024], index: 8, kind: output, shape index: {0}]
  %s9 = inlined_call_operand.hbm [shape: f32[8,1024], index: 9, kind: output, shape index: {1}]
  %10 = xla_tuple %s8, %s9
  %s11 = sld [smem:[#allocation0]]
  $region85: #{tpu_custom_call.1} parent=0
    _
  %s13 = ssub.s32 1, %s11
  %s14 = scalar_select 0, %s13, %s11
  $region1: #{tpu_custom_call.1} parent=0
    #allocation2 [shape = 'u8[32768]{0}', space=vmem, size = 0x8000, scoped, tag = 'input window, operand 0, single buffered']
    #allocation3 [shape = 's32[1]{0}', space=sflag, size = 0x4, scoped, tag = 'scoped memory for tpu_custom_call.1']
    #allocation4 [shape = 's32[1]{0}', space=sflag, size = 0x4, scoped, tag = 'scoped memory for tpu_custom_call.1']
    #allocation5 [shape = 'u8[4194304]{0}', space=vmem, size = 0x400000, scoped, tag = 'input window, operand 1, single buffered']
    #allocation6 [shape = 's32[1]{0}', space=sflag, size = 0x4, scoped, tag = 'scoped memory for tpu_custom_call.1']
    #allocation7 [shape = 'u8[4096]{0}', space=vmem, size = 0x1000, scoped, tag = 'input window, operand 2, single buffered']
    #allocation8 [shape = 'u8[16384]{0}', space=vmem, size = 0x4000, scoped, tag = 'input window, operand 4, single buffered']
    #allocation9 [shape = 's32[1]{0}', space=sflag, size = 0x4, scoped, tag = 'scoped memory for tpu_custom_call.1']
    #allocation10 [shape = 'u8[512]{0}', space=vmem, size = 0x400, scoped, tag = 'input window, operand 5, single buffered']
    #allocation11 [shape = 'u8[512]{0}', space=vmem, size = 0x400, scoped, tag = 'input window, operand 6, single buffered']
    #allocation12 [shape = 's32[1]{0}', space=sflag, size = 0x4, scoped, tag = 'scoped memory for tpu_custom_call.1']
    #allocation13 [shape = 'u8[4096]{0}', space=vmem, size = 0x1000, scoped, tag = 'input window, operand 7, single buffered']
    #allocation14 [shape = 'u8[32768]{0}', space=vmem, size = 0x8000, scoped, tag = 'output window, operand 0, single buffered']
    #allocation15 [shape = 'u8[32768]{0}', space=vmem, size = 0x8000, scoped, tag = 'output window, operand 1, single buffered']
    #allocation16 [shape = 's32[1]{0}', space=sflag, size = 0x4, scoped, tag = 'scoped memory for tpu_custom_call.1']
    %15 = vsyncpa [#allocation3], 0
    %16 = vsyncpa [#allocation6], 0
    %17 = vsyncpa [#allocation9], 0
    %18 = vsyncpa [#allocation12], 0
    %19 = vsyncpa [#allocation4], 0
    %20 = vsyncpa [#allocation16], 0
    // Predicated region
    $region2: #{tpu_custom_call.1} parent=1 // pred_check
      _
    $region3: #{tpu_custom_call.1} parent=1 // pred_check_branch
      %22 = sbr.rel (0) target = $region5
    $region4: #{tpu_custom_call.1} parent=1 // pred_region
      %s24 = ssub.s32 1024, 1024
      %25 = vsyncadd [#allocation3], %s24
      %s27 = sshll.u32 [#allocation2], 4
      %s28 = int_to_ptr.vmem [resolvable:$true] %s27
      %30 = dma.hbm_to_vmem [thread:$0]  %s0, 1024, %s28, [#allocation3]
    $region5: #{tpu_custom_call.1} parent=1 // pred_fallthru
      _
    // Predicated region
    $region6: #{tpu_custom_call.1} parent=1 // pred_check
      _
    $region7: #{tpu_custom_call.1} parent=1 // pred_check_branch
      %32 = sbr.rel (0) target = $region9
    $region8: #{tpu_custom_call.1} parent=1 // pred_region
      %s34 = ssub.s32 131072, 131072
      %35 = vsyncadd [#allocation6], %s34
      %s36 = sshll.u32 [#allocation5], 4
      %s37 = int_to_ptr.vmem [resolvable:$true] %s36
      %42 = dma.hbm_to_vmem [thread:$0]  %s1, 131072, %s37, [#allocation6], 1024, 1024, 64
    $region9: #{tpu_custom_call.1} parent=1 // pred_fallthru
      _
    // Predicated region
    $region10: #{tpu_custom_call.1} parent=1 // pred_check
      _
    $region11: #{tpu_custom_call.1} parent=1 // pred_check_branch
      %44 = sbr.rel (0) target = $region13
    $region12: #{tpu_custom_call.1} parent=1 // pred_region
      %s46 = ssub.s32 128, 128
      %47 = vsyncadd [#allocation6], %s46
      %s49 = sshll.u32 [#allocation7], 4
      %s50 = int_to_ptr.vmem [resolvable:$true] %s49
      %52 = dma.hbm_to_vmem [thread:$0]  %s2, 128, %s50, [#allocation6]
    $region13: #{tpu_custom_call.1} parent=1 // pred_fallthru
      _
    // Predicated region
    $region14: #{tpu_custom_call.1} parent=1 // pred_check
      _
    $region15: #{tpu_custom_call.1} parent=1 // pred_check_branch
      %54 = sbr.rel (0) target = $region17
    $region16: #{tpu_custom_call.1} parent=1 // pred_region
      _
    $region17: #{tpu_custom_call.1} parent=1 // pred_fallthru
      _
    // Predicated region
    $region18: #{tpu_custom_call.1} parent=1 // pred_check
      _
    $region19: #{tpu_custom_call.1} parent=1 // pred_check_branch
      %56 = sbr.rel (0) target = $region21
    $region20: #{tpu_custom_call.1} parent=1 // pred_region
      %s58 = ssub.s32 512, 512
      %59 = vsyncadd [#allocation9], %s58
      %s61 = sshll.u32 [#allocation8], 4
      %s62 = int_to_ptr.vmem [resolvable:$true] %s61
      %64 = dma.hbm_to_vmem [thread:$0]  %s4, 512, %s62, [#allocation9]
    $region21: #{tpu_custom_call.1} parent=1 // pred_fallthru
      _
    // Predicated region
    $region22: #{tpu_custom_call.1} parent=1 // pred_check
      _
    $region23: #{tpu_custom_call.1} parent=1 // pred_check_branch
      %66 = sbr.rel (0) target = $region25
    $region24: #{tpu_custom_call.1} parent=1 // pred_region
      %s68 = ssub.s32 16, 16
      %69 = vsyncadd [#allocation9], %s68
      %s71 = sshll.u32 [#allocation10], 4
      %s72 = int_to_ptr.vmem [resolvable:$true] %s71
      %74 = dma.hbm_to_vmem [thread:$0]  %s5, 16, %s72, [#allocation9]
    $region25: #{tpu_custom_call.1} parent=1 // pred_fallthru
      _
    // Predicated region
    $region26: #{tpu_custom_call.1} parent=1 // pred_check
      _
    $region27: #{tpu_custom_call.1} parent=1 // pred_check_branch
      %76 = sbr.rel (0) target = $region29
    $region28: #{tpu_custom_call.1} parent=1 // pred_region
      %s78 = ssub.s32 16, 16
      %79 = vsyncadd [#allocation12], %s78
      %s81 = sshll.u32 [#allocation11], 4
      %s82 = int_to_ptr.vmem [resolvable:$true] %s81
      %84 = dma.hbm_to_vmem [thread:$0]  %s6, 16, %s82, [#allocation12]
    $region29: #{tpu_custom_call.1} parent=1 // pred_fallthru
      _
    // Predicated region
    $region30: #{tpu_custom_call.1} parent=1 // pred_check
      _
    $region31: #{tpu_custom_call.1} parent=1 // pred_check_branch
      %86 = sbr.rel (0) target = $region33
    $region32: #{tpu_custom_call.1} parent=1 // pred_region
      %s88 = ssub.s32 128, 128
      %89 = vsyncadd [#allocation12], %s88
      %s91 = sshll.u32 [#allocation13], 4
      %s92 = int_to_ptr.vmem [resolvable:$true] %s91
      %94 = dma.hbm_to_vmem [thread:$0]  %s7, 128, %s92, [#allocation12]
    $region33: #{tpu_custom_call.1} parent=1 // pred_fallthru
      _
    // Predicated region
    $region34: #{tpu_custom_call.1} parent=1 // pred_check
      _
    $region35: #{tpu_custom_call.1} parent=1 // pred_check_branch
      %96 = sbr.rel (0) target = $region37
    $region36: #{tpu_custom_call.1} parent=1 // pred_region
      %97 = dma.done [#allocation3], 1024
    $region37: #{tpu_custom_call.1} parent=1 // pred_fallthru
      _
    // Predicated region
    $region38: #{tpu_custom_call.1} parent=1 // pred_check
      _
    $region39: #{tpu_custom_call.1} parent=1 // pred_check_branch
      %99 = sbr.rel (0) target = $region41
    $region40: #{tpu_custom_call.1} parent=1 // pred_region
      %100 = dma.done [#allocation6], 131072
    $region41: #{tpu_custom_call.1} parent=1 // pred_fallthru
      _
    // Predicated region
    $region42: #{tpu_custom_call.1} parent=1 // pred_check
      _
    $region43: #{tpu_custom_call.1} parent=1 // pred_check_branch
      %102 = sbr.rel (0) target = $region45
    $region44: #{tpu_custom_call.1} parent=1 // pred_region
      %103 = dma.done [#allocation6], 128
    $region45: #{tpu_custom_call.1} parent=1 // pred_fallthru
      _
    // Predicated region
    $region46: #{tpu_custom_call.1} parent=1 // pred_check
      _
    $region47: #{tpu_custom_call.1} parent=1 // pred_check_branch
      %105 = sbr.rel (0) target = $region49
    $region48: #{tpu_custom_call.1} parent=1 // pred_region
      %106 = dma.done [#allocation9], 512
    $region49: #{tpu_custom_call.1} parent=1 // pred_fallthru
      _
    // Predicated region
    $region50: #{tpu_custom_call.1} parent=1 // pred_check
      _
    $region51: #{tpu_custom_call.1} parent=1 // pred_check_branch
      %108 = sbr.rel (0) target = $region53
    $region52: #{tpu_custom_call.1} parent=1 // pred_region
      %109 = dma.done [#allocation9], 16
    $region53: #{tpu_custom_call.1} parent=1 // pred_fallthru
      _
    // Predicated region
    $region54: #{tpu_custom_call.1} parent=1 // pred_check
      _
    $region55: #{tpu_custom_call.1} parent=1 // pred_check_branch
      %111 = sbr.rel (0) target = $region57
    $region56: #{tpu_custom_call.1} parent=1 // pred_region
      %112 = dma.done [#allocation12], 16
    $region57: #{tpu_custom_call.1} parent=1 // pred_fallthru
      _
    // Predicated region
    $region58: #{tpu_custom_call.1} parent=1 // pred_check
      _
    $region59: #{tpu_custom_call.1} parent=1 // pred_check_branch
      %114 = sbr.rel (0) target = $region61
    $region60: #{tpu_custom_call.1} parent=1 // pred_region
      %115 = dma.done [#allocation12], 128
    $region61: #{tpu_custom_call.1} parent=1 // pred_fallthru
      _
    %v116 = vld [vmem:[#allocation2] sm:$0xff]
    %v117 = vld [vmem:[#allocation2 + $0x8] sm:$0xff]
    %v118 = vld [vmem:[#allocation2 + $0x10] sm:$0xff]
    %v119 = vld [vmem:[#allocation2 + $0x18] sm:$0xff]
    %v120 = vld [vmem:[#allocation2 + $0x20] sm:$0xff]
    %v121 = vld [vmem:[#allocation2 + $0x28] sm:$0xff]
    %v122 = vld [vmem:[#allocation2 + $0x30] sm:$0xff]
    %v123 = vld [vmem:[#allocation2 + $0x38] sm:$0xff]
    %v124 = vld [vmem:[#allocation5] sm:$0xff]
    %v125 = vld [vmem:[#allocation5 + $0x8] sm:$0xff]
    %v126 = vld [vmem:[#allocation5 + $0x10] sm:$0xff]
    %v127 = vld [vmem:[#allocation5 + $0x18] sm:$0xff]
    %v128 = vld [vmem:[#allocation5 + $0x20] sm:$0xff]
    %v129 = vld [vmem:[#allocation5 + $0x28] sm:$0xff]
    %v130 = vld [vmem:[#allocation5 + $0x30] sm:$0xff]
    %v131 = vld [vmem:[#allocation5 + $0x38] sm:$0xff]
    %v132 = vld [vmem:[#allocation5 + $0x40] sm:$0xff]
    %v133 = vld [vmem:[#allocation5 + $0x48] sm:$0xff]
    %v134 = vld [vmem:[#allocation5 + $0x50] sm:$0xff]
    %v135 = vld [vmem:[#allocation5 + $0x58] sm:$0xff]
    %v136 = vld [vmem:[#allocation5 + $0x60] sm:$0xff]
    %v137 = vld [vmem:[#allocation5 + $0x68] sm:$0xff]
    %v138 = vld [vmem:[#allocation5 + $0x70] sm:$0xff]
    %v139 = vld [vmem:[#allocation5 + $0x78] sm:$0xff]
    %v140 = vld [vmem:[#allocation5 + $0x80] sm:$0xff]
    %v141 = vld [vmem:[#allocation5 + $0x88] sm:$0xff]
    %v142 = vld [vmem:[#allocation5 + $0x90] sm:$0xff]
    %v143 = vld [vmem:[#allocation5 + $0x98] sm:$0xff]
    %v144 = vld [vmem:[#allocation5 + $0xa0] sm:$0xff]
    %v145 = vld [vmem:[#allocation5 + $0xa8] sm:$0xff]
    %v146 = vld [vmem:[#allocation5 + $0xb0] sm:$0xff]
    %v147 = vld [vmem:[#allocation5 + $0xb8] sm:$0xff]
    %v148 = vld [vmem:[#allocation5 + $0xc0] sm:$0xff]
    %v149 = vld [vmem:[#allocation5 + $0xc8] sm:$0xff]
    %v150 = vld [vmem:[#allocation5 + $0xd0] sm:$0xff]
    %v151 = vld [vmem:[#allocation5 + $0xd8] sm:$0xff]
    %v152 = vld [vmem:[#allocation5 + $0xe0] sm:$0xff]
    %v153 = vld [vmem:[#allocation5 + $0xe8] sm:$0xff]
    %v154 = vld [vmem:[#allocation5 + $0xf0] sm:$0xff]
    %v155 = vld [vmem:[#allocation5 + $0xf8] sm:$0xff]
    %v156 = vld [vmem:[#allocation5 + $0x100] sm:$0xff]
    %v157 = vld [vmem:[#allocation5 + $0x108] sm:$0xff]
    %v158 = vld [vmem:[#allocation5 + $0x110] sm:$0xff]
    %v159 = vld [vmem:[#allocation5 + $0x118] sm:$0xff]
    %v160 = vld [vmem:[#allocation5 + $0x120] sm:$0xff]
    %v161 = vld [vmem:[#allocation5 + $0x128] sm:$0xff]
    %v162 = vld [vmem:[#allocation5 + $0x130] sm:$0xff]
    %v163 = vld [vmem:[#allocation5 + $0x138] sm:$0xff]
    %v164 = vld [vmem:[#allocation5 + $0x140] sm:$0xff]
    %v165 = vld [vmem:[#allocation5 + $0x148] sm:$0xff]
    %v166 = vld [vmem:[#allocation5 + $0x150] sm:$0xff]
    %v167 = vld [vmem:[#allocation5 + $0x158] sm:$0xff]
    %v168 = vld [vmem:[#allocation5 + $0x160] sm:$0xff]
    %v169 = vld [vmem:[#allocation5 + $0x168] sm:$0xff]
    %v170 = vld [vmem:[#allocation5 + $0x170] sm:$0xff]
    %v171 = vld [vmem:[#allocation5 + $0x178] sm:$0xff]
    %v172 = vld [vmem:[#allocation5 + $0x180] sm:$0xff]
    %v173 = vld [vmem:[#allocation5 + $0x188] sm:$0xff]
    %v174 = vld [vmem:[#allocation5 + $0x190] sm:$0xff]
    %v175 = vld [vmem:[#allocation5 + $0x198] sm:$0xff]
    %v176 = vld [vmem:[#allocation5 + $0x1a0] sm:$0xff]
    %v177 = vld [vmem:[#allocation5 + $0x1a8] sm:$0xff]
    %v178 = vld [vmem:[#allocation5 + $0x1b0] sm:$0xff]
    %v179 = vld [vmem:[#allocation5 + $0x1b8] sm:$0xff]
    %v180 = vld [vmem:[#allocation5 + $0x1c0] sm:$0xff]
    %v181 = vld [vmem:[#allocation5 + $0x1c8] sm:$0xff]
    %v182 = vld [vmem:[#allocation5 + $0x1d0] sm:$0xff]
    %v183 = vld [vmem:[#allocation5 + $0x1d8] sm:$0xff]
    %v184 = vld [vmem:[#allocation5 + $0x1e0] sm:$0xff]
    %v185 = vld [vmem:[#allocation5 + $0x1e8] sm:$0xff]
    %v186 = vld [vmem:[#allocation5 + $0x1f0] sm:$0xff]
    %v187 = vld [vmem:[#allocation5 + $0x1f8] sm:$0xff]
    %v188 = vld [vmem:[#allocation5 + $0x200] sm:$0xff]
    %v189 = vld [vmem:[#allocation5 + $0x208] sm:$0xff]
    %v190 = vld [vmem:[#allocation5 + $0x210] sm:$0xff]
    %v191 = vld [vmem:[#allocation5 + $0x218] sm:$0xff]
    %v192 = vld [vmem:[#allocation5 + $0x220] sm:$0xff]
    %v193 = vld [vmem:[#allocation5 + $0x228] sm:$0xff]
    %v194 = vld [vmem:[#allocation5 + $0x230] sm:$0xff]
    %v195 = vld [vmem:[#allocation5 + $0x238] sm:$0xff]
    %v196 = vld [vmem:[#allocation5 + $0x240] sm:$0xff]
    %v197 = vld [vmem:[#allocation5 + $0x248] sm:$0xff]
    %v198 = vld [vmem:[#allocation5 + $0x250] sm:$0xff]
    %v199 = vld [vmem:[#allocation5 + $0x258] sm:$0xff]
    %v200 = vld [vmem:[#allocation5 + $0x260] sm:$0xff]
    %v201 = vld [vmem:[#allocation5 + $0x268] sm:$0xff]
    %v202 = vld [vmem:[#allocation5 + $0x270] sm:$0xff]
    %v203 = vld [vmem:[#allocation5 + $0x278] sm:$0xff]
    %v204 = vld [vmem:[#allocation5 + $0x280] sm:$0xff]
    %v205 = vld [vmem:[#allocation5 + $0x288] sm:$0xff]
    %v206 = vld [vmem:[#allocation5 + $0x290] sm:$0xff]
    %v207 = vld [vmem:[#allocation5 + $0x298] sm:$0xff]
    %v208 = vld [vmem:[#allocation5 + $0x2a0] sm:$0xff]
    %v209 = vld [vmem:[#allocation5 + $0x2a8] sm:$0xff]
    %v210 = vld [vmem:[#allocation5 + $0x2b0] sm:$0xff]
    %v211 = vld [vmem:[#allocation5 + $0x2b8] sm:$0xff]
    %v212 = vld [vmem:[#allocation5 + $0x2c0] sm:$0xff]
    %v213 = vld [vmem:[#allocation5 + $0x2c8] sm:$0xff]
    %v214 = vld [vmem:[#allocation5 + $0x2d0] sm:$0xff]
    %v215 = vld [vmem:[#allocation5 + $0x2d8] sm:$0xff]
    %v216 = vld [vmem:[#allocation5 + $0x2e0] sm:$0xff]
    %v217 = vld [vmem:[#allocation5 + $0x2e8] sm:$0xff]
    %v218 = vld [vmem:[#allocation5 + $0x2f0] sm:$0xff]
    %v219 = vld [vmem:[#allocation5 + $0x2f8] sm:$0xff]
    %v220 = vld [vmem:[#allocation5 + $0x300] sm:$0xff]
    %v221 = vld [vmem:[#allocation5 + $0x308] sm:$0xff]
    %v222 = vld [vmem:[#allocation5 + $0x310] sm:$0xff]
    %v223 = vld [vmem:[#allocation5 + $0x318] sm:$0xff]
    %v224 = vld [vmem:[#allocation5 + $0x320] sm:$0xff]
    %v225 = vld [vmem:[#allocation5 + $0x328] sm:$0xff]
    %v226 = vld [vmem:[#allocation5 + $0x330] sm:$0xff]
    %v227 = vld [vmem:[#allocation5 + $0x338] sm:$0xff]
    %v228 = vld [vmem:[#allocation5 + $0x340] sm:$0xff]
    %v229 = vld [vmem:[#allocation5 + $0x348] sm:$0xff]
    %v230 = vld [vmem:[#allocation5 + $0x350] sm:$0xff]
    %v231 = vld [vmem:[#allocation5 + $0x358] sm:$0xff]
    %v232 = vld [vmem:[#allocation5 + $0x360] sm:$0xff]
    %v233 = vld [vmem:[#allocation5 + $0x368] sm:$0xff]
    %v234 = vld [vmem:[#allocation5 + $0x370] sm:$0xff]
    %v235 = vld [vmem:[#allocation5 + $0x378] sm:$0xff]
    %v236 = vld [vmem:[#allocation5 + $0x380] sm:$0xff]
    %v237 = vld [vmem:[#allocation5 + $0x388] sm:$0xff]
    %v238 = vld [vmem:[#allocation5 + $0x390] sm:$0xff]
    %v239 = vld [vmem:[#allocation5 + $0x398] sm:$0xff]
    %v240 = vld [vmem:[#allocation5 + $0x3a0] sm:$0xff]
    %v241 = vld [vmem:[#allocation5 + $0x3a8] sm:$0xff]
    %v242 = vld [vmem:[#allocation5 + $0x3b0] sm:$0xff]
    %v243 = vld [vmem:[#allocation5 + $0x3b8] sm:$0xff]
    %v244 = vld [vmem:[#allocation5 + $0x3c0] sm:$0xff]
    %v245 = vld [vmem:[#allocation5 + $0x3c8] sm:$0xff]
    %v246 = vld [vmem:[#allocation5 + $0x3d0] sm:$0xff]
    %v247 = vld [vmem:[#allocation5 + $0x3d8] sm:$0xff]
    %v248 = vld [vmem:[#allocation5 + $0x3e0] sm:$0xff]
    %v249 = vld [vmem:[#allocation5 + $0x3e8] sm:$0xff]
    %v250 = vld [vmem:[#allocation5 + $0x3f0] sm:$0xff]
    %v251 = vld [vmem:[#allocation5 + $0x3f8] sm:$0xff]
    %v252 = vld [vmem:[#allocation5 + $0x400] sm:$0xff]
    %v253 = vld [vmem:[#allocation5 + $0x408] sm:$0xff]
    %v254 = vld [vmem:[#allocation5 + $0x410] sm:$0xff]
    %v255 = vld [vmem:[#allocation5 + $0x418] sm:$0xff]
    %v256 = vld [vmem:[#allocation5 + $0x420] sm:$0xff]
    %v257 = vld [vmem:[#allocation5 + $0x428] sm:$0xff]
    %v258 = vld [vmem:[#allocation5 + $0x430] sm:$0xff]
    %v259 = vld [vmem:[#allocation5 + $0x438] sm:$0xff]
    %v260 = vld [vmem:[#allocation5 + $0x440] sm:$0xff]
    %v261 = vld [vmem:[#allocation5 + $0x448] sm:$0xff]
    %v262 = vld [vmem:[#allocation5 + $0x450] sm:$0xff]
    %v263 = vld [vmem:[#allocation5 + $0x458] sm:$0xff]
    %v264 = vld [vmem:[#allocation5 + $0x460] sm:$0xff]
    %v265 = vld [vmem:[#allocation5 + $0x468] sm:$0xff]
    %v266 = vld [vmem:[#allocation5 + $0x470] sm:$0xff]
    %v267 = vld [vmem:[#allocation5 + $0x478] sm:$0xff]
    %v268 = vld [vmem:[#allocation5 + $0x480] sm:$0xff]
    %v269 = vld [vmem:[#allocation5 + $0x488] sm:$0xff]
    %v270 = vld [vmem:[#allocation5 + $0x490] sm:$0xff]
    %v271 = vld [vmem:[#allocation5 + $0x498] sm:$0xff]
    %v272 = vld [vmem:[#allocation5 + $0x4a0] sm:$0xff]
    %v273 = vld [vmem:[#allocation5 + $0x4a8] sm:$0xff]
    %v274 = vld [vmem:[#allocation5 + $0x4b0] sm:$0xff]
    %v275 = vld [vmem:[#allocation5 + $0x4b8] sm:$0xff]
    %v276 = vld [vmem:[#allocation5 + $0x4c0] sm:$0xff]
    %v277 = vld [vmem:[#allocation5 + $0x4c8] sm:$0xff]
    %v278 = vld [vmem:[#allocation5 + $0x4d0] sm:$0xff]
    %v279 = vld [vmem:[#allocation5 + $0x4d8] sm:$0xff]
    %v280 = vld [vmem:[#allocation5 + $0x4e0] sm:$0xff]
    %v281 = vld [vmem:[#allocation5 + $0x4e8] sm:$0xff]
    %v282 = vld [vmem:[#allocation5 + $0x4f0] sm:$0xff]
    %v283 = vld [vmem:[#allocation5 + $0x4f8] sm:$0xff]
    %v284 = vld [vmem:[#allocation5 + $0x500] sm:$0xff]
    %v285 = vld [vmem:[#allocation5 + $0x508] sm:$0xff]
    %v286 = vld [vmem:[#allocation5 + $0x510] sm:$0xff]
    %v287 = vld [vmem:[#allocation5 + $0x518] sm:$0xff]
    %v288 = vld [vmem:[#allocation5 + $0x520] sm:$0xff]
    %v289 = vld [vmem:[#allocation5 + $0x528] sm:$0xff]
    %v290 = vld [vmem:[#allocation5 + $0x530] sm:$0xff]
    %v291 = vld [vmem:[#allocation5 + $0x538] sm:$0xff]
    %v292 = vld [vmem:[#allocation5 + $0x540] sm:$0xff]
    %v293 = vld [vmem:[#allocation5 + $0x548] sm:$0xff]
    %v294 = vld [vmem:[#allocation5 + $0x550] sm:$0xff]
    %v295 = vld [vmem:[#allocation5 + $0x558] sm:$0xff]
    %v296 = vld [vmem:[#allocation5 + $0x560] sm:$0xff]
    %v297 = vld [vmem:[#allocation5 + $0x568] sm:$0xff]
    %v298 = vld [vmem:[#allocation5 + $0x570] sm:$0xff]
    %v299 = vld [vmem:[#allocation5 + $0x578] sm:$0xff]
    %v300 = vld [vmem:[#allocation5 + $0x580] sm:$0xff]
    %v301 = vld [vmem:[#allocation5 + $0x588] sm:$0xff]
    %v302 = vld [vmem:[#allocation5 + $0x590] sm:$0xff]
    %v303 = vld [vmem:[#allocation5 + $0x598] sm:$0xff]
    %v304 = vld [vmem:[#allocation5 + $0x5a0] sm:$0xff]
    %v305 = vld [vmem:[#allocation5 + $0x5a8] sm:$0xff]
    %v306 = vld [vmem:[#allocation5 + $0x5b0] sm:$0xff]
    %v307 = vld [vmem:[#allocation5 + $0x5b8] sm:$0xff]
    %v308 = vld [vmem:[#allocation5 + $0x5c0] sm:$0xff]
    %v309 = vld [vmem:[#allocation5 + $0x5c8] sm:$0xff]
    %v310 = vld [vmem:[#allocation5 + $0x5d0] sm:$0xff]
    %v311 = vld [vmem:[#allocation5 + $0x5d8] sm:$0xff]
    %v312 = vld [vmem:[#allocation5 + $0x5e0] sm:$0xff]
    %v313 = vld [vmem:[#allocation5 + $0x5e8] sm:$0xff]
    %v314 = vld [vmem:[#allocation5 + $0x5f0] sm:$0xff]
    %v315 = vld [vmem:[#allocation5 + $0x5f8] sm:$0xff]
    %v316 = vld [vmem:[#allocation5 + $0x600] sm:$0xff]
    %v317 = vld [vmem:[#allocation5 + $0x608] sm:$0xff]
    %v318 = vld [vmem:[#allocation5 + $0x610] sm:$0xff]
    %v319 = vld [vmem:[#allocation5 + $0x618] sm:$0xff]
    %v320 = vld [vmem:[#allocation5 + $0x620] sm:$0xff]
    %v321 = vld [vmem:[#allocation5 + $0x628] sm:$0xff]
    %v322 = vld [vmem:[#allocation5 + $0x630] sm:$0xff]
    %v323 = vld [vmem:[#allocation5 + $0x638] sm:$0xff]
    %v324 = vld [vmem:[#allocation5 + $0x640] sm:$0xff]
    %v325 = vld [vmem:[#allocation5 + $0x648] sm:$0xff]
    %v326 = vld [vmem:[#allocation5 + $0x650] sm:$0xff]
    %v327 = vld [vmem:[#allocation5 + $0x658] sm:$0xff]
    %v328 = vld [vmem:[#allocation5 + $0x660] sm:$0xff]
    %v329 = vld [vmem:[#allocation5 + $0x668] sm:$0xff]
    %v330 = vld [vmem:[#allocation5 + $0x670] sm:$0xff]
    %v331 = vld [vmem:[#allocation5 + $0x678] sm:$0xff]
    %v332 = vld [vmem:[#allocation5 + $0x680] sm:$0xff]
    %v333 = vld [vmem:[#allocation5 + $0x688] sm:$0xff]
    %v334 = vld [vmem:[#allocation5 + $0x690] sm:$0xff]
    %v335 = vld [vmem:[#allocation5 + $0x698] sm:$0xff]
    %v336 = vld [vmem:[#allocation5 + $0x6a0] sm:$0xff]
    %v337 = vld [vmem:[#allocation5 + $0x6a8] sm:$0xff]
    %v338 = vld [vmem:[#allocation5 + $0x6b0] sm:$0xff]
    %v339 = vld [vmem:[#allocation5 + $0x6b8] sm:$0xff]
    %v340 = vld [vmem:[#allocation5 + $0x6c0] sm:$0xff]
    %v341 = vld [vmem:[#allocation5 + $0x6c8] sm:$0xff]
    %v342 = vld [vmem:[#allocation5 + $0x6d0] sm:$0xff]
    %v343 = vld [vmem:[#allocation5 + $0x6d8] sm:$0xff]
    %v344 = vld [vmem:[#allocation5 + $0x6e0] sm:$0xff]
    %v345 = vld [vmem:[#allocation5 + $0x6e8] sm:$0xff]
    %v346 = vld [vmem:[#allocation5 + $0x6f0] sm:$0xff]
    %v347 = vld [vmem:[#allocation5 + $0x6f8] sm:$0xff]
    %v348 = vld [vmem:[#allocation5 + $0x700] sm:$0xff]
    %v349 = vld [vmem:[#allocation5 + $0x708] sm:$0xff]
    %v350 = vld [vmem:[#allocation5 + $0x710] sm:$0xff]
    %v351 = vld [vmem:[#allocation5 + $0x718] sm:$0xff]
    %v352 = vld [vmem:[#allocation5 + $0x720] sm:$0xff]
    %v353 = vld [vmem:[#allocation5 + $0x728] sm:$0xff]
    %v354 = vld [vmem:[#allocation5 + $0x730] sm:$0xff]
    %v355 = vld [vmem:[#allocation5 + $0x738] sm:$0xff]
    %v356 = vld [vmem:[#allocation5 + $0x740] sm:$0xff]
    %v357 = vld [vmem:[#allocation5 + $0x748] sm:$0xff]
    %v358 = vld [vmem:[#allocation5 + $0x750] sm:$0xff]
    %v359 = vld [vmem:[#allocation5 + $0x758] sm:$0xff]
    %v360 = vld [vmem:[#allocation5 + $0x760] sm:$0xff]
    %v361 = vld [vmem:[#allocation5 + $0x768] sm:$0xff]
    %v362 = vld [vmem:[#allocation5 + $0x770] sm:$0xff]
    %v363 = vld [vmem:[#allocation5 + $0x778] sm:$0xff]
    %v364 = vld [vmem:[#allocation5 + $0x780] sm:$0xff]
    %v365 = vld [vmem:[#allocation5 + $0x788] sm:$0xff]
    %v366 = vld [vmem:[#allocation5 + $0x790] sm:$0xff]
    %v367 = vld [vmem:[#allocation5 + $0x798] sm:$0xff]
    %v368 = vld [vmem:[#allocation5 + $0x7a0] sm:$0xff]
    %v369 = vld [vmem:[#allocation5 + $0x7a8] sm:$0xff]
    %v370 = vld [vmem:[#allocation5 + $0x7b0] sm:$0xff]
    %v371 = vld [vmem:[#allocation5 + $0x7b8] sm:$0xff]
    %v372 = vld [vmem:[#allocation5 + $0x7c0] sm:$0xff]
    %v373 = vld [vmem:[#allocation5 + $0x7c8] sm:$0xff]
    %v374 = vld [vmem:[#allocation5 + $0x7d0] sm:$0xff]
    %v375 = vld [vmem:[#allocation5 + $0x7d8] sm:$0xff]
    %v376 = vld [vmem:[#allocation5 + $0x7e0] sm:$0xff]
    %v377 = vld [vmem:[#allocation5 + $0x7e8] sm:$0xff]
    %v378 = vld [vmem:[#allocation5 + $0x7f0] sm:$0xff]
    %v379 = vld [vmem:[#allocation5 + $0x7f8] sm:$0xff]
    %v380 = vld [vmem:[#allocation5 + $0x800] sm:$0xff]
    %v381 = vld [vmem:[#allocation5 + $0x808] sm:$0xff]
    %v382 = vld [vmem:[#allocation5 + $0x810] sm:$0xff]
    %v383 = vld [vmem:[#allocation5 + $0x818] sm:$0xff]
    %v384 = vld [vmem:[#allocation5 + $0x820] sm:$0xff]
    %v385 = vld [vmem:[#allocation5 + $0x828] sm:$0xff]
    %v386 = vld [vmem:[#allocation5 + $0x830] sm:$0xff]
    %v387 = vld [vmem:[#allocation5 + $0x838] sm:$0xff]
    %v388 = vld [vmem:[#allocation5 + $0x840] sm:$0xff]
    %v389 = vld [vmem:[#allocation5 + $0x848] sm:$0xff]
    %v390 = vld [vmem:[#allocation5 + $0x850] sm:$0xff]
    %v391 = vld [vmem:[#allocation5 + $0x858] sm:$0xff]
    %v392 = vld [vmem:[#allocation5 + $0x860] sm:$0xff]
    %v393 = vld [vmem:[#allocation5 + $0x868] sm:$0xff]
    %v394 = vld [vmem:[#allocation5 + $0x870] sm:$0xff]
    %v395 = vld [vmem:[#allocation5 + $0x878] sm:$0xff]
    %v396 = vld [vmem:[#allocation5 + $0x880] sm:$0xff]
    %v397 = vld [vmem:[#allocation5 + $0x888] sm:$0xff]
    %v398 = vld [vmem:[#allocation5 + $0x890] sm:$0xff]
    %v399 = vld [vmem:[#allocation5 + $0x898] sm:$0xff]
    %v400 = vld [vmem:[#allocation5 + $0x8a0] sm:$0xff]
    %v401 = vld [vmem:[#allocation5 + $0x8a8] sm:$0xff]
    %v402 = vld [vmem:[#allocation5 + $0x8b0] sm:$0xff]
    %v403 = vld [vmem:[#allocation5 + $0x8b8] sm:$0xff]
    %v404 = vld [vmem:[#allocation5 + $0x8c0] sm:$0xff]
    %v405 = vld [vmem:[#allocation5 + $0x8c8] sm:$0xff]
    %v406 = vld [vmem:[#allocation5 + $0x8d0] sm:$0xff]
    %v407 = vld [vmem:[#allocation5 + $0x8d8] sm:$0xff]
    %v408 = vld [vmem:[#allocation5 + $0x8e0] sm:$0xff]
    %v409 = vld [vmem:[#allocation5 + $0x8e8] sm:$0xff]
    %v410 = vld [vmem:[#allocation5 + $0x8f0] sm:$0xff]
    %v411 = vld [vmem:[#allocation5 + $0x8f8] sm:$0xff]
    %v412 = vld [vmem:[#allocation5 + $0x900] sm:$0xff]
    %v413 = vld [vmem:[#allocation5 + $0x908] sm:$0xff]
    %v414 = vld [vmem:[#allocation5 + $0x910] sm:$0xff]
    %v415 = vld [vmem:[#allocation5 + $0x918] sm:$0xff]
    %v416 = vld [vmem:[#allocation5 + $0x920] sm:$0xff]
    %v417 = vld [vmem:[#allocation5 + $0x928] sm:$0xff]
    %v418 = vld [vmem:[#allocation5 + $0x930] sm:$0xff]
    %v419 = vld [vmem:[#allocation5 + $0x938] sm:$0xff]
    %v420 = vld [vmem:[#allocation5 + $0x940] sm:$0xff]
    %v421 = vld [vmem:[#allocation5 + $0x948] sm:$0xff]
    %v422 = vld [vmem:[#allocation5 + $0x950] sm:$0xff]
    %v423 = vld [vmem:[#allocation5 + $0x958] sm:$0xff]
    %v424 = vld [vmem:[#allocation5 + $0x960] sm:$0xff]
    %v425 = vld [vmem:[#allocation5 + $0x968] sm:$0xff]
    %v426 = vld [vmem:[#allocation5 + $0x970] sm:$0xff]
    %v427 = vld [vmem:[#allocation5 + $0x978] sm:$0xff]
    %v428 = vld [vmem:[#allocation5 + $0x980] sm:$0xff]
    %v429 = vld [vmem:[#allocation5 + $0x988] sm:$0xff]
    %v430 = vld [vmem:[#allocation5 + $0x990] sm:$0xff]
    %v431 = vld [vmem:[#allocation5 + $0x998] sm:$0xff]
    %v432 = vld [vmem:[#allocation5 + $0x9a0] sm:$0xff]
    %v433 = vld [vmem:[#allocation5 + $0x9a8] sm:$0xff]
    %v434 = vld [vmem:[#allocation5 + $0x9b0] sm:$0xff]
    %v435 = vld [vmem:[#allocation5 + $0x9b8] sm:$0xff]
    %v436 = vld [vmem:[#allocation5 + $0x9c0] sm:$0xff]
    %v437 = vld [vmem:[#allocation5 + $0x9c8] sm:$0xff]
    %v438 = vld [vmem:[#allocation5 + $0x9d0] sm:$0xff]
    %v439 = vld [vmem:[#allocation5 + $0x9d8] sm:$0xff]
    %v440 = vld [vmem:[#allocation5 + $0x9e0] sm:$0xff]
    %v441 = vld [vmem:[#allocation5 + $0x9e8] sm:$0xff]
    %v442 = vld [vmem:[#allocation5 + $0x9f0] sm:$0xff]
    %v443 = vld [vmem:[#allocation5 + $0x9f8] sm:$0xff]
    %v444 = vld [vmem:[#allocation5 + $0xa00] sm:$0xff]
    %v445 = vld [vmem:[#allocation5 + $0xa08] sm:$0xff]
    %v446 = vld [vmem:[#allocation5 + $0xa10] sm:$0xff]
    %v447 = vld [vmem:[#allocation5 + $0xa18] sm:$0xff]
    %v448 = vld [vmem:[#allocation5 + $0xa20] sm:$0xff]
    %v449 = vld [vmem:[#allocation5 + $0xa28] sm:$0xff]
    %v450 = vld [vmem:[#allocation5 + $0xa30] sm:$0xff]
    %v451 = vld [vmem:[#allocation5 + $0xa38] sm:$0xff]
    %v452 = vld [vmem:[#allocation5 + $0xa40] sm:$0xff]
    %v453 = vld [vmem:[#allocation5 + $0xa48] sm:$0xff]
    %v454 = vld [vmem:[#allocation5 + $0xa50] sm:$0xff]
    %v455 = vld [vmem:[#allocation5 + $0xa58] sm:$0xff]
    %v456 = vld [vmem:[#allocation5 + $0xa60] sm:$0xff]
    %v457 = vld [vmem:[#allocation5 + $0xa68] sm:$0xff]
    %v458 = vld [vmem:[#allocation5 + $0xa70] sm:$0xff]
    %v459 = vld [vmem:[#allocation5 + $0xa78] sm:$0xff]
    %v460 = vld [vmem:[#allocation5 + $0xa80] sm:$0xff]
    %v461 = vld [vmem:[#allocation5 + $0xa88] sm:$0xff]
    %v462 = vld [vmem:[#allocation5 + $0xa90] sm:$0xff]
    %v463 = vld [vmem:[#allocation5 + $0xa98] sm:$0xff]
    %v464 = vld [vmem:[#allocation5 + $0xaa0] sm:$0xff]
    %v465 = vld [vmem:[#allocation5 + $0xaa8] sm:$0xff]
    %v466 = vld [vmem:[#allocation5 + $0xab0] sm:$0xff]
    %v467 = vld [vmem:[#allocation5 + $0xab8] sm:$0xff]
    %v468 = vld [vmem:[#allocation5 + $0xac0] sm:$0xff]
    %v469 = vld [vmem:[#allocation5 + $0xac8] sm:$0xff]
    %v470 = vld [vmem:[#allocation5 + $0xad0] sm:$0xff]
    %v471 = vld [vmem:[#allocation5 + $0xad8] sm:$0xff]
    %v472 = vld [vmem:[#allocation5 + $0xae0] sm:$0xff]
    %v473 = vld [vmem:[#allocation5 + $0xae8] sm:$0xff]
    %v474 = vld [vmem:[#allocation5 + $0xaf0] sm:$0xff]
    %v475 = vld [vmem:[#allocation5 + $0xaf8] sm:$0xff]
    %v476 = vld [vmem:[#allocation5 + $0xb00] sm:$0xff]
    %v477 = vld [vmem:[#allocation5 + $0xb08] sm:$0xff]
    %v478 = vld [vmem:[#allocation5 + $0xb10] sm:$0xff]
    %v479 = vld [vmem:[#allocation5 + $0xb18] sm:$0xff]
    %v480 = vld [vmem:[#allocation5 + $0xb20] sm:$0xff]
    %v481 = vld [vmem:[#allocation5 + $0xb28] sm:$0xff]
    %v482 = vld [vmem:[#allocation5 + $0xb30] sm:$0xff]
    %v483 = vld [vmem:[#allocation5 + $0xb38] sm:$0xff]
    %v484 = vld [vmem:[#allocation5 + $0xb40] sm:$0xff]
    %v485 = vld [vmem:[#allocation5 + $0xb48] sm:$0xff]
    %v486 = vld [vmem:[#allocation5 + $0xb50] sm:$0xff]
    %v487 = vld [vmem:[#allocation5 + $0xb58] sm:$0xff]
    %v488 = vld [vmem:[#allocation5 + $0xb60] sm:$0xff]
    %v489 = vld [vmem:[#allocation5 + $0xb68] sm:$0xff]
    %v490 = vld [vmem:[#allocation5 + $0xb70] sm:$0xff]
    %v491 = vld [vmem:[#allocation5 + $0xb78] sm:$0xff]
    %v492 = vld [vmem:[#allocation5 + $0xb80] sm:$0xff]
    %v493 = vld [vmem:[#allocation5 + $0xb88] sm:$0xff]
    %v494 = vld [vmem:[#allocation5 + $0xb90] sm:$0xff]
    %v495 = vld [vmem:[#allocation5 + $0xb98] sm:$0xff]
    %v496 = vld [vmem:[#allocation5 + $0xba0] sm:$0xff]
    %v497 = vld [vmem:[#allocation5 + $0xba8] sm:$0xff]
    %v498 = vld [vmem:[#allocation5 + $0xbb0] sm:$0xff]
    %v499 = vld [vmem:[#allocation5 + $0xbb8] sm:$0xff]
    %v500 = vld [vmem:[#allocation5 + $0xbc0] sm:$0xff]
    %v501 = vld [vmem:[#allocation5 + $0xbc8] sm:$0xff]
    %v502 = vld [vmem:[#allocation5 + $0xbd0] sm:$0xff]
    %v503 = vld [vmem:[#allocation5 + $0xbd8] sm:$0xff]
    %v504 = vld [vmem:[#allocation5 + $0xbe0] sm:$0xff]
    %v505 = vld [vmem:[#allocation5 + $0xbe8] sm:$0xff]
    %v506 = vld [vmem:[#allocation5 + $0xbf0] sm:$0xff]
    %v507 = vld [vmem:[#allocation5 + $0xbf8] sm:$0xff]
    %v508 = vld [vmem:[#allocation5 + $0xc00] sm:$0xff]
    %v509 = vld [vmem:[#allocation5 + $0xc08] sm:$0xff]
    %v510 = vld [vmem:[#allocation5 + $0xc10] sm:$0xff]
    %v511 = vld [vmem:[#allocation5 + $0xc18] sm:$0xff]
    %v512 = vld [vmem:[#allocation5 + $0xc20] sm:$0xff]
    %v513 = vld [vmem:[#allocation5 + $0xc28] sm:$0xff]
    %v514 = vld [vmem:[#allocation5 + $0xc30] sm:$0xff]
    %v515 = vld [vmem:[#allocation5 + $0xc38] sm:$0xff]
    %v516 = vld [vmem:[#allocation5 + $0xc40] sm:$0xff]
    %v517 = vld [vmem:[#allocation5 + $0xc48] sm:$0xff]
    %v518 = vld [vmem:[#allocation5 + $0xc50] sm:$0xff]
    %v519 = vld [vmem:[#allocation5 + $0xc58] sm:$0xff]
    %v520 = vld [vmem:[#allocation5 + $0xc60] sm:$0xff]
    %v521 = vld [vmem:[#allocation5 + $0xc68] sm:$0xff]
    %v522 = vld [vmem:[#allocation5 + $0xc70] sm:$0xff]
    %v523 = vld [vmem:[#allocation5 + $0xc78] sm:$0xff]
    %v524 = vld [vmem:[#allocation5 + $0xc80] sm:$0xff]
    %v525 = vld [vmem:[#allocation5 + $0xc88] sm:$0xff]
    %v526 = vld [vmem:[#allocation5 + $0xc90] sm:$0xff]
    %v527 = vld [vmem:[#allocation5 + $0xc98] sm:$0xff]
    %v528 = vld [vmem:[#allocation5 + $0xca0] sm:$0xff]
    %v529 = vld [vmem:[#allocation5 + $0xca8] sm:$0xff]
    %v530 = vld [vmem:[#allocation5 + $0xcb0] sm:$0xff]
    %v531 = vld [vmem:[#allocation5 + $0xcb8] sm:$0xff]
    %v532 = vld [vmem:[#allocation5 + $0xcc0] sm:$0xff]
    %v533 = vld [vmem:[#allocation5 + $0xcc8] sm:$0xff]
    %v534 = vld [vmem:[#allocation5 + $0xcd0] sm:$0xff]
    %v535 = vld [vmem:[#allocation5 + $0xcd8] sm:$0xff]
    %v536 = vld [vmem:[#allocation5 + $0xce0] sm:$0xff]
    %v537 = vld [vmem:[#allocation5 + $0xce8] sm:$0xff]
    %v538 = vld [vmem:[#allocation5 + $0xcf0] sm:$0xff]
    %v539 = vld [vmem:[#allocation5 + $0xcf8] sm:$0xff]
    %v540 = vld [vmem:[#allocation5 + $0xd00] sm:$0xff]
    %v541 = vld [vmem:[#allocation5 + $0xd08] sm:$0xff]
    %v542 = vld [vmem:[#allocation5 + $0xd10] sm:$0xff]
    %v543 = vld [vmem:[#allocation5 + $0xd18] sm:$0xff]
    %v544 = vld [vmem:[#allocation5 + $0xd20] sm:$0xff]
    %v545 = vld [vmem:[#allocation5 + $0xd28] sm:$0xff]
    %v546 = vld [vmem:[#allocation5 + $0xd30] sm:$0xff]
    %v547 = vld [vmem:[#allocation5 + $0xd38] sm:$0xff]
    %v548 = vld [vmem:[#allocation5 + $0xd40] sm:$0xff]
    %v549 = vld [vmem:[#allocation5 + $0xd48] sm:$0xff]
    %v550 = vld [vmem:[#allocation5 + $0xd50] sm:$0xff]
    %v551 = vld [vmem:[#allocation5 + $0xd58] sm:$0xff]
    %v552 = vld [vmem:[#allocation5 + $0xd60] sm:$0xff]
    %v553 = vld [vmem:[#allocation5 + $0xd68] sm:$0xff]
    %v554 = vld [vmem:[#allocation5 + $0xd70] sm:$0xff]
    %v555 = vld [vmem:[#allocation5 + $0xd78] sm:$0xff]
    %v556 = vld [vmem:[#allocation5 + $0xd80] sm:$0xff]
    %v557 = vld [vmem:[#allocation5 + $0xd88] sm:$0xff]
    %v558 = vld [vmem:[#allocation5 + $0xd90] sm:$0xff]
    %v559 = vld [vmem:[#allocation5 + $0xd98] sm:$0xff]
    %v560 = vld [vmem:[#allocation5 + $0xda0] sm:$0xff]
    %v561 = vld [vmem:[#allocation5 + $0xda8] sm:$0xff]
    %v562 = vld [vmem:[#allocation5 + $0xdb0] sm:$0xff]
    %v563 = vld [vmem:[#allocation5 + $0xdb8] sm:$0xff]
    %v564 = vld [vmem:[#allocation5 + $0xdc0] sm:$0xff]
    %v565 = vld [vmem:[#allocation5 + $0xdc8] sm:$0xff]
    %v566 = vld [vmem:[#allocation5 + $0xdd0] sm:$0xff]
    %v567 = vld [vmem:[#allocation5 + $0xdd8] sm:$0xff]
    %v568 = vld [vmem:[#allocation5 + $0xde0] sm:$0xff]
    %v569 = vld [vmem:[#allocation5 + $0xde8] sm:$0xff]
    %v570 = vld [vmem:[#allocation5 + $0xdf0] sm:$0xff]
    %v571 = vld [vmem:[#allocation5 + $0xdf8] sm:$0xff]
    %v572 = vld [vmem:[#allocation5 + $0xe00] sm:$0xff]
    %v573 = vld [vmem:[#allocation5 + $0xe08] sm:$0xff]
    %v574 = vld [vmem:[#allocation5 + $0xe10] sm:$0xff]
    %v575 = vld [vmem:[#allocation5 + $0xe18] sm:$0xff]
    %v576 = vld [vmem:[#allocation5 + $0xe20] sm:$0xff]
    %v577 = vld [vmem:[#allocation5 + $0xe28] sm:$0xff]
    %v578 = vld [vmem:[#allocation5 + $0xe30] sm:$0xff]
    %v579 = vld [vmem:[#allocation5 + $0xe38] sm:$0xff]
    %v580 = vld [vmem:[#allocation5 + $0xe40] sm:$0xff]
    %v581 = vld [vmem:[#allocation5 + $0xe48] sm:$0xff]
    %v582 = vld [vmem:[#allocation5 + $0xe50] sm:$0xff]
    %v583 = vld [vmem:[#allocation5 + $0xe58] sm:$0xff]
    %v584 = vld [vmem:[#allocation5 + $0xe60] sm:$0xff]
    %v585 = vld [vmem:[#allocation5 + $0xe68] sm:$0xff]
    %v586 = vld [vmem:[#allocation5 + $0xe70] sm:$0xff]
    %v587 = vld [vmem:[#allocation5 + $0xe78] sm:$0xff]
    %v588 = vld [vmem:[#allocation5 + $0xe80] sm:$0xff]
    %v589 = vld [vmem:[#allocation5 + $0xe88] sm:$0xff]
    %v590 = vld [vmem:[#allocation5 + $0xe90] sm:$0xff]
    %v591 = vld [vmem:[#allocation5 + $0xe98] sm:$0xff]
    %v592 = vld [vmem:[#allocation5 + $0xea0] sm:$0xff]
    %v593 = vld [vmem:[#allocation5 + $0xea8] sm:$0xff]
    %v594 = vld [vmem:[#allocation5 + $0xeb0] sm:$0xff]
    %v595 = vld [vmem:[#allocation5 + $0xeb8] sm:$0xff]
    %v596 = vld [vmem:[#allocation5 + $0xec0] sm:$0xff]
    %v597 = vld [vmem:[#allocation5 + $0xec8] sm:$0xff]
    %v598 = vld [vmem:[#allocation5 + $0xed0] sm:$0xff]
    %v599 = vld [vmem:[#allocation5 + $0xed8] sm:$0xff]
    %v600 = vld [vmem:[#allocation5 + $0xee0] sm:$0xff]
    %v601 = vld [vmem:[#allocation5 + $0xee8] sm:$0xff]
    %v602 = vld [vmem:[#allocation5 + $0xef0] sm:$0xff]
    %v603 = vld [vmem:[#allocation5 + $0xef8] sm:$0xff]
    %v604 = vld [vmem:[#allocation5 + $0xf00] sm:$0xff]
    %v605 = vld [vmem:[#allocation5 + $0xf08] sm:$0xff]
    %v606 = vld [vmem:[#allocation5 + $0xf10] sm:$0xff]
    %v607 = vld [vmem:[#allocation5 + $0xf18] sm:$0xff]
    %v608 = vld [vmem:[#allocation5 + $0xf20] sm:$0xff]
    %v609 = vld [vmem:[#allocation5 + $0xf28] sm:$0xff]
    %v610 = vld [vmem:[#allocation5 + $0xf30] sm:$0xff]
    %v611 = vld [vmem:[#allocation5 + $0xf38] sm:$0xff]
    %v612 = vld [vmem:[#allocation5 + $0xf40] sm:$0xff]
    %v613 = vld [vmem:[#allocation5 + $0xf48] sm:$0xff]
    %v614 = vld [vmem:[#allocation5 + $0xf50] sm:$0xff]
    %v615 = vld [vmem:[#allocation5 + $0xf58] sm:$0xff]
    %v616 = vld [vmem:[#allocation5 + $0xf60] sm:$0xff]
    %v617 = vld [vmem:[#allocation5 + $0xf68] sm:$0xff]
    %v618 = vld [vmem:[#allocation5 + $0xf70] sm:$0xff]
    %v619 = vld [vmem:[#allocation5 + $0xf78] sm:$0xff]
    %v620 = vld [vmem:[#allocation5 + $0xf80] sm:$0xff]
    %v621 = vld [vmem:[#allocation5 + $0xf88] sm:$0xff]
    %v622 = vld [vmem:[#allocation5 + $0xf90] sm:$0xff]
    %v623 = vld [vmem:[#allocation5 + $0xf98] sm:$0xff]
    %v624 = vld [vmem:[#allocation5 + $0xfa0] sm:$0xff]
    %v625 = vld [vmem:[#allocation5 + $0xfa8] sm:$0xff]
    %v626 = vld [vmem:[#allocation5 + $0xfb0] sm:$0xff]
    %v627 = vld [vmem:[#allocation5 + $0xfb8] sm:$0xff]
    %v628 = vld [vmem:[#allocation5 + $0xfc0] sm:$0xff]
    %v629 = vld [vmem:[#allocation5 + $0xfc8] sm:$0xff]
    %v630 = vld [vmem:[#allocation5 + $0xfd0] sm:$0xff]
    %v631 = vld [vmem:[#allocation5 + $0xfd8] sm:$0xff]
    %v632 = vld [vmem:[#allocation5 + $0xfe0] sm:$0xff]
    %v633 = vld [vmem:[#allocation5 + $0xfe8] sm:$0xff]
    %v634 = vld [vmem:[#allocation5 + $0xff0] sm:$0xff]
    %v635 = vld [vmem:[#allocation5 + $0xff8] sm:$0xff]
    %v636 = vld [vmem:[#allocation5 + $0x1000] sm:$0xff]
    %v637 = vld [vmem:[#allocation5 + $0x1008] sm:$0xff]
    %v638 = vld [vmem:[#allocation5 + $0x1010] sm:$0xff]
    %v639 = vld [vmem:[#allocation5 + $0x1018] sm:$0xff]
    %v640 = vld [vmem:[#allocation5 + $0x1020] sm:$0xff]
    %v641 = vld [vmem:[#allocation5 + $0x1028] sm:$0xff]
    %v642 = vld [vmem:[#allocation5 + $0x1030] sm:$0xff]
    %v643 = vld [vmem:[#allocation5 + $0x1038] sm:$0xff]
    %v644 = vld [vmem:[#allocation5 + $0x1040] sm:$0xff]
    %v645 = vld [vmem:[#allocation5 + $0x1048] sm:$0xff]
    %v646 = vld [vmem:[#allocation5 + $0x1050] sm:$0xff]
    %v647 = vld [vmem:[#allocation5 + $0x1058] sm:$0xff]
    %v648 = vld [vmem:[#allocation5 + $0x1060] sm:$0xff]
    %v649 = vld [vmem:[#allocation5 + $0x1068] sm:$0xff]
    %v650 = vld [vmem:[#allocation5 + $0x1070] sm:$0xff]
    %v651 = vld [vmem:[#allocation5 + $0x1078] sm:$0xff]
    %v652 = vld [vmem:[#allocation5 + $0x1080] sm:$0xff]
    %v653 = vld [vmem:[#allocation5 + $0x1088] sm:$0xff]
    %v654 = vld [vmem:[#allocation5 + $0x1090] sm:$0xff]
    %v655 = vld [vmem:[#allocation5 + $0x1098] sm:$0xff]
    %v656 = vld [vmem:[#allocation5 + $0x10a0] sm:$0xff]
    %v657 = vld [vmem:[#allocation5 + $0x10a8] sm:$0xff]
    %v658 = vld [vmem:[#allocation5 + $0x10b0] sm:$0xff]
    %v659 = vld [vmem:[#allocation5 + $0x10b8] sm:$0xff]
    %v660 = vld [vmem:[#allocation5 + $0x10c0] sm:$0xff]
    %v661 = vld [vmem:[#allocation5 + $0x10c8] sm:$0xff]
    %v662 = vld [vmem:[#allocation5 + $0x10d0] sm:$0xff]
    %v663 = vld [vmem:[#allocation5 + $0x10d8] sm:$0xff]
    %v664 = vld [vmem:[#allocation5 + $0x10e0] sm:$0xff]
    %v665 = vld [vmem:[#allocation5 + $0x10e8] sm:$0xff]
    %v666 = vld [vmem:[#allocation5 + $0x10f0] sm:$0xff]
    %v667 = vld [vmem:[#allocation5 + $0x10f8] sm:$0xff]
    %v668 = vld [vmem:[#allocation5 + $0x1100] sm:$0xff]
    %v669 = vld [vmem:[#allocation5 + $0x1108] sm:$0xff]
    %v670 = vld [vmem:[#allocation5 + $0x1110] sm:$0xff]
    %v671 = vld [vmem:[#allocation5 + $0x1118] sm:$0xff]
    %v672 = vld [vmem:[#allocation5 + $0x1120] sm:$0xff]
    %v673 = vld [vmem:[#allocation5 + $0x1128] sm:$0xff]
    %v674 = vld [vmem:[#allocation5 + $0x1130] sm:$0xff]
    %v675 = vld [vmem:[#allocation5 + $0x1138] sm:$0xff]
    %v676 = vld [vmem:[#allocation5 + $0x1140] sm:$0xff]
    %v677 = vld [vmem:[#allocation5 + $0x1148] sm:$0xff]
    %v678 = vld [vmem:[#allocation5 + $0x1150] sm:$0xff]
    %v679 = vld [vmem:[#allocation5 + $0x1158] sm:$0xff]
    %v680 = vld [vmem:[#allocation5 + $0x1160] sm:$0xff]
    %v681 = vld [vmem:[#allocation5 + $0x1168] sm:$0xff]
    %v682 = vld [vmem:[#allocation5 + $0x1170] sm:$0xff]
    %v683 = vld [vmem:[#allocation5 + $0x1178] sm:$0xff]
    %v684 = vld [vmem:[#allocation5 + $0x1180] sm:$0xff]
    %v685 = vld [vmem:[#allocation5 + $0x1188] sm:$0xff]
    %v686 = vld [vmem:[#allocation5 + $0x1190] sm:$0xff]
    %v687 = vld [vmem:[#allocation5 + $0x1198] sm:$0xff]
    %v688 = vld [vmem:[#allocation5 + $0x11a0] sm:$0xff]
    %v689 = vld [vmem:[#allocation5 + $0x11a8] sm:$0xff]
    %v690 = vld [vmem:[#allocation5 + $0x11b0] sm:$0xff]
    %v691 = vld [vmem:[#allocation5 + $0x11b8] sm:$0xff]
    %v692 = vld [vmem:[#allocation5 + $0x11c0] sm:$0xff]
    %v693 = vld [vmem:[#allocation5 + $0x11c8] sm:$0xff]
    %v694 = vld [vmem:[#allocation5 + $0x11d0] sm:$0xff]
    %v695 = vld [vmem:[#allocation5 + $0x11d8] sm:$0xff]
    %v696 = vld [vmem:[#allocation5 + $0x11e0] sm:$0xff]
    %v697 = vld [vmem:[#allocation5 + $0x11e8] sm:$0xff]
    %v698 = vld [vmem:[#allocation5 + $0x11f0] sm:$0xff]
    %v699 = vld [vmem:[#allocation5 + $0x11f8] sm:$0xff]
    %v700 = vld [vmem:[#allocation5 + $0x1200] sm:$0xff]
    %v701 = vld [vmem:[#allocation5 + $0x1208] sm:$0xff]
    %v702 = vld [vmem:[#allocation5 + $0x1210] sm:$0xff]
    %v703 = vld [vmem:[#allocation5 + $0x1218] sm:$0xff]
    %v704 = vld [vmem:[#allocation5 + $0x1220] sm:$0xff]
    %v705 = vld [vmem:[#allocation5 + $0x1228] sm:$0xff]
    %v706 = vld [vmem:[#allocation5 + $0x1230] sm:$0xff]
    %v707 = vld [vmem:[#allocation5 + $0x1238] sm:$0xff]
    %v708 = vld [vmem:[#allocation5 + $0x1240] sm:$0xff]
    %v709 = vld [vmem:[#allocation5 + $0x1248] sm:$0xff]
    %v710 = vld [vmem:[#allocation5 + $0x1250] sm:$0xff]
    %v711 = vld [vmem:[#allocation5 + $0x1258] sm:$0xff]
    %v712 = vld [vmem:[#allocation5 + $0x1260] sm:$0xff]
    %v713 = vld [vmem:[#allocation5 + $0x1268] sm:$0xff]
    %v714 = vld [vmem:[#allocation5 + $0x1270] sm:$0xff]
    %v715 = vld [vmem:[#allocation5 + $0x1278] sm:$0xff]
    %v716 = vld [vmem:[#allocation5 + $0x1280] sm:$0xff]
    %v717 = vld [vmem:[#allocation5 + $0x1288] sm:$0xff]
    %v718 = vld [vmem:[#allocation5 + $0x1290] sm:$0xff]
    %v719 = vld [vmem:[#allocation5 + $0x1298] sm:$0xff]
    %v720 = vld [vmem:[#allocation5 + $0x12a0] sm:$0xff]
    %v721 = vld [vmem:[#allocation5 + $0x12a8] sm:$0xff]
    %v722 = vld [vmem:[#allocation5 + $0x12b0] sm:$0xff]
    %v723 = vld [vmem:[#allocation5 + $0x12b8] sm:$0xff]
    %v724 = vld [vmem:[#allocation5 + $0x12c0] sm:$0xff]
    %v725 = vld [vmem:[#allocation5 + $0x12c8] sm:$0xff]
    %v726 = vld [vmem:[#allocation5 + $0x12d0] sm:$0xff]
    %v727 = vld [vmem:[#allocation5 + $0x12d8] sm:$0xff]
    %v728 = vld [vmem:[#allocation5 + $0x12e0] sm:$0xff]
    %v729 = vld [vmem:[#allocation5 + $0x12e8] sm:$0xff]
    %v730 = vld [vmem:[#allocation5 + $0x12f0] sm:$0xff]
    %v731 = vld [vmem:[#allocation5 + $0x12f8] sm:$0xff]
    %v732 = vld [vmem:[#allocation5 + $0x1300] sm:$0xff]
    %v733 = vld [vmem:[#allocation5 + $0x1308] sm:$0xff]
    %v734 = vld [vmem:[#allocation5 + $0x1310] sm:$0xff]
    %v735 = vld [vmem:[#allocation5 + $0x1318] sm:$0xff]
    %v736 = vld [vmem:[#allocation5 + $0x1320] sm:$0xff]
    %v737 = vld [vmem:[#allocation5 + $0x1328] sm:$0xff]
    %v738 = vld [vmem:[#allocation5 + $0x1330] sm:$0xff]
    %v739 = vld [vmem:[#allocation5 + $0x1338] sm:$0xff]
    %v740 = vld [vmem:[#allocation5 + $0x1340] sm:$0xff]
    %v741 = vld [vmem:[#allocation5 + $0x1348] sm:$0xff]
    %v742 = vld [vmem:[#allocation5 + $0x1350] sm:$0xff]
    %v743 = vld [vmem:[#allocation5 + $0x1358] sm:$0xff]
    %v744 = vld [vmem:[#allocation5 + $0x1360] sm:$0xff]
    %v745 = vld [vmem:[#allocation5 + $0x1368] sm:$0xff]
    %v746 = vld [vmem:[#allocation5 + $0x1370] sm:$0xff]
    %v747 = vld [vmem:[#allocation5 + $0x1378] sm:$0xff]
    %v748 = vld [vmem:[#allocation5 + $0x1380] sm:$0xff]
    %v749 = vld [vmem:[#allocation5 + $0x1388] sm:$0xff]
    %v750 = vld [vmem:[#allocation5 + $0x1390] sm:$0xff]
    %v751 = vld [vmem:[#allocation5 + $0x1398] sm:$0xff]
    %v752 = vld [vmem:[#allocation5 + $0x13a0] sm:$0xff]
    %v753 = vld [vmem:[#allocation5 + $0x13a8] sm:$0xff]
    %v754 = vld [vmem:[#allocation5 + $0x13b0] sm:$0xff]
    %v755 = vld [vmem:[#allocation5 + $0x13b8] sm:$0xff]
    %v756 = vld [vmem:[#allocation5 + $0x13c0] sm:$0xff]
    %v757 = vld [vmem:[#allocation5 + $0x13c8] sm:$0xff]
    %v758 = vld [vmem:[#allocation5 + $0x13d0] sm:$0xff]
    %v759 = vld [vmem:[#allocation5 + $0x13d8] sm:$0xff]
    %v760 = vld [vmem:[#allocation5 + $0x13e0] sm:$0xff]
    %v761 = vld [vmem:[#allocation5 + $0x13e8] sm:$0xff]
    %v762 = vld [vmem:[#allocation5 + $0x13f0] sm:$0xff]
    %v763 = vld [vmem:[#allocation5 + $0x13f8] sm:$0xff]
    %v764 = vld [vmem:[#allocation5 + $0x1400] sm:$0xff]
    %v765 = vld [vmem:[#allocation5 + $0x1408] sm:$0xff]
    %v766 = vld [vmem:[#allocation5 + $0x1410] sm:$0xff]
    %v767 = vld [vmem:[#allocation5 + $0x1418] sm:$0xff]
    %v768 = vld [vmem:[#allocation5 + $0x1420] sm:$0xff]
    %v769 = vld [vmem:[#allocation5 + $0x1428] sm:$0xff]
    %v770 = vld [vmem:[#allocation5 + $0x1430] sm:$0xff]
    %v771 = vld [vmem:[#allocation5 + $0x1438] sm:$0xff]
    %v772 = vld [vmem:[#allocation5 + $0x1440] sm:$0xff]
    %v773 = vld [vmem:[#allocation5 + $0x1448] sm:$0xff]
    %v774 = vld [vmem:[#allocation5 + $0x1450] sm:$0xff]
    %v775 = vld [vmem:[#allocation5 + $0x1458] sm:$0xff]
    %v776 = vld [vmem:[#allocation5 + $0x1460] sm:$0xff]
    %v777 = vld [vmem:[#allocation5 + $0x1468] sm:$0xff]
    %v778 = vld [vmem:[#allocation5 + $0x1470] sm:$0xff]
    %v779 = vld [vmem:[#allocation5 + $0x1478] sm:$0xff]
    %v780 = vld [vmem:[#allocation5 + $0x1480] sm:$0xff]
    %v781 = vld [vmem:[#allocation5 + $0x1488] sm:$0xff]
    %v782 = vld [vmem:[#allocation5 + $0x1490] sm:$0xff]
    %v783 = vld [vmem:[#allocation5 + $0x1498] sm:$0xff]
    %v784 = vld [vmem:[#allocation5 + $0x14a0] sm:$0xff]
    %v785 = vld [vmem:[#allocation5 + $0x14a8] sm:$0xff]
    %v786 = vld [vmem:[#allocation5 + $0x14b0] sm:$0xff]
    %v787 = vld [vmem:[#allocation5 + $0x14b8] sm:$0xff]
    %v788 = vld [vmem:[#allocation5 + $0x14c0] sm:$0xff]
    %v789 = vld [vmem:[#allocation5 + $0x14c8] sm:$0xff]
    %v790 = vld [vmem:[#allocation5 + $0x14d0] sm:$0xff]
    %v791 = vld [vmem:[#allocation5 + $0x14d8] sm:$0xff]
    %v792 = vld [vmem:[#allocation5 + $0x14e0] sm:$0xff]
    %v793 = vld [vmem:[#allocation5 + $0x14e8] sm:$0xff]
    %v794 = vld [vmem:[#allocation5 + $0x14f0] sm:$0xff]
    %v795 = vld [vmem:[#allocation5 + $0x14f8] sm:$0xff]
    %v796 = vld [vmem:[#allocation5 + $0x1500] sm:$0xff]
    %v797 = vld [vmem:[#allocation5 + $0x1508] sm:$0xff]
    %v798 = vld [vmem:[#allocation5 + $0x1510] sm:$0xff]
    %v799 = vld [vmem:[#allocation5 + $0x1518] sm:$0xff]
    %v800 = vld [vmem:[#allocation5 + $0x1520] sm:$0xff]
    %v801 = vld [vmem:[#allocation5 + $0x1528] sm:$0xff]
    %v802 = vld [vmem:[#allocation5 + $0x1530] sm:$0xff]
    %v803 = vld [vmem:[#allocation5 + $0x1538] sm:$0xff]
    %v804 = vld [vmem:[#allocation5 + $0x1540] sm:$0xff]
    %v805 = vld [vmem:[#allocation5 + $0x1548] sm:$0xff]
    %v806 = vld [vmem:[#allocation5 + $0x1550] sm:$0xff]
    %v807 = vld [vmem:[#allocation5 + $0x1558] sm:$0xff]
    %v808 = vld [vmem:[#allocation5 + $0x1560] sm:$0xff]
    %v809 = vld [vmem:[#allocation5 + $0x1568] sm:$0xff]
    %v810 = vld [vmem:[#allocation5 + $0x1570] sm:$0xff]
    %v811 = vld [vmem:[#allocation5 + $0x1578] sm:$0xff]
    %v812 = vld [vmem:[#allocation5 + $0x1580] sm:$0xff]
    %v813 = vld [vmem:[#allocation5 + $0x1588] sm:$0xff]
    %v814 = vld [vmem:[#allocation5 + $0x1590] sm:$0xff]
    %v815 = vld [vmem:[#allocation5 + $0x1598] sm:$0xff]
    %v816 = vld [vmem:[#allocation5 + $0x15a0] sm:$0xff]
    %v817 = vld [vmem:[#allocation5 + $0x15a8] sm:$0xff]
    %v818 = vld [vmem:[#allocation5 + $0x15b0] sm:$0xff]
    %v819 = vld [vmem:[#allocation5 + $0x15b8] sm:$0xff]
    %v820 = vld [vmem:[#allocation5 + $0x15c0] sm:$0xff]
    %v821 = vld [vmem:[#allocation5 + $0x15c8] sm:$0xff]
    %v822 = vld [vmem:[#allocation5 + $0x15d0] sm:$0xff]
    %v823 = vld [vmem:[#allocation5 + $0x15d8] sm:$0xff]
    %v824 = vld [vmem:[#allocation5 + $0x15e0] sm:$0xff]
    %v825 = vld [vmem:[#allocation5 + $0x15e8] sm:$0xff]
    %v826 = vld [vmem:[#allocation5 + $0x15f0] sm:$0xff]
    %v827 = vld [vmem:[#allocation5 + $0x15f8] sm:$0xff]
    %v828 = vld [vmem:[#allocation5 + $0x1600] sm:$0xff]
    %v829 = vld [vmem:[#allocation5 + $0x1608] sm:$0xff]
    %v830 = vld [vmem:[#allocation5 + $0x1610] sm:$0xff]
    %v831 = vld [vmem:[#allocation5 + $0x1618] sm:$0xff]
    %v832 = vld [vmem:[#allocation5 + $0x1620] sm:$0xff]
    %v833 = vld [vmem:[#allocation5 + $0x1628] sm:$0xff]
    %v834 = vld [vmem:[#allocation5 + $0x1630] sm:$0xff]
    %v835 = vld [vmem:[#allocation5 + $0x1638] sm:$0xff]
    %v836 = vld [vmem:[#allocation5 + $0x1640] sm:$0xff]
    %v837 = vld [vmem:[#allocation5 + $0x1648] sm:$0xff]
    %v838 = vld [vmem:[#allocation5 + $0x1650] sm:$0xff]
    %v839 = vld [vmem:[#allocation5 + $0x1658] sm:$0xff]
    %v840 = vld [vmem:[#allocation5 + $0x1660] sm:$0xff]
    %v841 = vld [vmem:[#allocation5 + $0x1668] sm:$0xff]
    %v842 = vld [vmem:[#allocation5 + $0x1670] sm:$0xff]
    %v843 = vld [vmem:[#allocation5 + $0x1678] sm:$0xff]
    %v844 = vld [vmem:[#allocation5 + $0x1680] sm:$0xff]
    %v845 = vld [vmem:[#allocation5 + $0x1688] sm:$0xff]
    %v846 = vld [vmem:[#allocation5 + $0x1690] sm:$0xff]
    %v847 = vld [vmem:[#allocation5 + $0x1698] sm:$0xff]
    %v848 = vld [vmem:[#allocation5 + $0x16a0] sm:$0xff]
    %v849 = vld [vmem:[#allocation5 + $0x16a8] sm:$0xff]
    %v850 = vld [vmem:[#allocation5 + $0x16b0] sm:$0xff]
    %v851 = vld [vmem:[#allocation5 + $0x16b8] sm:$0xff]
    %v852 = vld [vmem:[#allocation5 + $0x16c0] sm:$0xff]
    %v853 = vld [vmem:[#allocation5 + $0x16c8] sm:$0xff]
    %v854 = vld [vmem:[#allocation5 + $0x16d0] sm:$0xff]
    %v855 = vld [vmem:[#allocation5 + $0x16d8] sm:$0xff]
    %v856 = vld [vmem:[#allocation5 + $0x16e0] sm:$0xff]
    %v857 = vld [vmem:[#allocation5 + $0x16e8] sm:$0xff]
    %v858 = vld [vmem:[#allocation5 + $0x16f0] sm:$0xff]
    %v859 = vld [vmem:[#allocation5 + $0x16f8] sm:$0xff]
    %v860 = vld [vmem:[#allocation5 + $0x1700] sm:$0xff]
    %v861 = vld [vmem:[#allocation5 + $0x1708] sm:$0xff]
    %v862 = vld [vmem:[#allocation5 + $0x1710] sm:$0xff]
    %v863 = vld [vmem:[#allocation5 + $0x1718] sm:$0xff]
    %v864 = vld [vmem:[#allocation5 + $0x1720] sm:$0xff]
    %v865 = vld [vmem:[#allocation5 + $0x1728] sm:$0xff]
    %v866 = vld [vmem:[#allocation5 + $0x1730] sm:$0xff]
    %v867 = vld [vmem:[#allocation5 + $0x1738] sm:$0xff]
    %v868 = vld [vmem:[#allocation5 + $0x1740] sm:$0xff]
    %v869 = vld [vmem:[#allocation5 + $0x1748] sm:$0xff]
    %v870 = vld [vmem:[#allocation5 + $0x1750] sm:$0xff]
    %v871 = vld [vmem:[#allocation5 + $0x1758] sm:$0xff]
    %v872 = vld [vmem:[#allocation5 + $0x1760] sm:$0xff]
    %v873 = vld [vmem:[#allocation5 + $0x1768] sm:$0xff]
    %v874 = vld [vmem:[#allocation5 + $0x1770] sm:$0xff]
    %v875 = vld [vmem:[#allocation5 + $0x1778] sm:$0xff]
    %v876 = vld [vmem:[#allocation5 + $0x1780] sm:$0xff]
    %v877 = vld [vmem:[#allocation5 + $0x1788] sm:$0xff]
    %v878 = vld [vmem:[#allocation5 + $0x1790] sm:$0xff]
    %v879 = vld [vmem:[#allocation5 + $0x1798] sm:$0xff]
    %v880 = vld [vmem:[#allocation5 + $0x17a0] sm:$0xff]
    %v881 = vld [vmem:[#allocation5 + $0x17a8] sm:$0xff]
    %v882 = vld [vmem:[#allocation5 + $0x17b0] sm:$0xff]
    %v883 = vld [vmem:[#allocation5 + $0x17b8] sm:$0xff]
    %v884 = vld [vmem:[#allocation5 + $0x17c0] sm:$0xff]
    %v885 = vld [vmem:[#allocation5 + $0x17c8] sm:$0xff]
    %v886 = vld [vmem:[#allocation5 + $0x17d0] sm:$0xff]
    %v887 = vld [vmem:[#allocation5 + $0x17d8] sm:$0xff]
    %v888 = vld [vmem:[#allocation5 + $0x17e0] sm:$0xff]
    %v889 = vld [vmem:[#allocation5 + $0x17e8] sm:$0xff]
    %v890 = vld [vmem:[#allocation5 + $0x17f0] sm:$0xff]
    %v891 = vld [vmem:[#allocation5 + $0x17f8] sm:$0xff]
    %v892 = vld [vmem:[#allocation5 + $0x1800] sm:$0xff]
    %v893 = vld [vmem:[#allocation5 + $0x1808] sm:$0xff]
    %v894 = vld [vmem:[#allocation5 + $0x1810] sm:$0xff]
    %v895 = vld [vmem:[#allocation5 + $0x1818] sm:$0xff]
    %v896 = vld [vmem:[#allocation5 + $0x1820] sm:$0xff]
    %v897 = vld [vmem:[#allocation5 + $0x1828] sm:$0xff]
    %v898 = vld [vmem:[#allocation5 + $0x1830] sm:$0xff]
    %v899 = vld [vmem:[#allocation5 + $0x1838] sm:$0xff]
    %v900 = vld [vmem:[#allocation5 + $0x1840] sm:$0xff]
    %v901 = vld [vmem:[#allocation5 + $0x1848] sm:$0xff]
    %v902 = vld [vmem:[#allocation5 + $0x1850] sm:$0xff]
    %v903 = vld [vmem:[#allocation5 + $0x1858] sm:$0xff]
    %v904 = vld [vmem:[#allocation5 + $0x1860] sm:$0xff]
    %v905 = vld [vmem:[#allocation5 + $0x1868] sm:$0xff]
    %v906 = vld [vmem:[#allocation5 + $0x1870] sm:$0xff]
    %v907 = vld [vmem:[#allocation5 + $0x1878] sm:$0xff]
    %v908 = vld [vmem:[#allocation5 + $0x1880] sm:$0xff]
    %v909 = vld [vmem:[#allocation5 + $0x1888] sm:$0xff]
    %v910 = vld [vmem:[#allocation5 + $0x1890] sm:$0xff]
    %v911 = vld [vmem:[#allocation5 + $0x1898] sm:$0xff]
    %v912 = vld [vmem:[#allocation5 + $0x18a0] sm:$0xff]
    %v913 = vld [vmem:[#allocation5 + $0x18a8] sm:$0xff]
    %v914 = vld [vmem:[#allocation5 + $0x18b0] sm:$0xff]
    %v915 = vld [vmem:[#allocation5 + $0x18b8] sm:$0xff]
    %v916 = vld [vmem:[#allocation5 + $0x18c0] sm:$0xff]
    %v917 = vld [vmem:[#allocation5 + $0x18c8] sm:$0xff]
    %v918 = vld [vmem:[#allocation5 + $0x18d0] sm:$0xff]
    %v919 = vld [vmem:[#allocation5 + $0x18d8] sm:$0xff]
    %v920 = vld [vmem:[#allocation5 + $0x18e0] sm:$0xff]
    %v921 = vld [vmem:[#allocation5 + $0x18e8] sm:$0xff]
    %v922 = vld [vmem:[#allocation5 + $0x18f0] sm:$0xff]
    %v923 = vld [vmem:[#allocation5 + $0x18f8] sm:$0xff]
    %v924 = vld [vmem:[#allocation5 + $0x1900] sm:$0xff]
    %v925 = vld [vmem:[#allocation5 + $0x1908] sm:$0xff]
    %v926 = vld [vmem:[#allocation5 + $0x1910] sm:$0xff]
    %v927 = vld [vmem:[#allocation5 + $0x1918] sm:$0xff]
    %v928 = vld [vmem:[#allocation5 + $0x1920] sm:$0xff]
    %v929 = vld [vmem:[#allocation5 + $0x1928] sm:$0xff]
    %v930 = vld [vmem:[#allocation5 + $0x1930] sm:$0xff]
    %v931 = vld [vmem:[#allocation5 + $0x1938] sm:$0xff]
    %v932 = vld [vmem:[#allocation5 + $0x1940] sm:$0xff]
    %v933 = vld [vmem:[#allocation5 + $0x1948] sm:$0xff]
    %v934 = vld [vmem:[#allocation5 + $0x1950] sm:$0xff]
    %v935 = vld [vmem:[#allocation5 + $0x1958] sm:$0xff]
    %v936 = vld [vmem:[#allocation5 + $0x1960] sm:$0xff]
    %v937 = vld [vmem:[#allocation5 + $0x1968] sm:$0xff]
    %v938 = vld [vmem:[#allocation5 + $0x1970] sm:$0xff]
    %v939 = vld [vmem:[#allocation5 + $0x1978] sm:$0xff]
    %v940 = vld [vmem:[#allocation5 + $0x1980] sm:$0xff]
    %v941 = vld [vmem:[#allocation5 + $0x1988] sm:$0xff]
    %v942 = vld [vmem:[#allocation5 + $0x1990] sm:$0xff]
    %v943 = vld [vmem:[#allocation5 + $0x1998] sm:$0xff]
    %v944 = vld [vmem:[#allocation5 + $0x19a0] sm:$0xff]
    %v945 = vld [vmem:[#allocation5 + $0x19a8] sm:$0xff]
    %v946 = vld [vmem:[#allocation5 + $0x19b0] sm:$0xff]
    %v947 = vld [vmem:[#allocation5 + $0x19b8] sm:$0xff]
    %v948 = vld [vmem:[#allocation5 + $0x19c0] sm:$0xff]
    %v949 = vld [vmem:[#allocation5 + $0x19c8] sm:$0xff]
    %v950 = vld [vmem:[#allocation5 + $0x19d0] sm:$0xff]
    %v951 = vld [vmem:[#allocation5 + $0x19d8] sm:$0xff]
    %v952 = vld [vmem:[#allocation5 + $0x19e0] sm:$0xff]
    %v953 = vld [vmem:[#allocation5 + $0x19e8] sm:$0xff]
    %v954 = vld [vmem:[#allocation5 + $0x19f0] sm:$0xff]
    %v955 = vld [vmem:[#allocation5 + $0x19f8] sm:$0xff]
    %v956 = vld [vmem:[#allocation5 + $0x1a00] sm:$0xff]
    %v957 = vld [vmem:[#allocation5 + $0x1a08] sm:$0xff]
    %v958 = vld [vmem:[#allocation5 + $0x1a10] sm:$0xff]
    %v959 = vld [vmem:[#allocation5 + $0x1a18] sm:$0xff]
    %v960 = vld [vmem:[#allocation5 + $0x1a20] sm:$0xff]
    %v961 = vld [vmem:[#allocation5 + $0x1a28] sm:$0xff]
    %v962 = vld [vmem:[#allocation5 + $0x1a30] sm:$0xff]
    %v963 = vld [vmem:[#allocation5 + $0x1a38] sm:$0xff]
    %v964 = vld [vmem:[#allocation5 + $0x1a40] sm:$0xff]
    %v965 = vld [vmem:[#allocation5 + $0x1a48] sm:$0xff]
    %v966 = vld [vmem:[#allocation5 + $0x1a50] sm:$0xff]
    %v967 = vld [vmem:[#allocation5 + $0x1a58] sm:$0xff]
    %v968 = vld [vmem:[#allocation5 + $0x1a60] sm:$0xff]
    %v969 = vld [vmem:[#allocation5 + $0x1a68] sm:$0xff]
    %v970 = vld [vmem:[#allocation5 + $0x1a70] sm:$0xff]
    %v971 = vld [vmem:[#allocation5 + $0x1a78] sm:$0xff]
    %v972 = vld [vmem:[#allocation5 + $0x1a80] sm:$0xff]
    %v973 = vld [vmem:[#allocation5 + $0x1a88] sm:$0xff]
    %v974 = vld [vmem:[#allocation5 + $0x1a90] sm:$0xff]
    %v975 = vld [vmem:[#allocation5 + $0x1a98] sm:$0xff]
    %v976 = vld [vmem:[#allocation5 + $0x1aa0] sm:$0xff]
    %v977 = vld [vmem:[#allocation5 + $0x1aa8] sm:$0xff]
    %v978 = vld [vmem:[#allocation5 + $0x1ab0] sm:$0xff]
    %v979 = vld [vmem:[#allocation5 + $0x1ab8] sm:$0xff]
    %v980 = vld [vmem:[#allocation5 + $0x1ac0] sm:$0xff]
    %v981 = vld [vmem:[#allocation5 + $0x1ac8] sm:$0xff]
    %v982 = vld [vmem:[#allocation5 + $0x1ad0] sm:$0xff]
    %v983 = vld [vmem:[#allocation5 + $0x1ad8] sm:$0xff]
    %v984 = vld [vmem:[#allocation5 + $0x1ae0] sm:$0xff]
    %v985 = vld [vmem:[#allocation5 + $0x1ae8] sm:$0xff]
    %v986 = vld [vmem:[#allocation5 + $0x1af0] sm:$0xff]
    %v987 = vld [vmem:[#allocation5 + $0x1af8] sm:$0xff]
    %v988 = vld [vmem:[#allocation5 + $0x1b00] sm:$0xff]
    %v989 = vld [vmem:[#allocation5 + $0x1b08] sm:$0xff]
    %v990 = vld [vmem:[#allocation5 + $0x1b10] sm:$0xff]
    %v991 = vld [vmem:[#allocation5 + $0x1b18] sm:$0xff]
    %v992 = vld [vmem:[#allocation5 + $0x1b20] sm:$0xff]
    %v993 = vld [vmem:[#allocation5 + $0x1b28] sm:$0xff]
    %v994 = vld [vmem:[#allocation5 + $0x1b30] sm:$0xff]
    %v995 = vld [vmem:[#allocation5 + $0x1b38] sm:$0xff]
    %v996 = vld [vmem:[#allocation5 + $0x1b40] sm:$0xff]
    %v997 = vld [vmem:[#allocation5 + $0x1b48] sm:$0xff]
    %v998 = vld [vmem:[#allocation5 + $0x1b50] sm:$0xff]
    %v999 = vld [vmem:[#allocation5 + $0x1b58] sm:$0xff]
    %v1000 = vld [vmem:[#allocation5 + $0x1b60] sm:$0xff]
    %v1001 = vld [vmem:[#allocation5 + $0x1b68] sm:$0xff]
    %v1002 = vld [vmem:[#allocation5 + $0x1b70] sm:$0xff]
    %v1003 = vld [vmem:[#allocation5 + $0x1b78] sm:$0xff]
    %v1004 = vld [vmem:[#allocation5 + $0x1b80] sm:$0xff]
    %v1005 = vld [vmem:[#allocation5 + $0x1b88] sm:$0xff]
    %v1006 = vld [vmem:[#allocation5 + $0x1b90] sm:$0xff]
    %v1007 = vld [vmem:[#allocation5 + $0x1b98] sm:$0xff]
    %v1008 = vld [vmem:[#allocation5 + $0x1ba0] sm:$0xff]
    %v1009 = vld [vmem:[#allocation5 + $0x1ba8] sm:$0xff]
    %v1010 = vld [vmem:[#allocation5 + $0x1bb0] sm:$0xff]
    %v1011 = vld [vmem:[#allocation5 + $0x1bb8] sm:$0xff]
    %v1012 = vld [vmem:[#allocation5 + $0x1bc0] sm:$0xff]
    %v1013 = vld [vmem:[#allocation5 + $0x1bc8] sm:$0xff]
    %v1014 = vld [vmem:[#allocation5 + $0x1bd0] sm:$0xff]
    %v1015 = vld [vmem:[#allocation5 + $0x1bd8] sm:$0xff]
    %v1016 = vld [vmem:[#allocation5 + $0x1be0] sm:$0xff]
    %v1017 = vld [vmem:[#allocation5 + $0x1be8] sm:$0xff]
    %v1018 = vld [vmem:[#allocation5 + $0x1bf0] sm:$0xff]
    %v1019 = vld [vmem:[#allocation5 + $0x1bf8] sm:$0xff]
    %v1020 = vld [vmem:[#allocation5 + $0x1c00] sm:$0xff]
    %v1021 = vld [vmem:[#allocation5 + $0x1c08] sm:$0xff]
    %v1022 = vld [vmem:[#allocation5 + $0x1c10] sm:$0xff]
    %v1023 = vld [vmem:[#allocation5 + $0x1c18] sm:$0xff]
    %v1024 = vld [vmem:[#allocation5 + $0x1c20] sm:$0xff]
    %v1025 = vld [vmem:[#allocation5 + $0x1c28] sm:$0xff]
    %v1026 = vld [vmem:[#allocation5 + $0x1c30] sm:$0xff]
    %v1027 = vld [vmem:[#allocation5 + $0x1c38] sm:$0xff]
    %v1028 = vld [vmem:[#allocation5 + $0x1c40] sm:$0xff]
    %v1029 = vld [vmem:[#allocation5 + $0x1c48] sm:$0xff]
    %v1030 = vld [vmem:[#allocation5 + $0x1c50] sm:$0xff]
    %v1031 = vld [vmem:[#allocation5 + $0x1c58] sm:$0xff]
    %v1032 = vld [vmem:[#allocation5 + $0x1c60] sm:$0xff]
    %v1033 = vld [vmem:[#allocation5 + $0x1c68] sm:$0xff]
    %v1034 = vld [vmem:[#allocation5 + $0x1c70] sm:$0xff]
    %v1035 = vld [vmem:[#allocation5 + $0x1c78] sm:$0xff]
    %v1036 = vld [vmem:[#allocation5 + $0x1c80] sm:$0xff]
    %v1037 = vld [vmem:[#allocation5 + $0x1c88] sm:$0xff]
    %v1038 = vld [vmem:[#allocation5 + $0x1c90] sm:$0xff]
    %v1039 = vld [vmem:[#allocation5 + $0x1c98] sm:$0xff]
    %v1040 = vld [vmem:[#allocation5 + $0x1ca0] sm:$0xff]
    %v1041 = vld [vmem:[#allocation5 + $0x1ca8] sm:$0xff]
    %v1042 = vld [vmem:[#allocation5 + $0x1cb0] sm:$0xff]
    %v1043 = vld [vmem:[#allocation5 + $0x1cb8] sm:$0xff]
    %v1044 = vld [vmem:[#allocation5 + $0x1cc0] sm:$0xff]
    %v1045 = vld [vmem:[#allocation5 + $0x1cc8] sm:$0xff]
    %v1046 = vld [vmem:[#allocation5 + $0x1cd0] sm:$0xff]
    %v1047 = vld [vmem:[#allocation5 + $0x1cd8] sm:$0xff]
    %v1048 = vld [vmem:[#allocation5 + $0x1ce0] sm:$0xff]
    %v1049 = vld [vmem:[#allocation5 + $0x1ce8] sm:$0xff]
    %v1050 = vld [vmem:[#allocation5 + $0x1cf0] sm:$0xff]
    %v1051 = vld [vmem:[#allocation5 + $0x1cf8] sm:$0xff]
    %v1052 = vld [vmem:[#allocation5 + $0x1d00] sm:$0xff]
    %v1053 = vld [vmem:[#allocation5 + $0x1d08] sm:$0xff]
    %v1054 = vld [vmem:[#allocation5 + $0x1d10] sm:$0xff]
    %v1055 = vld [vmem:[#allocation5 + $0x1d18] sm:$0xff]
    %v1056 = vld [vmem:[#allocation5 + $0x1d20] sm:$0xff]
    %v1057 = vld [vmem:[#allocation5 + $0x1d28] sm:$0xff]
    %v1058 = vld [vmem:[#allocation5 + $0x1d30] sm:$0xff]
    %v1059 = vld [vmem:[#allocation5 + $0x1d38] sm:$0xff]
    %v1060 = vld [vmem:[#allocation5 + $0x1d40] sm:$0xff]
    %v1061 = vld [vmem:[#allocation5 + $0x1d48] sm:$0xff]
    %v1062 = vld [vmem:[#allocation5 + $0x1d50] sm:$0xff]
    %v1063 = vld [vmem:[#allocation5 + $0x1d58] sm:$0xff]
    %v1064 = vld [vmem:[#allocation5 + $0x1d60] sm:$0xff]
    %v1065 = vld [vmem:[#allocation5 + $0x1d68] sm:$0xff]
    %v1066 = vld [vmem:[#allocation5 + $0x1d70] sm:$0xff]
    %v1067 = vld [vmem:[#allocation5 + $0x1d78] sm:$0xff]
    %v1068 = vld [vmem:[#allocation5 + $0x1d80] sm:$0xff]
    %v1069 = vld [vmem:[#allocation5 + $0x1d88] sm:$0xff]
    %v1070 = vld [vmem:[#allocation5 + $0x1d90] sm:$0xff]
    %v1071 = vld [vmem:[#allocation5 + $0x1d98] sm:$0xff]
    %v1072 = vld [vmem:[#allocation5 + $0x1da0] sm:$0xff]
    %v1073 = vld [vmem:[#allocation5 + $0x1da8] sm:$0xff]
    %v1074 = vld [vmem:[#allocation5 + $0x1db0] sm:$0xff]
    %v1075 = vld [vmem:[#allocation5 + $0x1db8] sm:$0xff]
    %v1076 = vld [vmem:[#allocation5 + $0x1dc0] sm:$0xff]
    %v1077 = vld [vmem:[#allocation5 + $0x1dc8] sm:$0xff]
    %v1078 = vld [vmem:[#allocation5 + $0x1dd0] sm:$0xff]
    %v1079 = vld [vmem:[#allocation5 + $0x1dd8] sm:$0xff]
    %v1080 = vld [vmem:[#allocation5 + $0x1de0] sm:$0xff]
    %v1081 = vld [vmem:[#allocation5 + $0x1de8] sm:$0xff]
    %v1082 = vld [vmem:[#allocation5 + $0x1df0] sm:$0xff]
    %v1083 = vld [vmem:[#allocation5 + $0x1df8] sm:$0xff]
    %v1084 = vld [vmem:[#allocation5 + $0x1e00] sm:$0xff]
    %v1085 = vld [vmem:[#allocation5 + $0x1e08] sm:$0xff]
    %v1086 = vld [vmem:[#allocation5 + $0x1e10] sm:$0xff]
    %v1087 = vld [vmem:[#allocation5 + $0x1e18] sm:$0xff]
    %v1088 = vld [vmem:[#allocation5 + $0x1e20] sm:$0xff]
    %v1089 = vld [vmem:[#allocation5 + $0x1e28] sm:$0xff]
    %v1090 = vld [vmem:[#allocation5 + $0x1e30] sm:$0xff]
    %v1091 = vld [vmem:[#allocation5 + $0x1e38] sm:$0xff]
    %v1092 = vld [vmem:[#allocation5 + $0x1e40] sm:$0xff]
    %v1093 = vld [vmem:[#allocation5 + $0x1e48] sm:$0xff]
    %v1094 = vld [vmem:[#allocation5 + $0x1e50] sm:$0xff]
    %v1095 = vld [vmem:[#allocation5 + $0x1e58] sm:$0xff]
    %v1096 = vld [vmem:[#allocation5 + $0x1e60] sm:$0xff]
    %v1097 = vld [vmem:[#allocation5 + $0x1e68] sm:$0xff]
    %v1098 = vld [vmem:[#allocation5 + $0x1e70] sm:$0xff]
    %v1099 = vld [vmem:[#allocation5 + $0x1e78] sm:$0xff]
    %v1100 = vld [vmem:[#allocation5 + $0x1e80] sm:$0xff]
    %v1101 = vld [vmem:[#allocation5 + $0x1e88] sm:$0xff]
    %v1102 = vld [vmem:[#allocation5 + $0x1e90] sm:$0xff]
    %v1103 = vld [vmem:[#allocation5 + $0x1e98] sm:$0xff]
    %v1104 = vld [vmem:[#allocation5 + $0x1ea0] sm:$0xff]
    %v1105 = vld [vmem:[#allocation5 + $0x1ea8] sm:$0xff]
    %v1106 = vld [vmem:[#allocation5 + $0x1eb0] sm:$0xff]
    %v1107 = vld [vmem:[#allocation5 + $0x1eb8] sm:$0xff]
    %v1108 = vld [vmem:[#allocation5 + $0x1ec0] sm:$0xff]
    %v1109 = vld [vmem:[#allocation5 + $0x1ec8] sm:$0xff]
    %v1110 = vld [vmem:[#allocation5 + $0x1ed0] sm:$0xff]
    %v1111 = vld [vmem:[#allocation5 + $0x1ed8] sm:$0xff]
    %v1112 = vld [vmem:[#allocation5 + $0x1ee0] sm:$0xff]
    %v1113 = vld [vmem:[#allocation5 + $0x1ee8] sm:$0xff]
    %v1114 = vld [vmem:[#allocation5 + $0x1ef0] sm:$0xff]
    %v1115 = vld [vmem:[#allocation5 + $0x1ef8] sm:$0xff]
    %v1116 = vld [vmem:[#allocation5 + $0x1f00] sm:$0xff]
    %v1117 = vld [vmem:[#allocation5 + $0x1f08] sm:$0xff]
    %v1118 = vld [vmem:[#allocation5 + $0x1f10] sm:$0xff]
    %v1119 = vld [vmem:[#allocation5 + $0x1f18] sm:$0xff]
    %v1120 = vld [vmem:[#allocation5 + $0x1f20] sm:$0xff]
    %v1121 = vld [vmem:[#allocation5 + $0x1f28] sm:$0xff]
    %v1122 = vld [vmem:[#allocation5 + $0x1f30] sm:$0xff]
    %v1123 = vld [vmem:[#allocation5 + $0x1f38] sm:$0xff]
    %v1124 = vld [vmem:[#allocation5 + $0x1f40] sm:$0xff]
    %v1125 = vld [vmem:[#allocation5 + $0x1f48] sm:$0xff]
    %v1126 = vld [vmem:[#allocation5 + $0x1f50] sm:$0xff]
    %v1127 = vld [vmem:[#allocation5 + $0x1f58] sm:$0xff]
    %v1128 = vld [vmem:[#allocation5 + $0x1f60] sm:$0xff]
    %v1129 = vld [vmem:[#allocation5 + $0x1f68] sm:$0xff]
    %v1130 = vld [vmem:[#allocation5 + $0x1f70] sm:$0xff]
    %v1131 = vld [vmem:[#allocation5 + $0x1f78] sm:$0xff]
    %v1132 = vld [vmem:[#allocation5 + $0x1f80] sm:$0xff]
    %v1133 = vld [vmem:[#allocation5 + $0x1f88] sm:$0xff]
    %v1134 = vld [vmem:[#allocation5 + $0x1f90] sm:$0xff]
    %v1135 = vld [vmem:[#allocation5 + $0x1f98] sm:$0xff]
    %v1136 = vld [vmem:[#allocation5 + $0x1fa0] sm:$0xff]
    %v1137 = vld [vmem:[#allocation5 + $0x1fa8] sm:$0xff]
    %v1138 = vld [vmem:[#allocation5 + $0x1fb0] sm:$0xff]
    %v1139 = vld [vmem:[#allocation5 + $0x1fb8] sm:$0xff]
    %v1140 = vld [vmem:[#allocation5 + $0x1fc0] sm:$0xff]
    %v1141 = vld [vmem:[#allocation5 + $0x1fc8] sm:$0xff]
    %v1142 = vld [vmem:[#allocation5 + $0x1fd0] sm:$0xff]
    %v1143 = vld [vmem:[#allocation5 + $0x1fd8] sm:$0xff]
    %v1144 = vld [vmem:[#allocation5 + $0x1fe0] sm:$0xff]
    %v1145 = vld [vmem:[#allocation5 + $0x1fe8] sm:$0xff]
    %v1146 = vld [vmem:[#allocation5 + $0x1ff0] sm:$0xff]
    %v1147 = vld [vmem:[#allocation5 + $0x1ff8] sm:$0xff]
    %v1148 = vld [vmem:[#allocation7] sm:$0xff]
    %v1149 = vld [vmem:[%s3] sm:$0xff]
    %v1150 = vld [vmem:[%s3 + $0x8] sm:$0xff]
    %v1151 = vld [vmem:[%s3 + $0x10] sm:$0xff]
    %v1152 = vld [vmem:[%s3 + $0x18] sm:$0xff]
    %v1153 = vld [vmem:[%s3 + $0x20] sm:$0xff]
    %v1154 = vld [vmem:[%s3 + $0x28] sm:$0xff]
    %v1155 = vld [vmem:[%s3 + $0x30] sm:$0xff]
    %v1156 = vld [vmem:[%s3 + $0x38] sm:$0xff]
    %v1157 = vld [vmem:[%s3 + $0x40] sm:$0xff]
    %v1158 = vld [vmem:[%s3 + $0x48] sm:$0xff]
    %v1159 = vld [vmem:[%s3 + $0x50] sm:$0xff]
    %v1160 = vld [vmem:[%s3 + $0x58] sm:$0xff]
    %v1161 = vld [vmem:[%s3 + $0x60] sm:$0xff]
    %v1162 = vld [vmem:[%s3 + $0x68] sm:$0xff]
    %v1163 = vld [vmem:[%s3 + $0x70] sm:$0xff]
    %v1164 = vld [vmem:[%s3 + $0x78] sm:$0xff]
    %v1165 = vld [vmem:[%s3 + $0x80] sm:$0xff]
    %v1166 = vld [vmem:[%s3 + $0x88] sm:$0xff]
    %v1167 = vld [vmem:[%s3 + $0x90] sm:$0xff]
    %v1168 = vld [vmem:[%s3 + $0x98] sm:$0xff]
    %v1169 = vld [vmem:[%s3 + $0xa0] sm:$0xff]
    %v1170 = vld [vmem:[%s3 + $0xa8] sm:$0xff]
    %v1171 = vld [vmem:[%s3 + $0xb0] sm:$0xff]
    %v1172 = vld [vmem:[%s3 + $0xb8] sm:$0xff]
    %v1173 = vld [vmem:[%s3 + $0xc0] sm:$0xff]
    %v1174 = vld [vmem:[%s3 + $0xc8] sm:$0xff]
    %v1175 = vld [vmem:[%s3 + $0xd0] sm:$0xff]
    %v1176 = vld [vmem:[%s3 + $0xd8] sm:$0xff]
    %v1177 = vld [vmem:[%s3 + $0xe0] sm:$0xff]
    %v1178 = vld [vmem:[%s3 + $0xe8] sm:$0xff]
    %v1179 = vld [vmem:[%s3 + $0xf0] sm:$0xff]
    %v1180 = vld [vmem:[%s3 + $0xf8] sm:$0xff]
    %v1181 = vld [vmem:[%s3 + $0x100] sm:$0xff]
    %v1182 = vld [vmem:[%s3 + $0x108] sm:$0xff]
    %v1183 = vld [vmem:[%s3 + $0x110] sm:$0xff]
    %v1184 = vld [vmem:[%s3 + $0x118] sm:$0xff]
    %v1185 = vld [vmem:[%s3 + $0x120] sm:$0xff]
    %v1186 = vld [vmem:[%s3 + $0x128] sm:$0xff]
    %v1187 = vld [vmem:[%s3 + $0x130] sm:$0xff]
    %v1188 = vld [vmem:[%s3 + $0x138] sm:$0xff]
    %v1189 = vld [vmem:[%s3 + $0x140] sm:$0xff]
    %v1190 = vld [vmem:[%s3 + $0x148] sm:$0xff]
    %v1191 = vld [vmem:[%s3 + $0x150] sm:$0xff]
    %v1192 = vld [vmem:[%s3 + $0x158] sm:$0xff]
    %v1193 = vld [vmem:[%s3 + $0x160] sm:$0xff]
    %v1194 = vld [vmem:[%s3 + $0x168] sm:$0xff]
    %v1195 = vld [vmem:[%s3 + $0x170] sm:$0xff]
    %v1196 = vld [vmem:[%s3 + $0x178] sm:$0xff]
    %v1197 = vld [vmem:[%s3 + $0x180] sm:$0xff]
    %v1198 = vld [vmem:[%s3 + $0x188] sm:$0xff]
    %v1199 = vld [vmem:[%s3 + $0x190] sm:$0xff]
    %v1200 = vld [vmem:[%s3 + $0x198] sm:$0xff]
    %v1201 = vld [vmem:[%s3 + $0x1a0] sm:$0xff]
    %v1202 = vld [vmem:[%s3 + $0x1a8] sm:$0xff]
    %v1203 = vld [vmem:[%s3 + $0x1b0] sm:$0xff]
    %v1204 = vld [vmem:[%s3 + $0x1b8] sm:$0xff]
    %v1205 = vld [vmem:[%s3 + $0x1c0] sm:$0xff]
    %v1206 = vld [vmem:[%s3 + $0x1c8] sm:$0xff]
    %v1207 = vld [vmem:[%s3 + $0x1d0] sm:$0xff]
    %v1208 = vld [vmem:[%s3 + $0x1d8] sm:$0xff]
    %v1209 = vld [vmem:[%s3 + $0x1e0] sm:$0xff]
    %v1210 = vld [vmem:[%s3 + $0x1e8] sm:$0xff]
    %v1211 = vld [vmem:[%s3 + $0x1f0] sm:$0xff]
    %v1212 = vld [vmem:[%s3 + $0x1f8] sm:$0xff]
    %v1213 = vld [vmem:[%s3 + $0x200] sm:$0xff]
    %v1214 = vld [vmem:[%s3 + $0x208] sm:$0xff]
    %v1215 = vld [vmem:[%s3 + $0x210] sm:$0xff]
    %v1216 = vld [vmem:[%s3 + $0x218] sm:$0xff]
    %v1217 = vld [vmem:[%s3 + $0x220] sm:$0xff]
    %v1218 = vld [vmem:[%s3 + $0x228] sm:$0xff]
    %v1219 = vld [vmem:[%s3 + $0x230] sm:$0xff]
    %v1220 = vld [vmem:[%s3 + $0x238] sm:$0xff]
    %v1221 = vld [vmem:[%s3 + $0x240] sm:$0xff]
    %v1222 = vld [vmem:[%s3 + $0x248] sm:$0xff]
    %v1223 = vld [vmem:[%s3 + $0x250] sm:$0xff]
    %v1224 = vld [vmem:[%s3 + $0x258] sm:$0xff]
    %v1225 = vld [vmem:[%s3 + $0x260] sm:$0xff]
    %v1226 = vld [vmem:[%s3 + $0x268] sm:$0xff]
    %v1227 = vld [vmem:[%s3 + $0x270] sm:$0xff]
    %v1228 = vld [vmem:[%s3 + $0x278] sm:$0xff]
    %v1229 = vld [vmem:[%s3 + $0x280] sm:$0xff]
    %v1230 = vld [vmem:[%s3 + $0x288] sm:$0xff]
    %v1231 = vld [vmem:[%s3 + $0x290] sm:$0xff]
    %v1232 = vld [vmem:[%s3 + $0x298] sm:$0xff]
    %v1233 = vld [vmem:[%s3 + $0x2a0] sm:$0xff]
    %v1234 = vld [vmem:[%s3 + $0x2a8] sm:$0xff]
    %v1235 = vld [vmem:[%s3 + $0x2b0] sm:$0xff]
    %v1236 = vld [vmem:[%s3 + $0x2b8] sm:$0xff]
    %v1237 = vld [vmem:[%s3 + $0x2c0] sm:$0xff]
    %v1238 = vld [vmem:[%s3 + $0x2c8] sm:$0xff]
    %v1239 = vld [vmem:[%s3 + $0x2d0] sm:$0xff]
    %v1240 = vld [vmem:[%s3 + $0x2d8] sm:$0xff]
    %v1241 = vld [vmem:[%s3 + $0x2e0] sm:$0xff]
    %v1242 = vld [vmem:[%s3 + $0x2e8] sm:$0xff]
    %v1243 = vld [vmem:[%s3 + $0x2f0] sm:$0xff]
    %v1244 = vld [vmem:[%s3 + $0x2f8] sm:$0xff]
    %v1245 = vld [vmem:[%s3 + $0x300] sm:$0xff]
    %v1246 = vld [vmem:[%s3 + $0x308] sm:$0xff]
    %v1247 = vld [vmem:[%s3 + $0x310] sm:$0xff]
    %v1248 = vld [vmem:[%s3 + $0x318] sm:$0xff]
    %v1249 = vld [vmem:[%s3 + $0x320] sm:$0xff]
    %v1250 = vld [vmem:[%s3 + $0x328] sm:$0xff]
    %v1251 = vld [vmem:[%s3 + $0x330] sm:$0xff]
    %v1252 = vld [vmem:[%s3 + $0x338] sm:$0xff]
    %v1253 = vld [vmem:[%s3 + $0x340] sm:$0xff]
    %v1254 = vld [vmem:[%s3 + $0x348] sm:$0xff]
    %v1255 = vld [vmem:[%s3 + $0x350] sm:$0xff]
    %v1256 = vld [vmem:[%s3 + $0x358] sm:$0xff]
    %v1257 = vld [vmem:[%s3 + $0x360] sm:$0xff]
    %v1258 = vld [vmem:[%s3 + $0x368] sm:$0xff]
    %v1259 = vld [vmem:[%s3 + $0x370] sm:$0xff]
    %v1260 = vld [vmem:[%s3 + $0x378] sm:$0xff]
    %v1261 = vld [vmem:[%s3 + $0x380] sm:$0xff]
    %v1262 = vld [vmem:[%s3 + $0x388] sm:$0xff]
    %v1263 = vld [vmem:[%s3 + $0x390] sm:$0xff]
    %v1264 = vld [vmem:[%s3 + $0x398] sm:$0xff]
    %v1265 = vld [vmem:[%s3 + $0x3a0] sm:$0xff]
    %v1266 = vld [vmem:[%s3 + $0x3a8] sm:$0xff]
    %v1267 = vld [vmem:[%s3 + $0x3b0] sm:$0xff]
    %v1268 = vld [vmem:[%s3 + $0x3b8] sm:$0xff]
    %v1269 = vld [vmem:[%s3 + $0x3c0] sm:$0xff]
    %v1270 = vld [vmem:[%s3 + $0x3c8] sm:$0xff]
    %v1271 = vld [vmem:[%s3 + $0x3d0] sm:$0xff]
    %v1272 = vld [vmem:[%s3 + $0x3d8] sm:$0xff]
    %v1273 = vld [vmem:[%s3 + $0x3e0] sm:$0xff]
    %v1274 = vld [vmem:[%s3 + $0x3e8] sm:$0xff]
    %v1275 = vld [vmem:[%s3 + $0x3f0] sm:$0xff]
    %v1276 = vld [vmem:[%s3 + $0x3f8] sm:$0xff]
    %v1277 = vld [vmem:[#allocation8] sm:$0xff]
    %v1278 = vld [vmem:[#allocation8 + $0x8] sm:$0xff]
    %v1279 = vld [vmem:[#allocation8 + $0x10] sm:$0xff]
    %v1280 = vld [vmem:[#allocation8 + $0x18] sm:$0xff]
    %v1281 = vld [vmem:[#allocation10] sm:$0x1]
    %v1282 = vld [vmem:[#allocation11] sm:$0x1]
    %v1283 = vld [vmem:[#allocation13] sm:$0xff]
    %v1284 = vmax.f32 %v1283, 0.0
    loop: start=0, step=1, limit=7
    $region62: #{tpu_custom_call.1} parent=1 // loop_pre_header
      _
    $region63: #{tpu_custom_call.1} parent=1 // loop_header
      %s1286 = sphi 0, %s1290
      %p1287 = scmp.ge.s32.totalorder %s1286, 7
      %v1291 = vphi %v116, %v6295
      %v1292 = vphi %v117, %v6296
      %v1293 = vphi %v118, %v6297
      %v1294 = vphi %v119, %v6298
      %v1295 = vphi %v120, %v6299
      %v1296 = vphi %v121, %v6300
      %v1297 = vphi %v122, %v6301
      %v1298 = vphi %v123, %v6302
      %v1299 = vphi %v116, %v5111
      %v1300 = vphi %v117, %v5112
      %v1301 = vphi %v118, %v5113
      %v1302 = vphi %v119, %v5114
      %v1303 = vphi %v120, %v5115
      %v1304 = vphi %v121, %v5116
      %v1305 = vphi %v122, %v5117
      %v1306 = vphi %v123, %v5118
    $region64: #{tpu_custom_call.1} parent=1 // loop_header_branch
      %1289 = sbr.rel (%p1287) target = $region68
    $region65: #{tpu_custom_call.1} parent=1 // loop_body
      %v1308 = vlaneseq
      %v1309 = vshrl.u32 %v1308, 7
      %v1310 = vsub.s32 0, %v1309
      %v1311 = vrot.slane %v1148, %v1310
      %v1312 = vlaneseq
      %v1313 = vshrl.u32 %v1312, 7
      %v1314 = vsub.s32 1, %v1313
      %v1315 = vrot.slane %v1148, %v1314
      %v1316 = vlaneseq
      %v1317 = vshrl.u32 %v1316, 7
      %v1318 = vsub.s32 2, %v1317
      %v1319 = vrot.slane %v1148, %v1318
      %v1320 = vlaneseq
      %v1321 = vshrl.u32 %v1320, 7
      %v1322 = vsub.s32 3, %v1321
      %v1323 = vrot.slane %v1148, %v1322
      %v1324 = vlaneseq
      %v1325 = vshrl.u32 %v1324, 7
      %v1326 = vsub.s32 4, %v1325
      %v1327 = vrot.slane %v1148, %v1326
      %v1328 = vlaneseq
      %v1329 = vshrl.u32 %v1328, 7
      %v1330 = vsub.s32 5, %v1329
      %v1331 = vrot.slane %v1148, %v1330
      %v1332 = vlaneseq
      %v1333 = vshrl.u32 %v1332, 7
      %v1334 = vsub.s32 6, %v1333
      %v1335 = vrot.slane %v1148, %v1334
      %v1336 = vlaneseq
      %v1337 = vshrl.u32 %v1336, 7
      %v1338 = vsub.s32 7, %v1337
      %v1339 = vrot.slane %v1148, %v1338
      %1348 = vmatprep.subr.mxu0 %v125
      %1349 = vmatpush1.msra.mxu0 %v124
      %1350 = vmatprep.subr.mxu0 %v133
      %1351 = vmatpush1.msra.mxu0 %v132
      %1352 = vmatprep.subr.mxu0 %v141
      %1353 = vmatpush1.msra.mxu0 %v140
      %1354 = vmatprep.subr.mxu0 %v149
      %1355 = vmatpush1.msra.mxu0 %v148
      %1356 = vmatprep.subr.mxu0 %v157
      %1357 = vmatpush1.msra.mxu0 %v156
      %1358 = vmatprep.subr.mxu0 %v165
      %1359 = vmatpush1.msra.mxu0 %v164
      %1360 = vmatprep.subr.mxu0 %v173
      %1361 = vmatpush1.msra.mxu0 %v172
      %1362 = vmatprep.subr.mxu0 %v181
      %1363 = vmatpush1.msra.mxu0 %v180
      %1364 = vmatprep.subr.mxu0 %v189
      %1365 = vmatpush1.msra.mxu0 %v188
      %1366 = vmatprep.subr.mxu0 %v197
      %1367 = vmatpush1.msra.mxu0 %v196
      %1368 = vmatprep.subr.mxu0 %v205
      %1369 = vmatpush1.msra.mxu0 %v204
      %1370 = vmatprep.subr.mxu0 %v213
      %1371 = vmatpush1.msra.mxu0 %v212
      %1372 = vmatprep.subr.mxu0 %v221
      %1373 = vmatpush1.msra.mxu0 %v220
      %1374 = vmatprep.subr.mxu0 %v229
      %1375 = vmatpush1.msra.mxu0 %v228
      %1376 = vmatprep.subr.mxu0 %v237
      %1377 = vmatpush1.msra.mxu0 %v236
      %1378 = vmatprep.subr.mxu0 %v245
      %1379 = vmatpush1.msra.mxu0 %v244
      %1380 = vmatprep.subr.mxu0 %v253
      %1381 = vmatpush1.msra.mxu0 %v252
      %1382 = vmatprep.subr.mxu0 %v261
      %1383 = vmatpush1.msra.mxu0 %v260
      %1384 = vmatprep.subr.mxu0 %v269
      %1385 = vmatpush1.msra.mxu0 %v268
      %1386 = vmatprep.subr.mxu0 %v277
      %1387 = vmatpush1.msra.mxu0 %v276
      %1388 = vmatprep.subr.mxu0 %v285
      %1389 = vmatpush1.msra.mxu0 %v284
      %1390 = vmatprep.subr.mxu0 %v293
      %1391 = vmatpush1.msra.mxu0 %v292
      %1392 = vmatprep.subr.mxu0 %v301
      %1393 = vmatpush1.msra.mxu0 %v300
      %1394 = vmatprep.subr.mxu0 %v309
      %1395 = vmatpush1.msra.mxu0 %v308
      %1396 = vmatprep.subr.mxu0 %v317
      %1397 = vmatpush1.msra.mxu0 %v316
      %1398 = vmatprep.subr.mxu0 %v325
      %1399 = vmatpush1.msra.mxu0 %v324
      %1400 = vmatprep.subr.mxu0 %v333
      %1401 = vmatpush1.msra.mxu0 %v332
      %1402 = vmatprep.subr.mxu0 %v341
      %1403 = vmatpush1.msra.mxu0 %v340
      %1404 = vmatprep.subr.mxu0 %v349
      %1405 = vmatpush1.msra.mxu0 %v348
      %1406 = vmatprep.subr.mxu0 %v357
      %1407 = vmatpush1.msra.mxu0 %v356
      %1408 = vmatprep.subr.mxu0 %v365
      %1409 = vmatpush1.msra.mxu0 %v364
      %1410 = vmatprep.subr.mxu0 %v373
      %1411 = vmatpush1.msra.mxu0 %v372
      %1412 = vmatprep.mubr.f32.mxu0 %v1300
      %1413 = vmatmul.mubr.f32.gmra.mrb[0].mxu0 %v1299
      %v1414 = vpop.f32.mrb[0].mxu0
      %v1415 = vadd.f32 %v1311, %v1414
      %v1416 = vpop.f32.mrb[0].mxu0
      %v1417 = vadd.f32 %v1315, %v1416
      %1418 = vdwg.mxu0
      %1419 = vmatprep.subr.mxu0 %v381
      %1420 = vmatpush1.msra.mxu0 %v380
      %1421 = vmatprep.subr.mxu0 %v389
      %1422 = vmatpush1.msra.mxu0 %v388
      %1423 = vmatprep.subr.mxu0 %v397
      %1424 = vmatpush1.msra.mxu0 %v396
      %1425 = vmatprep.subr.mxu0 %v405
      %1426 = vmatpush1.msra.mxu0 %v404
      %1427 = vmatprep.subr.mxu0 %v413
      %1428 = vmatpush1.msra.mxu0 %v412
      %1429 = vmatprep.subr.mxu0 %v421
      %1430 = vmatpush1.msra.mxu0 %v420
      %1431 = vmatprep.subr.mxu0 %v429
      %1432 = vmatpush1.msra.mxu0 %v428
      %1433 = vmatprep.subr.mxu0 %v437
      %1434 = vmatpush1.msra.mxu0 %v436
      %1435 = vmatprep.subr.mxu0 %v445
      %1436 = vmatpush1.msra.mxu0 %v444
      %1437 = vmatprep.subr.mxu0 %v453
      %1438 = vmatpush1.msra.mxu0 %v452
      %1439 = vmatprep.subr.mxu0 %v461
      %1440 = vmatpush1.msra.mxu0 %v460
      %1441 = vmatprep.subr.mxu0 %v469
      %1442 = vmatpush1.msra.mxu0 %v468
      %1443 = vmatprep.subr.mxu0 %v477
      %1444 = vmatpush1.msra.mxu0 %v476
      %1445 = vmatprep.subr.mxu0 %v485
      %1446 = vmatpush1.msra.mxu0 %v484
      %1447 = vmatprep.subr.mxu0 %v493
      %1448 = vmatpush1.msra.mxu0 %v492
      %1449 = vmatprep.subr.mxu0 %v501
      %1450 = vmatpush1.msra.mxu0 %v500
      %1451 = vmatprep.subr.mxu0 %v509
      %1452 = vmatpush1.msra.mxu0 %v508
      %1453 = vmatprep.subr.mxu0 %v517
      %1454 = vmatpush1.msra.mxu0 %v516
      %1455 = vmatprep.subr.mxu0 %v525
      %1456 = vmatpush1.msra.mxu0 %v524
      %1457 = vmatprep.subr.mxu0 %v533
      %1458 = vmatpush1.msra.mxu0 %v532
      %1459 = vmatprep.subr.mxu0 %v541
      %1460 = vmatpush1.msra.mxu0 %v540
      %1461 = vmatprep.subr.mxu0 %v549
      %1462 = vmatpush1.msra.mxu0 %v548
      %1463 = vmatprep.subr.mxu0 %v557
      %1464 = vmatpush1.msra.mxu0 %v556
      %1465 = vmatprep.subr.mxu0 %v565
      %1466 = vmatpush1.msra.mxu0 %v564
      %1467 = vmatprep.subr.mxu0 %v573
      %1468 = vmatpush1.msra.mxu0 %v572
      %1469 = vmatprep.subr.mxu0 %v581
      %1470 = vmatpush1.msra.mxu0 %v580
      %1471 = vmatprep.subr.mxu0 %v589
      %1472 = vmatpush1.msra.mxu0 %v588
      %1473 = vmatprep.subr.mxu0 %v597
      %1474 = vmatpush1.msra.mxu0 %v596
      %1475 = vmatprep.subr.mxu0 %v605
      %1476 = vmatpush1.msra.mxu0 %v604
      %1477 = vmatprep.subr.mxu0 %v613
      %1478 = vmatpush1.msra.mxu0 %v612
      %1479 = vmatprep.subr.mxu0 %v621
      %1480 = vmatpush1.msra.mxu0 %v620
      %1481 = vmatprep.subr.mxu0 %v629
      %1482 = vmatpush1.msra.mxu0 %v628
      %1483 = vmatprep.mubr.f32.mxu0 %v1302
      %1484 = vmatmul.mubr.f32.gmra.mrb[0].mxu0 %v1301
      %v1485 = vpop.f32.mrb[0].mxu0
      %v1486 = vadd.f32 %v1415, %v1485
      %v1487 = vpop.f32.mrb[0].mxu0
      %v1488 = vadd.f32 %v1417, %v1487
      %1489 = vdwg.mxu0
      %1490 = vmatprep.subr.mxu0 %v637
      %1491 = vmatpush1.msra.mxu0 %v636
      %1492 = vmatprep.subr.mxu0 %v645
      %1493 = vmatpush1.msra.mxu0 %v644
      %1494 = vmatprep.subr.mxu0 %v653
      %1495 = vmatpush1.msra.mxu0 %v652
      %1496 = vmatprep.subr.mxu0 %v661
      %1497 = vmatpush1.msra.mxu0 %v660
      %1498 = vmatprep.subr.mxu0 %v669
      %1499 = vmatpush1.msra.mxu0 %v668
      %1500 = vmatprep.subr.mxu0 %v677
      %1501 = vmatpush1.msra.mxu0 %v676
      %1502 = vmatprep.subr.mxu0 %v685
      %1503 = vmatpush1.msra.mxu0 %v684
      %1504 = vmatprep.subr.mxu0 %v693
      %1505 = vmatpush1.msra.mxu0 %v692
      %1506 = vmatprep.subr.mxu0 %v701
      %1507 = vmatpush1.msra.mxu0 %v700
      %1508 = vmatprep.subr.mxu0 %v709
      %1509 = vmatpush1.msra.mxu0 %v708
      %1510 = vmatprep.subr.mxu0 %v717
      %1511 = vmatpush1.msra.mxu0 %v716
      %1512 = vmatprep.subr.mxu0 %v725
      %1513 = vmatpush1.msra.mxu0 %v724
      %1514 = vmatprep.subr.mxu0 %v733
      %1515 = vmatpush1.msra.mxu0 %v732
      %1516 = vmatprep.subr.mxu0 %v741
      %1517 = vmatpush1.msra.mxu0 %v740
      %1518 = vmatprep.subr.mxu0 %v749
      %1519 = vmatpush1.msra.mxu0 %v748
      %1520 = vmatprep.subr.mxu0 %v757
      %1521 = vmatpush1.msra.mxu0 %v756
      %1522 = vmatprep.subr.mxu0 %v765
      %1523 = vmatpush1.msra.mxu0 %v764
      %1524 = vmatprep.subr.mxu0 %v773
      %1525 = vmatpush1.msra.mxu0 %v772
      %1526 = vmatprep.subr.mxu0 %v781
      %1527 = vmatpush1.msra.mxu0 %v780
      %1528 = vmatprep.subr.mxu0 %v789
      %1529 = vmatpush1.msra.mxu0 %v788
      %1530 = vmatprep.subr.mxu0 %v797
      %1531 = vmatpush1.msra.mxu0 %v796
      %1532 = vmatprep.subr.mxu0 %v805
      %1533 = vmatpush1.msra.mxu0 %v804
      %1534 = vmatprep.subr.mxu0 %v813
      %1535 = vmatpush1.msra.mxu0 %v812
      %1536 = vmatprep.subr.mxu0 %v821
      %1537 = vmatpush1.msra.mxu0 %v820
      %1538 = vmatprep.subr.mxu0 %v829
      %1539 = vmatpush1.msra.mxu0 %v828
      %1540 = vmatprep.subr.mxu0 %v837
      %1541 = vmatpush1.msra.mxu0 %v836
      %1542 = vmatprep.subr.mxu0 %v845
      %1543 = vmatpush1.msra.mxu0 %v844
      %1544 = vmatprep.subr.mxu0 %v853
      %1545 = vmatpush1.msra.mxu0 %v852
      %1546 = vmatprep.subr.mxu0 %v861
      %1547 = vmatpush1.msra.mxu0 %v860
      %1548 = vmatprep.subr.mxu0 %v869
      %1549 = vmatpush1.msra.mxu0 %v868
      %1550 = vmatprep.subr.mxu0 %v877
      %1551 = vmatpush1.msra.mxu0 %v876
      %1552 = vmatprep.subr.mxu0 %v885
      %1553 = vmatpush1.msra.mxu0 %v884
      %1554 = vmatprep.mubr.f32.mxu0 %v1304
      %1555 = vmatmul.mubr.f32.gmra.mrb[0].mxu0 %v1303
      %v1556 = vpop.f32.mrb[0].mxu0
      %v1557 = vadd.f32 %v1486, %v1556
      %v1558 = vpop.f32.mrb[0].mxu0
      %v1559 = vadd.f32 %v1488, %v1558
      %1560 = vdwg.mxu0
      %1561 = vmatprep.subr.mxu0 %v893
      %1562 = vmatpush1.msra.mxu0 %v892
      %1563 = vmatprep.subr.mxu0 %v901
      %1564 = vmatpush1.msra.mxu0 %v900
      %1565 = vmatprep.subr.mxu0 %v909
      %1566 = vmatpush1.msra.mxu0 %v908
      %1567 = vmatprep.subr.mxu0 %v917
      %1568 = vmatpush1.msra.mxu0 %v916
      %1569 = vmatprep.subr.mxu0 %v925
      %1570 = vmatpush1.msra.mxu0 %v924
      %1571 = vmatprep.subr.mxu0 %v933
      %1572 = vmatpush1.msra.mxu0 %v932
      %1573 = vmatprep.subr.mxu0 %v941
      %1574 = vmatpush1.msra.mxu0 %v940
      %1575 = vmatprep.subr.mxu0 %v949
      %1576 = vmatpush1.msra.mxu0 %v948
      %1577 = vmatprep.subr.mxu0 %v957
      %1578 = vmatpush1.msra.mxu0 %v956
      %1579 = vmatprep.subr.mxu0 %v965
      %1580 = vmatpush1.msra.mxu0 %v964
      %1581 = vmatprep.subr.mxu0 %v973
      %1582 = vmatpush1.msra.mxu0 %v972
      %1583 = vmatprep.subr.mxu0 %v981
      %1584 = vmatpush1.msra.mxu0 %v980
      %1585 = vmatprep.subr.mxu0 %v989
      %1586 = vmatpush1.msra.mxu0 %v988
      %1587 = vmatprep.subr.mxu0 %v997
      %1588 = vmatpush1.msra.mxu0 %v996
      %1589 = vmatprep.subr.mxu0 %v1005
      %1590 = vmatpush1.msra.mxu0 %v1004
      %1591 = vmatprep.subr.mxu0 %v1013
      %1592 = vmatpush1.msra.mxu0 %v1012
      %1593 = vmatprep.subr.mxu0 %v1021
      %1594 = vmatpush1.msra.mxu0 %v1020
      %1595 = vmatprep.subr.mxu0 %v1029
      %1596 = vmatpush1.msra.mxu0 %v1028
      %1597 = vmatprep.subr.mxu0 %v1037
      %1598 = vmatpush1.msra.mxu0 %v1036
      %1599 = vmatprep.subr.mxu0 %v1045
      %1600 = vmatpush1.msra.mxu0 %v1044
      %1601 = vmatprep.subr.mxu0 %v1053
      %1602 = vmatpush1.msra.mxu0 %v1052
      %1603 = vmatprep.subr.mxu0 %v1061
      %1604 = vmatpush1.msra.mxu0 %v1060
      %1605 = vmatprep.subr.mxu0 %v1069
      %1606 = vmatpush1.msra.mxu0 %v1068
      %1607 = vmatprep.subr.mxu0 %v1077
      %1608 = vmatpush1.msra.mxu0 %v1076
      %1609 = vmatprep.subr.mxu0 %v1085
      %1610 = vmatpush1.msra.mxu0 %v1084
      %1611 = vmatprep.subr.mxu0 %v1093
      %1612 = vmatpush1.msra.mxu0 %v1092
      %1613 = vmatprep.subr.mxu0 %v1101
      %1614 = vmatpush1.msra.mxu0 %v1100
      %1615 = vmatprep.subr.mxu0 %v1109
      %1616 = vmatpush1.msra.mxu0 %v1108
      %1617 = vmatprep.subr.mxu0 %v1117
      %1618 = vmatpush1.msra.mxu0 %v1116
      %1619 = vmatprep.subr.mxu0 %v1125
      %1620 = vmatpush1.msra.mxu0 %v1124
      %1621 = vmatprep.subr.mxu0 %v1133
      %1622 = vmatpush1.msra.mxu0 %v1132
      %1623 = vmatprep.subr.mxu0 %v1141
      %1624 = vmatpush1.msra.mxu0 %v1140
      %1625 = vmatprep.mubr.f32.mxu0 %v1306
      %1626 = vmatmul.mubr.f32.gmra.mrb[0].mxu0 %v1305
      %v1627 = vpop.f32.mrb[0].mxu0
      %v1628 = vadd.f32 %v1557, %v1627
      %v1629 = vpop.f32.mrb[0].mxu0
      %v1630 = vadd.f32 %v1559, %v1629
      %1631 = vdwg.mxu0
      %1632 = vmatprep.subr.mxu0 %v127
      %1633 = vmatpush1.msra.mxu0 %v126
      %1634 = vmatprep.subr.mxu0 %v135
      %1635 = vmatpush1.msra.mxu0 %v134
      %1636 = vmatprep.subr.mxu0 %v143
      %1637 = vmatpush1.msra.mxu0 %v142
      %1638 = vmatprep.subr.mxu0 %v151
      %1639 = vmatpush1.msra.mxu0 %v150
      %1640 = vmatprep.subr.mxu0 %v159
      %1641 = vmatpush1.msra.mxu0 %v158
      %1642 = vmatprep.subr.mxu0 %v167
      %1643 = vmatpush1.msra.mxu0 %v166
      %1644 = vmatprep.subr.mxu0 %v175
      %1645 = vmatpush1.msra.mxu0 %v174
      %1646 = vmatprep.subr.mxu0 %v183
      %1647 = vmatpush1.msra.mxu0 %v182
      %1648 = vmatprep.subr.mxu0 %v191
      %1649 = vmatpush1.msra.mxu0 %v190
      %1650 = vmatprep.subr.mxu0 %v199
      %1651 = vmatpush1.msra.mxu0 %v198
      %1652 = vmatprep.subr.mxu0 %v207
      %1653 = vmatpush1.msra.mxu0 %v206
      %1654 = vmatprep.subr.mxu0 %v215
      %1655 = vmatpush1.msra.mxu0 %v214
      %1656 = vmatprep.subr.mxu0 %v223
      %1657 = vmatpush1.msra.mxu0 %v222
      %1658 = vmatprep.subr.mxu0 %v231
      %1659 = vmatpush1.msra.mxu0 %v230
      %1660 = vmatprep.subr.mxu0 %v239
      %1661 = vmatpush1.msra.mxu0 %v238
      %1662 = vmatprep.subr.mxu0 %v247
      %1663 = vmatpush1.msra.mxu0 %v246
      %1664 = vmatprep.subr.mxu0 %v255
      %1665 = vmatpush1.msra.mxu0 %v254
      %1666 = vmatprep.subr.mxu0 %v263
      %1667 = vmatpush1.msra.mxu0 %v262
      %1668 = vmatprep.subr.mxu0 %v271
      %1669 = vmatpush1.msra.mxu0 %v270
      %1670 = vmatprep.subr.mxu0 %v279
      %1671 = vmatpush1.msra.mxu0 %v278
      %1672 = vmatprep.subr.mxu0 %v287
      %1673 = vmatpush1.msra.mxu0 %v286
      %1674 = vmatprep.subr.mxu0 %v295
      %1675 = vmatpush1.msra.mxu0 %v294
      %1676 = vmatprep.subr.mxu0 %v303
      %1677 = vmatpush1.msra.mxu0 %v302
      %1678 = vmatprep.subr.mxu0 %v311
      %1679 = vmatpush1.msra.mxu0 %v310
      %1680 = vmatprep.subr.mxu0 %v319
      %1681 = vmatpush1.msra.mxu0 %v318
      %1682 = vmatprep.subr.mxu0 %v327
      %1683 = vmatpush1.msra.mxu0 %v326
      %1684 = vmatprep.subr.mxu0 %v335
      %1685 = vmatpush1.msra.mxu0 %v334
      %1686 = vmatprep.subr.mxu0 %v343
      %1687 = vmatpush1.msra.mxu0 %v342
      %1688 = vmatprep.subr.mxu0 %v351
      %1689 = vmatpush1.msra.mxu0 %v350
      %1690 = vmatprep.subr.mxu0 %v359
      %1691 = vmatpush1.msra.mxu0 %v358
      %1692 = vmatprep.subr.mxu0 %v367
      %1693 = vmatpush1.msra.mxu0 %v366
      %1694 = vmatprep.subr.mxu0 %v375
      %1695 = vmatpush1.msra.mxu0 %v374
      %1696 = vmatprep.mubr.f32.mxu0 %v1300
      %1697 = vmatmul.mubr.f32.gmra.mrb[0].mxu0 %v1299
      %v1698 = vpop.f32.mrb[0].mxu0
      %v1699 = vadd.f32 %v1319, %v1698
      %v1700 = vpop.f32.mrb[0].mxu0
      %v1701 = vadd.f32 %v1323, %v1700
      %1702 = vdwg.mxu0
      %1703 = vmatprep.subr.mxu0 %v383
      %1704 = vmatpush1.msra.mxu0 %v382
      %1705 = vmatprep.subr.mxu0 %v391
      %1706 = vmatpush1.msra.mxu0 %v390
      %1707 = vmatprep.subr.mxu0 %v399
      %1708 = vmatpush1.msra.mxu0 %v398
      %1709 = vmatprep.subr.mxu0 %v407
      %1710 = vmatpush1.msra.mxu0 %v406
      %1711 = vmatprep.subr.mxu0 %v415
      %1712 = vmatpush1.msra.mxu0 %v414
      %1713 = vmatprep.subr.mxu0 %v423
      %1714 = vmatpush1.msra.mxu0 %v422
      %1715 = vmatprep.subr.mxu0 %v431
      %1716 = vmatpush1.msra.mxu0 %v430
      %1717 = vmatprep.subr.mxu0 %v439
      %1718 = vmatpush1.msra.mxu0 %v438
      %1719 = vmatprep.subr.mxu0 %v447
      %1720 = vmatpush1.msra.mxu0 %v446
      %1721 = vmatprep.subr.mxu0 %v455
      %1722 = vmatpush1.msra.mxu0 %v454
      %1723 = vmatprep.subr.mxu0 %v463
      %1724 = vmatpush1.msra.mxu0 %v462
      %1725 = vmatprep.subr.mxu0 %v471
      %1726 = vmatpush1.msra.mxu0 %v470
      %1727 = vmatprep.subr.mxu0 %v479
      %1728 = vmatpush1.msra.mxu0 %v478
      %1729 = vmatprep.subr.mxu0 %v487
      %1730 = vmatpush1.msra.mxu0 %v486
      %1731 = vmatprep.subr.mxu0 %v495
      %1732 = vmatpush1.msra.mxu0 %v494
      %1733 = vmatprep.subr.mxu0 %v503
      %1734 = vmatpush1.msra.mxu0 %v502
      %1735 = vmatprep.subr.mxu0 %v511
      %1736 = vmatpush1.msra.mxu0 %v510
      %1737 = vmatprep.subr.mxu0 %v519
      %1738 = vmatpush1.msra.mxu0 %v518
      %1739 = vmatprep.subr.mxu0 %v527
      %1740 = vmatpush1.msra.mxu0 %v526
      %1741 = vmatprep.subr.mxu0 %v535
      %1742 = vmatpush1.msra.mxu0 %v534
      %1743 = vmatprep.subr.mxu0 %v543
      %1744 = vmatpush1.msra.mxu0 %v542
      %1745 = vmatprep.subr.mxu0 %v551
      %1746 = vmatpush1.msra.mxu0 %v550
      %1747 = vmatprep.subr.mxu0 %v559
      %1748 = vmatpush1.msra.mxu0 %v558
      %1749 = vmatprep.subr.mxu0 %v567
      %1750 = vmatpush1.msra.mxu0 %v566
      %1751 = vmatprep.subr.mxu0 %v575
      %1752 = vmatpush1.msra.mxu0 %v574
      %1753 = vmatprep.subr.mxu0 %v583
      %1754 = vmatpush1.msra.mxu0 %v582
      %1755 = vmatprep.subr.mxu0 %v591
      %1756 = vmatpush1.msra.mxu0 %v590
      %1757 = vmatprep.subr.mxu0 %v599
      %1758 = vmatpush1.msra.mxu0 %v598
      %1759 = vmatprep.subr.mxu0 %v607
      %1760 = vmatpush1.msra.mxu0 %v606
      %1761 = vmatprep.subr.mxu0 %v615
      %1762 = vmatpush1.msra.mxu0 %v614
      %1763 = vmatprep.subr.mxu0 %v623
      %1764 = vmatpush1.msra.mxu0 %v622
      %1765 = vmatprep.subr.mxu0 %v631
      %1766 = vmatpush1.msra.mxu0 %v630
      %1767 = vmatprep.mubr.f32.mxu0 %v1302
      %1768 = vmatmul.mubr.f32.gmra.mrb[0].mxu0 %v1301
      %v1769 = vpop.f32.mrb[0].mxu0
      %v1770 = vadd.f32 %v1699, %v1769
      %v1771 = vpop.f32.mrb[0].mxu0
      %v1772 = vadd.f32 %v1701, %v1771
      %1773 = vdwg.mxu0
      %1774 = vmatprep.subr.mxu0 %v639
      %1775 = vmatpush1.msra.mxu0 %v638
      %1776 = vmatprep.subr.mxu0 %v647
      %1777 = vmatpush1.msra.mxu0 %v646
      %1778 = vmatprep.subr.mxu0 %v655
      %1779 = vmatpush1.msra.mxu0 %v654
      %1780 = vmatprep.subr.mxu0 %v663
      %1781 = vmatpush1.msra.mxu0 %v662
      %1782 = vmatprep.subr.mxu0 %v671
      %1783 = vmatpush1.msra.mxu0 %v670
      %1784 = vmatprep.subr.mxu0 %v679
      %1785 = vmatpush1.msra.mxu0 %v678
      %1786 = vmatprep.subr.mxu0 %v687
      %1787 = vmatpush1.msra.mxu0 %v686
      %1788 = vmatprep.subr.mxu0 %v695
      %1789 = vmatpush1.msra.mxu0 %v694
      %1790 = vmatprep.subr.mxu0 %v703
      %1791 = vmatpush1.msra.mxu0 %v702
      %1792 = vmatprep.subr.mxu0 %v711
      %1793 = vmatpush1.msra.mxu0 %v710
      %1794 = vmatprep.subr.mxu0 %v719
      %1795 = vmatpush1.msra.mxu0 %v718
      %1796 = vmatprep.subr.mxu0 %v727
      %1797 = vmatpush1.msra.mxu0 %v726
      %1798 = vmatprep.subr.mxu0 %v735
      %1799 = vmatpush1.msra.mxu0 %v734
      %1800 = vmatprep.subr.mxu0 %v743
      %1801 = vmatpush1.msra.mxu0 %v742
      %1802 = vmatprep.subr.mxu0 %v751
      %1803 = vmatpush1.msra.mxu0 %v750
      %1804 = vmatprep.subr.mxu0 %v759
      %1805 = vmatpush1.msra.mxu0 %v758
      %1806 = vmatprep.subr.mxu0 %v767
      %1807 = vmatpush1.msra.mxu0 %v766
      %1808 = vmatprep.subr.mxu0 %v775
      %1809 = vmatpush1.msra.mxu0 %v774
      %1810 = vmatprep.subr.mxu0 %v783
      %1811 = vmatpush1.msra.mxu0 %v782
      %1812 = vmatprep.subr.mxu0 %v791
      %1813 = vmatpush1.msra.mxu0 %v790
      %1814 = vmatprep.subr.mxu0 %v799
      %1815 = vmatpush1.msra.mxu0 %v798
      %1816 = vmatprep.subr.mxu0 %v807
      %1817 = vmatpush1.msra.mxu0 %v806
      %1818 = vmatprep.subr.mxu0 %v815
      %1819 = vmatpush1.msra.mxu0 %v814
      %1820 = vmatprep.subr.mxu0 %v823
      %1821 = vmatpush1.msra.mxu0 %v822
      %1822 = vmatprep.subr.mxu0 %v831
      %1823 = vmatpush1.msra.mxu0 %v830
      %1824 = vmatprep.subr.mxu0 %v839
      %1825 = vmatpush1.msra.mxu0 %v838
      %1826 = vmatprep.subr.mxu0 %v847
      %1827 = vmatpush1.msra.mxu0 %v846
      %1828 = vmatprep.subr.mxu0 %v855
      %1829 = vmatpush1.msra.mxu0 %v854
      %1830 = vmatprep.subr.mxu0 %v863
      %1831 = vmatpush1.msra.mxu0 %v862
      %1832 = vmatprep.subr.mxu0 %v871
      %1833 = vmatpush1.msra.mxu0 %v870
      %1834 = vmatprep.subr.mxu0 %v879
      %1835 = vmatpush1.msra.mxu0 %v878
      %1836 = vmatprep.subr.mxu0 %v887
      %1837 = vmatpush1.msra.mxu0 %v886
      %1838 = vmatprep.mubr.f32.mxu0 %v1304
      %1839 = vmatmul.mubr.f32.gmra.mrb[0].mxu0 %v1303
      %v1840 = vpop.f32.mrb[0].mxu0
      %v1841 = vadd.f32 %v1770, %v1840
      %v1842 = vpop.f32.mrb[0].mxu0
      %v1843 = vadd.f32 %v1772, %v1842
      %1844 = vdwg.mxu0
      %1845 = vmatprep.subr.mxu0 %v895
      %1846 = vmatpush1.msra.mxu0 %v894
      %1847 = vmatprep.subr.mxu0 %v903
      %1848 = vmatpush1.msra.mxu0 %v902
      %1849 = vmatprep.subr.mxu0 %v911
      %1850 = vmatpush1.msra.mxu0 %v910
      %1851 = vmatprep.subr.mxu0 %v919
      %1852 = vmatpush1.msra.mxu0 %v918
      %1853 = vmatprep.subr.mxu0 %v927
      %1854 = vmatpush1.msra.mxu0 %v926
      %1855 = vmatprep.subr.mxu0 %v935
      %1856 = vmatpush1.msra.mxu0 %v934
      %1857 = vmatprep.subr.mxu0 %v943
      %1858 = vmatpush1.msra.mxu0 %v942
      %1859 = vmatprep.subr.mxu0 %v951
      %1860 = vmatpush1.msra.mxu0 %v950
      %1861 = vmatprep.subr.mxu0 %v959
      %1862 = vmatpush1.msra.mxu0 %v958
      %1863 = vmatprep.subr.mxu0 %v967
      %1864 = vmatpush1.msra.mxu0 %v966
      %1865 = vmatprep.subr.mxu0 %v975
      %1866 = vmatpush1.msra.mxu0 %v974
      %1867 = vmatprep.subr.mxu0 %v983
      %1868 = vmatpush1.msra.mxu0 %v982
      %1869 = vmatprep.subr.mxu0 %v991
      %1870 = vmatpush1.msra.mxu0 %v990
      %1871 = vmatprep.subr.mxu0 %v999
      %1872 = vmatpush1.msra.mxu0 %v998
      %1873 = vmatprep.subr.mxu0 %v1007
      %1874 = vmatpush1.msra.mxu0 %v1006
      %1875 = vmatprep.subr.mxu0 %v1015
      %1876 = vmatpush1.msra.mxu0 %v1014
      %1877 = vmatprep.subr.mxu0 %v1023
      %1878 = vmatpush1.msra.mxu0 %v1022
      %1879 = vmatprep.subr.mxu0 %v1031
      %1880 = vmatpush1.msra.mxu0 %v1030
      %1881 = vmatprep.subr.mxu0 %v1039
      %1882 = vmatpush1.msra.mxu0 %v1038
      %1883 = vmatprep.subr.mxu0 %v1047
      %1884 = vmatpush1.msra.mxu0 %v1046
      %1885 = vmatprep.subr.mxu0 %v1055
      %1886 = vmatpush1.msra.mxu0 %v1054
      %1887 = vmatprep.subr.mxu0 %v1063
      %1888 = vmatpush1.msra.mxu0 %v1062
      %1889 = vmatprep.subr.mxu0 %v1071
      %1890 = vmatpush1.msra.mxu0 %v1070
      %1891 = vmatprep.subr.mxu0 %v1079
      %1892 = vmatpush1.msra.mxu0 %v1078
      %1893 = vmatprep.subr.mxu0 %v1087
      %1894 = vmatpush1.msra.mxu0 %v1086
      %1895 = vmatprep.subr.mxu0 %v1095
      %1896 = vmatpush1.msra.mxu0 %v1094
      %1897 = vmatprep.subr.mxu0 %v1103
      %1898 = vmatpush1.msra.mxu0 %v1102
      %1899 = vmatprep.subr.mxu0 %v1111
      %1900 = vmatpush1.msra.mxu0 %v1110
      %1901 = vmatprep.subr.mxu0 %v1119
      %1902 = vmatpush1.msra.mxu0 %v1118
      %1903 = vmatprep.subr.mxu0 %v1127
      %1904 = vmatpush1.msra.mxu0 %v1126
      %1905 = vmatprep.subr.mxu0 %v1135
      %1906 = vmatpush1.msra.mxu0 %v1134
      %1907 = vmatprep.subr.mxu0 %v1143
      %1908 = vmatpush1.msra.mxu0 %v1142
      %1909 = vmatprep.mubr.f32.mxu0 %v1306
      %1910 = vmatmul.mubr.f32.gmra.mrb[0].mxu0 %v1305
      %v1911 = vpop.f32.mrb[0].mxu0
      %v1912 = vadd.f32 %v1841, %v1911
      %v1913 = vpop.f32.mrb[0].mxu0
      %v1914 = vadd.f32 %v1843, %v1913
      %1915 = vdwg.mxu0
      %1916 = vmatprep.subr.mxu0 %v129
      %1917 = vmatpush1.msra.mxu0 %v128
      %1918 = vmatprep.subr.mxu0 %v137
      %1919 = vmatpush1.msra.mxu0 %v136
      %1920 = vmatprep.subr.mxu0 %v145
      %1921 = vmatpush1.msra.mxu0 %v144
      %1922 = vmatprep.subr.mxu0 %v153
      %1923 = vmatpush1.msra.mxu0 %v152
      %1924 = vmatprep.subr.mxu0 %v161
      %1925 = vmatpush1.msra.mxu0 %v160
      %1926 = vmatprep.subr.mxu0 %v169
      %1927 = vmatpush1.msra.mxu0 %v168
      %1928 = vmatprep.subr.mxu0 %v177
      %1929 = vmatpush1.msra.mxu0 %v176
      %1930 = vmatprep.subr.mxu0 %v185
      %1931 = vmatpush1.msra.mxu0 %v184
      %1932 = vmatprep.subr.mxu0 %v193
      %1933 = vmatpush1.msra.mxu0 %v192
      %1934 = vmatprep.subr.mxu0 %v201
      %1935 = vmatpush1.msra.mxu0 %v200
      %1936 = vmatprep.subr.mxu0 %v209
      %1937 = vmatpush1.msra.mxu0 %v208
      %1938 = vmatprep.subr.mxu0 %v217
      %1939 = vmatpush1.msra.mxu0 %v216
      %1940 = vmatprep.subr.mxu0 %v225
      %1941 = vmatpush1.msra.mxu0 %v224
      %1942 = vmatprep.subr.mxu0 %v233
      %1943 = vmatpush1.msra.mxu0 %v232
      %1944 = vmatprep.subr.mxu0 %v241
      %1945 = vmatpush1.msra.mxu0 %v240
      %1946 = vmatprep.subr.mxu0 %v249
      %1947 = vmatpush1.msra.mxu0 %v248
      %1948 = vmatprep.subr.mxu0 %v257
      %1949 = vmatpush1.msra.mxu0 %v256
      %1950 = vmatprep.subr.mxu0 %v265
      %1951 = vmatpush1.msra.mxu0 %v264
      %1952 = vmatprep.subr.mxu0 %v273
      %1953 = vmatpush1.msra.mxu0 %v272
      %1954 = vmatprep.subr.mxu0 %v281
      %1955 = vmatpush1.msra.mxu0 %v280
      %1956 = vmatprep.subr.mxu0 %v289
      %1957 = vmatpush1.msra.mxu0 %v288
      %1958 = vmatprep.subr.mxu0 %v297
      %1959 = vmatpush1.msra.mxu0 %v296
      %1960 = vmatprep.subr.mxu0 %v305
      %1961 = vmatpush1.msra.mxu0 %v304
      %1962 = vmatprep.subr.mxu0 %v313
      %1963 = vmatpush1.msra.mxu0 %v312
      %1964 = vmatprep.subr.mxu0 %v321
      %1965 = vmatpush1.msra.mxu0 %v320
      %1966 = vmatprep.subr.mxu0 %v329
      %1967 = vmatpush1.msra.mxu0 %v328
      %1968 = vmatprep.subr.mxu0 %v337
      %1969 = vmatpush1.msra.mxu0 %v336
      %1970 = vmatprep.subr.mxu0 %v345
      %1971 = vmatpush1.msra.mxu0 %v344
      %1972 = vmatprep.subr.mxu0 %v353
      %1973 = vmatpush1.msra.mxu0 %v352
      %1974 = vmatprep.subr.mxu0 %v361
      %1975 = vmatpush1.msra.mxu0 %v360
      %1976 = vmatprep.subr.mxu0 %v369
      %1977 = vmatpush1.msra.mxu0 %v368
      %1978 = vmatprep.subr.mxu0 %v377
      %1979 = vmatpush1.msra.mxu0 %v376
      %1980 = vmatprep.mubr.f32.mxu0 %v1300
      %1981 = vmatmul.mubr.f32.gmra.mrb[0].mxu0 %v1299
      %v1982 = vpop.f32.mrb[0].mxu0
      %v1983 = vadd.f32 %v1327, %v1982
      %v1984 = vpop.f32.mrb[0].mxu0
      %v1985 = vadd.f32 %v1331, %v1984
      %1986 = vdwg.mxu0
      %1987 = vmatprep.subr.mxu0 %v385
      %1988 = vmatpush1.msra.mxu0 %v384
      %1989 = vmatprep.subr.mxu0 %v393
      %1990 = vmatpush1.msra.mxu0 %v392
      %1991 = vmatprep.subr.mxu0 %v401
      %1992 = vmatpush1.msra.mxu0 %v400
      %1993 = vmatprep.subr.mxu0 %v409
      %1994 = vmatpush1.msra.mxu0 %v408
      %1995 = vmatprep.subr.mxu0 %v417
      %1996 = vmatpush1.msra.mxu0 %v416
      %1997 = vmatprep.subr.mxu0 %v425
      %1998 = vmatpush1.msra.mxu0 %v424
      %1999 = vmatprep.subr.mxu0 %v433
      %2000 = vmatpush1.msra.mxu0 %v432
      %2001 = vmatprep.subr.mxu0 %v441
      %2002 = vmatpush1.msra.mxu0 %v440
      %2003 = vmatprep.subr.mxu0 %v449
      %2004 = vmatpush1.msra.mxu0 %v448
      %2005 = vmatprep.subr.mxu0 %v457
      %2006 = vmatpush1.msra.mxu0 %v456
      %2007 = vmatprep.subr.mxu0 %v465
      %2008 = vmatpush1.msra.mxu0 %v464
      %2009 = vmatprep.subr.mxu0 %v473
      %2010 = vmatpush1.msra.mxu0 %v472
      %2011 = vmatprep.subr.mxu0 %v481
      %2012 = vmatpush1.msra.mxu0 %v480
      %2013 = vmatprep.subr.mxu0 %v489
      %2014 = vmatpush1.msra.mxu0 %v488
      %2015 = vmatprep.subr.mxu0 %v497
      %2016 = vmatpush1.msra.mxu0 %v496
      %2017 = vmatprep.subr.mxu0 %v505
      %2018 = vmatpush1.msra.mxu0 %v504
      %2019 = vmatprep.subr.mxu0 %v513
      %2020 = vmatpush1.msra.mxu0 %v512
      %2021 = vmatprep.subr.mxu0 %v521
      %2022 = vmatpush1.msra.mxu0 %v520
      %2023 = vmatprep.subr.mxu0 %v529
      %2024 = vmatpush1.msra.mxu0 %v528
      %2025 = vmatprep.subr.mxu0 %v537
      %2026 = vmatpush1.msra.mxu0 %v536
      %2027 = vmatprep.subr.mxu0 %v545
      %2028 = vmatpush1.msra.mxu0 %v544
      %2029 = vmatprep.subr.mxu0 %v553
      %2030 = vmatpush1.msra.mxu0 %v552
      %2031 = vmatprep.subr.mxu0 %v561
      %2032 = vmatpush1.msra.mxu0 %v560
      %2033 = vmatprep.subr.mxu0 %v569
      %2034 = vmatpush1.msra.mxu0 %v568
      %2035 = vmatprep.subr.mxu0 %v577
      %2036 = vmatpush1.msra.mxu0 %v576
      %2037 = vmatprep.subr.mxu0 %v585
      %2038 = vmatpush1.msra.mxu0 %v584
      %2039 = vmatprep.subr.mxu0 %v593
      %2040 = vmatpush1.msra.mxu0 %v592
      %2041 = vmatprep.subr.mxu0 %v601
      %2042 = vmatpush1.msra.mxu0 %v600
      %2043 = vmatprep.subr.mxu0 %v609
      %2044 = vmatpush1.msra.mxu0 %v608
      %2045 = vmatprep.subr.mxu0 %v617
      %2046 = vmatpush1.msra.mxu0 %v616
      %2047 = vmatprep.subr.mxu0 %v625
      %2048 = vmatpush1.msra.mxu0 %v624
      %2049 = vmatprep.subr.mxu0 %v633
      %2050 = vmatpush1.msra.mxu0 %v632
      %2051 = vmatprep.mubr.f32.mxu0 %v1302
      %2052 = vmatmul.mubr.f32.gmra.mrb[0].mxu0 %v1301
      %v2053 = vpop.f32.mrb[0].mxu0
      %v2054 = vadd.f32 %v1983, %v2053
      %v2055 = vpop.f32.mrb[0].mxu0
      %v2056 = vadd.f32 %v1985, %v2055
      %2057 = vdwg.mxu0
      %2058 = vmatprep.subr.mxu0 %v641
      %2059 = vmatpush1.msra.mxu0 %v640
      %2060 = vmatprep.subr.mxu0 %v649
      %2061 = vmatpush1.msra.mxu0 %v648
      %2062 = vmatprep.subr.mxu0 %v657
      %2063 = vmatpush1.msra.mxu0 %v656
      %2064 = vmatprep.subr.mxu0 %v665
      %2065 = vmatpush1.msra.mxu0 %v664
      %2066 = vmatprep.subr.mxu0 %v673
      %2067 = vmatpush1.msra.mxu0 %v672
      %2068 = vmatprep.subr.mxu0 %v681
      %2069 = vmatpush1.msra.mxu0 %v680
      %2070 = vmatprep.subr.mxu0 %v689
      %2071 = vmatpush1.msra.mxu0 %v688
      %2072 = vmatprep.subr.mxu0 %v697
      %2073 = vmatpush1.msra.mxu0 %v696
      %2074 = vmatprep.subr.mxu0 %v705
      %2075 = vmatpush1.msra.mxu0 %v704
      %2076 = vmatprep.subr.mxu0 %v713
      %2077 = vmatpush1.msra.mxu0 %v712
      %2078 = vmatprep.subr.mxu0 %v721
      %2079 = vmatpush1.msra.mxu0 %v720
      %2080 = vmatprep.subr.mxu0 %v729
      %2081 = vmatpush1.msra.mxu0 %v728
      %2082 = vmatprep.subr.mxu0 %v737
      %2083 = vmatpush1.msra.mxu0 %v736
      %2084 = vmatprep.subr.mxu0 %v745
      %2085 = vmatpush1.msra.mxu0 %v744
      %2086 = vmatprep.subr.mxu0 %v753
      %2087 = vmatpush1.msra.mxu0 %v752
      %2088 = vmatprep.subr.mxu0 %v761
      %2089 = vmatpush1.msra.mxu0 %v760
      %2090 = vmatprep.subr.mxu0 %v769
      %2091 = vmatpush1.msra.mxu0 %v768
      %2092 = vmatprep.subr.mxu0 %v777
      %2093 = vmatpush1.msra.mxu0 %v776
      %2094 = vmatprep.subr.mxu0 %v785
      %2095 = vmatpush1.msra.mxu0 %v784
      %2096 = vmatprep.subr.mxu0 %v793
      %2097 = vmatpush1.msra.mxu0 %v792
      %2098 = vmatprep.subr.mxu0 %v801
      %2099 = vmatpush1.msra.mxu0 %v800
      %2100 = vmatprep.subr.mxu0 %v809
      %2101 = vmatpush1.msra.mxu0 %v808
      %2102 = vmatprep.subr.mxu0 %v817
      %2103 = vmatpush1.msra.mxu0 %v816
      %2104 = vmatprep.subr.mxu0 %v825
      %2105 = vmatpush1.msra.mxu0 %v824
      %2106 = vmatprep.subr.mxu0 %v833
      %2107 = vmatpush1.msra.mxu0 %v832
      %2108 = vmatprep.subr.mxu0 %v841
      %2109 = vmatpush1.msra.mxu0 %v840
      %2110 = vmatprep.subr.mxu0 %v849
      %2111 = vmatpush1.msra.mxu0 %v848
      %2112 = vmatprep.subr.mxu0 %v857
      %2113 = vmatpush1.msra.mxu0 %v856
      %2114 = vmatprep.subr.mxu0 %v865
      %2115 = vmatpush1.msra.mxu0 %v864
      %2116 = vmatprep.subr.mxu0 %v873
      %2117 = vmatpush1.msra.mxu0 %v872
      %2118 = vmatprep.subr.mxu0 %v881
      %2119 = vmatpush1.msra.mxu0 %v880
      %2120 = vmatprep.subr.mxu0 %v889
      %2121 = vmatpush1.msra.mxu0 %v888
      %2122 = vmatprep.mubr.f32.mxu0 %v1304
      %2123 = vmatmul.mubr.f32.gmra.mrb[0].mxu0 %v1303
      %v2124 = vpop.f32.mrb[0].mxu0
      %v2125 = vadd.f32 %v2054, %v2124
      %v2126 = vpop.f32.mrb[0].mxu0
      %v2127 = vadd.f32 %v2056, %v2126
      %2128 = vdwg.mxu0
      %2129 = vmatprep.subr.mxu0 %v897
      %2130 = vmatpush1.msra.mxu0 %v896
      %2131 = vmatprep.subr.mxu0 %v905
      %2132 = vmatpush1.msra.mxu0 %v904
      %2133 = vmatprep.subr.mxu0 %v913
      %2134 = vmatpush1.msra.mxu0 %v912
      %2135 = vmatprep.subr.mxu0 %v921
      %2136 = vmatpush1.msra.mxu0 %v920
      %2137 = vmatprep.subr.mxu0 %v929
      %2138 = vmatpush1.msra.mxu0 %v928
      %2139 = vmatprep.subr.mxu0 %v937
      %2140 = vmatpush1.msra.mxu0 %v936
      %2141 = vmatprep.subr.mxu0 %v945
      %2142 = vmatpush1.msra.mxu0 %v944
      %2143 = vmatprep.subr.mxu0 %v953
      %2144 = vmatpush1.msra.mxu0 %v952
      %2145 = vmatprep.subr.mxu0 %v961
      %2146 = vmatpush1.msra.mxu0 %v960
      %2147 = vmatprep.subr.mxu0 %v969
      %2148 = vmatpush1.msra.mxu0 %v968
      %2149 = vmatprep.subr.mxu0 %v977
      %2150 = vmatpush1.msra.mxu0 %v976
      %2151 = vmatprep.subr.mxu0 %v985
      %2152 = vmatpush1.msra.mxu0 %v984
      %2153 = vmatprep.subr.mxu0 %v993
      %2154 = vmatpush1.msra.mxu0 %v992
      %2155 = vmatprep.subr.mxu0 %v1001
      %2156 = vmatpush1.msra.mxu0 %v1000
      %2157 = vmatprep.subr.mxu0 %v1009
      %2158 = vmatpush1.msra.mxu0 %v1008
      %2159 = vmatprep.subr.mxu0 %v1017
      %2160 = vmatpush1.msra.mxu0 %v1016
      %2161 = vmatprep.subr.mxu0 %v1025
      %2162 = vmatpush1.msra.mxu0 %v1024
      %2163 = vmatprep.subr.mxu0 %v1033
      %2164 = vmatpush1.msra.mxu0 %v1032
      %2165 = vmatprep.subr.mxu0 %v1041
      %2166 = vmatpush1.msra.mxu0 %v1040
      %2167 = vmatprep.subr.mxu0 %v1049
      %2168 = vmatpush1.msra.mxu0 %v1048
      %2169 = vmatprep.subr.mxu0 %v1057
      %2170 = vmatpush1.msra.mxu0 %v1056
      %2171 = vmatprep.subr.mxu0 %v1065
      %2172 = vmatpush1.msra.mxu0 %v1064
      %2173 = vmatprep.subr.mxu0 %v1073
      %2174 = vmatpush1.msra.mxu0 %v1072
      %2175 = vmatprep.subr.mxu0 %v1081
      %2176 = vmatpush1.msra.mxu0 %v1080
      %2177 = vmatprep.subr.mxu0 %v1089
      %2178 = vmatpush1.msra.mxu0 %v1088
      %2179 = vmatprep.subr.mxu0 %v1097
      %2180 = vmatpush1.msra.mxu0 %v1096
      %2181 = vmatprep.subr.mxu0 %v1105
      %2182 = vmatpush1.msra.mxu0 %v1104
      %2183 = vmatprep.subr.mxu0 %v1113
      %2184 = vmatpush1.msra.mxu0 %v1112
      %2185 = vmatprep.subr.mxu0 %v1121
      %2186 = vmatpush1.msra.mxu0 %v1120
      %2187 = vmatprep.subr.mxu0 %v1129
      %2188 = vmatpush1.msra.mxu0 %v1128
      %2189 = vmatprep.subr.mxu0 %v1137
      %2190 = vmatpush1.msra.mxu0 %v1136
      %2191 = vmatprep.subr.mxu0 %v1145
      %2192 = vmatpush1.msra.mxu0 %v1144
      %2193 = vmatprep.mubr.f32.mxu0 %v1306
      %2194 = vmatmul.mubr.f32.gmra.mrb[0].mxu0 %v1305
      %v2195 = vpop.f32.mrb[0].mxu0
      %v2196 = vadd.f32 %v2125, %v2195
      %v2197 = vpop.f32.mrb[0].mxu0
      %v2198 = vadd.f32 %v2127, %v2197
      %2199 = vdwg.mxu0
      %2200 = vmatprep.subr.mxu0 %v131
      %2201 = vmatpush1.msra.mxu0 %v130
      %2202 = vmatprep.subr.mxu0 %v139
      %2203 = vmatpush1.msra.mxu0 %v138
      %2204 = vmatprep.subr.mxu0 %v147
      %2205 = vmatpush1.msra.mxu0 %v146
      %2206 = vmatprep.subr.mxu0 %v155
      %2207 = vmatpush1.msra.mxu0 %v154
      %2208 = vmatprep.subr.mxu0 %v163
      %2209 = vmatpush1.msra.mxu0 %v162
      %2210 = vmatprep.subr.mxu0 %v171
      %2211 = vmatpush1.msra.mxu0 %v170
      %2212 = vmatprep.subr.mxu0 %v179
      %2213 = vmatpush1.msra.mxu0 %v178
      %2214 = vmatprep.subr.mxu0 %v187
      %2215 = vmatpush1.msra.mxu0 %v186
      %2216 = vmatprep.subr.mxu0 %v195
      %2217 = vmatpush1.msra.mxu0 %v194
      %2218 = vmatprep.subr.mxu0 %v203
      %2219 = vmatpush1.msra.mxu0 %v202
      %2220 = vmatprep.subr.mxu0 %v211
      %2221 = vmatpush1.msra.mxu0 %v210
      %2222 = vmatprep.subr.mxu0 %v219
      %2223 = vmatpush1.msra.mxu0 %v218
      %2224 = vmatprep.subr.mxu0 %v227
      %2225 = vmatpush1.msra.mxu0 %v226
      %2226 = vmatprep.subr.mxu0 %v235
      %2227 = vmatpush1.msra.mxu0 %v234
      %2228 = vmatprep.subr.mxu0 %v243
      %2229 = vmatpush1.msra.mxu0 %v242
      %2230 = vmatprep.subr.mxu0 %v251
      %2231 = vmatpush1.msra.mxu0 %v250
      %2232 = vmatprep.subr.mxu0 %v259
      %2233 = vmatpush1.msra.mxu0 %v258
      %2234 = vmatprep.subr.mxu0 %v267
      %2235 = vmatpush1.msra.mxu0 %v266
      %2236 = vmatprep.subr.mxu0 %v275
      %2237 = vmatpush1.msra.mxu0 %v274
      %2238 = vmatprep.subr.mxu0 %v283
      %2239 = vmatpush1.msra.mxu0 %v282
      %2240 = vmatprep.subr.mxu0 %v291
      %2241 = vmatpush1.msra.mxu0 %v290
      %2242 = vmatprep.subr.mxu0 %v299
      %2243 = vmatpush1.msra.mxu0 %v298
      %2244 = vmatprep.subr.mxu0 %v307
      %2245 = vmatpush1.msra.mxu0 %v306
      %2246 = vmatprep.subr.mxu0 %v315
      %2247 = vmatpush1.msra.mxu0 %v314
      %2248 = vmatprep.subr.mxu0 %v323
      %2249 = vmatpush1.msra.mxu0 %v322
      %2250 = vmatprep.subr.mxu0 %v331
      %2251 = vmatpush1.msra.mxu0 %v330
      %2252 = vmatprep.subr.mxu0 %v339
      %2253 = vmatpush1.msra.mxu0 %v338
      %2254 = vmatprep.subr.mxu0 %v347
      %2255 = vmatpush1.msra.mxu0 %v346
      %2256 = vmatprep.subr.mxu0 %v355
      %2257 = vmatpush1.msra.mxu0 %v354
      %2258 = vmatprep.subr.mxu0 %v363
      %2259 = vmatpush1.msra.mxu0 %v362
      %2260 = vmatprep.subr.mxu0 %v371
      %2261 = vmatpush1.msra.mxu0 %v370
      %2262 = vmatprep.subr.mxu0 %v379
      %2263 = vmatpush1.msra.mxu0 %v378
      %2264 = vmatprep.mubr.f32.mxu0 %v1300
      %2265 = vmatmul.mubr.f32.gmra.mrb[0].mxu0 %v1299
      %v2266 = vpop.f32.mrb[0].mxu0
      %v2267 = vadd.f32 %v1335, %v2266
      %v2268 = vpop.f32.mrb[0].mxu0
      %v2269 = vadd.f32 %v1339, %v2268
      %2270 = vdwg.mxu0
      %2271 = vmatprep.subr.mxu0 %v387
      %2272 = vmatpush1.msra.mxu0 %v386
      %2273 = vmatprep.subr.mxu0 %v395
      %2274 = vmatpush1.msra.mxu0 %v394
      %2275 = vmatprep.subr.mxu0 %v403
      %2276 = vmatpush1.msra.mxu0 %v402
      %2277 = vmatprep.subr.mxu0 %v411
      %2278 = vmatpush1.msra.mxu0 %v410
      %2279 = vmatprep.subr.mxu0 %v419
      %2280 = vmatpush1.msra.mxu0 %v418
      %2281 = vmatprep.subr.mxu0 %v427
      %2282 = vmatpush1.msra.mxu0 %v426
      %2283 = vmatprep.subr.mxu0 %v435
      %2284 = vmatpush1.msra.mxu0 %v434
      %2285 = vmatprep.subr.mxu0 %v443
      %2286 = vmatpush1.msra.mxu0 %v442
      %2287 = vmatprep.subr.mxu0 %v451
      %2288 = vmatpush1.msra.mxu0 %v450
      %2289 = vmatprep.subr.mxu0 %v459
      %2290 = vmatpush1.msra.mxu0 %v458
      %2291 = vmatprep.subr.mxu0 %v467
      %2292 = vmatpush1.msra.mxu0 %v466
      %2293 = vmatprep.subr.mxu0 %v475
      %2294 = vmatpush1.msra.mxu0 %v474
      %2295 = vmatprep.subr.mxu0 %v483
      %2296 = vmatpush1.msra.mxu0 %v482
      %2297 = vmatprep.subr.mxu0 %v491
      %2298 = vmatpush1.msra.mxu0 %v490
      %2299 = vmatprep.subr.mxu0 %v499
      %2300 = vmatpush1.msra.mxu0 %v498
      %2301 = vmatprep.subr.mxu0 %v507
      %2302 = vmatpush1.msra.mxu0 %v506
      %2303 = vmatprep.subr.mxu0 %v515
      %2304 = vmatpush1.msra.mxu0 %v514
      %2305 = vmatprep.subr.mxu0 %v523
      %2306 = vmatpush1.msra.mxu0 %v522
      %2307 = vmatprep.subr.mxu0 %v531
      %2308 = vmatpush1.msra.mxu0 %v530
      %2309 = vmatprep.subr.mxu0 %v539
      %2310 = vmatpush1.msra.mxu0 %v538
      %2311 = vmatprep.subr.mxu0 %v547
      %2312 = vmatpush1.msra.mxu0 %v546
      %2313 = vmatprep.subr.mxu0 %v555
      %2314 = vmatpush1.msra.mxu0 %v554
      %2315 = vmatprep.subr.mxu0 %v563
      %2316 = vmatpush1.msra.mxu0 %v562
      %2317 = vmatprep.subr.mxu0 %v571
      %2318 = vmatpush1.msra.mxu0 %v570
      %2319 = vmatprep.subr.mxu0 %v579
      %2320 = vmatpush1.msra.mxu0 %v578
      %2321 = vmatprep.subr.mxu0 %v587
      %2322 = vmatpush1.msra.mxu0 %v586
      %2323 = vmatprep.subr.mxu0 %v595
      %2324 = vmatpush1.msra.mxu0 %v594
      %2325 = vmatprep.subr.mxu0 %v603
      %2326 = vmatpush1.msra.mxu0 %v602
      %2327 = vmatprep.subr.mxu0 %v611
      %2328 = vmatpush1.msra.mxu0 %v610
      %2329 = vmatprep.subr.mxu0 %v619
      %2330 = vmatpush1.msra.mxu0 %v618
      %2331 = vmatprep.subr.mxu0 %v627
      %2332 = vmatpush1.msra.mxu0 %v626
      %2333 = vmatprep.subr.mxu0 %v635
      %2334 = vmatpush1.msra.mxu0 %v634
      %2335 = vmatprep.mubr.f32.mxu0 %v1302
      %2336 = vmatmul.mubr.f32.gmra.mrb[0].mxu0 %v1301
      %v2337 = vpop.f32.mrb[0].mxu0
      %v2338 = vadd.f32 %v2267, %v2337
      %v2339 = vpop.f32.mrb[0].mxu0
      %v2340 = vadd.f32 %v2269, %v2339
      %2341 = vdwg.mxu0
      %2342 = vmatprep.subr.mxu0 %v643
      %2343 = vmatpush1.msra.mxu0 %v642
      %2344 = vmatprep.subr.mxu0 %v651
      %2345 = vmatpush1.msra.mxu0 %v650
      %2346 = vmatprep.subr.mxu0 %v659
      %2347 = vmatpush1.msra.mxu0 %v658
      %2348 = vmatprep.subr.mxu0 %v667
      %2349 = vmatpush1.msra.mxu0 %v666
      %2350 = vmatprep.subr.mxu0 %v675
      %2351 = vmatpush1.msra.mxu0 %v674
      %2352 = vmatprep.subr.mxu0 %v683
      %2353 = vmatpush1.msra.mxu0 %v682
      %2354 = vmatprep.subr.mxu0 %v691
      %2355 = vmatpush1.msra.mxu0 %v690
      %2356 = vmatprep.subr.mxu0 %v699
      %2357 = vmatpush1.msra.mxu0 %v698
      %2358 = vmatprep.subr.mxu0 %v707
      %2359 = vmatpush1.msra.mxu0 %v706
      %2360 = vmatprep.subr.mxu0 %v715
      %2361 = vmatpush1.msra.mxu0 %v714
      %2362 = vmatprep.subr.mxu0 %v723
      %2363 = vmatpush1.msra.mxu0 %v722
      %2364 = vmatprep.subr.mxu0 %v731
      %2365 = vmatpush1.msra.mxu0 %v730
      %2366 = vmatprep.subr.mxu0 %v739
      %2367 = vmatpush1.msra.mxu0 %v738
      %2368 = vmatprep.subr.mxu0 %v747
      %2369 = vmatpush1.msra.mxu0 %v746
      %2370 = vmatprep.subr.mxu0 %v755
      %2371 = vmatpush1.msra.mxu0 %v754
      %2372 = vmatprep.subr.mxu0 %v763
      %2373 = vmatpush1.msra.mxu0 %v762
      %2374 = vmatprep.subr.mxu0 %v771
      %2375 = vmatpush1.msra.mxu0 %v770
      %2376 = vmatprep.subr.mxu0 %v779
      %2377 = vmatpush1.msra.mxu0 %v778
      %2378 = vmatprep.subr.mxu0 %v787
      %2379 = vmatpush1.msra.mxu0 %v786
      %2380 = vmatprep.subr.mxu0 %v795
      %2381 = vmatpush1.msra.mxu0 %v794
      %2382 = vmatprep.subr.mxu0 %v803
      %2383 = vmatpush1.msra.mxu0 %v802
      %2384 = vmatprep.subr.mxu0 %v811
      %2385 = vmatpush1.msra.mxu0 %v810
      %2386 = vmatprep.subr.mxu0 %v819
      %2387 = vmatpush1.msra.mxu0 %v818
      %2388 = vmatprep.subr.mxu0 %v827
      %2389 = vmatpush1.msra.mxu0 %v826
      %2390 = vmatprep.subr.mxu0 %v835
      %2391 = vmatpush1.msra.mxu0 %v834
      %2392 = vmatprep.subr.mxu0 %v843
      %2393 = vmatpush1.msra.mxu0 %v842
      %2394 = vmatprep.subr.mxu0 %v851
      %2395 = vmatpush1.msra.mxu0 %v850
      %2396 = vmatprep.subr.mxu0 %v859
      %2397 = vmatpush1.msra.mxu0 %v858
      %2398 = vmatprep.subr.mxu0 %v867
      %2399 = vmatpush1.msra.mxu0 %v866
      %2400 = vmatprep.subr.mxu0 %v875
      %2401 = vmatpush1.msra.mxu0 %v874
      %2402 = vmatprep.subr.mxu0 %v883
      %2403 = vmatpush1.msra.mxu0 %v882
      %2404 = vmatprep.subr.mxu0 %v891
      %2405 = vmatpush1.msra.mxu0 %v890
      %2406 = vmatprep.mubr.f32.mxu0 %v1304
      %2407 = vmatmul.mubr.f32.gmra.mrb[0].mxu0 %v1303
      %v2408 = vpop.f32.mrb[0].mxu0
      %v2409 = vadd.f32 %v2338, %v2408
      %v2410 = vpop.f32.mrb[0].mxu0
      %v2411 = vadd.f32 %v2340, %v2410
      %2412 = vdwg.mxu0
      %2413 = vmatprep.subr.mxu0 %v899
      %2414 = vmatpush1.msra.mxu0 %v898
      %2415 = vmatprep.subr.mxu0 %v907
      %2416 = vmatpush1.msra.mxu0 %v906
      %2417 = vmatprep.subr.mxu0 %v915
      %2418 = vmatpush1.msra.mxu0 %v914
      %2419 = vmatprep.subr.mxu0 %v923
      %2420 = vmatpush1.msra.mxu0 %v922
      %2421 = vmatprep.subr.mxu0 %v931
      %2422 = vmatpush1.msra.mxu0 %v930
      %2423 = vmatprep.subr.mxu0 %v939
      %2424 = vmatpush1.msra.mxu0 %v938
      %2425 = vmatprep.subr.mxu0 %v947
      %2426 = vmatpush1.msra.mxu0 %v946
      %2427 = vmatprep.subr.mxu0 %v955
      %2428 = vmatpush1.msra.mxu0 %v954
      %2429 = vmatprep.subr.mxu0 %v963
      %2430 = vmatpush1.msra.mxu0 %v962
      %2431 = vmatprep.subr.mxu0 %v971
      %2432 = vmatpush1.msra.mxu0 %v970
      %2433 = vmatprep.subr.mxu0 %v979
      %2434 = vmatpush1.msra.mxu0 %v978
      %2435 = vmatprep.subr.mxu0 %v987
      %2436 = vmatpush1.msra.mxu0 %v986
      %2437 = vmatprep.subr.mxu0 %v995
      %2438 = vmatpush1.msra.mxu0 %v994
      %2439 = vmatprep.subr.mxu0 %v1003
      %2440 = vmatpush1.msra.mxu0 %v1002
      %2441 = vmatprep.subr.mxu0 %v1011
      %2442 = vmatpush1.msra.mxu0 %v1010
      %2443 = vmatprep.subr.mxu0 %v1019
      %2444 = vmatpush1.msra.mxu0 %v1018
      %2445 = vmatprep.subr.mxu0 %v1027
      %2446 = vmatpush1.msra.mxu0 %v1026
      %2447 = vmatprep.subr.mxu0 %v1035
      %2448 = vmatpush1.msra.mxu0 %v1034
      %2449 = vmatprep.subr.mxu0 %v1043
      %2450 = vmatpush1.msra.mxu0 %v1042
      %2451 = vmatprep.subr.mxu0 %v1051
      %2452 = vmatpush1.msra.mxu0 %v1050
      %2453 = vmatprep.subr.mxu0 %v1059
      %2454 = vmatpush1.msra.mxu0 %v1058
      %2455 = vmatprep.subr.mxu0 %v1067
      %2456 = vmatpush1.msra.mxu0 %v1066
      %2457 = vmatprep.subr.mxu0 %v1075
      %2458 = vmatpush1.msra.mxu0 %v1074
      %2459 = vmatprep.subr.mxu0 %v1083
      %2460 = vmatpush1.msra.mxu0 %v1082
      %2461 = vmatprep.subr.mxu0 %v1091
      %2462 = vmatpush1.msra.mxu0 %v1090
      %2463 = vmatprep.subr.mxu0 %v1099
      %2464 = vmatpush1.msra.mxu0 %v1098
      %2465 = vmatprep.subr.mxu0 %v1107
      %2466 = vmatpush1.msra.mxu0 %v1106
      %2467 = vmatprep.subr.mxu0 %v1115
      %2468 = vmatpush1.msra.mxu0 %v1114
      %2469 = vmatprep.subr.mxu0 %v1123
      %2470 = vmatpush1.msra.mxu0 %v1122
      %2471 = vmatprep.subr.mxu0 %v1131
      %2472 = vmatpush1.msra.mxu0 %v1130
      %2473 = vmatprep.subr.mxu0 %v1139
      %2474 = vmatpush1.msra.mxu0 %v1138
      %2475 = vmatprep.subr.mxu0 %v1147
      %2476 = vmatpush1.msra.mxu0 %v1146
      %2477 = vmatprep.mubr.f32.mxu0 %v1306
      %2478 = vmatmul.mubr.f32.gmra.mrb[0].mxu0 %v1305
      %v2479 = vpop.f32.mrb[0].mxu0
      %v2480 = vadd.f32 %v2409, %v2479
      %v2481 = vpop.f32.mrb[0].mxu0
      %v2482 = vadd.f32 %v2411, %v2481
      %2483 = vdwg.mxu0
      %v2484 = vsub.f32 %v1291, %v1628
      %v2485 = vsub.f32 %v1292, %v1630
      %v2486 = vsub.f32 %v1293, %v1912
      %v2487 = vsub.f32 %v1294, %v1914
      %v2488 = vsub.f32 %v1295, %v2196
      %v2489 = vsub.f32 %v1296, %v2198
      %v2490 = vsub.f32 %v1297, %v2480
      %v2491 = vsub.f32 %v1298, %v2482
      %2492 = vmatprep.subr.mxu0 %v125
      %2493 = vmatpush1.msra.mxu0 %v124
      %2494 = vmatprep.subr.mxu0 %v133
      %2495 = vmatpush1.msra.mxu0 %v132
      %2496 = vmatprep.subr.mxu0 %v141
      %2497 = vmatpush1.msra.mxu0 %v140
      %2498 = vmatprep.subr.mxu0 %v149
      %2499 = vmatpush1.msra.mxu0 %v148
      %2500 = vmatprep.subr.mxu0 %v157
      %2501 = vmatpush1.msra.mxu0 %v156
      %2502 = vmatprep.subr.mxu0 %v165
      %2503 = vmatpush1.msra.mxu0 %v164
      %2504 = vmatprep.subr.mxu0 %v173
      %2505 = vmatpush1.msra.mxu0 %v172
      %2506 = vmatprep.subr.mxu0 %v181
      %2507 = vmatpush1.msra.mxu0 %v180
      %2508 = vmatprep.subr.mxu0 %v189
      %2509 = vmatpush1.msra.mxu0 %v188
      %2510 = vmatprep.subr.mxu0 %v197
      %2511 = vmatpush1.msra.mxu0 %v196
      %2512 = vmatprep.subr.mxu0 %v205
      %2513 = vmatpush1.msra.mxu0 %v204
      %2514 = vmatprep.subr.mxu0 %v213
      %2515 = vmatpush1.msra.mxu0 %v212
      %2516 = vmatprep.subr.mxu0 %v221
      %2517 = vmatpush1.msra.mxu0 %v220
      %2518 = vmatprep.subr.mxu0 %v229
      %2519 = vmatpush1.msra.mxu0 %v228
      %2520 = vmatprep.subr.mxu0 %v237
      %2521 = vmatpush1.msra.mxu0 %v236
      %2522 = vmatprep.subr.mxu0 %v245
      %2523 = vmatpush1.msra.mxu0 %v244
      %2524 = vmatprep.subr.mxu0 %v253
      %2525 = vmatpush1.msra.mxu0 %v252
      %2526 = vmatprep.subr.mxu0 %v261
      %2527 = vmatpush1.msra.mxu0 %v260
      %2528 = vmatprep.subr.mxu0 %v269
      %2529 = vmatpush1.msra.mxu0 %v268
      %2530 = vmatprep.subr.mxu0 %v277
      %2531 = vmatpush1.msra.mxu0 %v276
      %2532 = vmatprep.subr.mxu0 %v285
      %2533 = vmatpush1.msra.mxu0 %v284
      %2534 = vmatprep.subr.mxu0 %v293
      %2535 = vmatpush1.msra.mxu0 %v292
      %2536 = vmatprep.subr.mxu0 %v301
      %2537 = vmatpush1.msra.mxu0 %v300
      %2538 = vmatprep.subr.mxu0 %v309
      %2539 = vmatpush1.msra.mxu0 %v308
      %2540 = vmatprep.subr.mxu0 %v317
      %2541 = vmatpush1.msra.mxu0 %v316
      %2542 = vmatprep.subr.mxu0 %v325
      %2543 = vmatpush1.msra.mxu0 %v324
      %2544 = vmatprep.subr.mxu0 %v333
      %2545 = vmatpush1.msra.mxu0 %v332
      %2546 = vmatprep.subr.mxu0 %v341
      %2547 = vmatpush1.msra.mxu0 %v340
      %2548 = vmatprep.subr.mxu0 %v349
      %2549 = vmatpush1.msra.mxu0 %v348
      %2550 = vmatprep.subr.mxu0 %v357
      %2551 = vmatpush1.msra.mxu0 %v356
      %2552 = vmatprep.subr.mxu0 %v365
      %2553 = vmatpush1.msra.mxu0 %v364
      %2554 = vmatprep.subr.mxu0 %v373
      %2555 = vmatpush1.msra.mxu0 %v372
      %2556 = vmatprep.mubr.f32.mxu0 %v2485
      %2557 = vmatmul.mubr.f32.gmra.mrb[0].mxu0 %v2484
      %v2558 = vpop.f32.mrb[0].mxu0
      %v2559 = vadd.f32 %v1311, %v2558
      %v2560 = vpop.f32.mrb[0].mxu0
      %v2561 = vadd.f32 %v1315, %v2560
      %2562 = vdwg.mxu0
      %2563 = vmatprep.subr.mxu0 %v381
      %2564 = vmatpush1.msra.mxu0 %v380
      %2565 = vmatprep.subr.mxu0 %v389
      %2566 = vmatpush1.msra.mxu0 %v388
      %2567 = vmatprep.subr.mxu0 %v397
      %2568 = vmatpush1.msra.mxu0 %v396
      %2569 = vmatprep.subr.mxu0 %v405
      %2570 = vmatpush1.msra.mxu0 %v404
      %2571 = vmatprep.subr.mxu0 %v413
      %2572 = vmatpush1.msra.mxu0 %v412
      %2573 = vmatprep.subr.mxu0 %v421
      %2574 = vmatpush1.msra.mxu0 %v420
      %2575 = vmatprep.subr.mxu0 %v429
      %2576 = vmatpush1.msra.mxu0 %v428
      %2577 = vmatprep.subr.mxu0 %v437
      %2578 = vmatpush1.msra.mxu0 %v436
      %2579 = vmatprep.subr.mxu0 %v445
      %2580 = vmatpush1.msra.mxu0 %v444
      %2581 = vmatprep.subr.mxu0 %v453
      %2582 = vmatpush1.msra.mxu0 %v452
      %2583 = vmatprep.subr.mxu0 %v461
      %2584 = vmatpush1.msra.mxu0 %v460
      %2585 = vmatprep.subr.mxu0 %v469
      %2586 = vmatpush1.msra.mxu0 %v468
      %2587 = vmatprep.subr.mxu0 %v477
      %2588 = vmatpush1.msra.mxu0 %v476
      %2589 = vmatprep.subr.mxu0 %v485
      %2590 = vmatpush1.msra.mxu0 %v484
      %2591 = vmatprep.subr.mxu0 %v493
      %2592 = vmatpush1.msra.mxu0 %v492
      %2593 = vmatprep.subr.mxu0 %v501
      %2594 = vmatpush1.msra.mxu0 %v500
      %2595 = vmatprep.subr.mxu0 %v509
      %2596 = vmatpush1.msra.mxu0 %v508
      %2597 = vmatprep.subr.mxu0 %v517
      %2598 = vmatpush1.msra.mxu0 %v516
      %2599 = vmatprep.subr.mxu0 %v525
      %2600 = vmatpush1.msra.mxu0 %v524
      %2601 = vmatprep.subr.mxu0 %v533
      %2602 = vmatpush1.msra.mxu0 %v532
      %2603 = vmatprep.subr.mxu0 %v541
      %2604 = vmatpush1.msra.mxu0 %v540
      %2605 = vmatprep.subr.mxu0 %v549
      %2606 = vmatpush1.msra.mxu0 %v548
      %2607 = vmatprep.subr.mxu0 %v557
      %2608 = vmatpush1.msra.mxu0 %v556
      %2609 = vmatprep.subr.mxu0 %v565
      %2610 = vmatpush1.msra.mxu0 %v564
      %2611 = vmatprep.subr.mxu0 %v573
      %2612 = vmatpush1.msra.mxu0 %v572
      %2613 = vmatprep.subr.mxu0 %v581
      %2614 = vmatpush1.msra.mxu0 %v580
      %2615 = vmatprep.subr.mxu0 %v589
      %2616 = vmatpush1.msra.mxu0 %v588
      %2617 = vmatprep.subr.mxu0 %v597
      %2618 = vmatpush1.msra.mxu0 %v596
      %2619 = vmatprep.subr.mxu0 %v605
      %2620 = vmatpush1.msra.mxu0 %v604
      %2621 = vmatprep.subr.mxu0 %v613
      %2622 = vmatpush1.msra.mxu0 %v612
      %2623 = vmatprep.subr.mxu0 %v621
      %2624 = vmatpush1.msra.mxu0 %v620
      %2625 = vmatprep.subr.mxu0 %v629
      %2626 = vmatpush1.msra.mxu0 %v628
      %2627 = vmatprep.mubr.f32.mxu0 %v2487
      %2628 = vmatmul.mubr.f32.gmra.mrb[0].mxu0 %v2486
      %v2629 = vpop.f32.mrb[0].mxu0
      %v2630 = vadd.f32 %v2559, %v2629
      %v2631 = vpop.f32.mrb[0].mxu0
      %v2632 = vadd.f32 %v2561, %v2631
      %2633 = vdwg.mxu0
      %2634 = vmatprep.subr.mxu0 %v637
      %2635 = vmatpush1.msra.mxu0 %v636
      %2636 = vmatprep.subr.mxu0 %v645
      %2637 = vmatpush1.msra.mxu0 %v644
      %2638 = vmatprep.subr.mxu0 %v653
      %2639 = vmatpush1.msra.mxu0 %v652
      %2640 = vmatprep.subr.mxu0 %v661
      %2641 = vmatpush1.msra.mxu0 %v660
      %2642 = vmatprep.subr.mxu0 %v669
      %2643 = vmatpush1.msra.mxu0 %v668
      %2644 = vmatprep.subr.mxu0 %v677
      %2645 = vmatpush1.msra.mxu0 %v676
      %2646 = vmatprep.subr.mxu0 %v685
      %2647 = vmatpush1.msra.mxu0 %v684
      %2648 = vmatprep.subr.mxu0 %v693
      %2649 = vmatpush1.msra.mxu0 %v692
      %2650 = vmatprep.subr.mxu0 %v701
      %2651 = vmatpush1.msra.mxu0 %v700
      %2652 = vmatprep.subr.mxu0 %v709
      %2653 = vmatpush1.msra.mxu0 %v708
      %2654 = vmatprep.subr.mxu0 %v717
      %2655 = vmatpush1.msra.mxu0 %v716
      %2656 = vmatprep.subr.mxu0 %v725
      %2657 = vmatpush1.msra.mxu0 %v724
      %2658 = vmatprep.subr.mxu0 %v733
      %2659 = vmatpush1.msra.mxu0 %v732
      %2660 = vmatprep.subr.mxu0 %v741
      %2661 = vmatpush1.msra.mxu0 %v740
      %2662 = vmatprep.subr.mxu0 %v749
      %2663 = vmatpush1.msra.mxu0 %v748
      %2664 = vmatprep.subr.mxu0 %v757
      %2665 = vmatpush1.msra.mxu0 %v756
      %2666 = vmatprep.subr.mxu0 %v765
      %2667 = vmatpush1.msra.mxu0 %v764
      %2668 = vmatprep.subr.mxu0 %v773
      %2669 = vmatpush1.msra.mxu0 %v772
      %2670 = vmatprep.subr.mxu0 %v781
      %2671 = vmatpush1.msra.mxu0 %v780
      %2672 = vmatprep.subr.mxu0 %v789
      %2673 = vmatpush1.msra.mxu0 %v788
      %2674 = vmatprep.subr.mxu0 %v797
      %2675 = vmatpush1.msra.mxu0 %v796
      %2676 = vmatprep.subr.mxu0 %v805
      %2677 = vmatpush1.msra.mxu0 %v804
      %2678 = vmatprep.subr.mxu0 %v813
      %2679 = vmatpush1.msra.mxu0 %v812
      %2680 = vmatprep.subr.mxu0 %v821
      %2681 = vmatpush1.msra.mxu0 %v820
      %2682 = vmatprep.subr.mxu0 %v829
      %2683 = vmatpush1.msra.mxu0 %v828
      %2684 = vmatprep.subr.mxu0 %v837
      %2685 = vmatpush1.msra.mxu0 %v836
      %2686 = vmatprep.subr.mxu0 %v845
      %2687 = vmatpush1.msra.mxu0 %v844
      %2688 = vmatprep.subr.mxu0 %v853
      %2689 = vmatpush1.msra.mxu0 %v852
      %2690 = vmatprep.subr.mxu0 %v861
      %2691 = vmatpush1.msra.mxu0 %v860
      %2692 = vmatprep.subr.mxu0 %v869
      %2693 = vmatpush1.msra.mxu0 %v868
      %2694 = vmatprep.subr.mxu0 %v877
      %2695 = vmatpush1.msra.mxu0 %v876
      %2696 = vmatprep.subr.mxu0 %v885
      %2697 = vmatpush1.msra.mxu0 %v884
      %2698 = vmatprep.mubr.f32.mxu0 %v2489
      %2699 = vmatmul.mubr.f32.gmra.mrb[0].mxu0 %v2488
      %v2700 = vpop.f32.mrb[0].mxu0
      %v2701 = vadd.f32 %v2630, %v2700
      %v2702 = vpop.f32.mrb[0].mxu0
      %v2703 = vadd.f32 %v2632, %v2702
      %2704 = vdwg.mxu0
      %2705 = vmatprep.subr.mxu0 %v893
      %2706 = vmatpush1.msra.mxu0 %v892
      %2707 = vmatprep.subr.mxu0 %v901
      %2708 = vmatpush1.msra.mxu0 %v900
      %2709 = vmatprep.subr.mxu0 %v909
      %2710 = vmatpush1.msra.mxu0 %v908
      %2711 = vmatprep.subr.mxu0 %v917
      %2712 = vmatpush1.msra.mxu0 %v916
      %2713 = vmatprep.subr.mxu0 %v925
      %2714 = vmatpush1.msra.mxu0 %v924
      %2715 = vmatprep.subr.mxu0 %v933
      %2716 = vmatpush1.msra.mxu0 %v932
      %2717 = vmatprep.subr.mxu0 %v941
      %2718 = vmatpush1.msra.mxu0 %v940
      %2719 = vmatprep.subr.mxu0 %v949
      %2720 = vmatpush1.msra.mxu0 %v948
      %2721 = vmatprep.subr.mxu0 %v957
      %2722 = vmatpush1.msra.mxu0 %v956
      %2723 = vmatprep.subr.mxu0 %v965
      %2724 = vmatpush1.msra.mxu0 %v964
      %2725 = vmatprep.subr.mxu0 %v973
      %2726 = vmatpush1.msra.mxu0 %v972
      %2727 = vmatprep.subr.mxu0 %v981
      %2728 = vmatpush1.msra.mxu0 %v980
      %2729 = vmatprep.subr.mxu0 %v989
      %2730 = vmatpush1.msra.mxu0 %v988
      %2731 = vmatprep.subr.mxu0 %v997
      %2732 = vmatpush1.msra.mxu0 %v996
      %2733 = vmatprep.subr.mxu0 %v1005
      %2734 = vmatpush1.msra.mxu0 %v1004
      %2735 = vmatprep.subr.mxu0 %v1013
      %2736 = vmatpush1.msra.mxu0 %v1012
      %2737 = vmatprep.subr.mxu0 %v1021
      %2738 = vmatpush1.msra.mxu0 %v1020
      %2739 = vmatprep.subr.mxu0 %v1029
      %2740 = vmatpush1.msra.mxu0 %v1028
      %2741 = vmatprep.subr.mxu0 %v1037
      %2742 = vmatpush1.msra.mxu0 %v1036
      %2743 = vmatprep.subr.mxu0 %v1045
      %2744 = vmatpush1.msra.mxu0 %v1044
      %2745 = vmatprep.subr.mxu0 %v1053
      %2746 = vmatpush1.msra.mxu0 %v1052
      %2747 = vmatprep.subr.mxu0 %v1061
      %2748 = vmatpush1.msra.mxu0 %v1060
      %2749 = vmatprep.subr.mxu0 %v1069
      %2750 = vmatpush1.msra.mxu0 %v1068
      %2751 = vmatprep.subr.mxu0 %v1077
      %2752 = vmatpush1.msra.mxu0 %v1076
      %2753 = vmatprep.subr.mxu0 %v1085
      %2754 = vmatpush1.msra.mxu0 %v1084
      %2755 = vmatprep.subr.mxu0 %v1093
      %2756 = vmatpush1.msra.mxu0 %v1092
      %2757 = vmatprep.subr.mxu0 %v1101
      %2758 = vmatpush1.msra.mxu0 %v1100
      %2759 = vmatprep.subr.mxu0 %v1109
      %2760 = vmatpush1.msra.mxu0 %v1108
      %2761 = vmatprep.subr.mxu0 %v1117
      %2762 = vmatpush1.msra.mxu0 %v1116
      %2763 = vmatprep.subr.mxu0 %v1125
      %2764 = vmatpush1.msra.mxu0 %v1124
      %2765 = vmatprep.subr.mxu0 %v1133
      %2766 = vmatpush1.msra.mxu0 %v1132
      %2767 = vmatprep.subr.mxu0 %v1141
      %2768 = vmatpush1.msra.mxu0 %v1140
      %2769 = vmatprep.mubr.f32.mxu0 %v2491
      %2770 = vmatmul.mubr.f32.gmra.mrb[0].mxu0 %v2490
      %v2771 = vpop.f32.mrb[0].mxu0
      %v2772 = vadd.f32 %v2701, %v2771
      %v2773 = vpop.f32.mrb[0].mxu0
      %v2774 = vadd.f32 %v2703, %v2773
      %2775 = vdwg.mxu0
      %2776 = vmatprep.subr.mxu0 %v127
      %2777 = vmatpush1.msra.mxu0 %v126
      %2778 = vmatprep.subr.mxu0 %v135
      %2779 = vmatpush1.msra.mxu0 %v134
      %2780 = vmatprep.subr.mxu0 %v143
      %2781 = vmatpush1.msra.mxu0 %v142
      %2782 = vmatprep.subr.mxu0 %v151
      %2783 = vmatpush1.msra.mxu0 %v150
      %2784 = vmatprep.subr.mxu0 %v159
      %2785 = vmatpush1.msra.mxu0 %v158
      %2786 = vmatprep.subr.mxu0 %v167
      %2787 = vmatpush1.msra.mxu0 %v166
      %2788 = vmatprep.subr.mxu0 %v175
      %2789 = vmatpush1.msra.mxu0 %v174
      %2790 = vmatprep.subr.mxu0 %v183
      %2791 = vmatpush1.msra.mxu0 %v182
      %2792 = vmatprep.subr.mxu0 %v191
      %2793 = vmatpush1.msra.mxu0 %v190
      %2794 = vmatprep.subr.mxu0 %v199
      %2795 = vmatpush1.msra.mxu0 %v198
      %2796 = vmatprep.subr.mxu0 %v207
      %2797 = vmatpush1.msra.mxu0 %v206
      %2798 = vmatprep.subr.mxu0 %v215
      %2799 = vmatpush1.msra.mxu0 %v214
      %2800 = vmatprep.subr.mxu0 %v223
      %2801 = vmatpush1.msra.mxu0 %v222
      %2802 = vmatprep.subr.mxu0 %v231
      %2803 = vmatpush1.msra.mxu0 %v230
      %2804 = vmatprep.subr.mxu0 %v239
      %2805 = vmatpush1.msra.mxu0 %v238
      %2806 = vmatprep.subr.mxu0 %v247
      %2807 = vmatpush1.msra.mxu0 %v246
      %2808 = vmatprep.subr.mxu0 %v255
      %2809 = vmatpush1.msra.mxu0 %v254
      %2810 = vmatprep.subr.mxu0 %v263
      %2811 = vmatpush1.msra.mxu0 %v262
      %2812 = vmatprep.subr.mxu0 %v271
      %2813 = vmatpush1.msra.mxu0 %v270
      %2814 = vmatprep.subr.mxu0 %v279
      %2815 = vmatpush1.msra.mxu0 %v278
      %2816 = vmatprep.subr.mxu0 %v287
      %2817 = vmatpush1.msra.mxu0 %v286
      %2818 = vmatprep.subr.mxu0 %v295
      %2819 = vmatpush1.msra.mxu0 %v294
      %2820 = vmatprep.subr.mxu0 %v303
      %2821 = vmatpush1.msra.mxu0 %v302
      %2822 = vmatprep.subr.mxu0 %v311
      %2823 = vmatpush1.msra.mxu0 %v310
      %2824 = vmatprep.subr.mxu0 %v319
      %2825 = vmatpush1.msra.mxu0 %v318
      %2826 = vmatprep.subr.mxu0 %v327
      %2827 = vmatpush1.msra.mxu0 %v326
      %2828 = vmatprep.subr.mxu0 %v335
      %2829 = vmatpush1.msra.mxu0 %v334
      %2830 = vmatprep.subr.mxu0 %v343
      %2831 = vmatpush1.msra.mxu0 %v342
      %2832 = vmatprep.subr.mxu0 %v351
      %2833 = vmatpush1.msra.mxu0 %v350
      %2834 = vmatprep.subr.mxu0 %v359
      %2835 = vmatpush1.msra.mxu0 %v358
      %2836 = vmatprep.subr.mxu0 %v367
      %2837 = vmatpush1.msra.mxu0 %v366
      %2838 = vmatprep.subr.mxu0 %v375
      %2839 = vmatpush1.msra.mxu0 %v374
      %2840 = vmatprep.mubr.f32.mxu0 %v2485
      %2841 = vmatmul.mubr.f32.gmra.mrb[0].mxu0 %v2484
      %v2842 = vpop.f32.mrb[0].mxu0
      %v2843 = vadd.f32 %v1319, %v2842
      %v2844 = vpop.f32.mrb[0].mxu0
      %v2845 = vadd.f32 %v1323, %v2844
      %2846 = vdwg.mxu0
      %2847 = vmatprep.subr.mxu0 %v383
      %2848 = vmatpush1.msra.mxu0 %v382
      %2849 = vmatprep.subr.mxu0 %v391
      %2850 = vmatpush1.msra.mxu0 %v390
      %2851 = vmatprep.subr.mxu0 %v399
      %2852 = vmatpush1.msra.mxu0 %v398
      %2853 = vmatprep.subr.mxu0 %v407
      %2854 = vmatpush1.msra.mxu0 %v406
      %2855 = vmatprep.subr.mxu0 %v415
      %2856 = vmatpush1.msra.mxu0 %v414
      %2857 = vmatprep.subr.mxu0 %v423
      %2858 = vmatpush1.msra.mxu0 %v422
      %2859 = vmatprep.subr.mxu0 %v431
      %2860 = vmatpush1.msra.mxu0 %v430
      %2861 = vmatprep.subr.mxu0 %v439
      %2862 = vmatpush1.msra.mxu0 %v438
      %2863 = vmatprep.subr.mxu0 %v447
      %2864 = vmatpush1.msra.mxu0 %v446
      %2865 = vmatprep.subr.mxu0 %v455
      %2866 = vmatpush1.msra.mxu0 %v454
      %2867 = vmatprep.subr.mxu0 %v463
      %2868 = vmatpush1.msra.mxu0 %v462
      %2869 = vmatprep.subr.mxu0 %v471
      %2870 = vmatpush1.msra.mxu0 %v470
      %2871 = vmatprep.subr.mxu0 %v479
      %2872 = vmatpush1.msra.mxu0 %v478
      %2873 = vmatprep.subr.mxu0 %v487
      %2874 = vmatpush1.msra.mxu0 %v486
      %2875 = vmatprep.subr.mxu0 %v495
      %2876 = vmatpush1.msra.mxu0 %v494
      %2877 = vmatprep.subr.mxu0 %v503
      %2878 = vmatpush1.msra.mxu0 %v502
      %2879 = vmatprep.subr.mxu0 %v511
      %2880 = vmatpush1.msra.mxu0 %v510
      %2881 = vmatprep.subr.mxu0 %v519
      %2882 = vmatpush1.msra.mxu0 %v518
      %2883 = vmatprep.subr.mxu0 %v527
      %2884 = vmatpush1.msra.mxu0 %v526
      %2885 = vmatprep.subr.mxu0 %v535
      %2886 = vmatpush1.msra.mxu0 %v534
      %2887 = vmatprep.subr.mxu0 %v543
      %2888 = vmatpush1.msra.mxu0 %v542
      %2889 = vmatprep.subr.mxu0 %v551
      %2890 = vmatpush1.msra.mxu0 %v550
      %2891 = vmatprep.subr.mxu0 %v559
      %2892 = vmatpush1.msra.mxu0 %v558
      %2893 = vmatprep.subr.mxu0 %v567
      %2894 = vmatpush1.msra.mxu0 %v566
      %2895 = vmatprep.subr.mxu0 %v575
      %2896 = vmatpush1.msra.mxu0 %v574
      %2897 = vmatprep.subr.mxu0 %v583
      %2898 = vmatpush1.msra.mxu0 %v582
      %2899 = vmatprep.subr.mxu0 %v591
      %2900 = vmatpush1.msra.mxu0 %v590
      %2901 = vmatprep.subr.mxu0 %v599
      %2902 = vmatpush1.msra.mxu0 %v598
      %2903 = vmatprep.subr.mxu0 %v607
      %2904 = vmatpush1.msra.mxu0 %v606
      %2905 = vmatprep.subr.mxu0 %v615
      %2906 = vmatpush1.msra.mxu0 %v614
      %2907 = vmatprep.subr.mxu0 %v623
      %2908 = vmatpush1.msra.mxu0 %v622
      %2909 = vmatprep.subr.mxu0 %v631
      %2910 = vmatpush1.msra.mxu0 %v630
      %2911 = vmatprep.mubr.f32.mxu0 %v2487
      %2912 = vmatmul.mubr.f32.gmra.mrb[0].mxu0 %v2486
      %v2913 = vpop.f32.mrb[0].mxu0
      %v2914 = vadd.f32 %v2843, %v2913
      %v2915 = vpop.f32.mrb[0].mxu0
      %v2916 = vadd.f32 %v2845, %v2915
      %2917 = vdwg.mxu0
      %2918 = vmatprep.subr.mxu0 %v639
      %2919 = vmatpush1.msra.mxu0 %v638
      %2920 = vmatprep.subr.mxu0 %v647
      %2921 = vmatpush1.msra.mxu0 %v646
      %2922 = vmatprep.subr.mxu0 %v655
      %2923 = vmatpush1.msra.mxu0 %v654
      %2924 = vmatprep.subr.mxu0 %v663
      %2925 = vmatpush1.msra.mxu0 %v662
      %2926 = vmatprep.subr.mxu0 %v671
      %2927 = vmatpush1.msra.mxu0 %v670
      %2928 = vmatprep.subr.mxu0 %v679
      %2929 = vmatpush1.msra.mxu0 %v678
      %2930 = vmatprep.subr.mxu0 %v687
      %2931 = vmatpush1.msra.mxu0 %v686
      %2932 = vmatprep.subr.mxu0 %v695
      %2933 = vmatpush1.msra.mxu0 %v694
      %2934 = vmatprep.subr.mxu0 %v703
      %2935 = vmatpush1.msra.mxu0 %v702
      %2936 = vmatprep.subr.mxu0 %v711
      %2937 = vmatpush1.msra.mxu0 %v710
      %2938 = vmatprep.subr.mxu0 %v719
      %2939 = vmatpush1.msra.mxu0 %v718
      %2940 = vmatprep.subr.mxu0 %v727
      %2941 = vmatpush1.msra.mxu0 %v726
      %2942 = vmatprep.subr.mxu0 %v735
      %2943 = vmatpush1.msra.mxu0 %v734
      %2944 = vmatprep.subr.mxu0 %v743
      %2945 = vmatpush1.msra.mxu0 %v742
      %2946 = vmatprep.subr.mxu0 %v751
      %2947 = vmatpush1.msra.mxu0 %v750
      %2948 = vmatprep.subr.mxu0 %v759
      %2949 = vmatpush1.msra.mxu0 %v758
      %2950 = vmatprep.subr.mxu0 %v767
      %2951 = vmatpush1.msra.mxu0 %v766
      %2952 = vmatprep.subr.mxu0 %v775
      %2953 = vmatpush1.msra.mxu0 %v774
      %2954 = vmatprep.subr.mxu0 %v783
      %2955 = vmatpush1.msra.mxu0 %v782
      %2956 = vmatprep.subr.mxu0 %v791
      %2957 = vmatpush1.msra.mxu0 %v790
      %2958 = vmatprep.subr.mxu0 %v799
      %2959 = vmatpush1.msra.mxu0 %v798
      %2960 = vmatprep.subr.mxu0 %v807
      %2961 = vmatpush1.msra.mxu0 %v806
      %2962 = vmatprep.subr.mxu0 %v815
      %2963 = vmatpush1.msra.mxu0 %v814
      %2964 = vmatprep.subr.mxu0 %v823
      %2965 = vmatpush1.msra.mxu0 %v822
      %2966 = vmatprep.subr.mxu0 %v831
      %2967 = vmatpush1.msra.mxu0 %v830
      %2968 = vmatprep.subr.mxu0 %v839
      %2969 = vmatpush1.msra.mxu0 %v838
      %2970 = vmatprep.subr.mxu0 %v847
      %2971 = vmatpush1.msra.mxu0 %v846
      %2972 = vmatprep.subr.mxu0 %v855
      %2973 = vmatpush1.msra.mxu0 %v854
      %2974 = vmatprep.subr.mxu0 %v863
      %2975 = vmatpush1.msra.mxu0 %v862
      %2976 = vmatprep.subr.mxu0 %v871
      %2977 = vmatpush1.msra.mxu0 %v870
      %2978 = vmatprep.subr.mxu0 %v879
      %2979 = vmatpush1.msra.mxu0 %v878
      %2980 = vmatprep.subr.mxu0 %v887
      %2981 = vmatpush1.msra.mxu0 %v886
      %2982 = vmatprep.mubr.f32.mxu0 %v2489
      %2983 = vmatmul.mubr.f32.gmra.mrb[0].mxu0 %v2488
      %v2984 = vpop.f32.mrb[0].mxu0
      %v2985 = vadd.f32 %v2914, %v2984
      %v2986 = vpop.f32.mrb[0].mxu0
      %v2987 = vadd.f32 %v2916, %v2986
      %2988 = vdwg.mxu0
      %2989 = vmatprep.subr.mxu0 %v895
      %2990 = vmatpush1.msra.mxu0 %v894
      %2991 = vmatprep.subr.mxu0 %v903
      %2992 = vmatpush1.msra.mxu0 %v902
      %2993 = vmatprep.subr.mxu0 %v911
      %2994 = vmatpush1.msra.mxu0 %v910
      %2995 = vmatprep.subr.mxu0 %v919
      %2996 = vmatpush1.msra.mxu0 %v918
      %2997 = vmatprep.subr.mxu0 %v927
      %2998 = vmatpush1.msra.mxu0 %v926
      %2999 = vmatprep.subr.mxu0 %v935
      %3000 = vmatpush1.msra.mxu0 %v934
      %3001 = vmatprep.subr.mxu0 %v943
      %3002 = vmatpush1.msra.mxu0 %v942
      %3003 = vmatprep.subr.mxu0 %v951
      %3004 = vmatpush1.msra.mxu0 %v950
      %3005 = vmatprep.subr.mxu0 %v959
      %3006 = vmatpush1.msra.mxu0 %v958
      %3007 = vmatprep.subr.mxu0 %v967
      %3008 = vmatpush1.msra.mxu0 %v966
      %3009 = vmatprep.subr.mxu0 %v975
      %3010 = vmatpush1.msra.mxu0 %v974
      %3011 = vmatprep.subr.mxu0 %v983
      %3012 = vmatpush1.msra.mxu0 %v982
      %3013 = vmatprep.subr.mxu0 %v991
      %3014 = vmatpush1.msra.mxu0 %v990
      %3015 = vmatprep.subr.mxu0 %v999
      %3016 = vmatpush1.msra.mxu0 %v998
      %3017 = vmatprep.subr.mxu0 %v1007
      %3018 = vmatpush1.msra.mxu0 %v1006
      %3019 = vmatprep.subr.mxu0 %v1015
      %3020 = vmatpush1.msra.mxu0 %v1014
      %3021 = vmatprep.subr.mxu0 %v1023
      %3022 = vmatpush1.msra.mxu0 %v1022
      %3023 = vmatprep.subr.mxu0 %v1031
      %3024 = vmatpush1.msra.mxu0 %v1030
      %3025 = vmatprep.subr.mxu0 %v1039
      %3026 = vmatpush1.msra.mxu0 %v1038
      %3027 = vmatprep.subr.mxu0 %v1047
      %3028 = vmatpush1.msra.mxu0 %v1046
      %3029 = vmatprep.subr.mxu0 %v1055
      %3030 = vmatpush1.msra.mxu0 %v1054
      %3031 = vmatprep.subr.mxu0 %v1063
      %3032 = vmatpush1.msra.mxu0 %v1062
      %3033 = vmatprep.subr.mxu0 %v1071
      %3034 = vmatpush1.msra.mxu0 %v1070
      %3035 = vmatprep.subr.mxu0 %v1079
      %3036 = vmatpush1.msra.mxu0 %v1078
      %3037 = vmatprep.subr.mxu0 %v1087
      %3038 = vmatpush1.msra.mxu0 %v1086
      %3039 = vmatprep.subr.mxu0 %v1095
      %3040 = vmatpush1.msra.mxu0 %v1094
      %3041 = vmatprep.subr.mxu0 %v1103
      %3042 = vmatpush1.msra.mxu0 %v1102
      %3043 = vmatprep.subr.mxu0 %v1111
      %3044 = vmatpush1.msra.mxu0 %v1110
      %3045 = vmatprep.subr.mxu0 %v1119
      %3046 = vmatpush1.msra.mxu0 %v1118
      %3047 = vmatprep.subr.mxu0 %v1127
      %3048 = vmatpush1.msra.mxu0 %v1126
      %3049 = vmatprep.subr.mxu0 %v1135
      %3050 = vmatpush1.msra.mxu0 %v1134
      %3051 = vmatprep.subr.mxu0 %v1143
      %3052 = vmatpush1.msra.mxu0 %v1142
      %3053 = vmatprep.mubr.f32.mxu0 %v2491
      %3054 = vmatmul.mubr.f32.gmra.mrb[0].mxu0 %v2490
      %v3055 = vpop.f32.mrb[0].mxu0
      %v3056 = vadd.f32 %v2985, %v3055
      %v3057 = vpop.f32.mrb[0].mxu0
      %v3058 = vadd.f32 %v2987, %v3057
      %3059 = vdwg.mxu0
      %3060 = vmatprep.subr.mxu0 %v129
      %3061 = vmatpush1.msra.mxu0 %v128
      %3062 = vmatprep.subr.mxu0 %v137
      %3063 = vmatpush1.msra.mxu0 %v136
      %3064 = vmatprep.subr.mxu0 %v145
      %3065 = vmatpush1.msra.mxu0 %v144
      %3066 = vmatprep.subr.mxu0 %v153
      %3067 = vmatpush1.msra.mxu0 %v152
      %3068 = vmatprep.subr.mxu0 %v161
      %3069 = vmatpush1.msra.mxu0 %v160
      %3070 = vmatprep.subr.mxu0 %v169
      %3071 = vmatpush1.msra.mxu0 %v168
      %3072 = vmatprep.subr.mxu0 %v177
      %3073 = vmatpush1.msra.mxu0 %v176
      %3074 = vmatprep.subr.mxu0 %v185
      %3075 = vmatpush1.msra.mxu0 %v184
      %3076 = vmatprep.subr.mxu0 %v193
      %3077 = vmatpush1.msra.mxu0 %v192
      %3078 = vmatprep.subr.mxu0 %v201
      %3079 = vmatpush1.msra.mxu0 %v200
      %3080 = vmatprep.subr.mxu0 %v209
      %3081 = vmatpush1.msra.mxu0 %v208
      %3082 = vmatprep.subr.mxu0 %v217
      %3083 = vmatpush1.msra.mxu0 %v216
      %3084 = vmatprep.subr.mxu0 %v225
      %3085 = vmatpush1.msra.mxu0 %v224
      %3086 = vmatprep.subr.mxu0 %v233
      %3087 = vmatpush1.msra.mxu0 %v232
      %3088 = vmatprep.subr.mxu0 %v241
      %3089 = vmatpush1.msra.mxu0 %v240
      %3090 = vmatprep.subr.mxu0 %v249
      %3091 = vmatpush1.msra.mxu0 %v248
      %3092 = vmatprep.subr.mxu0 %v257
      %3093 = vmatpush1.msra.mxu0 %v256
      %3094 = vmatprep.subr.mxu0 %v265
      %3095 = vmatpush1.msra.mxu0 %v264
      %3096 = vmatprep.subr.mxu0 %v273
      %3097 = vmatpush1.msra.mxu0 %v272
      %3098 = vmatprep.subr.mxu0 %v281
      %3099 = vmatpush1.msra.mxu0 %v280
      %3100 = vmatprep.subr.mxu0 %v289
      %3101 = vmatpush1.msra.mxu0 %v288
      %3102 = vmatprep.subr.mxu0 %v297
      %3103 = vmatpush1.msra.mxu0 %v296
      %3104 = vmatprep.subr.mxu0 %v305
      %3105 = vmatpush1.msra.mxu0 %v304
      %3106 = vmatprep.subr.mxu0 %v313
      %3107 = vmatpush1.msra.mxu0 %v312
      %3108 = vmatprep.subr.mxu0 %v321
      %3109 = vmatpush1.msra.mxu0 %v320
      %3110 = vmatprep.subr.mxu0 %v329
      %3111 = vmatpush1.msra.mxu0 %v328
      %3112 = vmatprep.subr.mxu0 %v337
      %3113 = vmatpush1.msra.mxu0 %v336
      %3114 = vmatprep.subr.mxu0 %v345
      %3115 = vmatpush1.msra.mxu0 %v344
      %3116 = vmatprep.subr.mxu0 %v353
      %3117 = vmatpush1.msra.mxu0 %v352
      %3118 = vmatprep.subr.mxu0 %v361
      %3119 = vmatpush1.msra.mxu0 %v360
      %3120 = vmatprep.subr.mxu0 %v369
      %3121 = vmatpush1.msra.mxu0 %v368
      %3122 = vmatprep.subr.mxu0 %v377
      %3123 = vmatpush1.msra.mxu0 %v376
      %3124 = vmatprep.mubr.f32.mxu0 %v2485
      %3125 = vmatmul.mubr.f32.gmra.mrb[0].mxu0 %v2484
      %v3126 = vpop.f32.mrb[0].mxu0
      %v3127 = vadd.f32 %v1327, %v3126
      %v3128 = vpop.f32.mrb[0].mxu0
      %v3129 = vadd.f32 %v1331, %v3128
      %3130 = vdwg.mxu0
      %3131 = vmatprep.subr.mxu0 %v385
      %3132 = vmatpush1.msra.mxu0 %v384
      %3133 = vmatprep.subr.mxu0 %v393
      %3134 = vmatpush1.msra.mxu0 %v392
      %3135 = vmatprep.subr.mxu0 %v401
      %3136 = vmatpush1.msra.mxu0 %v400
      %3137 = vmatprep.subr.mxu0 %v409
      %3138 = vmatpush1.msra.mxu0 %v408
      %3139 = vmatprep.subr.mxu0 %v417
      %3140 = vmatpush1.msra.mxu0 %v416
      %3141 = vmatprep.subr.mxu0 %v425
      %3142 = vmatpush1.msra.mxu0 %v424
      %3143 = vmatprep.subr.mxu0 %v433
      %3144 = vmatpush1.msra.mxu0 %v432
      %3145 = vmatprep.subr.mxu0 %v441
      %3146 = vmatpush1.msra.mxu0 %v440
      %3147 = vmatprep.subr.mxu0 %v449
      %3148 = vmatpush1.msra.mxu0 %v448
      %3149 = vmatprep.subr.mxu0 %v457
      %3150 = vmatpush1.msra.mxu0 %v456
      %3151 = vmatprep.subr.mxu0 %v465
      %3152 = vmatpush1.msra.mxu0 %v464
      %3153 = vmatprep.subr.mxu0 %v473
      %3154 = vmatpush1.msra.mxu0 %v472
      %3155 = vmatprep.subr.mxu0 %v481
      %3156 = vmatpush1.msra.mxu0 %v480
      %3157 = vmatprep.subr.mxu0 %v489
      %3158 = vmatpush1.msra.mxu0 %v488
      %3159 = vmatprep.subr.mxu0 %v497
      %3160 = vmatpush1.msra.mxu0 %v496
      %3161 = vmatprep.subr.mxu0 %v505
      %3162 = vmatpush1.msra.mxu0 %v504
      %3163 = vmatprep.subr.mxu0 %v513
      %3164 = vmatpush1.msra.mxu0 %v512
      %3165 = vmatprep.subr.mxu0 %v521
      %3166 = vmatpush1.msra.mxu0 %v520
      %3167 = vmatprep.subr.mxu0 %v529
      %3168 = vmatpush1.msra.mxu0 %v528
      %3169 = vmatprep.subr.mxu0 %v537
      %3170 = vmatpush1.msra.mxu0 %v536
      %3171 = vmatprep.subr.mxu0 %v545
      %3172 = vmatpush1.msra.mxu0 %v544
      %3173 = vmatprep.subr.mxu0 %v553
      %3174 = vmatpush1.msra.mxu0 %v552
      %3175 = vmatprep.subr.mxu0 %v561
      %3176 = vmatpush1.msra.mxu0 %v560
      %3177 = vmatprep.subr.mxu0 %v569
      %3178 = vmatpush1.msra.mxu0 %v568
      %3179 = vmatprep.subr.mxu0 %v577
      %3180 = vmatpush1.msra.mxu0 %v576
      %3181 = vmatprep.subr.mxu0 %v585
      %3182 = vmatpush1.msra.mxu0 %v584
      %3183 = vmatprep.subr.mxu0 %v593
      %3184 = vmatpush1.msra.mxu0 %v592
      %3185 = vmatprep.subr.mxu0 %v601
      %3186 = vmatpush1.msra.mxu0 %v600
      %3187 = vmatprep.subr.mxu0 %v609
      %3188 = vmatpush1.msra.mxu0 %v608
      %3189 = vmatprep.subr.mxu0 %v617
      %3190 = vmatpush1.msra.mxu0 %v616
      %3191 = vmatprep.subr.mxu0 %v625
      %3192 = vmatpush1.msra.mxu0 %v624
      %3193 = vmatprep.subr.mxu0 %v633
      %3194 = vmatpush1.msra.mxu0 %v632
      %3195 = vmatprep.mubr.f32.mxu0 %v2487
      %3196 = vmatmul.mubr.f32.gmra.mrb[0].mxu0 %v2486
      %v3197 = vpop.f32.mrb[0].mxu0
      %v3198 = vadd.f32 %v3127, %v3197
      %v3199 = vpop.f32.mrb[0].mxu0
      %v3200 = vadd.f32 %v3129, %v3199
      %3201 = vdwg.mxu0
      %3202 = vmatprep.subr.mxu0 %v641
      %3203 = vmatpush1.msra.mxu0 %v640
      %3204 = vmatprep.subr.mxu0 %v649
      %3205 = vmatpush1.msra.mxu0 %v648
      %3206 = vmatprep.subr.mxu0 %v657
      %3207 = vmatpush1.msra.mxu0 %v656
      %3208 = vmatprep.subr.mxu0 %v665
      %3209 = vmatpush1.msra.mxu0 %v664
      %3210 = vmatprep.subr.mxu0 %v673
      %3211 = vmatpush1.msra.mxu0 %v672
      %3212 = vmatprep.subr.mxu0 %v681
      %3213 = vmatpush1.msra.mxu0 %v680
      %3214 = vmatprep.subr.mxu0 %v689
      %3215 = vmatpush1.msra.mxu0 %v688
      %3216 = vmatprep.subr.mxu0 %v697
      %3217 = vmatpush1.msra.mxu0 %v696
      %3218 = vmatprep.subr.mxu0 %v705
      %3219 = vmatpush1.msra.mxu0 %v704
      %3220 = vmatprep.subr.mxu0 %v713
      %3221 = vmatpush1.msra.mxu0 %v712
      %3222 = vmatprep.subr.mxu0 %v721
      %3223 = vmatpush1.msra.mxu0 %v720
      %3224 = vmatprep.subr.mxu0 %v729
      %3225 = vmatpush1.msra.mxu0 %v728
      %3226 = vmatprep.subr.mxu0 %v737
      %3227 = vmatpush1.msra.mxu0 %v736
      %3228 = vmatprep.subr.mxu0 %v745
      %3229 = vmatpush1.msra.mxu0 %v744
      %3230 = vmatprep.subr.mxu0 %v753
      %3231 = vmatpush1.msra.mxu0 %v752
      %3232 = vmatprep.subr.mxu0 %v761
      %3233 = vmatpush1.msra.mxu0 %v760
      %3234 = vmatprep.subr.mxu0 %v769
      %3235 = vmatpush1.msra.mxu0 %v768
      %3236 = vmatprep.subr.mxu0 %v777
      %3237 = vmatpush1.msra.mxu0 %v776
      %3238 = vmatprep.subr.mxu0 %v785
      %3239 = vmatpush1.msra.mxu0 %v784
      %3240 = vmatprep.subr.mxu0 %v793
      %3241 = vmatpush1.msra.mxu0 %v792
      %3242 = vmatprep.subr.mxu0 %v801
      %3243 = vmatpush1.msra.mxu0 %v800
      %3244 = vmatprep.subr.mxu0 %v809
      %3245 = vmatpush1.msra.mxu0 %v808
      %3246 = vmatprep.subr.mxu0 %v817
      %3247 = vmatpush1.msra.mxu0 %v816
      %3248 = vmatprep.subr.mxu0 %v825
      %3249 = vmatpush1.msra.mxu0 %v824
      %3250 = vmatprep.subr.mxu0 %v833
      %3251 = vmatpush1.msra.mxu0 %v832
      %3252 = vmatprep.subr.mxu0 %v841
      %3253 = vmatpush1.msra.mxu0 %v840
      %3254 = vmatprep.subr.mxu0 %v849
      %3255 = vmatpush1.msra.mxu0 %v848
      %3256 = vmatprep.subr.mxu0 %v857
      %3257 = vmatpush1.msra.mxu0 %v856
      %3258 = vmatprep.subr.mxu0 %v865
      %3259 = vmatpush1.msra.mxu0 %v864
      %3260 = vmatprep.subr.mxu0 %v873
      %3261 = vmatpush1.msra.mxu0 %v872
      %3262 = vmatprep.subr.mxu0 %v881
      %3263 = vmatpush1.msra.mxu0 %v880
      %3264 = vmatprep.subr.mxu0 %v889
      %3265 = vmatpush1.msra.mxu0 %v888
      %3266 = vmatprep.mubr.f32.mxu0 %v2489
      %3267 = vmatmul.mubr.f32.gmra.mrb[0].mxu0 %v2488
      %v3268 = vpop.f32.mrb[0].mxu0
      %v3269 = vadd.f32 %v3198, %v3268
      %v3270 = vpop.f32.mrb[0].mxu0
      %v3271 = vadd.f32 %v3200, %v3270
      %3272 = vdwg.mxu0
      %3273 = vmatprep.subr.mxu0 %v897
      %3274 = vmatpush1.msra.mxu0 %v896
      %3275 = vmatprep.subr.mxu0 %v905
      %3276 = vmatpush1.msra.mxu0 %v904
      %3277 = vmatprep.subr.mxu0 %v913
      %3278 = vmatpush1.msra.mxu0 %v912
      %3279 = vmatprep.subr.mxu0 %v921
      %3280 = vmatpush1.msra.mxu0 %v920
      %3281 = vmatprep.subr.mxu0 %v929
      %3282 = vmatpush1.msra.mxu0 %v928
      %3283 = vmatprep.subr.mxu0 %v937
      %3284 = vmatpush1.msra.mxu0 %v936
      %3285 = vmatprep.subr.mxu0 %v945
      %3286 = vmatpush1.msra.mxu0 %v944
      %3287 = vmatprep.subr.mxu0 %v953
      %3288 = vmatpush1.msra.mxu0 %v952
      %3289 = vmatprep.subr.mxu0 %v961
      %3290 = vmatpush1.msra.mxu0 %v960
      %3291 = vmatprep.subr.mxu0 %v969
      %3292 = vmatpush1.msra.mxu0 %v968
      %3293 = vmatprep.subr.mxu0 %v977
      %3294 = vmatpush1.msra.mxu0 %v976
      %3295 = vmatprep.subr.mxu0 %v985
      %3296 = vmatpush1.msra.mxu0 %v984
      %3297 = vmatprep.subr.mxu0 %v993
      %3298 = vmatpush1.msra.mxu0 %v992
      %3299 = vmatprep.subr.mxu0 %v1001
      %3300 = vmatpush1.msra.mxu0 %v1000
      %3301 = vmatprep.subr.mxu0 %v1009
      %3302 = vmatpush1.msra.mxu0 %v1008
      %3303 = vmatprep.subr.mxu0 %v1017
      %3304 = vmatpush1.msra.mxu0 %v1016
      %3305 = vmatprep.subr.mxu0 %v1025
      %3306 = vmatpush1.msra.mxu0 %v1024
      %3307 = vmatprep.subr.mxu0 %v1033
      %3308 = vmatpush1.msra.mxu0 %v1032
      %3309 = vmatprep.subr.mxu0 %v1041
      %3310 = vmatpush1.msra.mxu0 %v1040
      %3311 = vmatprep.subr.mxu0 %v1049
      %3312 = vmatpush1.msra.mxu0 %v1048
      %3313 = vmatprep.subr.mxu0 %v1057
      %3314 = vmatpush1.msra.mxu0 %v1056
      %3315 = vmatprep.subr.mxu0 %v1065
      %3316 = vmatpush1.msra.mxu0 %v1064
      %3317 = vmatprep.subr.mxu0 %v1073
      %3318 = vmatpush1.msra.mxu0 %v1072
      %3319 = vmatprep.subr.mxu0 %v1081
      %3320 = vmatpush1.msra.mxu0 %v1080
      %3321 = vmatprep.subr.mxu0 %v1089
      %3322 = vmatpush1.msra.mxu0 %v1088
      %3323 = vmatprep.subr.mxu0 %v1097
      %3324 = vmatpush1.msra.mxu0 %v1096
      %3325 = vmatprep.subr.mxu0 %v1105
      %3326 = vmatpush1.msra.mxu0 %v1104
      %3327 = vmatprep.subr.mxu0 %v1113
      %3328 = vmatpush1.msra.mxu0 %v1112
      %3329 = vmatprep.subr.mxu0 %v1121
      %3330 = vmatpush1.msra.mxu0 %v1120
      %3331 = vmatprep.subr.mxu0 %v1129
      %3332 = vmatpush1.msra.mxu0 %v1128
      %3333 = vmatprep.subr.mxu0 %v1137
      %3334 = vmatpush1.msra.mxu0 %v1136
      %3335 = vmatprep.subr.mxu0 %v1145
      %3336 = vmatpush1.msra.mxu0 %v1144
      %3337 = vmatprep.mubr.f32.mxu0 %v2491
      %3338 = vmatmul.mubr.f32.gmra.mrb[0].mxu0 %v2490
      %v3339 = vpop.f32.mrb[0].mxu0
      %v3340 = vadd.f32 %v3269, %v3339
      %v3341 = vpop.f32.mrb[0].mxu0
      %v3342 = vadd.f32 %v3271, %v3341
      %3343 = vdwg.mxu0
      %3344 = vmatprep.subr.mxu0 %v131
      %3345 = vmatpush1.msra.mxu0 %v130
      %3346 = vmatprep.subr.mxu0 %v139
      %3347 = vmatpush1.msra.mxu0 %v138
      %3348 = vmatprep.subr.mxu0 %v147
      %3349 = vmatpush1.msra.mxu0 %v146
      %3350 = vmatprep.subr.mxu0 %v155
      %3351 = vmatpush1.msra.mxu0 %v154
      %3352 = vmatprep.subr.mxu0 %v163
      %3353 = vmatpush1.msra.mxu0 %v162
      %3354 = vmatprep.subr.mxu0 %v171
      %3355 = vmatpush1.msra.mxu0 %v170
      %3356 = vmatprep.subr.mxu0 %v179
      %3357 = vmatpush1.msra.mxu0 %v178
      %3358 = vmatprep.subr.mxu0 %v187
      %3359 = vmatpush1.msra.mxu0 %v186
      %3360 = vmatprep.subr.mxu0 %v195
      %3361 = vmatpush1.msra.mxu0 %v194
      %3362 = vmatprep.subr.mxu0 %v203
      %3363 = vmatpush1.msra.mxu0 %v202
      %3364 = vmatprep.subr.mxu0 %v211
      %3365 = vmatpush1.msra.mxu0 %v210
      %3366 = vmatprep.subr.mxu0 %v219
      %3367 = vmatpush1.msra.mxu0 %v218
      %3368 = vmatprep.subr.mxu0 %v227
      %3369 = vmatpush1.msra.mxu0 %v226
      %3370 = vmatprep.subr.mxu0 %v235
      %3371 = vmatpush1.msra.mxu0 %v234
      %3372 = vmatprep.subr.mxu0 %v243
      %3373 = vmatpush1.msra.mxu0 %v242
      %3374 = vmatprep.subr.mxu0 %v251
      %3375 = vmatpush1.msra.mxu0 %v250
      %3376 = vmatprep.subr.mxu0 %v259
      %3377 = vmatpush1.msra.mxu0 %v258
      %3378 = vmatprep.subr.mxu0 %v267
      %3379 = vmatpush1.msra.mxu0 %v266
      %3380 = vmatprep.subr.mxu0 %v275
      %3381 = vmatpush1.msra.mxu0 %v274
      %3382 = vmatprep.subr.mxu0 %v283
      %3383 = vmatpush1.msra.mxu0 %v282
      %3384 = vmatprep.subr.mxu0 %v291
      %3385 = vmatpush1.msra.mxu0 %v290
      %3386 = vmatprep.subr.mxu0 %v299
      %3387 = vmatpush1.msra.mxu0 %v298
      %3388 = vmatprep.subr.mxu0 %v307
      %3389 = vmatpush1.msra.mxu0 %v306
      %3390 = vmatprep.subr.mxu0 %v315
      %3391 = vmatpush1.msra.mxu0 %v314
      %3392 = vmatprep.subr.mxu0 %v323
      %3393 = vmatpush1.msra.mxu0 %v322
      %3394 = vmatprep.subr.mxu0 %v331
      %3395 = vmatpush1.msra.mxu0 %v330
      %3396 = vmatprep.subr.mxu0 %v339
      %3397 = vmatpush1.msra.mxu0 %v338
      %3398 = vmatprep.subr.mxu0 %v347
      %3399 = vmatpush1.msra.mxu0 %v346
      %3400 = vmatprep.subr.mxu0 %v355
      %3401 = vmatpush1.msra.mxu0 %v354
      %3402 = vmatprep.subr.mxu0 %v363
      %3403 = vmatpush1.msra.mxu0 %v362
      %3404 = vmatprep.subr.mxu0 %v371
      %3405 = vmatpush1.msra.mxu0 %v370
      %3406 = vmatprep.subr.mxu0 %v379
      %3407 = vmatpush1.msra.mxu0 %v378
      %3408 = vmatprep.mubr.f32.mxu0 %v2485
      %3409 = vmatmul.mubr.f32.gmra.mrb[0].mxu0 %v2484
      %v3410 = vpop.f32.mrb[0].mxu0
      %v3411 = vadd.f32 %v1335, %v3410
      %v3412 = vpop.f32.mrb[0].mxu0
      %v3413 = vadd.f32 %v1339, %v3412
      %3414 = vdwg.mxu0
      %3415 = vmatprep.subr.mxu0 %v387
      %3416 = vmatpush1.msra.mxu0 %v386
      %3417 = vmatprep.subr.mxu0 %v395
      %3418 = vmatpush1.msra.mxu0 %v394
      %3419 = vmatprep.subr.mxu0 %v403
      %3420 = vmatpush1.msra.mxu0 %v402
      %3421 = vmatprep.subr.mxu0 %v411
      %3422 = vmatpush1.msra.mxu0 %v410
      %3423 = vmatprep.subr.mxu0 %v419
      %3424 = vmatpush1.msra.mxu0 %v418
      %3425 = vmatprep.subr.mxu0 %v427
      %3426 = vmatpush1.msra.mxu0 %v426
      %3427 = vmatprep.subr.mxu0 %v435
      %3428 = vmatpush1.msra.mxu0 %v434
      %3429 = vmatprep.subr.mxu0 %v443
      %3430 = vmatpush1.msra.mxu0 %v442
      %3431 = vmatprep.subr.mxu0 %v451
      %3432 = vmatpush1.msra.mxu0 %v450
      %3433 = vmatprep.subr.mxu0 %v459
      %3434 = vmatpush1.msra.mxu0 %v458
      %3435 = vmatprep.subr.mxu0 %v467
      %3436 = vmatpush1.msra.mxu0 %v466
      %3437 = vmatprep.subr.mxu0 %v475
      %3438 = vmatpush1.msra.mxu0 %v474
      %3439 = vmatprep.subr.mxu0 %v483
      %3440 = vmatpush1.msra.mxu0 %v482
      %3441 = vmatprep.subr.mxu0 %v491
      %3442 = vmatpush1.msra.mxu0 %v490
      %3443 = vmatprep.subr.mxu0 %v499
      %3444 = vmatpush1.msra.mxu0 %v498
      %3445 = vmatprep.subr.mxu0 %v507
      %3446 = vmatpush1.msra.mxu0 %v506
      %3447 = vmatprep.subr.mxu0 %v515
      %3448 = vmatpush1.msra.mxu0 %v514
      %3449 = vmatprep.subr.mxu0 %v523
      %3450 = vmatpush1.msra.mxu0 %v522
      %3451 = vmatprep.subr.mxu0 %v531
      %3452 = vmatpush1.msra.mxu0 %v530
      %3453 = vmatprep.subr.mxu0 %v539
      %3454 = vmatpush1.msra.mxu0 %v538
      %3455 = vmatprep.subr.mxu0 %v547
      %3456 = vmatpush1.msra.mxu0 %v546
      %3457 = vmatprep.subr.mxu0 %v555
      %3458 = vmatpush1.msra.mxu0 %v554
      %3459 = vmatprep.subr.mxu0 %v563
      %3460 = vmatpush1.msra.mxu0 %v562
      %3461 = vmatprep.subr.mxu0 %v571
      %3462 = vmatpush1.msra.mxu0 %v570
      %3463 = vmatprep.subr.mxu0 %v579
      %3464 = vmatpush1.msra.mxu0 %v578
      %3465 = vmatprep.subr.mxu0 %v587
      %3466 = vmatpush1.msra.mxu0 %v586
      %3467 = vmatprep.subr.mxu0 %v595
      %3468 = vmatpush1.msra.mxu0 %v594
      %3469 = vmatprep.subr.mxu0 %v603
      %3470 = vmatpush1.msra.mxu0 %v602
      %3471 = vmatprep.subr.mxu0 %v611
      %3472 = vmatpush1.msra.mxu0 %v610
      %3473 = vmatprep.subr.mxu0 %v619
      %3474 = vmatpush1.msra.mxu0 %v618
      %3475 = vmatprep.subr.mxu0 %v627
      %3476 = vmatpush1.msra.mxu0 %v626
      %3477 = vmatprep.subr.mxu0 %v635
      %3478 = vmatpush1.msra.mxu0 %v634
      %3479 = vmatprep.mubr.f32.mxu0 %v2487
      %3480 = vmatmul.mubr.f32.gmra.mrb[0].mxu0 %v2486
      %v3481 = vpop.f32.mrb[0].mxu0
      %v3482 = vadd.f32 %v3411, %v3481
      %v3483 = vpop.f32.mrb[0].mxu0
      %v3484 = vadd.f32 %v3413, %v3483
      %3485 = vdwg.mxu0
      %3486 = vmatprep.subr.mxu0 %v643
      %3487 = vmatpush1.msra.mxu0 %v642
      %3488 = vmatprep.subr.mxu0 %v651
      %3489 = vmatpush1.msra.mxu0 %v650
      %3490 = vmatprep.subr.mxu0 %v659
      %3491 = vmatpush1.msra.mxu0 %v658
      %3492 = vmatprep.subr.mxu0 %v667
      %3493 = vmatpush1.msra.mxu0 %v666
      %3494 = vmatprep.subr.mxu0 %v675
      %3495 = vmatpush1.msra.mxu0 %v674
      %3496 = vmatprep.subr.mxu0 %v683
      %3497 = vmatpush1.msra.mxu0 %v682
      %3498 = vmatprep.subr.mxu0 %v691
      %3499 = vmatpush1.msra.mxu0 %v690
      %3500 = vmatprep.subr.mxu0 %v699
      %3501 = vmatpush1.msra.mxu0 %v698
      %3502 = vmatprep.subr.mxu0 %v707
      %3503 = vmatpush1.msra.mxu0 %v706
      %3504 = vmatprep.subr.mxu0 %v715
      %3505 = vmatpush1.msra.mxu0 %v714
      %3506 = vmatprep.subr.mxu0 %v723
      %3507 = vmatpush1.msra.mxu0 %v722
      %3508 = vmatprep.subr.mxu0 %v731
      %3509 = vmatpush1.msra.mxu0 %v730
      %3510 = vmatprep.subr.mxu0 %v739
      %3511 = vmatpush1.msra.mxu0 %v738
      %3512 = vmatprep.subr.mxu0 %v747
      %3513 = vmatpush1.msra.mxu0 %v746
      %3514 = vmatprep.subr.mxu0 %v755
      %3515 = vmatpush1.msra.mxu0 %v754
      %3516 = vmatprep.subr.mxu0 %v763
      %3517 = vmatpush1.msra.mxu0 %v762
      %3518 = vmatprep.subr.mxu0 %v771
      %3519 = vmatpush1.msra.mxu0 %v770
      %3520 = vmatprep.subr.mxu0 %v779
      %3521 = vmatpush1.msra.mxu0 %v778
      %3522 = vmatprep.subr.mxu0 %v787
      %3523 = vmatpush1.msra.mxu0 %v786
      %3524 = vmatprep.subr.mxu0 %v795
      %3525 = vmatpush1.msra.mxu0 %v794
      %3526 = vmatprep.subr.mxu0 %v803
      %3527 = vmatpush1.msra.mxu0 %v802
      %3528 = vmatprep.subr.mxu0 %v811
      %3529 = vmatpush1.msra.mxu0 %v810
      %3530 = vmatprep.subr.mxu0 %v819
      %3531 = vmatpush1.msra.mxu0 %v818
      %3532 = vmatprep.subr.mxu0 %v827
      %3533 = vmatpush1.msra.mxu0 %v826
      %3534 = vmatprep.subr.mxu0 %v835
      %3535 = vmatpush1.msra.mxu0 %v834
      %3536 = vmatprep.subr.mxu0 %v843
      %3537 = vmatpush1.msra.mxu0 %v842
      %3538 = vmatprep.subr.mxu0 %v851
      %3539 = vmatpush1.msra.mxu0 %v850
      %3540 = vmatprep.subr.mxu0 %v859
      %3541 = vmatpush1.msra.mxu0 %v858
      %3542 = vmatprep.subr.mxu0 %v867
      %3543 = vmatpush1.msra.mxu0 %v866
      %3544 = vmatprep.subr.mxu0 %v875
      %3545 = vmatpush1.msra.mxu0 %v874
      %3546 = vmatprep.subr.mxu0 %v883
      %3547 = vmatpush1.msra.mxu0 %v882
      %3548 = vmatprep.subr.mxu0 %v891
      %3549 = vmatpush1.msra.mxu0 %v890
      %3550 = vmatprep.mubr.f32.mxu0 %v2489
      %3551 = vmatmul.mubr.f32.gmra.mrb[0].mxu0 %v2488
      %v3552 = vpop.f32.mrb[0].mxu0
      %v3553 = vadd.f32 %v3482, %v3552
      %v3554 = vpop.f32.mrb[0].mxu0
      %v3555 = vadd.f32 %v3484, %v3554
      %3556 = vdwg.mxu0
      %3557 = vmatprep.subr.mxu0 %v899
      %3558 = vmatpush1.msra.mxu0 %v898
      %3559 = vmatprep.subr.mxu0 %v907
      %3560 = vmatpush1.msra.mxu0 %v906
      %3561 = vmatprep.subr.mxu0 %v915
      %3562 = vmatpush1.msra.mxu0 %v914
      %3563 = vmatprep.subr.mxu0 %v923
      %3564 = vmatpush1.msra.mxu0 %v922
      %3565 = vmatprep.subr.mxu0 %v931
      %3566 = vmatpush1.msra.mxu0 %v930
      %3567 = vmatprep.subr.mxu0 %v939
      %3568 = vmatpush1.msra.mxu0 %v938
      %3569 = vmatprep.subr.mxu0 %v947
      %3570 = vmatpush1.msra.mxu0 %v946
      %3571 = vmatprep.subr.mxu0 %v955
      %3572 = vmatpush1.msra.mxu0 %v954
      %3573 = vmatprep.subr.mxu0 %v963
      %3574 = vmatpush1.msra.mxu0 %v962
      %3575 = vmatprep.subr.mxu0 %v971
      %3576 = vmatpush1.msra.mxu0 %v970
      %3577 = vmatprep.subr.mxu0 %v979
      %3578 = vmatpush1.msra.mxu0 %v978
      %3579 = vmatprep.subr.mxu0 %v987
      %3580 = vmatpush1.msra.mxu0 %v986
      %3581 = vmatprep.subr.mxu0 %v995
      %3582 = vmatpush1.msra.mxu0 %v994
      %3583 = vmatprep.subr.mxu0 %v1003
      %3584 = vmatpush1.msra.mxu0 %v1002
      %3585 = vmatprep.subr.mxu0 %v1011
      %3586 = vmatpush1.msra.mxu0 %v1010
      %3587 = vmatprep.subr.mxu0 %v1019
      %3588 = vmatpush1.msra.mxu0 %v1018
      %3589 = vmatprep.subr.mxu0 %v1027
      %3590 = vmatpush1.msra.mxu0 %v1026
      %3591 = vmatprep.subr.mxu0 %v1035
      %3592 = vmatpush1.msra.mxu0 %v1034
      %3593 = vmatprep.subr.mxu0 %v1043
      %3594 = vmatpush1.msra.mxu0 %v1042
      %3595 = vmatprep.subr.mxu0 %v1051
      %3596 = vmatpush1.msra.mxu0 %v1050
      %3597 = vmatprep.subr.mxu0 %v1059
      %3598 = vmatpush1.msra.mxu0 %v1058
      %3599 = vmatprep.subr.mxu0 %v1067
      %3600 = vmatpush1.msra.mxu0 %v1066
      %3601 = vmatprep.subr.mxu0 %v1075
      %3602 = vmatpush1.msra.mxu0 %v1074
      %3603 = vmatprep.subr.mxu0 %v1083
      %3604 = vmatpush1.msra.mxu0 %v1082
      %3605 = vmatprep.subr.mxu0 %v1091
      %3606 = vmatpush1.msra.mxu0 %v1090
      %3607 = vmatprep.subr.mxu0 %v1099
      %3608 = vmatpush1.msra.mxu0 %v1098
      %3609 = vmatprep.subr.mxu0 %v1107
      %3610 = vmatpush1.msra.mxu0 %v1106
      %3611 = vmatprep.subr.mxu0 %v1115
      %3612 = vmatpush1.msra.mxu0 %v1114
      %3613 = vmatprep.subr.mxu0 %v1123
      %3614 = vmatpush1.msra.mxu0 %v1122
      %3615 = vmatprep.subr.mxu0 %v1131
      %3616 = vmatpush1.msra.mxu0 %v1130
      %3617 = vmatprep.subr.mxu0 %v1139
      %3618 = vmatpush1.msra.mxu0 %v1138
      %3619 = vmatprep.subr.mxu0 %v1147
      %3620 = vmatpush1.msra.mxu0 %v1146
      %3621 = vmatprep.mubr.f32.mxu0 %v2491
      %3622 = vmatmul.mubr.f32.gmra.mrb[0].mxu0 %v2490
      %v3623 = vpop.f32.mrb[0].mxu0
      %v3624 = vadd.f32 %v3553, %v3623
      %v3625 = vpop.f32.mrb[0].mxu0
      %v3626 = vadd.f32 %v3555, %v3625
      %3627 = vdwg.mxu0
      %v3628 = vadd.f32 %v1299, %v2772
      %v3629 = vadd.f32 %v1300, %v2774
      %v3630 = vadd.f32 %v1301, %v3056
      %v3631 = vadd.f32 %v1302, %v3058
      %v3632 = vadd.f32 %v1303, %v3340
      %v3633 = vadd.f32 %v1304, %v3342
      %v3634 = vadd.f32 %v1305, %v3624
      %v3635 = vadd.f32 %v1306, %v3626
      %v3636 = vrot.slane %v3628, 4
      %v3637 = vadd.f32 %v3628, %v3636
      %v3638 = vrot.slane %v3637, 2
      %v3639 = vadd.f32 %v3637, %v3638
      %v3640 = vrot.slane %v3639, 1
      %v3641 = vadd.f32 %v3639, %v3640
      %v3642 = vrot.slane %v3629, 4
      %v3643 = vadd.f32 %v3629, %v3642
      %v3644 = vrot.slane %v3643, 2
      %v3645 = vadd.f32 %v3643, %v3644
      %v3646 = vrot.slane %v3645, 1
      %v3647 = vadd.f32 %v3645, %v3646
      %v3648 = vrot.slane %v3630, 4
      %v3649 = vadd.f32 %v3630, %v3648
      %v3650 = vrot.slane %v3649, 2
      %v3651 = vadd.f32 %v3649, %v3650
      %v3652 = vrot.slane %v3651, 1
      %v3653 = vadd.f32 %v3651, %v3652
      %v3654 = vrot.slane %v3631, 4
      %v3655 = vadd.f32 %v3631, %v3654
      %v3656 = vrot.slane %v3655, 2
      %v3657 = vadd.f32 %v3655, %v3656
      %v3658 = vrot.slane %v3657, 1
      %v3659 = vadd.f32 %v3657, %v3658
      %v3660 = vrot.slane %v3632, 4
      %v3661 = vadd.f32 %v3632, %v3660
      %v3662 = vrot.slane %v3661, 2
      %v3663 = vadd.f32 %v3661, %v3662
      %v3664 = vrot.slane %v3663, 1
      %v3665 = vadd.f32 %v3663, %v3664
      %v3666 = vrot.slane %v3633, 4
      %v3667 = vadd.f32 %v3633, %v3666
      %v3668 = vrot.slane %v3667, 2
      %v3669 = vadd.f32 %v3667, %v3668
      %v3670 = vrot.slane %v3669, 1
      %v3671 = vadd.f32 %v3669, %v3670
      %v3672 = vrot.slane %v3634, 4
      %v3673 = vadd.f32 %v3634, %v3672
      %v3674 = vrot.slane %v3673, 2
      %v3675 = vadd.f32 %v3673, %v3674
      %v3676 = vrot.slane %v3675, 1
      %v3677 = vadd.f32 %v3675, %v3676
      %v3678 = vrot.slane %v3635, 4
      %v3679 = vadd.f32 %v3635, %v3678
      %v3680 = vrot.slane %v3679, 2
      %v3681 = vadd.f32 %v3679, %v3680
      %v3682 = vrot.slane %v3681, 1
      %v3683 = vadd.f32 %v3681, %v3682
      %v3684 = vmul.f32 %v3628, %v3628
      %v3685 = vmul.f32 %v3629, %v3629
      %v3686 = vmul.f32 %v3630, %v3630
      %v3687 = vmul.f32 %v3631, %v3631
      %v3688 = vmul.f32 %v3632, %v3632
      %v3689 = vmul.f32 %v3633, %v3633
      %v3690 = vmul.f32 %v3634, %v3634
      %v3691 = vmul.f32 %v3635, %v3635
      %v3692 = vrot.slane %v3684, 4
      %v3693 = vadd.f32 %v3684, %v3692
      %v3694 = vrot.slane %v3693, 2
      %v3695 = vadd.f32 %v3693, %v3694
      %v3696 = vrot.slane %v3695, 1
      %v3697 = vadd.f32 %v3695, %v3696
      %v3698 = vrot.slane %v3685, 4
      %v3699 = vadd.f32 %v3685, %v3698
      %v3700 = vrot.slane %v3699, 2
      %v3701 = vadd.f32 %v3699, %v3700
      %v3702 = vrot.slane %v3701, 1
      %v3703 = vadd.f32 %v3701, %v3702
      %v3704 = vrot.slane %v3686, 4
      %v3705 = vadd.f32 %v3686, %v3704
      %v3706 = vrot.slane %v3705, 2
      %v3707 = vadd.f32 %v3705, %v3706
      %v3708 = vrot.slane %v3707, 1
      %v3709 = vadd.f32 %v3707, %v3708
      %v3710 = vrot.slane %v3687, 4
      %v3711 = vadd.f32 %v3687, %v3710
      %v3712 = vrot.slane %v3711, 2
      %v3713 = vadd.f32 %v3711, %v3712
      %v3714 = vrot.slane %v3713, 1
      %v3715 = vadd.f32 %v3713, %v3714
      %v3716 = vrot.slane %v3688, 4
      %v3717 = vadd.f32 %v3688, %v3716
      %v3718 = vrot.slane %v3717, 2
      %v3719 = vadd.f32 %v3717, %v3718
      %v3720 = vrot.slane %v3719, 1
      %v3721 = vadd.f32 %v3719, %v3720
      %v3722 = vrot.slane %v3689, 4
      %v3723 = vadd.f32 %v3689, %v3722
      %v3724 = vrot.slane %v3723, 2
      %v3725 = vadd.f32 %v3723, %v3724
      %v3726 = vrot.slane %v3725, 1
      %v3727 = vadd.f32 %v3725, %v3726
      %v3728 = vrot.slane %v3690, 4
      %v3729 = vadd.f32 %v3690, %v3728
      %v3730 = vrot.slane %v3729, 2
      %v3731 = vadd.f32 %v3729, %v3730
      %v3732 = vrot.slane %v3731, 1
      %v3733 = vadd.f32 %v3731, %v3732
      %v3734 = vrot.slane %v3691, 4
      %v3735 = vadd.f32 %v3691, %v3734
      %v3736 = vrot.slane %v3735, 2
      %v3737 = vadd.f32 %v3735, %v3736
      %v3738 = vrot.slane %v3737, 1
      %v3739 = vadd.f32 %v3737, %v3738
      %3740 = vmatprep.subr.mxu0 0.0
      %3741 = vmatpush1.msra.mxu0 %v1149
      %3742 = vmatprep.subr.mxu0 0.0
      %3743 = vmatpush1.msra.mxu0 %v1150
      %3744 = vmatprep.subr.mxu0 0.0
      %3745 = vmatpush1.msra.mxu0 %v1151
      %3746 = vmatprep.subr.mxu0 0.0
      %3747 = vmatpush1.msra.mxu0 %v1152
      %3748 = vmatprep.subr.mxu0 0.0
      %3749 = vmatpush1.msra.mxu0 %v1153
      %3750 = vmatprep.subr.mxu0 0.0
      %3751 = vmatpush1.msra.mxu0 %v1154
      %3752 = vmatprep.subr.mxu0 0.0
      %3753 = vmatpush1.msra.mxu0 %v1155
      %3754 = vmatprep.subr.mxu0 0.0
      %3755 = vmatpush1.msra.mxu0 %v1156
      %3756 = vmatprep.subr.mxu0 0.0
      %3757 = vmatpush1.msra.mxu0 %v1157
      %3758 = vmatprep.subr.mxu0 0.0
      %3759 = vmatpush1.msra.mxu0 %v1158
      %3760 = vmatprep.subr.mxu0 0.0
      %3761 = vmatpush1.msra.mxu0 %v1159
      %3762 = vmatprep.subr.mxu0 0.0
      %3763 = vmatpush1.msra.mxu0 %v1160
      %3764 = vmatprep.subr.mxu0 0.0
      %3765 = vmatpush1.msra.mxu0 %v1161
      %3766 = vmatprep.subr.mxu0 0.0
      %3767 = vmatpush1.msra.mxu0 %v1162
      %3768 = vmatprep.subr.mxu0 0.0
      %3769 = vmatpush1.msra.mxu0 %v1163
      %3770 = vmatprep.subr.mxu0 0.0
      %3771 = vmatpush1.msra.mxu0 %v1164
      %3772 = vmatprep.subr.mxu0 0.0
      %3773 = vmatpush1.msra.mxu0 %v1165
      %3774 = vmatprep.subr.mxu0 0.0
      %3775 = vmatpush1.msra.mxu0 %v1166
      %3776 = vmatprep.subr.mxu0 0.0
      %3777 = vmatpush1.msra.mxu0 %v1167
      %3778 = vmatprep.subr.mxu0 0.0
      %3779 = vmatpush1.msra.mxu0 %v1168
      %3780 = vmatprep.subr.mxu0 0.0
      %3781 = vmatpush1.msra.mxu0 %v1169
      %3782 = vmatprep.subr.mxu0 0.0
      %3783 = vmatpush1.msra.mxu0 %v1170
      %3784 = vmatprep.subr.mxu0 0.0
      %3785 = vmatpush1.msra.mxu0 %v1171
      %3786 = vmatprep.subr.mxu0 0.0
      %3787 = vmatpush1.msra.mxu0 %v1172
      %3788 = vmatprep.subr.mxu0 0.0
      %3789 = vmatpush1.msra.mxu0 %v1173
      %3790 = vmatprep.subr.mxu0 0.0
      %3791 = vmatpush1.msra.mxu0 %v1174
      %3792 = vmatprep.subr.mxu0 0.0
      %3793 = vmatpush1.msra.mxu0 %v1175
      %3794 = vmatprep.subr.mxu0 0.0
      %3795 = vmatpush1.msra.mxu0 %v1176
      %3796 = vmatprep.subr.mxu0 0.0
      %3797 = vmatpush1.msra.mxu0 %v1177
      %3798 = vmatprep.subr.mxu0 0.0
      %3799 = vmatpush1.msra.mxu0 %v1178
      %3800 = vmatprep.subr.mxu0 0.0
      %3801 = vmatpush1.msra.mxu0 %v1179
      %3802 = vmatprep.subr.mxu0 0.0
      %3803 = vmatpush1.msra.mxu0 %v1180
      %3804 = vmatprep.mubr.f32.mxu0 %v3647
      %3805 = vmatmul.mubr.f32.gmra.mrb[0].mxu0 %v3641
      %v3806 = vpop.f32.mrb[0].mxu0
      %v3807 = vadd.f32 0.0, %v3806
      %v3808 = vpop.f32.mrb[0].mxu0
      %3809 = vdwg.mxu0
      %3810 = vmatprep.subr.mxu0 0.0
      %3811 = vmatpush1.msra.mxu0 %v1181
      %3812 = vmatprep.subr.mxu0 0.0
      %3813 = vmatpush1.msra.mxu0 %v1182
      %3814 = vmatprep.subr.mxu0 0.0
      %3815 = vmatpush1.msra.mxu0 %v1183
      %3816 = vmatprep.subr.mxu0 0.0
      %3817 = vmatpush1.msra.mxu0 %v1184
      %3818 = vmatprep.subr.mxu0 0.0
      %3819 = vmatpush1.msra.mxu0 %v1185
      %3820 = vmatprep.subr.mxu0 0.0
      %3821 = vmatpush1.msra.mxu0 %v1186
      %3822 = vmatprep.subr.mxu0 0.0
      %3823 = vmatpush1.msra.mxu0 %v1187
      %3824 = vmatprep.subr.mxu0 0.0
      %3825 = vmatpush1.msra.mxu0 %v1188
      %3826 = vmatprep.subr.mxu0 0.0
      %3827 = vmatpush1.msra.mxu0 %v1189
      %3828 = vmatprep.subr.mxu0 0.0
      %3829 = vmatpush1.msra.mxu0 %v1190
      %3830 = vmatprep.subr.mxu0 0.0
      %3831 = vmatpush1.msra.mxu0 %v1191
      %3832 = vmatprep.subr.mxu0 0.0
      %3833 = vmatpush1.msra.mxu0 %v1192
      %3834 = vmatprep.subr.mxu0 0.0
      %3835 = vmatpush1.msra.mxu0 %v1193
      %3836 = vmatprep.subr.mxu0 0.0
      %3837 = vmatpush1.msra.mxu0 %v1194
      %3838 = vmatprep.subr.mxu0 0.0
      %3839 = vmatpush1.msra.mxu0 %v1195
      %3840 = vmatprep.subr.mxu0 0.0
      %3841 = vmatpush1.msra.mxu0 %v1196
      %3842 = vmatprep.subr.mxu0 0.0
      %3843 = vmatpush1.msra.mxu0 %v1197
      %3844 = vmatprep.subr.mxu0 0.0
      %3845 = vmatpush1.msra.mxu0 %v1198
      %3846 = vmatprep.subr.mxu0 0.0
      %3847 = vmatpush1.msra.mxu0 %v1199
      %3848 = vmatprep.subr.mxu0 0.0
      %3849 = vmatpush1.msra.mxu0 %v1200
      %3850 = vmatprep.subr.mxu0 0.0
      %3851 = vmatpush1.msra.mxu0 %v1201
      %3852 = vmatprep.subr.mxu0 0.0
      %3853 = vmatpush1.msra.mxu0 %v1202
      %3854 = vmatprep.subr.mxu0 0.0
      %3855 = vmatpush1.msra.mxu0 %v1203
      %3856 = vmatprep.subr.mxu0 0.0
      %3857 = vmatpush1.msra.mxu0 %v1204
      %3858 = vmatprep.subr.mxu0 0.0
      %3859 = vmatpush1.msra.mxu0 %v1205
      %3860 = vmatprep.subr.mxu0 0.0
      %3861 = vmatpush1.msra.mxu0 %v1206
      %3862 = vmatprep.subr.mxu0 0.0
      %3863 = vmatpush1.msra.mxu0 %v1207
      %3864 = vmatprep.subr.mxu0 0.0
      %3865 = vmatpush1.msra.mxu0 %v1208
      %3866 = vmatprep.subr.mxu0 0.0
      %3867 = vmatpush1.msra.mxu0 %v1209
      %3868 = vmatprep.subr.mxu0 0.0
      %3869 = vmatpush1.msra.mxu0 %v1210
      %3870 = vmatprep.subr.mxu0 0.0
      %3871 = vmatpush1.msra.mxu0 %v1211
      %3872 = vmatprep.subr.mxu0 0.0
      %3873 = vmatpush1.msra.mxu0 %v1212
      %3874 = vmatprep.mubr.f32.mxu0 %v3659
      %3875 = vmatmul.mubr.f32.gmra.mrb[0].mxu0 %v3653
      %v3876 = vpop.f32.mrb[0].mxu0
      %v3877 = vadd.f32 %v3807, %v3876
      %v3878 = vpop.f32.mrb[0].mxu0
      %3879 = vdwg.mxu0
      %3880 = vmatprep.subr.mxu0 0.0
      %3881 = vmatpush1.msra.mxu0 %v1213
      %3882 = vmatprep.subr.mxu0 0.0
      %3883 = vmatpush1.msra.mxu0 %v1214
      %3884 = vmatprep.subr.mxu0 0.0
      %3885 = vmatpush1.msra.mxu0 %v1215
      %3886 = vmatprep.subr.mxu0 0.0
      %3887 = vmatpush1.msra.mxu0 %v1216
      %3888 = vmatprep.subr.mxu0 0.0
      %3889 = vmatpush1.msra.mxu0 %v1217
      %3890 = vmatprep.subr.mxu0 0.0
      %3891 = vmatpush1.msra.mxu0 %v1218
      %3892 = vmatprep.subr.mxu0 0.0
      %3893 = vmatpush1.msra.mxu0 %v1219
      %3894 = vmatprep.subr.mxu0 0.0
      %3895 = vmatpush1.msra.mxu0 %v1220
      %3896 = vmatprep.subr.mxu0 0.0
      %3897 = vmatpush1.msra.mxu0 %v1221
      %3898 = vmatprep.subr.mxu0 0.0
      %3899 = vmatpush1.msra.mxu0 %v1222
      %3900 = vmatprep.subr.mxu0 0.0
      %3901 = vmatpush1.msra.mxu0 %v1223
      %3902 = vmatprep.subr.mxu0 0.0
      %3903 = vmatpush1.msra.mxu0 %v1224
      %3904 = vmatprep.subr.mxu0 0.0
      %3905 = vmatpush1.msra.mxu0 %v1225
      %3906 = vmatprep.subr.mxu0 0.0
      %3907 = vmatpush1.msra.mxu0 %v1226
      %3908 = vmatprep.subr.mxu0 0.0
      %3909 = vmatpush1.msra.mxu0 %v1227
      %3910 = vmatprep.subr.mxu0 0.0
      %3911 = vmatpush1.msra.mxu0 %v1228
      %3912 = vmatprep.subr.mxu0 0.0
      %3913 = vmatpush1.msra.mxu0 %v1229
      %3914 = vmatprep.subr.mxu0 0.0
      %3915 = vmatpush1.msra.mxu0 %v1230
      %3916 = vmatprep.subr.mxu0 0.0
      %3917 = vmatpush1.msra.mxu0 %v1231
      %3918 = vmatprep.subr.mxu0 0.0
      %3919 = vmatpush1.msra.mxu0 %v1232
      %3920 = vmatprep.subr.mxu0 0.0
      %3921 = vmatpush1.msra.mxu0 %v1233
      %3922 = vmatprep.subr.mxu0 0.0
      %3923 = vmatpush1.msra.mxu0 %v1234
      %3924 = vmatprep.subr.mxu0 0.0
      %3925 = vmatpush1.msra.mxu0 %v1235
      %3926 = vmatprep.subr.mxu0 0.0
      %3927 = vmatpush1.msra.mxu0 %v1236
      %3928 = vmatprep.subr.mxu0 0.0
      %3929 = vmatpush1.msra.mxu0 %v1237
      %3930 = vmatprep.subr.mxu0 0.0
      %3931 = vmatpush1.msra.mxu0 %v1238
      %3932 = vmatprep.subr.mxu0 0.0
      %3933 = vmatpush1.msra.mxu0 %v1239
      %3934 = vmatprep.subr.mxu0 0.0
      %3935 = vmatpush1.msra.mxu0 %v1240
      %3936 = vmatprep.subr.mxu0 0.0
      %3937 = vmatpush1.msra.mxu0 %v1241
      %3938 = vmatprep.subr.mxu0 0.0
      %3939 = vmatpush1.msra.mxu0 %v1242
      %3940 = vmatprep.subr.mxu0 0.0
      %3941 = vmatpush1.msra.mxu0 %v1243
      %3942 = vmatprep.subr.mxu0 0.0
      %3943 = vmatpush1.msra.mxu0 %v1244
      %3944 = vmatprep.mubr.f32.mxu0 %v3671
      %3945 = vmatmul.mubr.f32.gmra.mrb[0].mxu0 %v3665
      %v3946 = vpop.f32.mrb[0].mxu0
      %v3947 = vadd.f32 %v3877, %v3946
      %v3948 = vpop.f32.mrb[0].mxu0
      %3949 = vdwg.mxu0
      %3950 = vmatprep.subr.mxu0 0.0
      %3951 = vmatpush1.msra.mxu0 %v1245
      %3952 = vmatprep.subr.mxu0 0.0
      %3953 = vmatpush1.msra.mxu0 %v1246
      %3954 = vmatprep.subr.mxu0 0.0
      %3955 = vmatpush1.msra.mxu0 %v1247
      %3956 = vmatprep.subr.mxu0 0.0
      %3957 = vmatpush1.msra.mxu0 %v1248
      %3958 = vmatprep.subr.mxu0 0.0
      %3959 = vmatpush1.msra.mxu0 %v1249
      %3960 = vmatprep.subr.mxu0 0.0
      %3961 = vmatpush1.msra.mxu0 %v1250
      %3962 = vmatprep.subr.mxu0 0.0
      %3963 = vmatpush1.msra.mxu0 %v1251
      %3964 = vmatprep.subr.mxu0 0.0
      %3965 = vmatpush1.msra.mxu0 %v1252
      %3966 = vmatprep.subr.mxu0 0.0
      %3967 = vmatpush1.msra.mxu0 %v1253
      %3968 = vmatprep.subr.mxu0 0.0
      %3969 = vmatpush1.msra.mxu0 %v1254
      %3970 = vmatprep.subr.mxu0 0.0
      %3971 = vmatpush1.msra.mxu0 %v1255
      %3972 = vmatprep.subr.mxu0 0.0
      %3973 = vmatpush1.msra.mxu0 %v1256
      %3974 = vmatprep.subr.mxu0 0.0
      %3975 = vmatpush1.msra.mxu0 %v1257
      %3976 = vmatprep.subr.mxu0 0.0
      %3977 = vmatpush1.msra.mxu0 %v1258
      %3978 = vmatprep.subr.mxu0 0.0
      %3979 = vmatpush1.msra.mxu0 %v1259
      %3980 = vmatprep.subr.mxu0 0.0
      %3981 = vmatpush1.msra.mxu0 %v1260
      %3982 = vmatprep.subr.mxu0 0.0
      %3983 = vmatpush1.msra.mxu0 %v1261
      %3984 = vmatprep.subr.mxu0 0.0
      %3985 = vmatpush1.msra.mxu0 %v1262
      %3986 = vmatprep.subr.mxu0 0.0
      %3987 = vmatpush1.msra.mxu0 %v1263
      %3988 = vmatprep.subr.mxu0 0.0
      %3989 = vmatpush1.msra.mxu0 %v1264
      %3990 = vmatprep.subr.mxu0 0.0
      %3991 = vmatpush1.msra.mxu0 %v1265
      %3992 = vmatprep.subr.mxu0 0.0
      %3993 = vmatpush1.msra.mxu0 %v1266
      %3994 = vmatprep.subr.mxu0 0.0
      %3995 = vmatpush1.msra.mxu0 %v1267
      %3996 = vmatprep.subr.mxu0 0.0
      %3997 = vmatpush1.msra.mxu0 %v1268
      %3998 = vmatprep.subr.mxu0 0.0
      %3999 = vmatpush1.msra.mxu0 %v1269
      %4000 = vmatprep.subr.mxu0 0.0
      %4001 = vmatpush1.msra.mxu0 %v1270
      %4002 = vmatprep.subr.mxu0 0.0
      %4003 = vmatpush1.msra.mxu0 %v1271
      %4004 = vmatprep.subr.mxu0 0.0
      %4005 = vmatpush1.msra.mxu0 %v1272
      %4006 = vmatprep.subr.mxu0 0.0
      %4007 = vmatpush1.msra.mxu0 %v1273
      %4008 = vmatprep.subr.mxu0 0.0
      %4009 = vmatpush1.msra.mxu0 %v1274
      %4010 = vmatprep.subr.mxu0 0.0
      %4011 = vmatpush1.msra.mxu0 %v1275
      %4012 = vmatprep.subr.mxu0 0.0
      %4013 = vmatpush1.msra.mxu0 %v1276
      %4014 = vmatprep.mubr.f32.mxu0 %v3683
      %4015 = vmatmul.mubr.f32.gmra.mrb[0].mxu0 %v3677
      %v4016 = vpop.f32.mrb[0].mxu0
      %v4017 = vadd.f32 %v3947, %v4016
      %v4018 = vpop.f32.mrb[0].mxu0
      %4019 = vdwg.mxu0
      %4020 = vmatprep.subr.mxu0 0.0
      %4021 = vmatpush1.msra.mxu0 %v1149
      %4022 = vmatprep.subr.mxu0 0.0
      %4023 = vmatpush1.msra.mxu0 %v1150
      %4024 = vmatprep.subr.mxu0 0.0
      %4025 = vmatpush1.msra.mxu0 %v1151
      %4026 = vmatprep.subr.mxu0 0.0
      %4027 = vmatpush1.msra.mxu0 %v1152
      %4028 = vmatprep.subr.mxu0 0.0
      %4029 = vmatpush1.msra.mxu0 %v1153
      %4030 = vmatprep.subr.mxu0 0.0
      %4031 = vmatpush1.msra.mxu0 %v1154
      %4032 = vmatprep.subr.mxu0 0.0
      %4033 = vmatpush1.msra.mxu0 %v1155
      %4034 = vmatprep.subr.mxu0 0.0
      %4035 = vmatpush1.msra.mxu0 %v1156
      %4036 = vmatprep.subr.mxu0 0.0
      %4037 = vmatpush1.msra.mxu0 %v1157
      %4038 = vmatprep.subr.mxu0 0.0
      %4039 = vmatpush1.msra.mxu0 %v1158
      %4040 = vmatprep.subr.mxu0 0.0
      %4041 = vmatpush1.msra.mxu0 %v1159
      %4042 = vmatprep.subr.mxu0 0.0
      %4043 = vmatpush1.msra.mxu0 %v1160
      %4044 = vmatprep.subr.mxu0 0.0
      %4045 = vmatpush1.msra.mxu0 %v1161
      %4046 = vmatprep.subr.mxu0 0.0
      %4047 = vmatpush1.msra.mxu0 %v1162
      %4048 = vmatprep.subr.mxu0 0.0
      %4049 = vmatpush1.msra.mxu0 %v1163
      %4050 = vmatprep.subr.mxu0 0.0
      %4051 = vmatpush1.msra.mxu0 %v1164
      %4052 = vmatprep.subr.mxu0 0.0
      %4053 = vmatpush1.msra.mxu0 %v1165
      %4054 = vmatprep.subr.mxu0 0.0
      %4055 = vmatpush1.msra.mxu0 %v1166
      %4056 = vmatprep.subr.mxu0 0.0
      %4057 = vmatpush1.msra.mxu0 %v1167
      %4058 = vmatprep.subr.mxu0 0.0
      %4059 = vmatpush1.msra.mxu0 %v1168
      %4060 = vmatprep.subr.mxu0 0.0
      %4061 = vmatpush1.msra.mxu0 %v1169
      %4062 = vmatprep.subr.mxu0 0.0
      %4063 = vmatpush1.msra.mxu0 %v1170
      %4064 = vmatprep.subr.mxu0 0.0
      %4065 = vmatpush1.msra.mxu0 %v1171
      %4066 = vmatprep.subr.mxu0 0.0
      %4067 = vmatpush1.msra.mxu0 %v1172
      %4068 = vmatprep.subr.mxu0 0.0
      %4069 = vmatpush1.msra.mxu0 %v1173
      %4070 = vmatprep.subr.mxu0 0.0
      %4071 = vmatpush1.msra.mxu0 %v1174
      %4072 = vmatprep.subr.mxu0 0.0
      %4073 = vmatpush1.msra.mxu0 %v1175
      %4074 = vmatprep.subr.mxu0 0.0
      %4075 = vmatpush1.msra.mxu0 %v1176
      %4076 = vmatprep.subr.mxu0 0.0
      %4077 = vmatpush1.msra.mxu0 %v1177
      %4078 = vmatprep.subr.mxu0 0.0
      %4079 = vmatpush1.msra.mxu0 %v1178
      %4080 = vmatprep.subr.mxu0 0.0
      %4081 = vmatpush1.msra.mxu0 %v1179
      %4082 = vmatprep.subr.mxu0 0.0
      %4083 = vmatpush1.msra.mxu0 %v1180
      %4084 = vmatprep.mubr.f32.mxu0 %v3703
      %4085 = vmatmul.mubr.f32.gmra.mrb[0].mxu0 %v3697
      %v4086 = vpop.f32.mrb[0].mxu0
      %v4087 = vadd.f32 0.0, %v4086
      %v4088 = vpop.f32.mrb[0].mxu0
      %4089 = vdwg.mxu0
      %4090 = vmatprep.subr.mxu0 0.0
      %4091 = vmatpush1.msra.mxu0 %v1181
      %4092 = vmatprep.subr.mxu0 0.0
      %4093 = vmatpush1.msra.mxu0 %v1182
      %4094 = vmatprep.subr.mxu0 0.0
      %4095 = vmatpush1.msra.mxu0 %v1183
      %4096 = vmatprep.subr.mxu0 0.0
      %4097 = vmatpush1.msra.mxu0 %v1184
      %4098 = vmatprep.subr.mxu0 0.0
      %4099 = vmatpush1.msra.mxu0 %v1185
      %4100 = vmatprep.subr.mxu0 0.0
      %4101 = vmatpush1.msra.mxu0 %v1186
      %4102 = vmatprep.subr.mxu0 0.0
      %4103 = vmatpush1.msra.mxu0 %v1187
      %4104 = vmatprep.subr.mxu0 0.0
      %4105 = vmatpush1.msra.mxu0 %v1188
      %4106 = vmatprep.subr.mxu0 0.0
      %4107 = vmatpush1.msra.mxu0 %v1189
      %4108 = vmatprep.subr.mxu0 0.0
      %4109 = vmatpush1.msra.mxu0 %v1190
      %4110 = vmatprep.subr.mxu0 0.0
      %4111 = vmatpush1.msra.mxu0 %v1191
      %4112 = vmatprep.subr.mxu0 0.0
      %4113 = vmatpush1.msra.mxu0 %v1192
      %4114 = vmatprep.subr.mxu0 0.0
      %4115 = vmatpush1.msra.mxu0 %v1193
      %4116 = vmatprep.subr.mxu0 0.0
      %4117 = vmatpush1.msra.mxu0 %v1194
      %4118 = vmatprep.subr.mxu0 0.0
      %4119 = vmatpush1.msra.mxu0 %v1195
      %4120 = vmatprep.subr.mxu0 0.0
      %4121 = vmatpush1.msra.mxu0 %v1196
      %4122 = vmatprep.subr.mxu0 0.0
      %4123 = vmatpush1.msra.mxu0 %v1197
      %4124 = vmatprep.subr.mxu0 0.0
      %4125 = vmatpush1.msra.mxu0 %v1198
      %4126 = vmatprep.subr.mxu0 0.0
      %4127 = vmatpush1.msra.mxu0 %v1199
      %4128 = vmatprep.subr.mxu0 0.0
      %4129 = vmatpush1.msra.mxu0 %v1200
      %4130 = vmatprep.subr.mxu0 0.0
      %4131 = vmatpush1.msra.mxu0 %v1201
      %4132 = vmatprep.subr.mxu0 0.0
      %4133 = vmatpush1.msra.mxu0 %v1202
      %4134 = vmatprep.subr.mxu0 0.0
      %4135 = vmatpush1.msra.mxu0 %v1203
      %4136 = vmatprep.subr.mxu0 0.0
      %4137 = vmatpush1.msra.mxu0 %v1204
      %4138 = vmatprep.subr.mxu0 0.0
      %4139 = vmatpush1.msra.mxu0 %v1205
      %4140 = vmatprep.subr.mxu0 0.0
      %4141 = vmatpush1.msra.mxu0 %v1206
      %4142 = vmatprep.subr.mxu0 0.0
      %4143 = vmatpush1.msra.mxu0 %v1207
      %4144 = vmatprep.subr.mxu0 0.0
      %4145 = vmatpush1.msra.mxu0 %v1208
      %4146 = vmatprep.subr.mxu0 0.0
      %4147 = vmatpush1.msra.mxu0 %v1209
      %4148 = vmatprep.subr.mxu0 0.0
      %4149 = vmatpush1.msra.mxu0 %v1210
      %4150 = vmatprep.subr.mxu0 0.0
      %4151 = vmatpush1.msra.mxu0 %v1211
      %4152 = vmatprep.subr.mxu0 0.0
      %4153 = vmatpush1.msra.mxu0 %v1212
      %4154 = vmatprep.mubr.f32.mxu0 %v3715
      %4155 = vmatmul.mubr.f32.gmra.mrb[0].mxu0 %v3709
      %v4156 = vpop.f32.mrb[0].mxu0
      %v4157 = vadd.f32 %v4087, %v4156
      %v4158 = vpop.f32.mrb[0].mxu0
      %4159 = vdwg.mxu0
      %4160 = vmatprep.subr.mxu0 0.0
      %4161 = vmatpush1.msra.mxu0 %v1213
      %4162 = vmatprep.subr.mxu0 0.0
      %4163 = vmatpush1.msra.mxu0 %v1214
      %4164 = vmatprep.subr.mxu0 0.0
      %4165 = vmatpush1.msra.mxu0 %v1215
      %4166 = vmatprep.subr.mxu0 0.0
      %4167 = vmatpush1.msra.mxu0 %v1216
      %4168 = vmatprep.subr.mxu0 0.0
      %4169 = vmatpush1.msra.mxu0 %v1217
      %4170 = vmatprep.subr.mxu0 0.0
      %4171 = vmatpush1.msra.mxu0 %v1218
      %4172 = vmatprep.subr.mxu0 0.0
      %4173 = vmatpush1.msra.mxu0 %v1219
      %4174 = vmatprep.subr.mxu0 0.0
      %4175 = vmatpush1.msra.mxu0 %v1220
      %4176 = vmatprep.subr.mxu0 0.0
      %4177 = vmatpush1.msra.mxu0 %v1221
      %4178 = vmatprep.subr.mxu0 0.0
      %4179 = vmatpush1.msra.mxu0 %v1222
      %4180 = vmatprep.subr.mxu0 0.0
      %4181 = vmatpush1.msra.mxu0 %v1223
      %4182 = vmatprep.subr.mxu0 0.0
      %4183 = vmatpush1.msra.mxu0 %v1224
      %4184 = vmatprep.subr.mxu0 0.0
      %4185 = vmatpush1.msra.mxu0 %v1225
      %4186 = vmatprep.subr.mxu0 0.0
      %4187 = vmatpush1.msra.mxu0 %v1226
      %4188 = vmatprep.subr.mxu0 0.0
      %4189 = vmatpush1.msra.mxu0 %v1227
      %4190 = vmatprep.subr.mxu0 0.0
      %4191 = vmatpush1.msra.mxu0 %v1228
      %4192 = vmatprep.subr.mxu0 0.0
      %4193 = vmatpush1.msra.mxu0 %v1229
      %4194 = vmatprep.subr.mxu0 0.0
      %4195 = vmatpush1.msra.mxu0 %v1230
      %4196 = vmatprep.subr.mxu0 0.0
      %4197 = vmatpush1.msra.mxu0 %v1231
      %4198 = vmatprep.subr.mxu0 0.0
      %4199 = vmatpush1.msra.mxu0 %v1232
      %4200 = vmatprep.subr.mxu0 0.0
      %4201 = vmatpush1.msra.mxu0 %v1233
      %4202 = vmatprep.subr.mxu0 0.0
      %4203 = vmatpush1.msra.mxu0 %v1234
      %4204 = vmatprep.subr.mxu0 0.0
      %4205 = vmatpush1.msra.mxu0 %v1235
      %4206 = vmatprep.subr.mxu0 0.0
      %4207 = vmatpush1.msra.mxu0 %v1236
      %4208 = vmatprep.subr.mxu0 0.0
      %4209 = vmatpush1.msra.mxu0 %v1237
      %4210 = vmatprep.subr.mxu0 0.0
      %4211 = vmatpush1.msra.mxu0 %v1238
      %4212 = vmatprep.subr.mxu0 0.0
      %4213 = vmatpush1.msra.mxu0 %v1239
      %4214 = vmatprep.subr.mxu0 0.0
      %4215 = vmatpush1.msra.mxu0 %v1240
      %4216 = vmatprep.subr.mxu0 0.0
      %4217 = vmatpush1.msra.mxu0 %v1241
      %4218 = vmatprep.subr.mxu0 0.0
      %4219 = vmatpush1.msra.mxu0 %v1242
      %4220 = vmatprep.subr.mxu0 0.0
      %4221 = vmatpush1.msra.mxu0 %v1243
      %4222 = vmatprep.subr.mxu0 0.0
      %4223 = vmatpush1.msra.mxu0 %v1244
      %4224 = vmatprep.mubr.f32.mxu0 %v3727
      %4225 = vmatmul.mubr.f32.gmra.mrb[0].mxu0 %v3721
      %v4226 = vpop.f32.mrb[0].mxu0
      %v4227 = vadd.f32 %v4157, %v4226
      %v4228 = vpop.f32.mrb[0].mxu0
      %4229 = vdwg.mxu0
      %4230 = vmatprep.subr.mxu0 0.0
      %4231 = vmatpush1.msra.mxu0 %v1245
      %4232 = vmatprep.subr.mxu0 0.0
      %4233 = vmatpush1.msra.mxu0 %v1246
      %4234 = vmatprep.subr.mxu0 0.0
      %4235 = vmatpush1.msra.mxu0 %v1247
      %4236 = vmatprep.subr.mxu0 0.0
      %4237 = vmatpush1.msra.mxu0 %v1248
      %4238 = vmatprep.subr.mxu0 0.0
      %4239 = vmatpush1.msra.mxu0 %v1249
      %4240 = vmatprep.subr.mxu0 0.0
      %4241 = vmatpush1.msra.mxu0 %v1250
      %4242 = vmatprep.subr.mxu0 0.0
      %4243 = vmatpush1.msra.mxu0 %v1251
      %4244 = vmatprep.subr.mxu0 0.0
      %4245 = vmatpush1.msra.mxu0 %v1252
      %4246 = vmatprep.subr.mxu0 0.0
      %4247 = vmatpush1.msra.mxu0 %v1253
      %4248 = vmatprep.subr.mxu0 0.0
      %4249 = vmatpush1.msra.mxu0 %v1254
      %4250 = vmatprep.subr.mxu0 0.0
      %4251 = vmatpush1.msra.mxu0 %v1255
      %4252 = vmatprep.subr.mxu0 0.0
      %4253 = vmatpush1.msra.mxu0 %v1256
      %4254 = vmatprep.subr.mxu0 0.0
      %4255 = vmatpush1.msra.mxu0 %v1257
      %4256 = vmatprep.subr.mxu0 0.0
      %4257 = vmatpush1.msra.mxu0 %v1258
      %4258 = vmatprep.subr.mxu0 0.0
      %4259 = vmatpush1.msra.mxu0 %v1259
      %4260 = vmatprep.subr.mxu0 0.0
      %4261 = vmatpush1.msra.mxu0 %v1260
      %4262 = vmatprep.subr.mxu0 0.0
      %4263 = vmatpush1.msra.mxu0 %v1261
      %4264 = vmatprep.subr.mxu0 0.0
      %4265 = vmatpush1.msra.mxu0 %v1262
      %4266 = vmatprep.subr.mxu0 0.0
      %4267 = vmatpush1.msra.mxu0 %v1263
      %4268 = vmatprep.subr.mxu0 0.0
      %4269 = vmatpush1.msra.mxu0 %v1264
      %4270 = vmatprep.subr.mxu0 0.0
      %4271 = vmatpush1.msra.mxu0 %v1265
      %4272 = vmatprep.subr.mxu0 0.0
      %4273 = vmatpush1.msra.mxu0 %v1266
      %4274 = vmatprep.subr.mxu0 0.0
      %4275 = vmatpush1.msra.mxu0 %v1267
      %4276 = vmatprep.subr.mxu0 0.0
      %4277 = vmatpush1.msra.mxu0 %v1268
      %4278 = vmatprep.subr.mxu0 0.0
      %4279 = vmatpush1.msra.mxu0 %v1269
      %4280 = vmatprep.subr.mxu0 0.0
      %4281 = vmatpush1.msra.mxu0 %v1270
      %4282 = vmatprep.subr.mxu0 0.0
      %4283 = vmatpush1.msra.mxu0 %v1271
      %4284 = vmatprep.subr.mxu0 0.0
      %4285 = vmatpush1.msra.mxu0 %v1272
      %4286 = vmatprep.subr.mxu0 0.0
      %4287 = vmatpush1.msra.mxu0 %v1273
      %4288 = vmatprep.subr.mxu0 0.0
      %4289 = vmatpush1.msra.mxu0 %v1274
      %4290 = vmatprep.subr.mxu0 0.0
      %4291 = vmatpush1.msra.mxu0 %v1275
      %4292 = vmatprep.subr.mxu0 0.0
      %4293 = vmatpush1.msra.mxu0 %v1276
      %4294 = vmatprep.mubr.f32.mxu0 %v3739
      %4295 = vmatmul.mubr.f32.gmra.mrb[0].mxu0 %v3733
      %v4296 = vpop.f32.mrb[0].mxu0
      %v4297 = vadd.f32 %v4227, %v4296
      %v4298 = vpop.f32.mrb[0].mxu0
      %4299 = vdwg.mxu0
      %v4300 = vmul.f32 %v4017, %v4017
      %v4301 = vsub.f32 %v4297, %v4300
      %v4302 = vmax.f32 %v4301, 0.0
      %v4303 = vadd.f32 %v4302, 1e-05
      %v4304 = vrsqrt.pop %v4303
      %v4305 = vmul.f32 %v4304, %v1281
      %v4306 = vmul.f32 %v4017, %v4305
      %v4307 = vsub.f32 %v1282, %v4306
      %v4312 = vcombine.high %v1277, %v1277
      %v4313 = vcombine.high %v1278, %v1278
      %v4314 = vcombine.high %v1279, %v1279
      %v4315 = vcombine.high %v1280, %v1280
      %vm4316 = vcmask 31744
      %v4318 = vsel %vm4316, %v4305, 0
      %vm4320 = vcmask 1043456
      %v4321 = vsel %vm4320, %v1277, 0
      %v4323 = vsel %vm4320, %v4312, 0
      %v4325 = vsel %vm4320, %v1278, 0
      %v4327 = vsel %vm4320, %v4313, 0
      %v4329 = vsel %vm4320, %v1279, 0
      %v4331 = vsel %vm4320, %v4314, 0
      %v4333 = vsel %vm4320, %v1280, 0
      %v4335 = vsel %vm4320, %v4315, 0
      %4337 = vmatprep.subr.mxu0 %v4323
      %4338 = vmatpush1.msra.mxu0 %v4321
      %4339 = vmatprep.subr.mxu0 0.0
      %4340 = vmatpush1.msra.mxu0 0.0
      %4341 = vmatprep.subr.mxu0 0.0
      %4342 = vmatpush1.msra.mxu0 0.0
      %4343 = vmatprep.subr.mxu0 0.0
      %4344 = vmatpush1.msra.mxu0 0.0
      %4345 = vmatprep.subr.mxu0 0.0
      %4346 = vmatpush1.msra.mxu0 0.0
      %4347 = vmatprep.subr.mxu0 0.0
      %4348 = vmatpush1.msra.mxu0 0.0
      %4349 = vmatprep.subr.mxu0 0.0
      %4350 = vmatpush1.msra.mxu0 0.0
      %4351 = vmatprep.subr.mxu0 0.0
      %4352 = vmatpush1.msra.mxu0 0.0
      %4353 = vmatprep.subr.mxu0 0.0
      %4354 = vmatpush1.msra.mxu0 0.0
      %4355 = vmatprep.subr.mxu0 0.0
      %4356 = vmatpush1.msra.mxu0 0.0
      %4357 = vmatprep.subr.mxu0 0.0
      %4358 = vmatpush1.msra.mxu0 0.0
      %4359 = vmatprep.subr.mxu0 0.0
      %4360 = vmatpush1.msra.mxu0 0.0
      %4361 = vmatprep.subr.mxu0 0.0
      %4362 = vmatpush1.msra.mxu0 0.0
      %4363 = vmatprep.subr.mxu0 0.0
      %4364 = vmatpush1.msra.mxu0 0.0
      %4365 = vmatprep.subr.mxu0 0.0
      %4366 = vmatpush1.msra.mxu0 0.0
      %4367 = vmatprep.subr.mxu0 0.0
      %4368 = vmatpush1.msra.mxu0 0.0
      %4369 = vmatprep.subr.mxu0 0.0
      %4370 = vmatpush1.msra.mxu0 0.0
      %4371 = vmatprep.subr.mxu0 0.0
      %4372 = vmatpush1.msra.mxu0 0.0
      %4373 = vmatprep.subr.mxu0 0.0
      %4374 = vmatpush1.msra.mxu0 0.0
      %4375 = vmatprep.subr.mxu0 0.0
      %4376 = vmatpush1.msra.mxu0 0.0
      %4377 = vmatprep.subr.mxu0 0.0
      %4378 = vmatpush1.msra.mxu0 0.0
      %4379 = vmatprep.subr.mxu0 0.0
      %4380 = vmatpush1.msra.mxu0 0.0
      %4381 = vmatprep.subr.mxu0 0.0
      %4382 = vmatpush1.msra.mxu0 0.0
      %4383 = vmatprep.subr.mxu0 0.0
      %4384 = vmatpush1.msra.mxu0 0.0
      %4385 = vmatprep.subr.mxu0 0.0
      %4386 = vmatpush1.msra.mxu0 0.0
      %4387 = vmatprep.subr.mxu0 0.0
      %4388 = vmatpush1.msra.mxu0 0.0
      %4389 = vmatprep.subr.mxu0 0.0
      %4390 = vmatpush1.msra.mxu0 0.0
      %4391 = vmatprep.subr.mxu0 0.0
      %4392 = vmatpush1.msra.mxu0 0.0
      %4393 = vmatprep.subr.mxu0 0.0
      %4394 = vmatpush1.msra.mxu0 0.0
      %4395 = vmatprep.subr.mxu0 0.0
      %4396 = vmatpush1.msra.mxu0 0.0
      %4397 = vmatprep.subr.mxu0 0.0
      %4398 = vmatpush1.msra.mxu0 0.0
      %4399 = vmatprep.subr.mxu0 0.0
      %4400 = vmatpush1.msra.mxu0 0.0
      %4401 = vmatprep.mubr.f32.mxu0 0.0
      %4402 = vmatmul.mubr.f32.gmra.mrb[0].mxu0 %v4318
      %v4403 = vpop.f32.mrb[0].mxu0
      %v4404 = vadd.f32 0.0, %v4403
      %v4405 = vpop.f32.mrb[0].mxu0
      %v4406 = vadd.f32 0.0, %v4405
      %4407 = vdwg.mxu0
      %4408 = vmatprep.subr.mxu0 %v4327
      %4409 = vmatpush1.msra.mxu0 %v4325
      %4410 = vmatprep.subr.mxu0 0.0
      %4411 = vmatpush1.msra.mxu0 0.0
      %4412 = vmatprep.subr.mxu0 0.0
      %4413 = vmatpush1.msra.mxu0 0.0
      %4414 = vmatprep.subr.mxu0 0.0
      %4415 = vmatpush1.msra.mxu0 0.0
      %4416 = vmatprep.subr.mxu0 0.0
      %4417 = vmatpush1.msra.mxu0 0.0
      %4418 = vmatprep.subr.mxu0 0.0
      %4419 = vmatpush1.msra.mxu0 0.0
      %4420 = vmatprep.subr.mxu0 0.0
      %4421 = vmatpush1.msra.mxu0 0.0
      %4422 = vmatprep.subr.mxu0 0.0
      %4423 = vmatpush1.msra.mxu0 0.0
      %4424 = vmatprep.subr.mxu0 0.0
      %4425 = vmatpush1.msra.mxu0 0.0
      %4426 = vmatprep.subr.mxu0 0.0
      %4427 = vmatpush1.msra.mxu0 0.0
      %4428 = vmatprep.subr.mxu0 0.0
      %4429 = vmatpush1.msra.mxu0 0.0
      %4430 = vmatprep.subr.mxu0 0.0
      %4431 = vmatpush1.msra.mxu0 0.0
      %4432 = vmatprep.subr.mxu0 0.0
      %4433 = vmatpush1.msra.mxu0 0.0
      %4434 = vmatprep.subr.mxu0 0.0
      %4435 = vmatpush1.msra.mxu0 0.0
      %4436 = vmatprep.subr.mxu0 0.0
      %4437 = vmatpush1.msra.mxu0 0.0
      %4438 = vmatprep.subr.mxu0 0.0
      %4439 = vmatpush1.msra.mxu0 0.0
      %4440 = vmatprep.subr.mxu0 0.0
      %4441 = vmatpush1.msra.mxu0 0.0
      %4442 = vmatprep.subr.mxu0 0.0
      %4443 = vmatpush1.msra.mxu0 0.0
      %4444 = vmatprep.subr.mxu0 0.0
      %4445 = vmatpush1.msra.mxu0 0.0
      %4446 = vmatprep.subr.mxu0 0.0
      %4447 = vmatpush1.msra.mxu0 0.0
      %4448 = vmatprep.subr.mxu0 0.0
      %4449 = vmatpush1.msra.mxu0 0.0
      %4450 = vmatprep.subr.mxu0 0.0
      %4451 = vmatpush1.msra.mxu0 0.0
      %4452 = vmatprep.subr.mxu0 0.0
      %4453 = vmatpush1.msra.mxu0 0.0
      %4454 = vmatprep.subr.mxu0 0.0
      %4455 = vmatpush1.msra.mxu0 0.0
      %4456 = vmatprep.subr.mxu0 0.0
      %4457 = vmatpush1.msra.mxu0 0.0
      %4458 = vmatprep.subr.mxu0 0.0
      %4459 = vmatpush1.msra.mxu0 0.0
      %4460 = vmatprep.subr.mxu0 0.0
      %4461 = vmatpush1.msra.mxu0 0.0
      %4462 = vmatprep.subr.mxu0 0.0
      %4463 = vmatpush1.msra.mxu0 0.0
      %4464 = vmatprep.subr.mxu0 0.0
      %4465 = vmatpush1.msra.mxu0 0.0
      %4466 = vmatprep.subr.mxu0 0.0
      %4467 = vmatpush1.msra.mxu0 0.0
      %4468 = vmatprep.subr.mxu0 0.0
      %4469 = vmatpush1.msra.mxu0 0.0
      %4470 = vmatprep.subr.mxu0 0.0
      %4471 = vmatpush1.msra.mxu0 0.0
      %4472 = vmatprep.mubr.f32.mxu0 0.0
      %4473 = vmatmul.mubr.f32.gmra.mrb[0].mxu0 %v4318
      %v4474 = vpop.f32.mrb[0].mxu0
      %v4475 = vadd.f32 0.0, %v4474
      %v4476 = vpop.f32.mrb[0].mxu0
      %v4477 = vadd.f32 0.0, %v4476
      %4478 = vdwg.mxu0
      %4479 = vmatprep.subr.mxu0 %v4331
      %4480 = vmatpush1.msra.mxu0 %v4329
      %4481 = vmatprep.subr.mxu0 0.0
      %4482 = vmatpush1.msra.mxu0 0.0
      %4483 = vmatprep.subr.mxu0 0.0
      %4484 = vmatpush1.msra.mxu0 0.0
      %4485 = vmatprep.subr.mxu0 0.0
      %4486 = vmatpush1.msra.mxu0 0.0
      %4487 = vmatprep.subr.mxu0 0.0
      %4488 = vmatpush1.msra.mxu0 0.0
      %4489 = vmatprep.subr.mxu0 0.0
      %4490 = vmatpush1.msra.mxu0 0.0
      %4491 = vmatprep.subr.mxu0 0.0
      %4492 = vmatpush1.msra.mxu0 0.0
      %4493 = vmatprep.subr.mxu0 0.0
      %4494 = vmatpush1.msra.mxu0 0.0
      %4495 = vmatprep.subr.mxu0 0.0
      %4496 = vmatpush1.msra.mxu0 0.0
      %4497 = vmatprep.subr.mxu0 0.0
      %4498 = vmatpush1.msra.mxu0 0.0
      %4499 = vmatprep.subr.mxu0 0.0
      %4500 = vmatpush1.msra.mxu0 0.0
      %4501 = vmatprep.subr.mxu0 0.0
      %4502 = vmatpush1.msra.mxu0 0.0
      %4503 = vmatprep.subr.mxu0 0.0
      %4504 = vmatpush1.msra.mxu0 0.0
      %4505 = vmatprep.subr.mxu0 0.0
      %4506 = vmatpush1.msra.mxu0 0.0
      %4507 = vmatprep.subr.mxu0 0.0
      %4508 = vmatpush1.msra.mxu0 0.0
      %4509 = vmatprep.subr.mxu0 0.0
      %4510 = vmatpush1.msra.mxu0 0.0
      %4511 = vmatprep.subr.mxu0 0.0
      %4512 = vmatpush1.msra.mxu0 0.0
      %4513 = vmatprep.subr.mxu0 0.0
      %4514 = vmatpush1.msra.mxu0 0.0
      %4515 = vmatprep.subr.mxu0 0.0
      %4516 = vmatpush1.msra.mxu0 0.0
      %4517 = vmatprep.subr.mxu0 0.0
      %4518 = vmatpush1.msra.mxu0 0.0
      %4519 = vmatprep.subr.mxu0 0.0
      %4520 = vmatpush1.msra.mxu0 0.0
      %4521 = vmatprep.subr.mxu0 0.0
      %4522 = vmatpush1.msra.mxu0 0.0
      %4523 = vmatprep.subr.mxu0 0.0
      %4524 = vmatpush1.msra.mxu0 0.0
      %4525 = vmatprep.subr.mxu0 0.0
      %4526 = vmatpush1.msra.mxu0 0.0
      %4527 = vmatprep.subr.mxu0 0.0
      %4528 = vmatpush1.msra.mxu0 0.0
      %4529 = vmatprep.subr.mxu0 0.0
      %4530 = vmatpush1.msra.mxu0 0.0
      %4531 = vmatprep.subr.mxu0 0.0
      %4532 = vmatpush1.msra.mxu0 0.0
      %4533 = vmatprep.subr.mxu0 0.0
      %4534 = vmatpush1.msra.mxu0 0.0
      %4535 = vmatprep.subr.mxu0 0.0
      %4536 = vmatpush1.msra.mxu0 0.0
      %4537 = vmatprep.subr.mxu0 0.0
      %4538 = vmatpush1.msra.mxu0 0.0
      %4539 = vmatprep.subr.mxu0 0.0
      %4540 = vmatpush1.msra.mxu0 0.0
      %4541 = vmatprep.subr.mxu0 0.0
      %4542 = vmatpush1.msra.mxu0 0.0
      %4543 = vmatprep.mubr.f32.mxu0 0.0
      %4544 = vmatmul.mubr.f32.gmra.mrb[0].mxu0 %v4318
      %v4545 = vpop.f32.mrb[0].mxu0
      %v4546 = vadd.f32 0.0, %v4545
      %v4547 = vpop.f32.mrb[0].mxu0
      %v4548 = vadd.f32 0.0, %v4547
      %4549 = vdwg.mxu0
      %4550 = vmatprep.subr.mxu0 %v4335
      %4551 = vmatpush1.msra.mxu0 %v4333
      %4552 = vmatprep.subr.mxu0 0.0
      %4553 = vmatpush1.msra.mxu0 0.0
      %4554 = vmatprep.subr.mxu0 0.0
      %4555 = vmatpush1.msra.mxu0 0.0
      %4556 = vmatprep.subr.mxu0 0.0
      %4557 = vmatpush1.msra.mxu0 0.0
      %4558 = vmatprep.subr.mxu0 0.0
      %4559 = vmatpush1.msra.mxu0 0.0
      %4560 = vmatprep.subr.mxu0 0.0
      %4561 = vmatpush1.msra.mxu0 0.0
      %4562 = vmatprep.subr.mxu0 0.0
      %4563 = vmatpush1.msra.mxu0 0.0
      %4564 = vmatprep.subr.mxu0 0.0
      %4565 = vmatpush1.msra.mxu0 0.0
      %4566 = vmatprep.subr.mxu0 0.0
      %4567 = vmatpush1.msra.mxu0 0.0
      %4568 = vmatprep.subr.mxu0 0.0
      %4569 = vmatpush1.msra.mxu0 0.0
      %4570 = vmatprep.subr.mxu0 0.0
      %4571 = vmatpush1.msra.mxu0 0.0
      %4572 = vmatprep.subr.mxu0 0.0
      %4573 = vmatpush1.msra.mxu0 0.0
      %4574 = vmatprep.subr.mxu0 0.0
      %4575 = vmatpush1.msra.mxu0 0.0
      %4576 = vmatprep.subr.mxu0 0.0
      %4577 = vmatpush1.msra.mxu0 0.0
      %4578 = vmatprep.subr.mxu0 0.0
      %4579 = vmatpush1.msra.mxu0 0.0
      %4580 = vmatprep.subr.mxu0 0.0
      %4581 = vmatpush1.msra.mxu0 0.0
      %4582 = vmatprep.subr.mxu0 0.0
      %4583 = vmatpush1.msra.mxu0 0.0
      %4584 = vmatprep.subr.mxu0 0.0
      %4585 = vmatpush1.msra.mxu0 0.0
      %4586 = vmatprep.subr.mxu0 0.0
      %4587 = vmatpush1.msra.mxu0 0.0
      %4588 = vmatprep.subr.mxu0 0.0
      %4589 = vmatpush1.msra.mxu0 0.0
      %4590 = vmatprep.subr.mxu0 0.0
      %4591 = vmatpush1.msra.mxu0 0.0
      %4592 = vmatprep.subr.mxu0 0.0
      %4593 = vmatpush1.msra.mxu0 0.0
      %4594 = vmatprep.subr.mxu0 0.0
      %4595 = vmatpush1.msra.mxu0 0.0
      %4596 = vmatprep.subr.mxu0 0.0
      %4597 = vmatpush1.msra.mxu0 0.0
      %4598 = vmatprep.subr.mxu0 0.0
      %4599 = vmatpush1.msra.mxu0 0.0
      %4600 = vmatprep.subr.mxu0 0.0
      %4601 = vmatpush1.msra.mxu0 0.0
      %4602 = vmatprep.subr.mxu0 0.0
      %4603 = vmatpush1.msra.mxu0 0.0
      %4604 = vmatprep.subr.mxu0 0.0
      %4605 = vmatpush1.msra.mxu0 0.0
      %4606 = vmatprep.subr.mxu0 0.0
      %4607 = vmatpush1.msra.mxu0 0.0
      %4608 = vmatprep.subr.mxu0 0.0
      %4609 = vmatpush1.msra.mxu0 0.0
      %4610 = vmatprep.subr.mxu0 0.0
      %4611 = vmatpush1.msra.mxu0 0.0
      %4612 = vmatprep.subr.mxu0 0.0
      %4613 = vmatpush1.msra.mxu0 0.0
      %4614 = vmatprep.mubr.f32.mxu0 0.0
      %4615 = vmatmul.mubr.f32.gmra.mrb[0].mxu0 %v4318
      %v4616 = vpop.f32.mrb[0].mxu0
      %v4617 = vadd.f32 0.0, %v4616
      %v4618 = vpop.f32.mrb[0].mxu0
      %v4619 = vadd.f32 0.0, %v4618
      %4620 = vdwg.mxu0
      %v4622 = vsel %vm4316, %v4307, 0
      %4624 = vmatprep.subr.mxu0 %v4323
      %4625 = vmatpush1.msra.mxu0 %v4321
      %4626 = vmatprep.subr.mxu0 0.0
      %4627 = vmatpush1.msra.mxu0 0.0
      %4628 = vmatprep.subr.mxu0 0.0
      %4629 = vmatpush1.msra.mxu0 0.0
      %4630 = vmatprep.subr.mxu0 0.0
      %4631 = vmatpush1.msra.mxu0 0.0
      %4632 = vmatprep.subr.mxu0 0.0
      %4633 = vmatpush1.msra.mxu0 0.0
      %4634 = vmatprep.subr.mxu0 0.0
      %4635 = vmatpush1.msra.mxu0 0.0
      %4636 = vmatprep.subr.mxu0 0.0
      %4637 = vmatpush1.msra.mxu0 0.0
      %4638 = vmatprep.subr.mxu0 0.0
      %4639 = vmatpush1.msra.mxu0 0.0
      %4640 = vmatprep.subr.mxu0 0.0
      %4641 = vmatpush1.msra.mxu0 0.0
      %4642 = vmatprep.subr.mxu0 0.0
      %4643 = vmatpush1.msra.mxu0 0.0
      %4644 = vmatprep.subr.mxu0 0.0
      %4645 = vmatpush1.msra.mxu0 0.0
      %4646 = vmatprep.subr.mxu0 0.0
      %4647 = vmatpush1.msra.mxu0 0.0
      %4648 = vmatprep.subr.mxu0 0.0
      %4649 = vmatpush1.msra.mxu0 0.0
      %4650 = vmatprep.subr.mxu0 0.0
      %4651 = vmatpush1.msra.mxu0 0.0
      %4652 = vmatprep.subr.mxu0 0.0
      %4653 = vmatpush1.msra.mxu0 0.0
      %4654 = vmatprep.subr.mxu0 0.0
      %4655 = vmatpush1.msra.mxu0 0.0
      %4656 = vmatprep.subr.mxu0 0.0
      %4657 = vmatpush1.msra.mxu0 0.0
      %4658 = vmatprep.subr.mxu0 0.0
      %4659 = vmatpush1.msra.mxu0 0.0
      %4660 = vmatprep.subr.mxu0 0.0
      %4661 = vmatpush1.msra.mxu0 0.0
      %4662 = vmatprep.subr.mxu0 0.0
      %4663 = vmatpush1.msra.mxu0 0.0
      %4664 = vmatprep.subr.mxu0 0.0
      %4665 = vmatpush1.msra.mxu0 0.0
      %4666 = vmatprep.subr.mxu0 0.0
      %4667 = vmatpush1.msra.mxu0 0.0
      %4668 = vmatprep.subr.mxu0 0.0
      %4669 = vmatpush1.msra.mxu0 0.0
      %4670 = vmatprep.subr.mxu0 0.0
      %4671 = vmatpush1.msra.mxu0 0.0
      %4672 = vmatprep.subr.mxu0 0.0
      %4673 = vmatpush1.msra.mxu0 0.0
      %4674 = vmatprep.subr.mxu0 0.0
      %4675 = vmatpush1.msra.mxu0 0.0
      %4676 = vmatprep.subr.mxu0 0.0
      %4677 = vmatpush1.msra.mxu0 0.0
      %4678 = vmatprep.subr.mxu0 0.0
      %4679 = vmatpush1.msra.mxu0 0.0
      %4680 = vmatprep.subr.mxu0 0.0
      %4681 = vmatpush1.msra.mxu0 0.0
      %4682 = vmatprep.subr.mxu0 0.0
      %4683 = vmatpush1.msra.mxu0 0.0
      %4684 = vmatprep.subr.mxu0 0.0
      %4685 = vmatpush1.msra.mxu0 0.0
      %4686 = vmatprep.subr.mxu0 0.0
      %4687 = vmatpush1.msra.mxu0 0.0
      %4688 = vmatprep.mubr.f32.mxu0 0.0
      %4689 = vmatmul.mubr.f32.gmra.mrb[0].mxu0 %v4622
      %v4690 = vpop.f32.mrb[0].mxu0
      %v4691 = vadd.f32 0.0, %v4690
      %v4692 = vpop.f32.mrb[0].mxu0
      %v4693 = vadd.f32 0.0, %v4692
      %4694 = vdwg.mxu0
      %4695 = vmatprep.subr.mxu0 %v4327
      %4696 = vmatpush1.msra.mxu0 %v4325
      %4697 = vmatprep.subr.mxu0 0.0
      %4698 = vmatpush1.msra.mxu0 0.0
      %4699 = vmatprep.subr.mxu0 0.0
      %4700 = vmatpush1.msra.mxu0 0.0
      %4701 = vmatprep.subr.mxu0 0.0
      %4702 = vmatpush1.msra.mxu0 0.0
      %4703 = vmatprep.subr.mxu0 0.0
      %4704 = vmatpush1.msra.mxu0 0.0
      %4705 = vmatprep.subr.mxu0 0.0
      %4706 = vmatpush1.msra.mxu0 0.0
      %4707 = vmatprep.subr.mxu0 0.0
      %4708 = vmatpush1.msra.mxu0 0.0
      %4709 = vmatprep.subr.mxu0 0.0
      %4710 = vmatpush1.msra.mxu0 0.0
      %4711 = vmatprep.subr.mxu0 0.0
      %4712 = vmatpush1.msra.mxu0 0.0
      %4713 = vmatprep.subr.mxu0 0.0
      %4714 = vmatpush1.msra.mxu0 0.0
      %4715 = vmatprep.subr.mxu0 0.0
      %4716 = vmatpush1.msra.mxu0 0.0
      %4717 = vmatprep.subr.mxu0 0.0
      %4718 = vmatpush1.msra.mxu0 0.0
      %4719 = vmatprep.subr.mxu0 0.0
      %4720 = vmatpush1.msra.mxu0 0.0
      %4721 = vmatprep.subr.mxu0 0.0
      %4722 = vmatpush1.msra.mxu0 0.0
      %4723 = vmatprep.subr.mxu0 0.0
      %4724 = vmatpush1.msra.mxu0 0.0
      %4725 = vmatprep.subr.mxu0 0.0
      %4726 = vmatpush1.msra.mxu0 0.0
      %4727 = vmatprep.subr.mxu0 0.0
      %4728 = vmatpush1.msra.mxu0 0.0
      %4729 = vmatprep.subr.mxu0 0.0
      %4730 = vmatpush1.msra.mxu0 0.0
      %4731 = vmatprep.subr.mxu0 0.0
      %4732 = vmatpush1.msra.mxu0 0.0
      %4733 = vmatprep.subr.mxu0 0.0
      %4734 = vmatpush1.msra.mxu0 0.0
      %4735 = vmatprep.subr.mxu0 0.0
      %4736 = vmatpush1.msra.mxu0 0.0
      %4737 = vmatprep.subr.mxu0 0.0
      %4738 = vmatpush1.msra.mxu0 0.0
      %4739 = vmatprep.subr.mxu0 0.0
      %4740 = vmatpush1.msra.mxu0 0.0
      %4741 = vmatprep.subr.mxu0 0.0
      %4742 = vmatpush1.msra.mxu0 0.0
      %4743 = vmatprep.subr.mxu0 0.0
      %4744 = vmatpush1.msra.mxu0 0.0
      %4745 = vmatprep.subr.mxu0 0.0
      %4746 = vmatpush1.msra.mxu0 0.0
      %4747 = vmatprep.subr.mxu0 0.0
      %4748 = vmatpush1.msra.mxu0 0.0
      %4749 = vmatprep.subr.mxu0 0.0
      %4750 = vmatpush1.msra.mxu0 0.0
      %4751 = vmatprep.subr.mxu0 0.0
      %4752 = vmatpush1.msra.mxu0 0.0
      %4753 = vmatprep.subr.mxu0 0.0
      %4754 = vmatpush1.msra.mxu0 0.0
      %4755 = vmatprep.subr.mxu0 0.0
      %4756 = vmatpush1.msra.mxu0 0.0
      %4757 = vmatprep.subr.mxu0 0.0
      %4758 = vmatpush1.msra.mxu0 0.0
      %4759 = vmatprep.mubr.f32.mxu0 0.0
      %4760 = vmatmul.mubr.f32.gmra.mrb[0].mxu0 %v4622
      %v4761 = vpop.f32.mrb[0].mxu0
      %v4762 = vadd.f32 0.0, %v4761
      %v4763 = vpop.f32.mrb[0].mxu0
      %v4764 = vadd.f32 0.0, %v4763
      %4765 = vdwg.mxu0
      %4766 = vmatprep.subr.mxu0 %v4331
      %4767 = vmatpush1.msra.mxu0 %v4329
      %4768 = vmatprep.subr.mxu0 0.0
      %4769 = vmatpush1.msra.mxu0 0.0
      %4770 = vmatprep.subr.mxu0 0.0
      %4771 = vmatpush1.msra.mxu0 0.0
      %4772 = vmatprep.subr.mxu0 0.0
      %4773 = vmatpush1.msra.mxu0 0.0
      %4774 = vmatprep.subr.mxu0 0.0
      %4775 = vmatpush1.msra.mxu0 0.0
      %4776 = vmatprep.subr.mxu0 0.0
      %4777 = vmatpush1.msra.mxu0 0.0
      %4778 = vmatprep.subr.mxu0 0.0
      %4779 = vmatpush1.msra.mxu0 0.0
      %4780 = vmatprep.subr.mxu0 0.0
      %4781 = vmatpush1.msra.mxu0 0.0
      %4782 = vmatprep.subr.mxu0 0.0
      %4783 = vmatpush1.msra.mxu0 0.0
      %4784 = vmatprep.subr.mxu0 0.0
      %4785 = vmatpush1.msra.mxu0 0.0
      %4786 = vmatprep.subr.mxu0 0.0
      %4787 = vmatpush1.msra.mxu0 0.0
      %4788 = vmatprep.subr.mxu0 0.0
      %4789 = vmatpush1.msra.mxu0 0.0
      %4790 = vmatprep.subr.mxu0 0.0
      %4791 = vmatpush1.msra.mxu0 0.0
      %4792 = vmatprep.subr.mxu0 0.0
      %4793 = vmatpush1.msra.mxu0 0.0
      %4794 = vmatprep.subr.mxu0 0.0
      %4795 = vmatpush1.msra.mxu0 0.0
      %4796 = vmatprep.subr.mxu0 0.0
      %4797 = vmatpush1.msra.mxu0 0.0
      %4798 = vmatprep.subr.mxu0 0.0
      %4799 = vmatpush1.msra.mxu0 0.0
      %4800 = vmatprep.subr.mxu0 0.0
      %4801 = vmatpush1.msra.mxu0 0.0
      %4802 = vmatprep.subr.mxu0 0.0
      %4803 = vmatpush1.msra.mxu0 0.0
      %4804 = vmatprep.subr.mxu0 0.0
      %4805 = vmatpush1.msra.mxu0 0.0
      %4806 = vmatprep.subr.mxu0 0.0
      %4807 = vmatpush1.msra.mxu0 0.0
      %4808 = vmatprep.subr.mxu0 0.0
      %4809 = vmatpush1.msra.mxu0 0.0
      %4810 = vmatprep.subr.mxu0 0.0
      %4811 = vmatpush1.msra.mxu0 0.0
      %4812 = vmatprep.subr.mxu0 0.0
      %4813 = vmatpush1.msra.mxu0 0.0
      %4814 = vmatprep.subr.mxu0 0.0
      %4815 = vmatpush1.msra.mxu0 0.0
      %4816 = vmatprep.subr.mxu0 0.0
      %4817 = vmatpush1.msra.mxu0 0.0
      %4818 = vmatprep.subr.mxu0 0.0
      %4819 = vmatpush1.msra.mxu0 0.0
      %4820 = vmatprep.subr.mxu0 0.0
      %4821 = vmatpush1.msra.mxu0 0.0
      %4822 = vmatprep.subr.mxu0 0.0
      %4823 = vmatpush1.msra.mxu0 0.0
      %4824 = vmatprep.subr.mxu0 0.0
      %4825 = vmatpush1.msra.mxu0 0.0
      %4826 = vmatprep.subr.mxu0 0.0
      %4827 = vmatpush1.msra.mxu0 0.0
      %4828 = vmatprep.subr.mxu0 0.0
      %4829 = vmatpush1.msra.mxu0 0.0
      %4830 = vmatprep.mubr.f32.mxu0 0.0
      %4831 = vmatmul.mubr.f32.gmra.mrb[0].mxu0 %v4622
      %v4832 = vpop.f32.mrb[0].mxu0
      %v4833 = vadd.f32 0.0, %v4832
      %v4834 = vpop.f32.mrb[0].mxu0
      %v4835 = vadd.f32 0.0, %v4834
      %4836 = vdwg.mxu0
      %4837 = vmatprep.subr.mxu0 %v4335
      %4838 = vmatpush1.msra.mxu0 %v4333
      %4839 = vmatprep.subr.mxu0 0.0
      %4840 = vmatpush1.msra.mxu0 0.0
      %4841 = vmatprep.subr.mxu0 0.0
      %4842 = vmatpush1.msra.mxu0 0.0
      %4843 = vmatprep.subr.mxu0 0.0
      %4844 = vmatpush1.msra.mxu0 0.0
      %4845 = vmatprep.subr.mxu0 0.0
      %4846 = vmatpush1.msra.mxu0 0.0
      %4847 = vmatprep.subr.mxu0 0.0
      %4848 = vmatpush1.msra.mxu0 0.0
      %4849 = vmatprep.subr.mxu0 0.0
      %4850 = vmatpush1.msra.mxu0 0.0
      %4851 = vmatprep.subr.mxu0 0.0
      %4852 = vmatpush1.msra.mxu0 0.0
      %4853 = vmatprep.subr.mxu0 0.0
      %4854 = vmatpush1.msra.mxu0 0.0
      %4855 = vmatprep.subr.mxu0 0.0
      %4856 = vmatpush1.msra.mxu0 0.0
      %4857 = vmatprep.subr.mxu0 0.0
      %4858 = vmatpush1.msra.mxu0 0.0
      %4859 = vmatprep.subr.mxu0 0.0
      %4860 = vmatpush1.msra.mxu0 0.0
      %4861 = vmatprep.subr.mxu0 0.0
      %4862 = vmatpush1.msra.mxu0 0.0
      %4863 = vmatprep.subr.mxu0 0.0
      %4864 = vmatpush1.msra.mxu0 0.0
      %4865 = vmatprep.subr.mxu0 0.0
      %4866 = vmatpush1.msra.mxu0 0.0
      %4867 = vmatprep.subr.mxu0 0.0
      %4868 = vmatpush1.msra.mxu0 0.0
      %4869 = vmatprep.subr.mxu0 0.0
      %4870 = vmatpush1.msra.mxu0 0.0
      %4871 = vmatprep.subr.mxu0 0.0
      %4872 = vmatpush1.msra.mxu0 0.0
      %4873 = vmatprep.subr.mxu0 0.0
      %4874 = vmatpush1.msra.mxu0 0.0
      %4875 = vmatprep.subr.mxu0 0.0
      %4876 = vmatpush1.msra.mxu0 0.0
      %4877 = vmatprep.subr.mxu0 0.0
      %4878 = vmatpush1.msra.mxu0 0.0
      %4879 = vmatprep.subr.mxu0 0.0
      %4880 = vmatpush1.msra.mxu0 0.0
      %4881 = vmatprep.subr.mxu0 0.0
      %4882 = vmatpush1.msra.mxu0 0.0
      %4883 = vmatprep.subr.mxu0 0.0
      %4884 = vmatpush1.msra.mxu0 0.0
      %4885 = vmatprep.subr.mxu0 0.0
      %4886 = vmatpush1.msra.mxu0 0.0
      %4887 = vmatprep.subr.mxu0 0.0
      %4888 = vmatpush1.msra.mxu0 0.0
      %4889 = vmatprep.subr.mxu0 0.0
      %4890 = vmatpush1.msra.mxu0 0.0
      %4891 = vmatprep.subr.mxu0 0.0
      %4892 = vmatpush1.msra.mxu0 0.0
      %4893 = vmatprep.subr.mxu0 0.0
      %4894 = vmatpush1.msra.mxu0 0.0
      %4895 = vmatprep.subr.mxu0 0.0
      %4896 = vmatpush1.msra.mxu0 0.0
      %4897 = vmatprep.subr.mxu0 0.0
      %4898 = vmatpush1.msra.mxu0 0.0
      %4899 = vmatprep.subr.mxu0 0.0
      %4900 = vmatpush1.msra.mxu0 0.0
      %4901 = vmatprep.mubr.f32.mxu0 0.0
      %4902 = vmatmul.mubr.f32.gmra.mrb[0].mxu0 %v4622
      %v4903 = vpop.f32.mrb[0].mxu0
      %v4904 = vadd.f32 0.0, %v4903
      %v4905 = vpop.f32.mrb[0].mxu0
      %v4906 = vadd.f32 0.0, %v4905
      %4907 = vdwg.mxu0
      %v4908 = vlaneseq
      %v4909 = vshrl.u32 %v4908, 7
      %v4910 = vsub.s32 0, %v4909
      %v4911 = vrot.slane %v4404, %v4910
      %v4912 = vlaneseq
      %v4913 = vshrl.u32 %v4912, 7
      %v4914 = vsub.s32 0, %v4913
      %v4915 = vrot.slane %v4406, %v4914
      %v4916 = vlaneseq
      %v4917 = vshrl.u32 %v4916, 7
      %v4918 = vsub.s32 0, %v4917
      %v4919 = vrot.slane %v4475, %v4918
      %v4920 = vlaneseq
      %v4921 = vshrl.u32 %v4920, 7
      %v4922 = vsub.s32 0, %v4921
      %v4923 = vrot.slane %v4477, %v4922
      %v4924 = vlaneseq
      %v4925 = vshrl.u32 %v4924, 7
      %v4926 = vsub.s32 0, %v4925
      %v4927 = vrot.slane %v4546, %v4926
      %v4928 = vlaneseq
      %v4929 = vshrl.u32 %v4928, 7
      %v4930 = vsub.s32 0, %v4929
      %v4931 = vrot.slane %v4548, %v4930
      %v4932 = vlaneseq
      %v4933 = vshrl.u32 %v4932, 7
      %v4934 = vsub.s32 0, %v4933
      %v4935 = vrot.slane %v4617, %v4934
      %v4936 = vlaneseq
      %v4937 = vshrl.u32 %v4936, 7
      %v4938 = vsub.s32 0, %v4937
      %v4939 = vrot.slane %v4619, %v4938
      %v4940 = vmul.f32 %v3628, %v4911
      %v4941 = vmul.f32 %v3629, %v4915
      %v4942 = vmul.f32 %v3630, %v4919
      %v4943 = vmul.f32 %v3631, %v4923
      %v4944 = vmul.f32 %v3632, %v4927
      %v4945 = vmul.f32 %v3633, %v4931
      %v4946 = vmul.f32 %v3634, %v4935
      %v4947 = vmul.f32 %v3635, %v4939
      %v4948 = vlaneseq
      %v4949 = vshrl.u32 %v4948, 7
      %v4950 = vsub.s32 0, %v4949
      %v4951 = vrot.slane %v4691, %v4950
      %v4952 = vlaneseq
      %v4953 = vshrl.u32 %v4952, 7
      %v4954 = vsub.s32 0, %v4953
      %v4955 = vrot.slane %v4693, %v4954
      %v4956 = vlaneseq
      %v4957 = vshrl.u32 %v4956, 7
      %v4958 = vsub.s32 0, %v4957
      %v4959 = vrot.slane %v4762, %v4958
      %v4960 = vlaneseq
      %v4961 = vshrl.u32 %v4960, 7
      %v4962 = vsub.s32 0, %v4961
      %v4963 = vrot.slane %v4764, %v4962
      %v4964 = vlaneseq
      %v4965 = vshrl.u32 %v4964, 7
      %v4966 = vsub.s32 0, %v4965
      %v4967 = vrot.slane %v4833, %v4966
      %v4968 = vlaneseq
      %v4969 = vshrl.u32 %v4968, 7
      %v4970 = vsub.s32 0, %v4969
      %v4971 = vrot.slane %v4835, %v4970
      %v4972 = vlaneseq
      %v4973 = vshrl.u32 %v4972, 7
      %v4974 = vsub.s32 0, %v4973
      %v4975 = vrot.slane %v4904, %v4974
      %v4976 = vlaneseq
      %v4977 = vshrl.u32 %v4976, 7
      %v4978 = vsub.s32 0, %v4977
      %v4979 = vrot.slane %v4906, %v4978
      %v4980 = vadd.f32 %v4940, %v4951
      %v4981 = vadd.f32 %v4941, %v4955
      %v4982 = vadd.f32 %v4942, %v4959
      %v4983 = vadd.f32 %v4943, %v4963
      %v4984 = vadd.f32 %v4944, %v4967
      %v4985 = vadd.f32 %v4945, %v4971
      %v4986 = vadd.f32 %v4946, %v4975
      %v4987 = vadd.f32 %v4947, %v4979
      %v4989 = vlaneseq
      %v4990 = vshrl.u32 %v4989, 7
      %v4991 = vsub.s32 0, %v4990
      %v4992 = vrot.slane %v1284, %v4991
      %v4993 = vlaneseq
      %v4994 = vshrl.u32 %v4993, 7
      %v4995 = vsub.s32 1, %v4994
      %v4996 = vrot.slane %v1284, %v4995
      %v4997 = vlaneseq
      %v4998 = vshrl.u32 %v4997, 7
      %v4999 = vsub.s32 2, %v4998
      %v5000 = vrot.slane %v1284, %v4999
      %v5001 = vlaneseq
      %v5002 = vshrl.u32 %v5001, 7
      %v5003 = vsub.s32 3, %v5002
      %v5004 = vrot.slane %v1284, %v5003
      %v5005 = vlaneseq
      %v5006 = vshrl.u32 %v5005, 7
      %v5007 = vsub.s32 4, %v5006
      %v5008 = vrot.slane %v1284, %v5007
      %v5009 = vlaneseq
      %v5010 = vshrl.u32 %v5009, 7
      %v5011 = vsub.s32 5, %v5010
      %v5012 = vrot.slane %v1284, %v5011
      %v5013 = vlaneseq
      %v5014 = vshrl.u32 %v5013, 7
      %v5015 = vsub.s32 6, %v5014
      %v5016 = vrot.slane %v1284, %v5015
      %v5017 = vlaneseq
      %v5018 = vshrl.u32 %v5017, 7
      %v5019 = vsub.s32 7, %v5018
      %v5020 = vrot.slane %v1284, %v5019
      %vm5029 = vcmp.gt.f32.partialorder %v4980, %v4992
      %vm5030 = vcmp.gt.f32.partialorder %v4981, %v4996
      %vm5031 = vcmp.gt.f32.partialorder %v4982, %v5000
      %vm5032 = vcmp.gt.f32.partialorder %v4983, %v5004
      %vm5033 = vcmp.gt.f32.partialorder %v4984, %v5008
      %vm5034 = vcmp.gt.f32.partialorder %v4985, %v5012
      %vm5035 = vcmp.gt.f32.partialorder %v4986, %v5016
      %vm5036 = vcmp.gt.f32.partialorder %v4987, %v5020
      %v5037 = vsub.f32 %v4980, %v4992
      %v5038 = vsub.f32 %v4981, %v4996
      %v5039 = vsub.f32 %v4982, %v5000
      %v5040 = vsub.f32 %v4983, %v5004
      %v5041 = vsub.f32 %v4984, %v5008
      %v5042 = vsub.f32 %v4985, %v5012
      %v5043 = vsub.f32 %v4986, %v5016
      %v5044 = vsub.f32 %v4987, %v5020
      %v5045 = vsub.f32 0.0, %v1284
      %v5047 = vlaneseq
      %v5048 = vshrl.u32 %v5047, 7
      %v5049 = vsub.s32 0, %v5048
      %v5050 = vrot.slane %v5045, %v5049
      %v5051 = vlaneseq
      %v5052 = vshrl.u32 %v5051, 7
      %v5053 = vsub.s32 1, %v5052
      %v5054 = vrot.slane %v5045, %v5053
      %v5055 = vlaneseq
      %v5056 = vshrl.u32 %v5055, 7
      %v5057 = vsub.s32 2, %v5056
      %v5058 = vrot.slane %v5045, %v5057
      %v5059 = vlaneseq
      %v5060 = vshrl.u32 %v5059, 7
      %v5061 = vsub.s32 3, %v5060
      %v5062 = vrot.slane %v5045, %v5061
      %v5063 = vlaneseq
      %v5064 = vshrl.u32 %v5063, 7
      %v5065 = vsub.s32 4, %v5064
      %v5066 = vrot.slane %v5045, %v5065
      %v5067 = vlaneseq
      %v5068 = vshrl.u32 %v5067, 7
      %v5069 = vsub.s32 5, %v5068
      %v5070 = vrot.slane %v5045, %v5069
      %v5071 = vlaneseq
      %v5072 = vshrl.u32 %v5071, 7
      %v5073 = vsub.s32 6, %v5072
      %v5074 = vrot.slane %v5045, %v5073
      %v5075 = vlaneseq
      %v5076 = vshrl.u32 %v5075, 7
      %v5077 = vsub.s32 7, %v5076
      %v5078 = vrot.slane %v5045, %v5077
      %vm5087 = vcmp.lt.f32.partialorder %v4980, %v5050
      %vm5088 = vcmp.lt.f32.partialorder %v4981, %v5054
      %vm5089 = vcmp.lt.f32.partialorder %v4982, %v5058
      %vm5090 = vcmp.lt.f32.partialorder %v4983, %v5062
      %vm5091 = vcmp.lt.f32.partialorder %v4984, %v5066
      %vm5092 = vcmp.lt.f32.partialorder %v4985, %v5070
      %vm5093 = vcmp.lt.f32.partialorder %v4986, %v5074
      %vm5094 = vcmp.lt.f32.partialorder %v4987, %v5078
      %v5095 = vadd.f32 %v4980, %v4992
      %v5096 = vadd.f32 %v4981, %v4996
      %v5097 = vadd.f32 %v4982, %v5000
      %v5098 = vadd.f32 %v4983, %v5004
      %v5099 = vadd.f32 %v4984, %v5008
      %v5100 = vadd.f32 %v4985, %v5012
      %v5101 = vadd.f32 %v4986, %v5016
      %v5102 = vadd.f32 %v4987, %v5020
      %v5103 = vsel %vm5087, %v5095, 0.0
      %v5104 = vsel %vm5088, %v5096, 0.0
      %v5105 = vsel %vm5089, %v5097, 0.0
      %v5106 = vsel %vm5090, %v5098, 0.0
      %v5107 = vsel %vm5091, %v5099, 0.0
      %v5108 = vsel %vm5092, %v5100, 0.0
      %v5109 = vsel %vm5093, %v5101, 0.0
      %v5110 = vsel %vm5094, %v5102, 0.0
      %v5111 = vsel %vm5029, %v5037, %v5103
      %v5112 = vsel %vm5030, %v5038, %v5104
      %v5113 = vsel %vm5031, %v5039, %v5105
      %v5114 = vsel %vm5032, %v5040, %v5106
      %v5115 = vsel %vm5033, %v5041, %v5107
      %v5116 = vsel %vm5034, %v5042, %v5108
      %v5117 = vsel %vm5035, %v5043, %v5109
      %v5118 = vsel %vm5036, %v5044, %v5110
      %5119 = vmatprep.subr.mxu0 %v125
      %5120 = vmatpush1.msra.mxu0 %v124
      %5121 = vmatprep.subr.mxu0 %v133
      %5122 = vmatpush1.msra.mxu0 %v132
      %5123 = vmatprep.subr.mxu0 %v141
      %5124 = vmatpush1.msra.mxu0 %v140
      %5125 = vmatprep.subr.mxu0 %v149
      %5126 = vmatpush1.msra.mxu0 %v148
      %5127 = vmatprep.subr.mxu0 %v157
      %5128 = vmatpush1.msra.mxu0 %v156
      %5129 = vmatprep.subr.mxu0 %v165
      %5130 = vmatpush1.msra.mxu0 %v164
      %5131 = vmatprep.subr.mxu0 %v173
      %5132 = vmatpush1.msra.mxu0 %v172
      %5133 = vmatprep.subr.mxu0 %v181
      %5134 = vmatpush1.msra.mxu0 %v180
      %5135 = vmatprep.subr.mxu0 %v189
      %5136 = vmatpush1.msra.mxu0 %v188
      %5137 = vmatprep.subr.mxu0 %v197
      %5138 = vmatpush1.msra.mxu0 %v196
      %5139 = vmatprep.subr.mxu0 %v205
      %5140 = vmatpush1.msra.mxu0 %v204
      %5141 = vmatprep.subr.mxu0 %v213
      %5142 = vmatpush1.msra.mxu0 %v212
      %5143 = vmatprep.subr.mxu0 %v221
      %5144 = vmatpush1.msra.mxu0 %v220
      %5145 = vmatprep.subr.mxu0 %v229
      %5146 = vmatpush1.msra.mxu0 %v228
      %5147 = vmatprep.subr.mxu0 %v237
      %5148 = vmatpush1.msra.mxu0 %v236
      %5149 = vmatprep.subr.mxu0 %v245
      %5150 = vmatpush1.msra.mxu0 %v244
      %5151 = vmatprep.subr.mxu0 %v253
      %5152 = vmatpush1.msra.mxu0 %v252
      %5153 = vmatprep.subr.mxu0 %v261
      %5154 = vmatpush1.msra.mxu0 %v260
      %5155 = vmatprep.subr.mxu0 %v269
      %5156 = vmatpush1.msra.mxu0 %v268
      %5157 = vmatprep.subr.mxu0 %v277
      %5158 = vmatpush1.msra.mxu0 %v276
      %5159 = vmatprep.subr.mxu0 %v285
      %5160 = vmatpush1.msra.mxu0 %v284
      %5161 = vmatprep.subr.mxu0 %v293
      %5162 = vmatpush1.msra.mxu0 %v292
      %5163 = vmatprep.subr.mxu0 %v301
      %5164 = vmatpush1.msra.mxu0 %v300
      %5165 = vmatprep.subr.mxu0 %v309
      %5166 = vmatpush1.msra.mxu0 %v308
      %5167 = vmatprep.subr.mxu0 %v317
      %5168 = vmatpush1.msra.mxu0 %v316
      %5169 = vmatprep.subr.mxu0 %v325
      %5170 = vmatpush1.msra.mxu0 %v324
      %5171 = vmatprep.subr.mxu0 %v333
      %5172 = vmatpush1.msra.mxu0 %v332
      %5173 = vmatprep.subr.mxu0 %v341
      %5174 = vmatpush1.msra.mxu0 %v340
      %5175 = vmatprep.subr.mxu0 %v349
      %5176 = vmatpush1.msra.mxu0 %v348
      %5177 = vmatprep.subr.mxu0 %v357
      %5178 = vmatpush1.msra.mxu0 %v356
      %5179 = vmatprep.subr.mxu0 %v365
      %5180 = vmatpush1.msra.mxu0 %v364
      %5181 = vmatprep.subr.mxu0 %v373
      %5182 = vmatpush1.msra.mxu0 %v372
      %5183 = vmatprep.mubr.f32.mxu0 %v5112
      %5184 = vmatmul.mubr.f32.gmra.mrb[0].mxu0 %v5111
      %v5185 = vpop.f32.mrb[0].mxu0
      %v5186 = vadd.f32 %v1311, %v5185
      %v5187 = vpop.f32.mrb[0].mxu0
      %v5188 = vadd.f32 %v1315, %v5187
      %5189 = vdwg.mxu0
      %5190 = vmatprep.subr.mxu0 %v381
      %5191 = vmatpush1.msra.mxu0 %v380
      %5192 = vmatprep.subr.mxu0 %v389
      %5193 = vmatpush1.msra.mxu0 %v388
      %5194 = vmatprep.subr.mxu0 %v397
      %5195 = vmatpush1.msra.mxu0 %v396
      %5196 = vmatprep.subr.mxu0 %v405
      %5197 = vmatpush1.msra.mxu0 %v404
      %5198 = vmatprep.subr.mxu0 %v413
      %5199 = vmatpush1.msra.mxu0 %v412
      %5200 = vmatprep.subr.mxu0 %v421
      %5201 = vmatpush1.msra.mxu0 %v420
      %5202 = vmatprep.subr.mxu0 %v429
      %5203 = vmatpush1.msra.mxu0 %v428
      %5204 = vmatprep.subr.mxu0 %v437
      %5205 = vmatpush1.msra.mxu0 %v436
      %5206 = vmatprep.subr.mxu0 %v445
      %5207 = vmatpush1.msra.mxu0 %v444
      %5208 = vmatprep.subr.mxu0 %v453
      %5209 = vmatpush1.msra.mxu0 %v452
      %5210 = vmatprep.subr.mxu0 %v461
      %5211 = vmatpush1.msra.mxu0 %v460
      %5212 = vmatprep.subr.mxu0 %v469
      %5213 = vmatpush1.msra.mxu0 %v468
      %5214 = vmatprep.subr.mxu0 %v477
      %5215 = vmatpush1.msra.mxu0 %v476
      %5216 = vmatprep.subr.mxu0 %v485
      %5217 = vmatpush1.msra.mxu0 %v484
      %5218 = vmatprep.subr.mxu0 %v493
      %5219 = vmatpush1.msra.mxu0 %v492
      %5220 = vmatprep.subr.mxu0 %v501
      %5221 = vmatpush1.msra.mxu0 %v500
      %5222 = vmatprep.subr.mxu0 %v509
      %5223 = vmatpush1.msra.mxu0 %v508
      %5224 = vmatprep.subr.mxu0 %v517
      %5225 = vmatpush1.msra.mxu0 %v516
      %5226 = vmatprep.subr.mxu0 %v525
      %5227 = vmatpush1.msra.mxu0 %v524
      %5228 = vmatprep.subr.mxu0 %v533
      %5229 = vmatpush1.msra.mxu0 %v532
      %5230 = vmatprep.subr.mxu0 %v541
      %5231 = vmatpush1.msra.mxu0 %v540
      %5232 = vmatprep.subr.mxu0 %v549
      %5233 = vmatpush1.msra.mxu0 %v548
      %5234 = vmatprep.subr.mxu0 %v557
      %5235 = vmatpush1.msra.mxu0 %v556
      %5236 = vmatprep.subr.mxu0 %v565
      %5237 = vmatpush1.msra.mxu0 %v564
      %5238 = vmatprep.subr.mxu0 %v573
      %5239 = vmatpush1.msra.mxu0 %v572
      %5240 = vmatprep.subr.mxu0 %v581
      %5241 = vmatpush1.msra.mxu0 %v580
      %5242 = vmatprep.subr.mxu0 %v589
      %5243 = vmatpush1.msra.mxu0 %v588
      %5244 = vmatprep.subr.mxu0 %v597
      %5245 = vmatpush1.msra.mxu0 %v596
      %5246 = vmatprep.subr.mxu0 %v605
      %5247 = vmatpush1.msra.mxu0 %v604
      %5248 = vmatprep.subr.mxu0 %v613
      %5249 = vmatpush1.msra.mxu0 %v612
      %5250 = vmatprep.subr.mxu0 %v621
      %5251 = vmatpush1.msra.mxu0 %v620
      %5252 = vmatprep.subr.mxu0 %v629
      %5253 = vmatpush1.msra.mxu0 %v628
      %5254 = vmatprep.mubr.f32.mxu0 %v5114
      %5255 = vmatmul.mubr.f32.gmra.mrb[0].mxu0 %v5113
      %v5256 = vpop.f32.mrb[0].mxu0
      %v5257 = vadd.f32 %v5186, %v5256
      %v5258 = vpop.f32.mrb[0].mxu0
      %v5259 = vadd.f32 %v5188, %v5258
      %5260 = vdwg.mxu0
      %5261 = vmatprep.subr.mxu0 %v637
      %5262 = vmatpush1.msra.mxu0 %v636
      %5263 = vmatprep.subr.mxu0 %v645
      %5264 = vmatpush1.msra.mxu0 %v644
      %5265 = vmatprep.subr.mxu0 %v653
      %5266 = vmatpush1.msra.mxu0 %v652
      %5267 = vmatprep.subr.mxu0 %v661
      %5268 = vmatpush1.msra.mxu0 %v660
      %5269 = vmatprep.subr.mxu0 %v669
      %5270 = vmatpush1.msra.mxu0 %v668
      %5271 = vmatprep.subr.mxu0 %v677
      %5272 = vmatpush1.msra.mxu0 %v676
      %5273 = vmatprep.subr.mxu0 %v685
      %5274 = vmatpush1.msra.mxu0 %v684
      %5275 = vmatprep.subr.mxu0 %v693
      %5276 = vmatpush1.msra.mxu0 %v692
      %5277 = vmatprep.subr.mxu0 %v701
      %5278 = vmatpush1.msra.mxu0 %v700
      %5279 = vmatprep.subr.mxu0 %v709
      %5280 = vmatpush1.msra.mxu0 %v708
      %5281 = vmatprep.subr.mxu0 %v717
      %5282 = vmatpush1.msra.mxu0 %v716
      %5283 = vmatprep.subr.mxu0 %v725
      %5284 = vmatpush1.msra.mxu0 %v724
      %5285 = vmatprep.subr.mxu0 %v733
      %5286 = vmatpush1.msra.mxu0 %v732
      %5287 = vmatprep.subr.mxu0 %v741
      %5288 = vmatpush1.msra.mxu0 %v740
      %5289 = vmatprep.subr.mxu0 %v749
      %5290 = vmatpush1.msra.mxu0 %v748
      %5291 = vmatprep.subr.mxu0 %v757
      %5292 = vmatpush1.msra.mxu0 %v756
      %5293 = vmatprep.subr.mxu0 %v765
      %5294 = vmatpush1.msra.mxu0 %v764
      %5295 = vmatprep.subr.mxu0 %v773
      %5296 = vmatpush1.msra.mxu0 %v772
      %5297 = vmatprep.subr.mxu0 %v781
      %5298 = vmatpush1.msra.mxu0 %v780
      %5299 = vmatprep.subr.mxu0 %v789
      %5300 = vmatpush1.msra.mxu0 %v788
      %5301 = vmatprep.subr.mxu0 %v797
      %5302 = vmatpush1.msra.mxu0 %v796
      %5303 = vmatprep.subr.mxu0 %v805
      %5304 = vmatpush1.msra.mxu0 %v804
      %5305 = vmatprep.subr.mxu0 %v813
      %5306 = vmatpush1.msra.mxu0 %v812
      %5307 = vmatprep.subr.mxu0 %v821
      %5308 = vmatpush1.msra.mxu0 %v820
      %5309 = vmatprep.subr.mxu0 %v829
      %5310 = vmatpush1.msra.mxu0 %v828
      %5311 = vmatprep.subr.mxu0 %v837
      %5312 = vmatpush1.msra.mxu0 %v836
      %5313 = vmatprep.subr.mxu0 %v845
      %5314 = vmatpush1.msra.mxu0 %v844
      %5315 = vmatprep.subr.mxu0 %v853
      %5316 = vmatpush1.msra.mxu0 %v852
      %5317 = vmatprep.subr.mxu0 %v861
      %5318 = vmatpush1.msra.mxu0 %v860
      %5319 = vmatprep.subr.mxu0 %v869
      %5320 = vmatpush1.msra.mxu0 %v868
      %5321 = vmatprep.subr.mxu0 %v877
      %5322 = vmatpush1.msra.mxu0 %v876
      %5323 = vmatprep.subr.mxu0 %v885
      %5324 = vmatpush1.msra.mxu0 %v884
      %5325 = vmatprep.mubr.f32.mxu0 %v5116
      %5326 = vmatmul.mubr.f32.gmra.mrb[0].mxu0 %v5115
      %v5327 = vpop.f32.mrb[0].mxu0
      %v5328 = vadd.f32 %v5257, %v5327
      %v5329 = vpop.f32.mrb[0].mxu0
      %v5330 = vadd.f32 %v5259, %v5329
      %5331 = vdwg.mxu0
      %5332 = vmatprep.subr.mxu0 %v893
      %5333 = vmatpush1.msra.mxu0 %v892
      %5334 = vmatprep.subr.mxu0 %v901
      %5335 = vmatpush1.msra.mxu0 %v900
      %5336 = vmatprep.subr.mxu0 %v909
      %5337 = vmatpush1.msra.mxu0 %v908
      %5338 = vmatprep.subr.mxu0 %v917
      %5339 = vmatpush1.msra.mxu0 %v916
      %5340 = vmatprep.subr.mxu0 %v925
      %5341 = vmatpush1.msra.mxu0 %v924
      %5342 = vmatprep.subr.mxu0 %v933
      %5343 = vmatpush1.msra.mxu0 %v932
      %5344 = vmatprep.subr.mxu0 %v941
      %5345 = vmatpush1.msra.mxu0 %v940
      %5346 = vmatprep.subr.mxu0 %v949
      %5347 = vmatpush1.msra.mxu0 %v948
      %5348 = vmatprep.subr.mxu0 %v957
      %5349 = vmatpush1.msra.mxu0 %v956
      %5350 = vmatprep.subr.mxu0 %v965
      %5351 = vmatpush1.msra.mxu0 %v964
      %5352 = vmatprep.subr.mxu0 %v973
      %5353 = vmatpush1.msra.mxu0 %v972
      %5354 = vmatprep.subr.mxu0 %v981
      %5355 = vmatpush1.msra.mxu0 %v980
      %5356 = vmatprep.subr.mxu0 %v989
      %5357 = vmatpush1.msra.mxu0 %v988
      %5358 = vmatprep.subr.mxu0 %v997
      %5359 = vmatpush1.msra.mxu0 %v996
      %5360 = vmatprep.subr.mxu0 %v1005
      %5361 = vmatpush1.msra.mxu0 %v1004
      %5362 = vmatprep.subr.mxu0 %v1013
      %5363 = vmatpush1.msra.mxu0 %v1012
      %5364 = vmatprep.subr.mxu0 %v1021
      %5365 = vmatpush1.msra.mxu0 %v1020
      %5366 = vmatprep.subr.mxu0 %v1029
      %5367 = vmatpush1.msra.mxu0 %v1028
      %5368 = vmatprep.subr.mxu0 %v1037
      %5369 = vmatpush1.msra.mxu0 %v1036
      %5370 = vmatprep.subr.mxu0 %v1045
      %5371 = vmatpush1.msra.mxu0 %v1044
      %5372 = vmatprep.subr.mxu0 %v1053
      %5373 = vmatpush1.msra.mxu0 %v1052
      %5374 = vmatprep.subr.mxu0 %v1061
      %5375 = vmatpush1.msra.mxu0 %v1060
      %5376 = vmatprep.subr.mxu0 %v1069
      %5377 = vmatpush1.msra.mxu0 %v1068
      %5378 = vmatprep.subr.mxu0 %v1077
      %5379 = vmatpush1.msra.mxu0 %v1076
      %5380 = vmatprep.subr.mxu0 %v1085
      %5381 = vmatpush1.msra.mxu0 %v1084
      %5382 = vmatprep.subr.mxu0 %v1093
      %5383 = vmatpush1.msra.mxu0 %v1092
      %5384 = vmatprep.subr.mxu0 %v1101
      %5385 = vmatpush1.msra.mxu0 %v1100
      %5386 = vmatprep.subr.mxu0 %v1109
      %5387 = vmatpush1.msra.mxu0 %v1108
      %5388 = vmatprep.subr.mxu0 %v1117
      %5389 = vmatpush1.msra.mxu0 %v1116
      %5390 = vmatprep.subr.mxu0 %v1125
      %5391 = vmatpush1.msra.mxu0 %v1124
      %5392 = vmatprep.subr.mxu0 %v1133
      %5393 = vmatpush1.msra.mxu0 %v1132
      %5394 = vmatprep.subr.mxu0 %v1141
      %5395 = vmatpush1.msra.mxu0 %v1140
      %5396 = vmatprep.mubr.f32.mxu0 %v5118
      %5397 = vmatmul.mubr.f32.gmra.mrb[0].mxu0 %v5117
      %v5398 = vpop.f32.mrb[0].mxu0
      %v5399 = vadd.f32 %v5328, %v5398
      %v5400 = vpop.f32.mrb[0].mxu0
      %v5401 = vadd.f32 %v5330, %v5400
      %5402 = vdwg.mxu0
      %5403 = vmatprep.subr.mxu0 %v127
      %5404 = vmatpush1.msra.mxu0 %v126
      %5405 = vmatprep.subr.mxu0 %v135
      %5406 = vmatpush1.msra.mxu0 %v134
      %5407 = vmatprep.subr.mxu0 %v143
      %5408 = vmatpush1.msra.mxu0 %v142
      %5409 = vmatprep.subr.mxu0 %v151
      %5410 = vmatpush1.msra.mxu0 %v150
      %5411 = vmatprep.subr.mxu0 %v159
      %5412 = vmatpush1.msra.mxu0 %v158
      %5413 = vmatprep.subr.mxu0 %v167
      %5414 = vmatpush1.msra.mxu0 %v166
      %5415 = vmatprep.subr.mxu0 %v175
      %5416 = vmatpush1.msra.mxu0 %v174
      %5417 = vmatprep.subr.mxu0 %v183
      %5418 = vmatpush1.msra.mxu0 %v182
      %5419 = vmatprep.subr.mxu0 %v191
      %5420 = vmatpush1.msra.mxu0 %v190
      %5421 = vmatprep.subr.mxu0 %v199
      %5422 = vmatpush1.msra.mxu0 %v198
      %5423 = vmatprep.subr.mxu0 %v207
      %5424 = vmatpush1.msra.mxu0 %v206
      %5425 = vmatprep.subr.mxu0 %v215
      %5426 = vmatpush1.msra.mxu0 %v214
      %5427 = vmatprep.subr.mxu0 %v223
      %5428 = vmatpush1.msra.mxu0 %v222
      %5429 = vmatprep.subr.mxu0 %v231
      %5430 = vmatpush1.msra.mxu0 %v230
      %5431 = vmatprep.subr.mxu0 %v239
      %5432 = vmatpush1.msra.mxu0 %v238
      %5433 = vmatprep.subr.mxu0 %v247
      %5434 = vmatpush1.msra.mxu0 %v246
      %5435 = vmatprep.subr.mxu0 %v255
      %5436 = vmatpush1.msra.mxu0 %v254
      %5437 = vmatprep.subr.mxu0 %v263
      %5438 = vmatpush1.msra.mxu0 %v262
      %5439 = vmatprep.subr.mxu0 %v271
      %5440 = vmatpush1.msra.mxu0 %v270
      %5441 = vmatprep.subr.mxu0 %v279
      %5442 = vmatpush1.msra.mxu0 %v278
      %5443 = vmatprep.subr.mxu0 %v287
      %5444 = vmatpush1.msra.mxu0 %v286
      %5445 = vmatprep.subr.mxu0 %v295
      %5446 = vmatpush1.msra.mxu0 %v294
      %5447 = vmatprep.subr.mxu0 %v303
      %5448 = vmatpush1.msra.mxu0 %v302
      %5449 = vmatprep.subr.mxu0 %v311
      %5450 = vmatpush1.msra.mxu0 %v310
      %5451 = vmatprep.subr.mxu0 %v319
      %5452 = vmatpush1.msra.mxu0 %v318
      %5453 = vmatprep.subr.mxu0 %v327
      %5454 = vmatpush1.msra.mxu0 %v326
      %5455 = vmatprep.subr.mxu0 %v335
      %5456 = vmatpush1.msra.mxu0 %v334
      %5457 = vmatprep.subr.mxu0 %v343
      %5458 = vmatpush1.msra.mxu0 %v342
      %5459 = vmatprep.subr.mxu0 %v351
      %5460 = vmatpush1.msra.mxu0 %v350
      %5461 = vmatprep.subr.mxu0 %v359
      %5462 = vmatpush1.msra.mxu0 %v358
      %5463 = vmatprep.subr.mxu0 %v367
      %5464 = vmatpush1.msra.mxu0 %v366
      %5465 = vmatprep.subr.mxu0 %v375
      %5466 = vmatpush1.msra.mxu0 %v374
      %5467 = vmatprep.mubr.f32.mxu0 %v5112
      %5468 = vmatmul.mubr.f32.gmra.mrb[0].mxu0 %v5111
      %v5469 = vpop.f32.mrb[0].mxu0
      %v5470 = vadd.f32 %v1319, %v5469
      %v5471 = vpop.f32.mrb[0].mxu0
      %v5472 = vadd.f32 %v1323, %v5471
      %5473 = vdwg.mxu0
      %5474 = vmatprep.subr.mxu0 %v383
      %5475 = vmatpush1.msra.mxu0 %v382
      %5476 = vmatprep.subr.mxu0 %v391
      %5477 = vmatpush1.msra.mxu0 %v390
      %5478 = vmatprep.subr.mxu0 %v399
      %5479 = vmatpush1.msra.mxu0 %v398
      %5480 = vmatprep.subr.mxu0 %v407
      %5481 = vmatpush1.msra.mxu0 %v406
      %5482 = vmatprep.subr.mxu0 %v415
      %5483 = vmatpush1.msra.mxu0 %v414
      %5484 = vmatprep.subr.mxu0 %v423
      %5485 = vmatpush1.msra.mxu0 %v422
      %5486 = vmatprep.subr.mxu0 %v431
      %5487 = vmatpush1.msra.mxu0 %v430
      %5488 = vmatprep.subr.mxu0 %v439
      %5489 = vmatpush1.msra.mxu0 %v438
      %5490 = vmatprep.subr.mxu0 %v447
      %5491 = vmatpush1.msra.mxu0 %v446
      %5492 = vmatprep.subr.mxu0 %v455
      %5493 = vmatpush1.msra.mxu0 %v454
      %5494 = vmatprep.subr.mxu0 %v463
      %5495 = vmatpush1.msra.mxu0 %v462
      %5496 = vmatprep.subr.mxu0 %v471
      %5497 = vmatpush1.msra.mxu0 %v470
      %5498 = vmatprep.subr.mxu0 %v479
      %5499 = vmatpush1.msra.mxu0 %v478
      %5500 = vmatprep.subr.mxu0 %v487
      %5501 = vmatpush1.msra.mxu0 %v486
      %5502 = vmatprep.subr.mxu0 %v495
      %5503 = vmatpush1.msra.mxu0 %v494
      %5504 = vmatprep.subr.mxu0 %v503
      %5505 = vmatpush1.msra.mxu0 %v502
      %5506 = vmatprep.subr.mxu0 %v511
      %5507 = vmatpush1.msra.mxu0 %v510
      %5508 = vmatprep.subr.mxu0 %v519
      %5509 = vmatpush1.msra.mxu0 %v518
      %5510 = vmatprep.subr.mxu0 %v527
      %5511 = vmatpush1.msra.mxu0 %v526
      %5512 = vmatprep.subr.mxu0 %v535
      %5513 = vmatpush1.msra.mxu0 %v534
      %5514 = vmatprep.subr.mxu0 %v543
      %5515 = vmatpush1.msra.mxu0 %v542
      %5516 = vmatprep.subr.mxu0 %v551
      %5517 = vmatpush1.msra.mxu0 %v550
      %5518 = vmatprep.subr.mxu0 %v559
      %5519 = vmatpush1.msra.mxu0 %v558
      %5520 = vmatprep.subr.mxu0 %v567
      %5521 = vmatpush1.msra.mxu0 %v566
      %5522 = vmatprep.subr.mxu0 %v575
      %5523 = vmatpush1.msra.mxu0 %v574
      %5524 = vmatprep.subr.mxu0 %v583
      %5525 = vmatpush1.msra.mxu0 %v582
      %5526 = vmatprep.subr.mxu0 %v591
      %5527 = vmatpush1.msra.mxu0 %v590
      %5528 = vmatprep.subr.mxu0 %v599
      %5529 = vmatpush1.msra.mxu0 %v598
      %5530 = vmatprep.subr.mxu0 %v607
      %5531 = vmatpush1.msra.mxu0 %v606
      %5532 = vmatprep.subr.mxu0 %v615
      %5533 = vmatpush1.msra.mxu0 %v614
      %5534 = vmatprep.subr.mxu0 %v623
      %5535 = vmatpush1.msra.mxu0 %v622
      %5536 = vmatprep.subr.mxu0 %v631
      %5537 = vmatpush1.msra.mxu0 %v630
      %5538 = vmatprep.mubr.f32.mxu0 %v5114
      %5539 = vmatmul.mubr.f32.gmra.mrb[0].mxu0 %v5113
      %v5540 = vpop.f32.mrb[0].mxu0
      %v5541 = vadd.f32 %v5470, %v5540
      %v5542 = vpop.f32.mrb[0].mxu0
      %v5543 = vadd.f32 %v5472, %v5542
      %5544 = vdwg.mxu0
      %5545 = vmatprep.subr.mxu0 %v639
      %5546 = vmatpush1.msra.mxu0 %v638
      %5547 = vmatprep.subr.mxu0 %v647
      %5548 = vmatpush1.msra.mxu0 %v646
      %5549 = vmatprep.subr.mxu0 %v655
      %5550 = vmatpush1.msra.mxu0 %v654
      %5551 = vmatprep.subr.mxu0 %v663
      %5552 = vmatpush1.msra.mxu0 %v662
      %5553 = vmatprep.subr.mxu0 %v671
      %5554 = vmatpush1.msra.mxu0 %v670
      %5555 = vmatprep.subr.mxu0 %v679
      %5556 = vmatpush1.msra.mxu0 %v678
      %5557 = vmatprep.subr.mxu0 %v687
      %5558 = vmatpush1.msra.mxu0 %v686
      %5559 = vmatprep.subr.mxu0 %v695
      %5560 = vmatpush1.msra.mxu0 %v694
      %5561 = vmatprep.subr.mxu0 %v703
      %5562 = vmatpush1.msra.mxu0 %v702
      %5563 = vmatprep.subr.mxu0 %v711
      %5564 = vmatpush1.msra.mxu0 %v710
      %5565 = vmatprep.subr.mxu0 %v719
      %5566 = vmatpush1.msra.mxu0 %v718
      %5567 = vmatprep.subr.mxu0 %v727
      %5568 = vmatpush1.msra.mxu0 %v726
      %5569 = vmatprep.subr.mxu0 %v735
      %5570 = vmatpush1.msra.mxu0 %v734
      %5571 = vmatprep.subr.mxu0 %v743
      %5572 = vmatpush1.msra.mxu0 %v742
      %5573 = vmatprep.subr.mxu0 %v751
      %5574 = vmatpush1.msra.mxu0 %v750
      %5575 = vmatprep.subr.mxu0 %v759
      %5576 = vmatpush1.msra.mxu0 %v758
      %5577 = vmatprep.subr.mxu0 %v767
      %5578 = vmatpush1.msra.mxu0 %v766
      %5579 = vmatprep.subr.mxu0 %v775
      %5580 = vmatpush1.msra.mxu0 %v774
      %5581 = vmatprep.subr.mxu0 %v783
      %5582 = vmatpush1.msra.mxu0 %v782
      %5583 = vmatprep.subr.mxu0 %v791
      %5584 = vmatpush1.msra.mxu0 %v790
      %5585 = vmatprep.subr.mxu0 %v799
      %5586 = vmatpush1.msra.mxu0 %v798
      %5587 = vmatprep.subr.mxu0 %v807
      %5588 = vmatpush1.msra.mxu0 %v806
      %5589 = vmatprep.subr.mxu0 %v815
      %5590 = vmatpush1.msra.mxu0 %v814
      %5591 = vmatprep.subr.mxu0 %v823
      %5592 = vmatpush1.msra.mxu0 %v822
      %5593 = vmatprep.subr.mxu0 %v831
      %5594 = vmatpush1.msra.mxu0 %v830
      %5595 = vmatprep.subr.mxu0 %v839
      %5596 = vmatpush1.msra.mxu0 %v838
      %5597 = vmatprep.subr.mxu0 %v847
      %5598 = vmatpush1.msra.mxu0 %v846
      %5599 = vmatprep.subr.mxu0 %v855
      %5600 = vmatpush1.msra.mxu0 %v854
      %5601 = vmatprep.subr.mxu0 %v863
      %5602 = vmatpush1.msra.mxu0 %v862
      %5603 = vmatprep.subr.mxu0 %v871
      %5604 = vmatpush1.msra.mxu0 %v870
      %5605 = vmatprep.subr.mxu0 %v879
      %5606 = vmatpush1.msra.mxu0 %v878
      %5607 = vmatprep.subr.mxu0 %v887
      %5608 = vmatpush1.msra.mxu0 %v886
      %5609 = vmatprep.mubr.f32.mxu0 %v5116
      %5610 = vmatmul.mubr.f32.gmra.mrb[0].mxu0 %v5115
      %v5611 = vpop.f32.mrb[0].mxu0
      %v5612 = vadd.f32 %v5541, %v5611
      %v5613 = vpop.f32.mrb[0].mxu0
      %v5614 = vadd.f32 %v5543, %v5613
      %5615 = vdwg.mxu0
      %5616 = vmatprep.subr.mxu0 %v895
      %5617 = vmatpush1.msra.mxu0 %v894
      %5618 = vmatprep.subr.mxu0 %v903
      %5619 = vmatpush1.msra.mxu0 %v902
      %5620 = vmatprep.subr.mxu0 %v911
      %5621 = vmatpush1.msra.mxu0 %v910
      %5622 = vmatprep.subr.mxu0 %v919
      %5623 = vmatpush1.msra.mxu0 %v918
      %5624 = vmatprep.subr.mxu0 %v927
      %5625 = vmatpush1.msra.mxu0 %v926
      %5626 = vmatprep.subr.mxu0 %v935
      %5627 = vmatpush1.msra.mxu0 %v934
      %5628 = vmatprep.subr.mxu0 %v943
      %5629 = vmatpush1.msra.mxu0 %v942
      %5630 = vmatprep.subr.mxu0 %v951
      %5631 = vmatpush1.msra.mxu0 %v950
      %5632 = vmatprep.subr.mxu0 %v959
      %5633 = vmatpush1.msra.mxu0 %v958
      %5634 = vmatprep.subr.mxu0 %v967
      %5635 = vmatpush1.msra.mxu0 %v966
      %5636 = vmatprep.subr.mxu0 %v975
      %5637 = vmatpush1.msra.mxu0 %v974
      %5638 = vmatprep.subr.mxu0 %v983
      %5639 = vmatpush1.msra.mxu0 %v982
      %5640 = vmatprep.subr.mxu0 %v991
      %5641 = vmatpush1.msra.mxu0 %v990
      %5642 = vmatprep.subr.mxu0 %v999
      %5643 = vmatpush1.msra.mxu0 %v998
      %5644 = vmatprep.subr.mxu0 %v1007
      %5645 = vmatpush1.msra.mxu0 %v1006
      %5646 = vmatprep.subr.mxu0 %v1015
      %5647 = vmatpush1.msra.mxu0 %v1014
      %5648 = vmatprep.subr.mxu0 %v1023
      %5649 = vmatpush1.msra.mxu0 %v1022
      %5650 = vmatprep.subr.mxu0 %v1031
      %5651 = vmatpush1.msra.mxu0 %v1030
      %5652 = vmatprep.subr.mxu0 %v1039
      %5653 = vmatpush1.msra.mxu0 %v1038
      %5654 = vmatprep.subr.mxu0 %v1047
      %5655 = vmatpush1.msra.mxu0 %v1046
      %5656 = vmatprep.subr.mxu0 %v1055
      %5657 = vmatpush1.msra.mxu0 %v1054
      %5658 = vmatprep.subr.mxu0 %v1063
      %5659 = vmatpush1.msra.mxu0 %v1062
      %5660 = vmatprep.subr.mxu0 %v1071
      %5661 = vmatpush1.msra.mxu0 %v1070
      %5662 = vmatprep.subr.mxu0 %v1079
      %5663 = vmatpush1.msra.mxu0 %v1078
      %5664 = vmatprep.subr.mxu0 %v1087
      %5665 = vmatpush1.msra.mxu0 %v1086
      %5666 = vmatprep.subr.mxu0 %v1095
      %5667 = vmatpush1.msra.mxu0 %v1094
      %5668 = vmatprep.subr.mxu0 %v1103
      %5669 = vmatpush1.msra.mxu0 %v1102
      %5670 = vmatprep.subr.mxu0 %v1111
      %5671 = vmatpush1.msra.mxu0 %v1110
      %5672 = vmatprep.subr.mxu0 %v1119
      %5673 = vmatpush1.msra.mxu0 %v1118
      %5674 = vmatprep.subr.mxu0 %v1127
      %5675 = vmatpush1.msra.mxu0 %v1126
      %5676 = vmatprep.subr.mxu0 %v1135
      %5677 = vmatpush1.msra.mxu0 %v1134
      %5678 = vmatprep.subr.mxu0 %v1143
      %5679 = vmatpush1.msra.mxu0 %v1142
      %5680 = vmatprep.mubr.f32.mxu0 %v5118
      %5681 = vmatmul.mubr.f32.gmra.mrb[0].mxu0 %v5117
      %v5682 = vpop.f32.mrb[0].mxu0
      %v5683 = vadd.f32 %v5612, %v5682
      %v5684 = vpop.f32.mrb[0].mxu0
      %v5685 = vadd.f32 %v5614, %v5684
      %5686 = vdwg.mxu0
      %5687 = vmatprep.subr.mxu0 %v129
      %5688 = vmatpush1.msra.mxu0 %v128
      %5689 = vmatprep.subr.mxu0 %v137
      %5690 = vmatpush1.msra.mxu0 %v136
      %5691 = vmatprep.subr.mxu0 %v145
      %5692 = vmatpush1.msra.mxu0 %v144
      %5693 = vmatprep.subr.mxu0 %v153
      %5694 = vmatpush1.msra.mxu0 %v152
      %5695 = vmatprep.subr.mxu0 %v161
      %5696 = vmatpush1.msra.mxu0 %v160
      %5697 = vmatprep.subr.mxu0 %v169
      %5698 = vmatpush1.msra.mxu0 %v168
      %5699 = vmatprep.subr.mxu0 %v177
      %5700 = vmatpush1.msra.mxu0 %v176
      %5701 = vmatprep.subr.mxu0 %v185
      %5702 = vmatpush1.msra.mxu0 %v184
      %5703 = vmatprep.subr.mxu0 %v193
      %5704 = vmatpush1.msra.mxu0 %v192
      %5705 = vmatprep.subr.mxu0 %v201
      %5706 = vmatpush1.msra.mxu0 %v200
      %5707 = vmatprep.subr.mxu0 %v209
      %5708 = vmatpush1.msra.mxu0 %v208
      %5709 = vmatprep.subr.mxu0 %v217
      %5710 = vmatpush1.msra.mxu0 %v216
      %5711 = vmatprep.subr.mxu0 %v225
      %5712 = vmatpush1.msra.mxu0 %v224
      %5713 = vmatprep.subr.mxu0 %v233
      %5714 = vmatpush1.msra.mxu0 %v232
      %5715 = vmatprep.subr.mxu0 %v241
      %5716 = vmatpush1.msra.mxu0 %v240
      %5717 = vmatprep.subr.mxu0 %v249
      %5718 = vmatpush1.msra.mxu0 %v248
      %5719 = vmatprep.subr.mxu0 %v257
      %5720 = vmatpush1.msra.mxu0 %v256
      %5721 = vmatprep.subr.mxu0 %v265
      %5722 = vmatpush1.msra.mxu0 %v264
      %5723 = vmatprep.subr.mxu0 %v273
      %5724 = vmatpush1.msra.mxu0 %v272
      %5725 = vmatprep.subr.mxu0 %v281
      %5726 = vmatpush1.msra.mxu0 %v280
      %5727 = vmatprep.subr.mxu0 %v289
      %5728 = vmatpush1.msra.mxu0 %v288
      %5729 = vmatprep.subr.mxu0 %v297
      %5730 = vmatpush1.msra.mxu0 %v296
      %5731 = vmatprep.subr.mxu0 %v305
      %5732 = vmatpush1.msra.mxu0 %v304
      %5733 = vmatprep.subr.mxu0 %v313
      %5734 = vmatpush1.msra.mxu0 %v312
      %5735 = vmatprep.subr.mxu0 %v321
      %5736 = vmatpush1.msra.mxu0 %v320
      %5737 = vmatprep.subr.mxu0 %v329
      %5738 = vmatpush1.msra.mxu0 %v328
      %5739 = vmatprep.subr.mxu0 %v337
      %5740 = vmatpush1.msra.mxu0 %v336
      %5741 = vmatprep.subr.mxu0 %v345
      %5742 = vmatpush1.msra.mxu0 %v344
      %5743 = vmatprep.subr.mxu0 %v353
      %5744 = vmatpush1.msra.mxu0 %v352
      %5745 = vmatprep.subr.mxu0 %v361
      %5746 = vmatpush1.msra.mxu0 %v360
      %5747 = vmatprep.subr.mxu0 %v369
      %5748 = vmatpush1.msra.mxu0 %v368
      %5749 = vmatprep.subr.mxu0 %v377
      %5750 = vmatpush1.msra.mxu0 %v376
      %5751 = vmatprep.mubr.f32.mxu0 %v5112
      %5752 = vmatmul.mubr.f32.gmra.mrb[0].mxu0 %v5111
      %v5753 = vpop.f32.mrb[0].mxu0
      %v5754 = vadd.f32 %v1327, %v5753
      %v5755 = vpop.f32.mrb[0].mxu0
      %v5756 = vadd.f32 %v1331, %v5755
      %5757 = vdwg.mxu0
      %5758 = vmatprep.subr.mxu0 %v385
      %5759 = vmatpush1.msra.mxu0 %v384
      %5760 = vmatprep.subr.mxu0 %v393
      %5761 = vmatpush1.msra.mxu0 %v392
      %5762 = vmatprep.subr.mxu0 %v401
      %5763 = vmatpush1.msra.mxu0 %v400
      %5764 = vmatprep.subr.mxu0 %v409
      %5765 = vmatpush1.msra.mxu0 %v408
      %5766 = vmatprep.subr.mxu0 %v417
      %5767 = vmatpush1.msra.mxu0 %v416
      %5768 = vmatprep.subr.mxu0 %v425
      %5769 = vmatpush1.msra.mxu0 %v424
      %5770 = vmatprep.subr.mxu0 %v433
      %5771 = vmatpush1.msra.mxu0 %v432
      %5772 = vmatprep.subr.mxu0 %v441
      %5773 = vmatpush1.msra.mxu0 %v440
      %5774 = vmatprep.subr.mxu0 %v449
      %5775 = vmatpush1.msra.mxu0 %v448
      %5776 = vmatprep.subr.mxu0 %v457
      %5777 = vmatpush1.msra.mxu0 %v456
      %5778 = vmatprep.subr.mxu0 %v465
      %5779 = vmatpush1.msra.mxu0 %v464
      %5780 = vmatprep.subr.mxu0 %v473
      %5781 = vmatpush1.msra.mxu0 %v472
      %5782 = vmatprep.subr.mxu0 %v481
      %5783 = vmatpush1.msra.mxu0 %v480
      %5784 = vmatprep.subr.mxu0 %v489
      %5785 = vmatpush1.msra.mxu0 %v488
      %5786 = vmatprep.subr.mxu0 %v497
      %5787 = vmatpush1.msra.mxu0 %v496
      %5788 = vmatprep.subr.mxu0 %v505
      %5789 = vmatpush1.msra.mxu0 %v504
      %5790 = vmatprep.subr.mxu0 %v513
      %5791 = vmatpush1.msra.mxu0 %v512
      %5792 = vmatprep.subr.mxu0 %v521
      %5793 = vmatpush1.msra.mxu0 %v520
      %5794 = vmatprep.subr.mxu0 %v529
      %5795 = vmatpush1.msra.mxu0 %v528
      %5796 = vmatprep.subr.mxu0 %v537
      %5797 = vmatpush1.msra.mxu0 %v536
      %5798 = vmatprep.subr.mxu0 %v545
      %5799 = vmatpush1.msra.mxu0 %v544
      %5800 = vmatprep.subr.mxu0 %v553
      %5801 = vmatpush1.msra.mxu0 %v552
      %5802 = vmatprep.subr.mxu0 %v561
      %5803 = vmatpush1.msra.mxu0 %v560
      %5804 = vmatprep.subr.mxu0 %v569
      %5805 = vmatpush1.msra.mxu0 %v568
      %5806 = vmatprep.subr.mxu0 %v577
      %5807 = vmatpush1.msra.mxu0 %v576
      %5808 = vmatprep.subr.mxu0 %v585
      %5809 = vmatpush1.msra.mxu0 %v584
      %5810 = vmatprep.subr.mxu0 %v593
      %5811 = vmatpush1.msra.mxu0 %v592
      %5812 = vmatprep.subr.mxu0 %v601
      %5813 = vmatpush1.msra.mxu0 %v600
      %5814 = vmatprep.subr.mxu0 %v609
      %5815 = vmatpush1.msra.mxu0 %v608
      %5816 = vmatprep.subr.mxu0 %v617
      %5817 = vmatpush1.msra.mxu0 %v616
      %5818 = vmatprep.subr.mxu0 %v625
      %5819 = vmatpush1.msra.mxu0 %v624
      %5820 = vmatprep.subr.mxu0 %v633
      %5821 = vmatpush1.msra.mxu0 %v632
      %5822 = vmatprep.mubr.f32.mxu0 %v5114
      %5823 = vmatmul.mubr.f32.gmra.mrb[0].mxu0 %v5113
      %v5824 = vpop.f32.mrb[0].mxu0
      %v5825 = vadd.f32 %v5754, %v5824
      %v5826 = vpop.f32.mrb[0].mxu0
      %v5827 = vadd.f32 %v5756, %v5826
      %5828 = vdwg.mxu0
      %5829 = vmatprep.subr.mxu0 %v641
      %5830 = vmatpush1.msra.mxu0 %v640
      %5831 = vmatprep.subr.mxu0 %v649
      %5832 = vmatpush1.msra.mxu0 %v648
      %5833 = vmatprep.subr.mxu0 %v657
      %5834 = vmatpush1.msra.mxu0 %v656
      %5835 = vmatprep.subr.mxu0 %v665
      %5836 = vmatpush1.msra.mxu0 %v664
      %5837 = vmatprep.subr.mxu0 %v673
      %5838 = vmatpush1.msra.mxu0 %v672
      %5839 = vmatprep.subr.mxu0 %v681
      %5840 = vmatpush1.msra.mxu0 %v680
      %5841 = vmatprep.subr.mxu0 %v689
      %5842 = vmatpush1.msra.mxu0 %v688
      %5843 = vmatprep.subr.mxu0 %v697
      %5844 = vmatpush1.msra.mxu0 %v696
      %5845 = vmatprep.subr.mxu0 %v705
      %5846 = vmatpush1.msra.mxu0 %v704
      %5847 = vmatprep.subr.mxu0 %v713
      %5848 = vmatpush1.msra.mxu0 %v712
      %5849 = vmatprep.subr.mxu0 %v721
      %5850 = vmatpush1.msra.mxu0 %v720
      %5851 = vmatprep.subr.mxu0 %v729
      %5852 = vmatpush1.msra.mxu0 %v728
      %5853 = vmatprep.subr.mxu0 %v737
      %5854 = vmatpush1.msra.mxu0 %v736
      %5855 = vmatprep.subr.mxu0 %v745
      %5856 = vmatpush1.msra.mxu0 %v744
      %5857 = vmatprep.subr.mxu0 %v753
      %5858 = vmatpush1.msra.mxu0 %v752
      %5859 = vmatprep.subr.mxu0 %v761
      %5860 = vmatpush1.msra.mxu0 %v760
      %5861 = vmatprep.subr.mxu0 %v769
      %5862 = vmatpush1.msra.mxu0 %v768
      %5863 = vmatprep.subr.mxu0 %v777
      %5864 = vmatpush1.msra.mxu0 %v776
      %5865 = vmatprep.subr.mxu0 %v785
      %5866 = vmatpush1.msra.mxu0 %v784
      %5867 = vmatprep.subr.mxu0 %v793
      %5868 = vmatpush1.msra.mxu0 %v792
      %5869 = vmatprep.subr.mxu0 %v801
      %5870 = vmatpush1.msra.mxu0 %v800
      %5871 = vmatprep.subr.mxu0 %v809
      %5872 = vmatpush1.msra.mxu0 %v808
      %5873 = vmatprep.subr.mxu0 %v817
      %5874 = vmatpush1.msra.mxu0 %v816
      %5875 = vmatprep.subr.mxu0 %v825
      %5876 = vmatpush1.msra.mxu0 %v824
      %5877 = vmatprep.subr.mxu0 %v833
      %5878 = vmatpush1.msra.mxu0 %v832
      %5879 = vmatprep.subr.mxu0 %v841
      %5880 = vmatpush1.msra.mxu0 %v840
      %5881 = vmatprep.subr.mxu0 %v849
      %5882 = vmatpush1.msra.mxu0 %v848
      %5883 = vmatprep.subr.mxu0 %v857
      %5884 = vmatpush1.msra.mxu0 %v856
      %5885 = vmatprep.subr.mxu0 %v865
      %5886 = vmatpush1.msra.mxu0 %v864
      %5887 = vmatprep.subr.mxu0 %v873
      %5888 = vmatpush1.msra.mxu0 %v872
      %5889 = vmatprep.subr.mxu0 %v881
      %5890 = vmatpush1.msra.mxu0 %v880
      %5891 = vmatprep.subr.mxu0 %v889
      %5892 = vmatpush1.msra.mxu0 %v888
      %5893 = vmatprep.mubr.f32.mxu0 %v5116
      %5894 = vmatmul.mubr.f32.gmra.mrb[0].mxu0 %v5115
      %v5895 = vpop.f32.mrb[0].mxu0
      %v5896 = vadd.f32 %v5825, %v5895
      %v5897 = vpop.f32.mrb[0].mxu0
      %v5898 = vadd.f32 %v5827, %v5897
      %5899 = vdwg.mxu0
      %5900 = vmatprep.subr.mxu0 %v897
      %5901 = vmatpush1.msra.mxu0 %v896
      %5902 = vmatprep.subr.mxu0 %v905
      %5903 = vmatpush1.msra.mxu0 %v904
      %5904 = vmatprep.subr.mxu0 %v913
      %5905 = vmatpush1.msra.mxu0 %v912
      %5906 = vmatprep.subr.mxu0 %v921
      %5907 = vmatpush1.msra.mxu0 %v920
      %5908 = vmatprep.subr.mxu0 %v929
      %5909 = vmatpush1.msra.mxu0 %v928
      %5910 = vmatprep.subr.mxu0 %v937
      %5911 = vmatpush1.msra.mxu0 %v936
      %5912 = vmatprep.subr.mxu0 %v945
      %5913 = vmatpush1.msra.mxu0 %v944
      %5914 = vmatprep.subr.mxu0 %v953
      %5915 = vmatpush1.msra.mxu0 %v952
      %5916 = vmatprep.subr.mxu0 %v961
      %5917 = vmatpush1.msra.mxu0 %v960
      %5918 = vmatprep.subr.mxu0 %v969
      %5919 = vmatpush1.msra.mxu0 %v968
      %5920 = vmatprep.subr.mxu0 %v977
      %5921 = vmatpush1.msra.mxu0 %v976
      %5922 = vmatprep.subr.mxu0 %v985
      %5923 = vmatpush1.msra.mxu0 %v984
      %5924 = vmatprep.subr.mxu0 %v993
      %5925 = vmatpush1.msra.mxu0 %v992
      %5926 = vmatprep.subr.mxu0 %v1001
      %5927 = vmatpush1.msra.mxu0 %v1000
      %5928 = vmatprep.subr.mxu0 %v1009
      %5929 = vmatpush1.msra.mxu0 %v1008
      %5930 = vmatprep.subr.mxu0 %v1017
      %5931 = vmatpush1.msra.mxu0 %v1016
      %5932 = vmatprep.subr.mxu0 %v1025
      %5933 = vmatpush1.msra.mxu0 %v1024
      %5934 = vmatprep.subr.mxu0 %v1033
      %5935 = vmatpush1.msra.mxu0 %v1032
      %5936 = vmatprep.subr.mxu0 %v1041
      %5937 = vmatpush1.msra.mxu0 %v1040
      %5938 = vmatprep.subr.mxu0 %v1049
      %5939 = vmatpush1.msra.mxu0 %v1048
      %5940 = vmatprep.subr.mxu0 %v1057
      %5941 = vmatpush1.msra.mxu0 %v1056
      %5942 = vmatprep.subr.mxu0 %v1065
      %5943 = vmatpush1.msra.mxu0 %v1064
      %5944 = vmatprep.subr.mxu0 %v1073
      %5945 = vmatpush1.msra.mxu0 %v1072
      %5946 = vmatprep.subr.mxu0 %v1081
      %5947 = vmatpush1.msra.mxu0 %v1080
      %5948 = vmatprep.subr.mxu0 %v1089
      %5949 = vmatpush1.msra.mxu0 %v1088
      %5950 = vmatprep.subr.mxu0 %v1097
      %5951 = vmatpush1.msra.mxu0 %v1096
      %5952 = vmatprep.subr.mxu0 %v1105
      %5953 = vmatpush1.msra.mxu0 %v1104
      %5954 = vmatprep.subr.mxu0 %v1113
      %5955 = vmatpush1.msra.mxu0 %v1112
      %5956 = vmatprep.subr.mxu0 %v1121
      %5957 = vmatpush1.msra.mxu0 %v1120
      %5958 = vmatprep.subr.mxu0 %v1129
      %5959 = vmatpush1.msra.mxu0 %v1128
      %5960 = vmatprep.subr.mxu0 %v1137
      %5961 = vmatpush1.msra.mxu0 %v1136
      %5962 = vmatprep.subr.mxu0 %v1145
      %5963 = vmatpush1.msra.mxu0 %v1144
      %5964 = vmatprep.mubr.f32.mxu0 %v5118
      %5965 = vmatmul.mubr.f32.gmra.mrb[0].mxu0 %v5117
      %v5966 = vpop.f32.mrb[0].mxu0
      %v5967 = vadd.f32 %v5896, %v5966
      %v5968 = vpop.f32.mrb[0].mxu0
      %v5969 = vadd.f32 %v5898, %v5968
      %5970 = vdwg.mxu0
      %5971 = vmatprep.subr.mxu0 %v131
      %5972 = vmatpush1.msra.mxu0 %v130
      %5973 = vmatprep.subr.mxu0 %v139
      %5974 = vmatpush1.msra.mxu0 %v138
      %5975 = vmatprep.subr.mxu0 %v147
      %5976 = vmatpush1.msra.mxu0 %v146
      %5977 = vmatprep.subr.mxu0 %v155
      %5978 = vmatpush1.msra.mxu0 %v154
      %5979 = vmatprep.subr.mxu0 %v163
      %5980 = vmatpush1.msra.mxu0 %v162
      %5981 = vmatprep.subr.mxu0 %v171
      %5982 = vmatpush1.msra.mxu0 %v170
      %5983 = vmatprep.subr.mxu0 %v179
      %5984 = vmatpush1.msra.mxu0 %v178
      %5985 = vmatprep.subr.mxu0 %v187
      %5986 = vmatpush1.msra.mxu0 %v186
      %5987 = vmatprep.subr.mxu0 %v195
      %5988 = vmatpush1.msra.mxu0 %v194
      %5989 = vmatprep.subr.mxu0 %v203
      %5990 = vmatpush1.msra.mxu0 %v202
      %5991 = vmatprep.subr.mxu0 %v211
      %5992 = vmatpush1.msra.mxu0 %v210
      %5993 = vmatprep.subr.mxu0 %v219
      %5994 = vmatpush1.msra.mxu0 %v218
      %5995 = vmatprep.subr.mxu0 %v227
      %5996 = vmatpush1.msra.mxu0 %v226
      %5997 = vmatprep.subr.mxu0 %v235
      %5998 = vmatpush1.msra.mxu0 %v234
      %5999 = vmatprep.subr.mxu0 %v243
      %6000 = vmatpush1.msra.mxu0 %v242
      %6001 = vmatprep.subr.mxu0 %v251
      %6002 = vmatpush1.msra.mxu0 %v250
      %6003 = vmatprep.subr.mxu0 %v259
      %6004 = vmatpush1.msra.mxu0 %v258
      %6005 = vmatprep.subr.mxu0 %v267
      %6006 = vmatpush1.msra.mxu0 %v266
      %6007 = vmatprep.subr.mxu0 %v275
      %6008 = vmatpush1.msra.mxu0 %v274
      %6009 = vmatprep.subr.mxu0 %v283
      %6010 = vmatpush1.msra.mxu0 %v282
      %6011 = vmatprep.subr.mxu0 %v291
      %6012 = vmatpush1.msra.mxu0 %v290
      %6013 = vmatprep.subr.mxu0 %v299
      %6014 = vmatpush1.msra.mxu0 %v298
      %6015 = vmatprep.subr.mxu0 %v307
      %6016 = vmatpush1.msra.mxu0 %v306
      %6017 = vmatprep.subr.mxu0 %v315
      %6018 = vmatpush1.msra.mxu0 %v314
      %6019 = vmatprep.subr.mxu0 %v323
      %6020 = vmatpush1.msra.mxu0 %v322
      %6021 = vmatprep.subr.mxu0 %v331
      %6022 = vmatpush1.msra.mxu0 %v330
      %6023 = vmatprep.subr.mxu0 %v339
      %6024 = vmatpush1.msra.mxu0 %v338
      %6025 = vmatprep.subr.mxu0 %v347
      %6026 = vmatpush1.msra.mxu0 %v346
      %6027 = vmatprep.subr.mxu0 %v355
      %6028 = vmatpush1.msra.mxu0 %v354
      %6029 = vmatprep.subr.mxu0 %v363
      %6030 = vmatpush1.msra.mxu0 %v362
      %6031 = vmatprep.subr.mxu0 %v371
      %6032 = vmatpush1.msra.mxu0 %v370
      %6033 = vmatprep.subr.mxu0 %v379
      %6034 = vmatpush1.msra.mxu0 %v378
      %6035 = vmatprep.mubr.f32.mxu0 %v5112
      %6036 = vmatmul.mubr.f32.gmra.mrb[0].mxu0 %v5111
      %v6037 = vpop.f32.mrb[0].mxu0
      %v6038 = vadd.f32 %v1335, %v6037
      %v6039 = vpop.f32.mrb[0].mxu0
      %v6040 = vadd.f32 %v1339, %v6039
      %6041 = vdwg.mxu0
      %6042 = vmatprep.subr.mxu0 %v387
      %6043 = vmatpush1.msra.mxu0 %v386
      %6044 = vmatprep.subr.mxu0 %v395
      %6045 = vmatpush1.msra.mxu0 %v394
      %6046 = vmatprep.subr.mxu0 %v403
      %6047 = vmatpush1.msra.mxu0 %v402
      %6048 = vmatprep.subr.mxu0 %v411
      %6049 = vmatpush1.msra.mxu0 %v410
      %6050 = vmatprep.subr.mxu0 %v419
      %6051 = vmatpush1.msra.mxu0 %v418
      %6052 = vmatprep.subr.mxu0 %v427
      %6053 = vmatpush1.msra.mxu0 %v426
      %6054 = vmatprep.subr.mxu0 %v435
      %6055 = vmatpush1.msra.mxu0 %v434
      %6056 = vmatprep.subr.mxu0 %v443
      %6057 = vmatpush1.msra.mxu0 %v442
      %6058 = vmatprep.subr.mxu0 %v451
      %6059 = vmatpush1.msra.mxu0 %v450
      %6060 = vmatprep.subr.mxu0 %v459
      %6061 = vmatpush1.msra.mxu0 %v458
      %6062 = vmatprep.subr.mxu0 %v467
      %6063 = vmatpush1.msra.mxu0 %v466
      %6064 = vmatprep.subr.mxu0 %v475
      %6065 = vmatpush1.msra.mxu0 %v474
      %6066 = vmatprep.subr.mxu0 %v483
      %6067 = vmatpush1.msra.mxu0 %v482
      %6068 = vmatprep.subr.mxu0 %v491
      %6069 = vmatpush1.msra.mxu0 %v490
      %6070 = vmatprep.subr.mxu0 %v499
      %6071 = vmatpush1.msra.mxu0 %v498
      %6072 = vmatprep.subr.mxu0 %v507
      %6073 = vmatpush1.msra.mxu0 %v506
      %6074 = vmatprep.subr.mxu0 %v515
      %6075 = vmatpush1.msra.mxu0 %v514
      %6076 = vmatprep.subr.mxu0 %v523
      %6077 = vmatpush1.msra.mxu0 %v522
      %6078 = vmatprep.subr.mxu0 %v531
      %6079 = vmatpush1.msra.mxu0 %v530
      %6080 = vmatprep.subr.mxu0 %v539
      %6081 = vmatpush1.msra.mxu0 %v538
      %6082 = vmatprep.subr.mxu0 %v547
      %6083 = vmatpush1.msra.mxu0 %v546
      %6084 = vmatprep.subr.mxu0 %v555
      %6085 = vmatpush1.msra.mxu0 %v554
      %6086 = vmatprep.subr.mxu0 %v563
      %6087 = vmatpush1.msra.mxu0 %v562
      %6088 = vmatprep.subr.mxu0 %v571
      %6089 = vmatpush1.msra.mxu0 %v570
      %6090 = vmatprep.subr.mxu0 %v579
      %6091 = vmatpush1.msra.mxu0 %v578
      %6092 = vmatprep.subr.mxu0 %v587
      %6093 = vmatpush1.msra.mxu0 %v586
      %6094 = vmatprep.subr.mxu0 %v595
      %6095 = vmatpush1.msra.mxu0 %v594
      %6096 = vmatprep.subr.mxu0 %v603
      %6097 = vmatpush1.msra.mxu0 %v602
      %6098 = vmatprep.subr.mxu0 %v611
      %6099 = vmatpush1.msra.mxu0 %v610
      %6100 = vmatprep.subr.mxu0 %v619
      %6101 = vmatpush1.msra.mxu0 %v618
      %6102 = vmatprep.subr.mxu0 %v627
      %6103 = vmatpush1.msra.mxu0 %v626
      %6104 = vmatprep.subr.mxu0 %v635
      %6105 = vmatpush1.msra.mxu0 %v634
      %6106 = vmatprep.mubr.f32.mxu0 %v5114
      %6107 = vmatmul.mubr.f32.gmra.mrb[0].mxu0 %v5113
      %v6108 = vpop.f32.mrb[0].mxu0
      %v6109 = vadd.f32 %v6038, %v6108
      %v6110 = vpop.f32.mrb[0].mxu0
      %v6111 = vadd.f32 %v6040, %v6110
      %6112 = vdwg.mxu0
      %6113 = vmatprep.subr.mxu0 %v643
      %6114 = vmatpush1.msra.mxu0 %v642
      %6115 = vmatprep.subr.mxu0 %v651
      %6116 = vmatpush1.msra.mxu0 %v650
      %6117 = vmatprep.subr.mxu0 %v659
      %6118 = vmatpush1.msra.mxu0 %v658
      %6119 = vmatprep.subr.mxu0 %v667
      %6120 = vmatpush1.msra.mxu0 %v666
      %6121 = vmatprep.subr.mxu0 %v675
      %6122 = vmatpush1.msra.mxu0 %v674
      %6123 = vmatprep.subr.mxu0 %v683
      %6124 = vmatpush1.msra.mxu0 %v682
      %6125 = vmatprep.subr.mxu0 %v691
      %6126 = vmatpush1.msra.mxu0 %v690
      %6127 = vmatprep.subr.mxu0 %v699
      %6128 = vmatpush1.msra.mxu0 %v698
      %6129 = vmatprep.subr.mxu0 %v707
      %6130 = vmatpush1.msra.mxu0 %v706
      %6131 = vmatprep.subr.mxu0 %v715
      %6132 = vmatpush1.msra.mxu0 %v714
      %6133 = vmatprep.subr.mxu0 %v723
      %6134 = vmatpush1.msra.mxu0 %v722
      %6135 = vmatprep.subr.mxu0 %v731
      %6136 = vmatpush1.msra.mxu0 %v730
      %6137 = vmatprep.subr.mxu0 %v739
      %6138 = vmatpush1.msra.mxu0 %v738
      %6139 = vmatprep.subr.mxu0 %v747
      %6140 = vmatpush1.msra.mxu0 %v746
      %6141 = vmatprep.subr.mxu0 %v755
      %6142 = vmatpush1.msra.mxu0 %v754
      %6143 = vmatprep.subr.mxu0 %v763
      %6144 = vmatpush1.msra.mxu0 %v762
      %6145 = vmatprep.subr.mxu0 %v771
      %6146 = vmatpush1.msra.mxu0 %v770
      %6147 = vmatprep.subr.mxu0 %v779
      %6148 = vmatpush1.msra.mxu0 %v778
      %6149 = vmatprep.subr.mxu0 %v787
      %6150 = vmatpush1.msra.mxu0 %v786
      %6151 = vmatprep.subr.mxu0 %v795
      %6152 = vmatpush1.msra.mxu0 %v794
      %6153 = vmatprep.subr.mxu0 %v803
      %6154 = vmatpush1.msra.mxu0 %v802
      %6155 = vmatprep.subr.mxu0 %v811
      %6156 = vmatpush1.msra.mxu0 %v810
      %6157 = vmatprep.subr.mxu0 %v819
      %6158 = vmatpush1.msra.mxu0 %v818
      %6159 = vmatprep.subr.mxu0 %v827
      %6160 = vmatpush1.msra.mxu0 %v826
      %6161 = vmatprep.subr.mxu0 %v835
      %6162 = vmatpush1.msra.mxu0 %v834
      %6163 = vmatprep.subr.mxu0 %v843
      %6164 = vmatpush1.msra.mxu0 %v842
      %6165 = vmatprep.subr.mxu0 %v851
      %6166 = vmatpush1.msra.mxu0 %v850
      %6167 = vmatprep.subr.mxu0 %v859
      %6168 = vmatpush1.msra.mxu0 %v858
      %6169 = vmatprep.subr.mxu0 %v867
      %6170 = vmatpush1.msra.mxu0 %v866
      %6171 = vmatprep.subr.mxu0 %v875
      %6172 = vmatpush1.msra.mxu0 %v874
      %6173 = vmatprep.subr.mxu0 %v883
      %6174 = vmatpush1.msra.mxu0 %v882
      %6175 = vmatprep.subr.mxu0 %v891
      %6176 = vmatpush1.msra.mxu0 %v890
      %6177 = vmatprep.mubr.f32.mxu0 %v5116
      %6178 = vmatmul.mubr.f32.gmra.mrb[0].mxu0 %v5115
      %v6179 = vpop.f32.mrb[0].mxu0
      %v6180 = vadd.f32 %v6109, %v6179
      %v6181 = vpop.f32.mrb[0].mxu0
      %v6182 = vadd.f32 %v6111, %v6181
      %6183 = vdwg.mxu0
      %6184 = vmatprep.subr.mxu0 %v899
      %6185 = vmatpush1.msra.mxu0 %v898
      %6186 = vmatprep.subr.mxu0 %v907
      %6187 = vmatpush1.msra.mxu0 %v906
      %6188 = vmatprep.subr.mxu0 %v915
      %6189 = vmatpush1.msra.mxu0 %v914
      %6190 = vmatprep.subr.mxu0 %v923
      %6191 = vmatpush1.msra.mxu0 %v922
      %6192 = vmatprep.subr.mxu0 %v931
      %6193 = vmatpush1.msra.mxu0 %v930
      %6194 = vmatprep.subr.mxu0 %v939
      %6195 = vmatpush1.msra.mxu0 %v938
      %6196 = vmatprep.subr.mxu0 %v947
      %6197 = vmatpush1.msra.mxu0 %v946
      %6198 = vmatprep.subr.mxu0 %v955
      %6199 = vmatpush1.msra.mxu0 %v954
      %6200 = vmatprep.subr.mxu0 %v963
      %6201 = vmatpush1.msra.mxu0 %v962
      %6202 = vmatprep.subr.mxu0 %v971
      %6203 = vmatpush1.msra.mxu0 %v970
      %6204 = vmatprep.subr.mxu0 %v979
      %6205 = vmatpush1.msra.mxu0 %v978
      %6206 = vmatprep.subr.mxu0 %v987
      %6207 = vmatpush1.msra.mxu0 %v986
      %6208 = vmatprep.subr.mxu0 %v995
      %6209 = vmatpush1.msra.mxu0 %v994
      %6210 = vmatprep.subr.mxu0 %v1003
      %6211 = vmatpush1.msra.mxu0 %v1002
      %6212 = vmatprep.subr.mxu0 %v1011
      %6213 = vmatpush1.msra.mxu0 %v1010
      %6214 = vmatprep.subr.mxu0 %v1019
      %6215 = vmatpush1.msra.mxu0 %v1018
      %6216 = vmatprep.subr.mxu0 %v1027
      %6217 = vmatpush1.msra.mxu0 %v1026
      %6218 = vmatprep.subr.mxu0 %v1035
      %6219 = vmatpush1.msra.mxu0 %v1034
      %6220 = vmatprep.subr.mxu0 %v1043
      %6221 = vmatpush1.msra.mxu0 %v1042
      %6222 = vmatprep.subr.mxu0 %v1051
      %6223 = vmatpush1.msra.mxu0 %v1050
      %6224 = vmatprep.subr.mxu0 %v1059
      %6225 = vmatpush1.msra.mxu0 %v1058
      %6226 = vmatprep.subr.mxu0 %v1067
      %6227 = vmatpush1.msra.mxu0 %v1066
      %6228 = vmatprep.subr.mxu0 %v1075
      %6229 = vmatpush1.msra.mxu0 %v1074
      %6230 = vmatprep.subr.mxu0 %v1083
      %6231 = vmatpush1.msra.mxu0 %v1082
      %6232 = vmatprep.subr.mxu0 %v1091
      %6233 = vmatpush1.msra.mxu0 %v1090
      %6234 = vmatprep.subr.mxu0 %v1099
      %6235 = vmatpush1.msra.mxu0 %v1098
      %6236 = vmatprep.subr.mxu0 %v1107
      %6237 = vmatpush1.msra.mxu0 %v1106
      %6238 = vmatprep.subr.mxu0 %v1115
      %6239 = vmatpush1.msra.mxu0 %v1114
      %6240 = vmatprep.subr.mxu0 %v1123
      %6241 = vmatpush1.msra.mxu0 %v1122
      %6242 = vmatprep.subr.mxu0 %v1131
      %6243 = vmatpush1.msra.mxu0 %v1130
      %6244 = vmatprep.subr.mxu0 %v1139
      %6245 = vmatpush1.msra.mxu0 %v1138
      %6246 = vmatprep.subr.mxu0 %v1147
      %6247 = vmatpush1.msra.mxu0 %v1146
      %6248 = vmatprep.mubr.f32.mxu0 %v5118
      %6249 = vmatmul.mubr.f32.gmra.mrb[0].mxu0 %v5117
      %v6250 = vpop.f32.mrb[0].mxu0
      %v6251 = vadd.f32 %v6180, %v6250
      %v6252 = vpop.f32.mrb[0].mxu0
      %v6253 = vadd.f32 %v6182, %v6252
      %6254 = vdwg.mxu0
      %vm6255 = vcmp.gt.f32.partialorder %v5399, %v4992
      %vm6256 = vcmp.gt.f32.partialorder %v5401, %v4996
      %vm6257 = vcmp.gt.f32.partialorder %v5683, %v5000
      %vm6258 = vcmp.gt.f32.partialorder %v5685, %v5004
      %vm6259 = vcmp.gt.f32.partialorder %v5967, %v5008
      %vm6260 = vcmp.gt.f32.partialorder %v5969, %v5012
      %vm6261 = vcmp.gt.f32.partialorder %v6251, %v5016
      %vm6262 = vcmp.gt.f32.partialorder %v6253, %v5020
      %v6263 = vsub.f32 %v5399, %v4992
      %v6264 = vsub.f32 %v5401, %v4996
      %v6265 = vsub.f32 %v5683, %v5000
      %v6266 = vsub.f32 %v5685, %v5004
      %v6267 = vsub.f32 %v5967, %v5008
      %v6268 = vsub.f32 %v5969, %v5012
      %v6269 = vsub.f32 %v6251, %v5016
      %v6270 = vsub.f32 %v6253, %v5020
      %vm6271 = vcmp.lt.f32.partialorder %v5399, %v5050
      %vm6272 = vcmp.lt.f32.partialorder %v5401, %v5054
      %vm6273 = vcmp.lt.f32.partialorder %v5683, %v5058
      %vm6274 = vcmp.lt.f32.partialorder %v5685, %v5062
      %vm6275 = vcmp.lt.f32.partialorder %v5967, %v5066
      %vm6276 = vcmp.lt.f32.partialorder %v5969, %v5070
      %vm6277 = vcmp.lt.f32.partialorder %v6251, %v5074
      %vm6278 = vcmp.lt.f32.partialorder %v6253, %v5078
      %v6279 = vadd.f32 %v5399, %v4992
      %v6280 = vadd.f32 %v5401, %v4996
      %v6281 = vadd.f32 %v5683, %v5000
      %v6282 = vadd.f32 %v5685, %v5004
      %v6283 = vadd.f32 %v5967, %v5008
      %v6284 = vadd.f32 %v5969, %v5012
      %v6285 = vadd.f32 %v6251, %v5016
      %v6286 = vadd.f32 %v6253, %v5020
      %v6287 = vsel %vm6271, %v6279, 0.0
      %v6288 = vsel %vm6272, %v6280, 0.0
      %v6289 = vsel %vm6273, %v6281, 0.0
      %v6290 = vsel %vm6274, %v6282, 0.0
      %v6291 = vsel %vm6275, %v6283, 0.0
      %v6292 = vsel %vm6276, %v6284, 0.0
      %v6293 = vsel %vm6277, %v6285, 0.0
      %v6294 = vsel %vm6278, %v6286, 0.0
      %v6295 = vsel %vm6255, %v6263, %v6287
      %v6296 = vsel %vm6256, %v6264, %v6288
      %v6297 = vsel %vm6257, %v6265, %v6289
      %v6298 = vsel %vm6258, %v6266, %v6290
      %v6299 = vsel %vm6259, %v6267, %v6291
      %v6300 = vsel %vm6260, %v6268, %v6292
      %v6301 = vsel %vm6261, %v6269, %v6293
      %v6302 = vsel %vm6262, %v6270, %v6294
    $region66: #{tpu_custom_call.1} parent=1 // loop_footer
      %s1290 = sadd.s32 1, %s1286
    $region67: #{tpu_custom_call.1} parent=1 // loop_footer_branch
      %1285 = sbr.rel target = $region63
    $region68: #{tpu_custom_call.1} parent=1 // loop_exit
      _
    %6303 = vst [vmem:[#allocation14] sm:$0xff] %v1291
    %6304 = vst [vmem:[#allocation14 + $0x8] sm:$0xff] %v1292
    %6305 = vst [vmem:[#allocation14 + $0x10] sm:$0xff] %v1293
    %6306 = vst [vmem:[#allocation14 + $0x18] sm:$0xff] %v1294
    %6307 = vst [vmem:[#allocation14 + $0x20] sm:$0xff] %v1295
    %6308 = vst [vmem:[#allocation14 + $0x28] sm:$0xff] %v1296
    %6309 = vst [vmem:[#allocation14 + $0x30] sm:$0xff] %v1297
    %6310 = vst [vmem:[#allocation14 + $0x38] sm:$0xff] %v1298
    %6311 = vst [vmem:[#allocation15] sm:$0xff] %v1299
    %6312 = vst [vmem:[#allocation15 + $0x8] sm:$0xff] %v1300
    %6313 = vst [vmem:[#allocation15 + $0x10] sm:$0xff] %v1301
    %6314 = vst [vmem:[#allocation15 + $0x18] sm:$0xff] %v1302
    %6315 = vst [vmem:[#allocation15 + $0x20] sm:$0xff] %v1303
    %6316 = vst [vmem:[#allocation15 + $0x28] sm:$0xff] %v1304
    %6317 = vst [vmem:[#allocation15 + $0x30] sm:$0xff] %v1305
    %6318 = vst [vmem:[#allocation15 + $0x38] sm:$0xff] %v1306
    // Predicated region
    $region69: #{tpu_custom_call.1} parent=1 // pred_check
      _
    $region70: #{tpu_custom_call.1} parent=1 // pred_check_branch
      %6320 = sbr.rel (0) target = $region72
    $region71: #{tpu_custom_call.1} parent=1 // pred_region
      %s6322 = ssub.s32 1024, 1024
      %6323 = vsyncadd [#allocation4], %s6322
      %s6325 = sshll.u32 [#allocation14], 4
      %s6326 = int_to_ptr.vmem [resolvable:$true] %s6325
      %6328 = dma.vmem_to_hbm [thread:$0]  %s6326, 1024, %s8, [#allocation4]
    $region72: #{tpu_custom_call.1} parent=1 // pred_fallthru
      _
    // Predicated region
    $region73: #{tpu_custom_call.1} parent=1 // pred_check
      _
    $region74: #{tpu_custom_call.1} parent=1 // pred_check_branch
      %6330 = sbr.rel (0) target = $region76
    $region75: #{tpu_custom_call.1} parent=1 // pred_region
      %s6332 = ssub.s32 1024, 1024
      %6333 = vsyncadd [#allocation16], %s6332
      %s6335 = sshll.u32 [#allocation15], 4
      %s6336 = int_to_ptr.vmem [resolvable:$true] %s6335
      %6338 = dma.vmem_to_hbm [thread:$0]  %s6336, 1024, %s9, [#allocation16]
    $region76: #{tpu_custom_call.1} parent=1 // pred_fallthru
      _
    // Predicated region
    $region77: #{tpu_custom_call.1} parent=1 // pred_check
      _
    $region78: #{tpu_custom_call.1} parent=1 // pred_check_branch
      %6340 = sbr.rel (0) target = $region80
    $region79: #{tpu_custom_call.1} parent=1 // pred_region
      %6341 = dma.done [#allocation4], 1024
    $region80: #{tpu_custom_call.1} parent=1 // pred_fallthru
      _
    // Predicated region
    $region81: #{tpu_custom_call.1} parent=1 // pred_check
      _
    $region82: #{tpu_custom_call.1} parent=1 // pred_check_branch
      %6343 = sbr.rel (0) target = $region84
    $region83: #{tpu_custom_call.1} parent=1 // pred_region
      %6344 = dma.done [#allocation16], 1024
    $region84: #{tpu_custom_call.1} parent=1 // pred_fallthru
      _
    %6345 = vsyncpa [#allocation3], 1
    %6346 = vsyncpa [#allocation6], 1
    %6347 = vsyncpa [#allocation9], 1
    %6348 = vsyncpa [#allocation12], 1
    %6349 = vsyncpa [#allocation4], 1
    %6350 = vsyncpa [#allocation16], 1

</llo_original>
